<compile_context>
chip_gen: v7x
topology: tpu7x:2x2x1
jax: 0.10.0
libtpu: 0.0.40
codegen_flags: <defaults>
</compile_context>

<pallas_src>
import functools

import numpy as np
import jax
import jax.numpy as jnp
from jax.experimental import pallas as pl
from jax.experimental.pallas import tpu as pltpu

N_CLASS = 16           # synthetic len(strLabelConverter('VAT'))  (alphabet chars + CTC blank)
ROI_H, ROI_W = 8, 16   # SimpleROI out_height=32 at input scale -> 8 at 1/4 conv-map scale


# ====================== kernel A: fused backbone + DB detect head ======================

def _backbone_detect_kernel(xcol_ref, w1_ref, b1_ref, w2_ref, b2_ref, wl_ref, bl_ref,
                            d1w_ref, d1b_ref, d2w_ref, d2b_ref,
                            asel_ref, xoh_ref, bsel_ref,
                            cm_ref, bin_ref, ph_ref, det_ref, *, H4, W4):
    HW = H4 * W4

    # Zero the padded canvases once: only their (semantically constant) zero borders are
    # ever read without being overwritten, and the grid axis is sequential ("arbitrary").
    @pl.when(pl.program_id(0) == 0)
    def _():
        ph_ref[...] = jnp.zeros_like(ph_ref)
        det_ref[...] = jnp.zeros_like(det_ref)

    # ---- backbone conv1: stride-2 3x3 (3->16) + ReLU as ONE K=27 matmul ------------------
    h1 = jnp.dot(xcol_ref[0], w1_ref[...], preferred_element_type=jnp.float32)
    h1 = jnp.maximum(h1 + b1_ref[...], 0.0).astype(jnp.bfloat16)          # (4*H4*W4, 16)

    # h1 rows are phase-major (block 2p+q holds conv1 output at rows/cols (2i+p, 2j+q)).
    # Scatter the 4 phases into zero-padded VMEM canvases so every tap of the stride-2
    # conv2 is a static slice (no host round trip, no strided access).
    ph_ref[0, 1:H4 + 1, 1:W4 + 1, :] = h1[3 * HW:4 * HW].reshape(H4, W4, 16)   # phase (1,1)
    ph_ref[1, 1:H4 + 1, 0:W4, :] = h1[2 * HW:3 * HW].reshape(H4, W4, 16)       # phase (1,0)
    ph_ref[2, 0:H4, 1:W4 + 1, :] = h1[1 * HW:2 * HW].reshape(H4, W4, 16)       # phase (0,1)
    ph_ref[3, 0:H4, 0:W4, :] = h1[0:HW].reshape(H4, W4, 16)                    # phase (0,0)

    # (canvas id, row offset, col offset) for the 9 taps of the stride-2 conv2, (dy,dx) order
    tap_src = [(0, 0, 0), (1, 0, 0), (0, 0, 1),
               (2, 0, 0), (3, 0, 0), (2, 0, 1),
               (0, 1, 0), (1, 1, 0), (0, 1, 1)]
    taps = jnp.concatenate(
        [ph_ref[c, oy:oy + H4, ox:ox + W4, :].reshape(HW, 16) for c, oy, ox in tap_src],
        axis=-1)                                                          # (HW, 144) bf16

    # ---- backbone conv2 (16->32) + ReLU, fused 1x1 lateral (32->32) + ReLU ---------------
    h2 = jnp.dot(taps, w2_ref[...], preferred_element_type=jnp.float32)
    h2 = jnp.maximum(h2 + b2_ref[...], 0.0).astype(jnp.bfloat16)          # (HW, 32)
    cm = jnp.dot(h2, wl_ref[...], preferred_element_type=jnp.float32) + bl_ref[...]
    cm = jnp.maximum(cm, 0.0)                                             # (HW, 32) f32
    cm_bf = cm.astype(jnp.bfloat16)
    cm_ref[0] = cm_bf   # bf16, (H4*W4, 32): exactly the layout the fused ROI gather consumes

    # ---- detect head: 3x3 (32->16) + ReLU as one K=288 matmul, 1x1 (16->1) as lane reduce
    det_ref[1:H4 + 1, 1:W4 + 1, :] = cm_bf.reshape(H4, W4, 32)
    dtaps = jnp.concatenate(
        [det_ref[dy:dy + H4, dx:dx + W4, :].reshape(HW, 32)
         for dy in range(3) for dx in range(3)], axis=-1)                 # (HW, 288)
    dh = jnp.dot(dtaps, d1w_ref[...], preferred_element_type=jnp.float32)
    dh = jnp.maximum(dh + d1b_ref[...], 0.0)                              # (HW, 16) f32
    z = jnp.sum(dh * d2w_ref[...], axis=-1, keepdims=True) + d2b_ref[...]   # (HW, 1)
    sig = jax.nn.sigmoid(z)

    # Exact x4 nearest upsample emitted directly in a lane-dense (2*H4, 8*W4) layout (the
    # row-major flatten of the (4*H4, 4*W4) map): out[a,b] = sig[(a//2)*W4 + (b%(4W4))//4].
    # asel/xoh/bsel are hoisted host-built one-hot selectors.
    # TODO(synk): nearest x4 upsample stands in for DB's transposed convs.
    up = jnp.dot(jnp.dot(asel_ref[...], sig * xoh_ref[...],
                         preferred_element_type=jnp.float32),
                 bsel_ref[...], preferred_element_type=jnp.float32)       # (2*H4, 8*W4)
    bin_ref[0] = up


def backbone_detect(xcol, W, H4, W4):
    B, N1, K1 = xcol.shape
    HW = H4 * W4
    kern = functools.partial(_backbone_detect_kernel, H4=H4, W4=W4)

    def b2(shape):
        return pl.BlockSpec(shape, lambda i: (0, 0))

    grid_spec = pltpu.PrefetchScalarGridSpec(
        num_scalar_prefetch=0, grid=(B,),
        in_specs=[
            pl.BlockSpec((1, N1, K1), lambda i: (i, 0, 0)),
            b2((K1, 16)), b2((1, 16)),
            b2((144, 32)), b2((1, 32)),
            b2((32, 32)), b2((1, 32)),
            b2((288, 16)), b2((1, 16)),
            b2((1, 16)), b2((1, 1)),
            b2((2 * H4, HW)), b2((HW, W4)), b2((W4, 8 * W4)),
        ],
        out_specs=[pl.BlockSpec((1, HW, 32), lambda i: (i, 0, 0)),
                   pl.BlockSpec((1, 2 * H4, 8 * W4), lambda i: (i, 0, 0))],
        scratch_shapes=[pltpu.VMEM((4, H4 + 1, W4 + 1, 16), jnp.bfloat16),
                        pltpu.VMEM((H4 + 2, W4 + 2, 32), jnp.bfloat16)])
    return pl.pallas_call(
        kern,
        out_shape=(jax.ShapeDtypeStruct((B, HW, 32), jnp.bfloat16),
                   jax.ShapeDtypeStruct((B, 2 * H4, 8 * W4), jnp.float32)),
        grid_spec=grid_spec,
        compiler_params=pltpu.CompilerParams(dimension_semantics=("arbitrary",)),
    )(xcol, W["bb_c1_w"], W["bb_c1_b"], W["bb_c2_w"], W["bb_c2_b"],
      W["bb_lat_w"], W["bb_lat_b"], W["det_c1_w"], W["det_c1_b"],
      W["det_c2_w"], W["det_c2_b"], W["up_asel"], W["up_xoh"], W["up_bsel"])


# ====================== kernel B: SimpleROI gather + full CRNN (all ROIs) ===============

def _roi_crnn_kernel(cm_ref, sel_ref, w1_ref, b1_ref, w2_ref, b2_ref, w3_ref, b3_ref,
                     pe_ref, po_ref, f1w_ref, f1b_ref, f2w_ref, f2b_ref,
                     o_ref, pad1_ref, pad2_ref, pad3_ref):
    R = pad1_ref.shape[0]
    Bc, HW, C = cm_ref.shape
    H1, W1 = ROI_H, ROI_W               # 8, 16
    H2, W2 = ROI_H // 2, ROI_W // 2     # 4, 8
    H3 = ROI_H // 4                     # 2

    # grid=(1,): runs once; only the zero borders are ever read without being overwritten.
    pad1_ref[...] = jnp.zeros_like(pad1_ref)
    pad2_ref[...] = jnp.zeros_like(pad2_ref)
    pad3_ref[...] = jnp.zeros_like(pad3_ref)

    # ---- SimpleROI: gather every pixel of every ROI with ONE one-hot matmul --------------
    # TODO(synk): SimpleROI's cv2 perspective warp / aspect-ratio bucketing replaced by a
    # nearest-neighbour crop to a fixed (ROI_H, ROI_W) baked into the selector matrix.
    cm_flat = cm_ref[...].reshape(Bc * HW, C)                              # bf16
    g = jnp.dot(sel_ref[...], cm_flat, preferred_element_type=jnp.float32)  # (R*128, 32)
    pad1_ref[:, 1:H1 + 1, 1:W1 + 1, :] = g.astype(jnp.bfloat16).reshape(R, H1, W1, C)

    # ---- CRNN conv1 3x3 (32->64) + ReLU + maxpool(2,2), all ROIs batched into M ----------
    t1 = jnp.concatenate(
        [pad1_ref[:, dy:dy + H1, dx:dx + W1, :].reshape(R * H1 * W1, C)
         for dy in range(3) for dx in range(3)], axis=-1)                  # (R*128, 288)
    h = jnp.dot(t1, w1_ref[...], preferred_element_type=jnp.float32)
    h = jnp.maximum(h + b1_ref[...], 0.0)                                  # (R*128, 64) f32
    h = h.reshape(R * H2, 2, W1, 64).max(axis=1)                           # H-pool (f32)
    m = h.reshape(R * H2 * W1, 64)
    h = jnp.maximum(jnp.dot(pe_ref[...], m, preferred_element_type=jnp.float32),
                    jnp.dot(po_ref[...], m, preferred_element_type=jnp.float32))  # W-pool
    pad2_ref[:, 1:H2 + 1, 1:W2 + 1, :] = h.astype(jnp.bfloat16).reshape(R, H2, W2, 64)

    # ---- conv2 3x3 (64->64) + ReLU + maxpool(2,1) ----------------------------------------
    t2 = jnp.concatenate(
        [pad2_ref[:, dy:dy + H2, dx:dx + W2, :].reshape(R * H2 * W2, 64)
         for dy in range(3) for dx in range(3)], axis=-1)                  # (R*32, 576)
    h = jnp.dot(t2, w2_ref[...], preferred_element_type=jnp.float32)
    h = jnp.maximum(h + b2_ref[...], 0.0)
    h = h.reshape(R * H3, 2, W2, 64).max(axis=1)                           # (R*2, 8, 64)
    pad3_ref[:, 1:H3 + 1, 1:W2 + 1, :] = h.astype(jnp.bfloat16).reshape(R, H3, W2, 64)

    # ---- conv3 3x3 (64->64) + ReLU, collapse remaining H by max -> sequence (R*T, 64) ----
    t3 = jnp.concatenate(
        [pad3_ref[:, dy:dy + H3, dx:dx + W2, :].reshape(R * H3 * W2, 64)
         for dy in range(3) for dx in range(3)], axis=-1)                  # (R*16, 576)
    h = jnp.dot(t3, w3_ref[...], preferred_element_type=jnp.float32)
    h = jnp.maximum(h + b3_ref[...], 0.0)
    seq = h.reshape(R, H3, W2, 64).max(axis=1).reshape(R * W2, 64)         # (R*T, 64)
    seq = seq.astype(jnp.bfloat16)

    # ---- per-timestep head: fc1 (64->32) ReLU + fc2 (32->nclass), all ROIs/steps in M ----
    # TODO(synk): CRNN's bidirectional LSTM recurrence replaced by a per-timestep MLP.
    f = jnp.maximum(jnp.dot(seq, f1w_ref[...], preferred_element_type=jnp.float32)
                    + f1b_ref[...], 0.0).astype(jnp.bfloat16)              # (R*T, 32)
    o_ref[...] = (jnp.dot(f, f2w_ref[...], preferred_element_type=jnp.float32)
                  + f2b_ref[...])                                          # (R*T, nclass)


def roi_crnn(cm, sel, pe, po, n_roi, W):
    Bc, HW, C = cm.shape
    T = ROI_W // 2

    def b2(shape):
        return pl.BlockSpec(shape, lambda i: (0, 0))

    grid_spec = pltpu.PrefetchScalarGridSpec(
        num_scalar_prefetch=0, grid=(1,),
        in_specs=[
            pl.BlockSpec((Bc, HW, C), lambda i: (0, 0, 0)),
            b2(sel.shape),
            b2((9 * 32, 64)), b2((1, 64)),
            b2((9 * 64, 64)), b2((1, 64)),
            b2((9 * 64, 64)), b2((1, 64)),
            b2(pe.shape), b2(po.shape),
            b2((64, 32)), b2((1, 32)),
            b2((32, N_CLASS)), b2((1, N_CLASS)),
        ],
        out_specs=pl.BlockSpec((n_roi * T, N_CLASS), lambda i: (0, 0)),
        scratch_shapes=[
            pltpu.VMEM((n_roi, ROI_H + 2, ROI_W + 2, C), jnp.bfloat16),
            pltpu.VMEM((n_roi, ROI_H // 2 + 2, ROI_W // 2 + 2, 64), jnp.bfloat16),
            pltpu.VMEM((n_roi, ROI_H // 4 + 2, ROI_W // 2 + 2, 64), jnp.bfloat16),
        ])
    return pl.pallas_call(
        _roi_crnn_kernel,
        out_shape=jax.ShapeDtypeStruct((n_roi * T, N_CLASS), jnp.float32),
        grid_spec=grid_spec,
        compiler_params=pltpu.CompilerParams(dimension_semantics=("arbitrary",)),
    )(cm, sel, W["cr_c1_w"], W["cr_c1_b"], W["cr_c2_w"], W["cr_c2_b"],
      W["cr_c3_w"], W["cr_c3_b"], pe, po,
      W["cr_fc1_w"], W["cr_fc1_b"], W["cr_fc2_w"], W["cr_fc2_b"])


# ====================== deterministic parameters & host-side constants =================

def init_params(key):
    ks = jax.random.split(key, 10)

    def w(k, *shape, scale=0.1):
        return jax.random.normal(k, shape, jnp.float32) * scale

    return {
        # share_conv: small FPN(resnet50) stand-in -> 1/4-scale, 32-channel conv_maps
        "bb_c1_w": w(ks[0], 3, 3, 3, 16),   "bb_c1_b": jnp.zeros((16,), jnp.float32),
        "bb_c2_w": w(ks[1], 3, 3, 16, 32),  "bb_c2_b": jnp.zeros((32,), jnp.float32),
        "bb_lat_w": w(ks[2], 1, 1, 32, 32), "bb_lat_b": jnp.zeros((32,), jnp.float32),
        # detect_branch: DBSegDetector stand-in -> probability ('binary') map
        "det_c1_w": w(ks[3], 3, 3, 32, 16), "det_c1_b": jnp.zeros((16,), jnp.float32),
        "det_c2_w": w(ks[4], 1, 1, 16, 1),  "det_c2_b": jnp.zeros((1,), jnp.float32),
        # recog_branch: CRNN(imgH=8, nc=channels of conv_maps) stand-in
        "cr_c1_w": w(ks[5], 3, 3, 32, 64),  "cr_c1_b": jnp.zeros((64,), jnp.float32),
        "cr_c2_w": w(ks[6], 3, 3, 64, 64),  "cr_c2_b": jnp.zeros((64,), jnp.float32),
        "cr_c3_w": w(ks[7], 3, 3, 64, 64),  "cr_c3_b": jnp.zeros((64,), jnp.float32),
        "cr_fc1_w": w(ks[8], 64, 32),       "cr_fc1_b": jnp.zeros((32,), jnp.float32),
        "cr_fc2_w": w(ks[9], 32, N_CLASS),  "cr_fc2_b": jnp.zeros((N_CLASS,), jnp.float32),
    }


def _upsample_selectors(H4, W4):
    """One-hot selectors so the exact x4 nearest upsample lands directly in the lane-dense
    (2*H4, 8*W4) row-pair layout: out[a,b] = prob2d[a//2, (b % 4W4)//4]."""
    yx = np.arange(H4 * W4)
    a = np.arange(2 * H4)
    asel = (yx[None, :] // W4 == a[:, None] // 2).astype(np.float32)        # (2H4, H4*W4)
    xoh = (yx[:, None] % W4 == np.arange(W4)[None, :]).astype(np.float32)   # (H4*W4, W4)
    b = np.arange(8 * W4)
    bsel = (np.arange(W4)[:, None] == (b[None, :] % (4 * W4)) // 4).astype(np.float32)
    return jnp.asarray(asel), jnp.asarray(xoh), jnp.asarray(bsel)


def prepare_params(p, H4, W4):
    """Pack weights for the kernels: every 3x3 conv becomes a (9*Cin, Cout) bf16 matrix
    (taps concatenated along K in (dy, dx, cin) order), matmul weights bf16, biases (1,C)
    f32.  bf16 inputs + f32 accumulation for every MXU matmul."""
    bf, f32 = jnp.bfloat16, jnp.float32

    def wcat(w):
        return w.reshape(-1, w.shape[-1]).astype(bf)

    def row(b):
        return b.reshape(1, -1).astype(f32)

    asel, xoh, bsel = _upsample_selectors(H4, W4)
    return {
        "bb_c1_w": wcat(p["bb_c1_w"]), "bb_c1_b": row(p["bb_c1_b"]),
        "bb_c2_w": wcat(p["bb_c2_w"]), "bb_c2_b": row(p["bb_c2_b"]),
        "bb_lat_w": p["bb_lat_w"].reshape(32, 32).astype(bf), "bb_lat_b": row(p["bb_lat_b"]),
        "det_c1_w": wcat(p["det_c1_w"]), "det_c1_b": row(p["det_c1_b"]),
        "det_c2_w": p["det_c2_w"].reshape(1, 16).astype(f32),
        "det_c2_b": p["det_c2_b"].reshape(1, 1).astype(f32),
        "cr_c1_w": wcat(p["cr_c1_w"]), "cr_c1_b": row(p["cr_c1_b"]),
        "cr_c2_w": wcat(p["cr_c2_w"]), "cr_c2_b": row(p["cr_c2_b"]),
        "cr_c3_w": wcat(p["cr_c3_w"]), "cr_c3_b": row(p["cr_c3_b"]),
        "cr_fc1_w": p["cr_fc1_w"].astype(bf), "cr_fc1_b": row(p["cr_fc1_b"]),
        "cr_fc2_w": p["cr_fc2_w"].astype(bf), "cr_fc2_b": row(p["cr_fc2_b"]),
        "up_asel": asel, "up_xoh": xoh, "up_bsel": bsel,
    }


def _conv1_im2col_phase_major(x_nhwc):
    """im2col for the stride-2 3x3 conv1 (K = 27), rows ordered phase-major so the conv2
    stride-2 phases are contiguous 256-row blocks of the conv1 matmul output."""
    B, H, Wd, C = x_nhwc.shape
    Ho, Wo = H // 2, Wd // 2
    xp = jnp.pad(x_nhwc, ((0, 0), (1, 1), (1, 1), (0, 0)))
    taps = [xp[:, dy:dy + H:2, dx:dx + Wd:2, :] for dy in range(3) for dx in range(3)]
    xcol = jnp.concatenate(taps, axis=-1)                       # (B, Ho, Wo, 9C)
    xcol = xcol.reshape(B, Ho // 2, 2, Wo // 2, 2, 9 * C)
    xcol = xcol.transpose(0, 2, 4, 1, 3, 5).reshape(B, Ho * Wo, 9 * C)
    return xcol.astype(jnp.bfloat16)


def _build_roi_selector(boxes_batch, B, h4, w4):
    """SimpleROI as one host-built one-hot gather matrix (n_roi*ROI_H*ROI_W, B*h4*w4):
    nearest-neighbour axis-aligned crop-and-resize of each box to (ROI_H, ROI_W)."""
    sizes = [len(bx) for bx in boxes_batch]
    n_roi = int(sum(sizes))
    if n_roi == 0:                                  # guard: image(s) with zero boxes
        return None, sizes, 0
    sel = np.zeros((n_roi * ROI_H * ROI_W, B * h4 * w4), np.float32)
    r = 0
    for b, boxes in enumerate(boxes_batch):
        for (y0, x0, h, w) in boxes:
            ys = np.clip(y0 + (np.arange(ROI_H) * h) // ROI_H, 0, h4 - 1)
            xs = np.clip(x0 + (np.arange(ROI_W) * w) // ROI_W, 0, w4 - 1)
            rows = r * ROI_H * ROI_W + np.arange(ROI_H * ROI_W)
            cols = b * h4 * w4 + np.repeat(ys, ROI_W) * w4 + np.tile(xs, ROI_H)
            sel[rows, cols] = 1.0
            r += 1
    return jnp.asarray(sel, jnp.bfloat16), sizes, n_roi


def _wpool_selectors(n_roi):
    """Hoisted even/odd column selectors for the CRNN maxpool(2,2) W-pool over all ROIs."""
    half = ROI_W // 2
    e = np.zeros((half, ROI_W), np.float32)
    o = np.zeros((half, ROI_W), np.float32)
    e[np.arange(half), 2 * np.arange(half)] = 1.0
    o[np.arange(half), 2 * np.arange(half) + 1] = 1.0
    eye = np.eye(n_roi * (ROI_H // 2), dtype=np.float32)
    return jnp.asarray(np.kron(eye, e)), jnp.asarray(np.kron(eye, o))


# ====================== host-side glue (decode / batching) =============================

def unsqueeze_batches(items, sizes):
    out, start = [], 0
    for s in sizes:
        out.append(items[start:start + s])
        start += s
    assert start == len(items)
    return out


def repreasent_txts(recog_logits):
    # greedy CTC decode (strLabelConverter.decode, raw=False): argmax over classes,
    # collapse repeats, drop blank (index 0).
    preds = jnp.argmax(recog_logits, axis=2)               # (T, N)
    preds = np.asarray(jnp.transpose(preds, (1, 0)))       # (N, T)
    texts = []
    for rowv in preds:
        out, prev = [], -1
        for v in rowv.tolist():
            if v != prev and v != 0:
                out.append(int(v))
            prev = v
        texts.append(out)
    # TODO(synk): mapping of class indices to 'VAT' characters (strLabelConverter) omitted.
    return texts


# ====================== End2EndOcr forward (eval mode) =================================

def end2end_ocr_forward(params, x_nchw, boxes_batch):
    """Eval-mode forward: end2end=True, _inference_using_bounding_box=True."""
    B, _, H, Wd = x_nchw.shape
    H4, W4 = H // 4, Wd // 4
    W = prepare_params(params, H4, W4)
    x = jnp.transpose(x_nchw, (0, 2, 3, 1))                                # NCHW -> NHWC

    # share_conv + detect_branch: ONE fused kernel
    xcol = _conv1_im2col_phase_major(x)                                    # (B, H/2*W/2, 27)
    cm, bin_flat = backbone_detect(xcol, W, H4, W4)    # (B, H4*W4, 32) bf16 ; (B, 2H4, 8W4) f32
    binary = bin_flat.reshape(B, 1, H, Wd)                                 # NCHW prob map
    conv_maps = cm.reshape(B, H4, W4, 32).astype(jnp.float32)              # API NHWC view
    detect_res = {"binary": binary, "conv_maps": conv_maps}
    # TODO(synk): SegDetectorRepresenter (cv2 contour/box extraction) has no Pallas equivalent.

    # connectorLayer (SimpleROI) + forward_rec (CRNN): one kernel, all ROIs batched into M
    sel, batch_sizes, n_roi = _build_roi_selector(boxes_batch, B, H4, W4)
    T = ROI_W // 2
    if n_roi == 0:
        recog_logits = jnp.zeros((T, 0, N_CLASS), jnp.float32)
        return detect_res, [[] for _ in boxes_batch], 0, 0, recog_logits
    pe, po = _wpool_selectors(n_roi)
    logits_flat = roi_crnn(cm, sel, pe, po, n_roi, W)                      # (n_roi*T, nclass)
    recog_logits = jnp.transpose(logits_flat.reshape(n_roi, T, N_CLASS), (1, 0, 2))
    recog_res = repreasent_txts(recog_logits)                              # repreasent_txts
    recog_res = unsqueeze_batches(recog_res, batch_sizes)                  # _unsqueeze_batches
    detect_loss, rec_loss = 0, 0                                           # eval mode
    return detect_res, recog_res, detect_loss, rec_loss, recog_logits


# ====================== main ============================================================

if __name__ == "__main__":
    key = jax.random.PRNGKey(0)
    pkey, xkey = jax.random.split(key)
    params = init_params(pkey)

    # PyTorch-convention input: NCHW, small shapes
    x = jax.random.normal(xkey, (2, 3, 64, 64), jnp.float32)
    # boxes_batch: per-image list of boxes (y0, x0, h, w) in 1/4-scale conv-map coordinates
    boxes_batch = [[(2, 1, 8, 12), (4, 3, 6, 10)],
                   [(0, 0, 10, 14), (6, 2, 8, 8)]]

    detect_res, recog_res, detect_loss, rec_loss, logits = end2end_ocr_forward(
        params, x, boxes_batch)
    jax.block_until_ready((detect_res["binary"], detect_res["conv_maps"], logits))

    assert detect_res["binary"].shape == (2, 1, 64, 64)
    assert detect_res["conv_maps"].shape == (2, 16, 16, 32)
    assert logits.shape == (8, 4, N_CLASS)                  # (T, total_rois, nclass)
    assert len(recog_res) == 2 and len(recog_res[0]) == 2 and len(recog_res[1]) == 2

    print("KERNEL_OK")
</pallas_src>

<mosaic_0001>
module attributes {stable_mosaic.version = 11 : i64} {
  func.func @_backbone_detect_kernel(%arg0: i32, %arg1: memref<1x1024x27xbf16, #tpu.memory_space<vmem>>, %arg2: memref<27x16xbf16, #tpu.memory_space<vmem>>, %arg3: memref<1x16xf32, #tpu.memory_space<vmem>>, %arg4: memref<144x32xbf16, #tpu.memory_space<vmem>>, %arg5: memref<1x32xf32, #tpu.memory_space<vmem>>, %arg6: memref<32x32xbf16, #tpu.memory_space<vmem>>, %arg7: memref<1x32xf32, #tpu.memory_space<vmem>>, %arg8: memref<288x16xbf16, #tpu.memory_space<vmem>>, %arg9: memref<1x16xf32, #tpu.memory_space<vmem>>, %arg10: memref<1x16xf32, #tpu.memory_space<vmem>>, %arg11: memref<1x1xf32, #tpu.memory_space<vmem>>, %arg12: memref<32x256xf32, #tpu.memory_space<vmem>>, %arg13: memref<256x16xf32, #tpu.memory_space<vmem>>, %arg14: memref<16x128xf32, #tpu.memory_space<vmem>>, %arg15: memref<1x256x32xbf16, #tpu.memory_space<vmem>>, %arg16: memref<1x32x128xf32, #tpu.memory_space<vmem>>, %arg17: memref<4x17x17x16xbf16, #tpu.memory_space<vmem>>, %arg18: memref<18x18x32xbf16, #tpu.memory_space<vmem>>) attributes {dimension_semantics = [#tpu.dimension_semantics<arbitrary>], iteration_bounds = array<i64: 2>, scalar_prefetch = 0 : i64, scratch_operands = 2 : i64, tpu.core_type = #tpu.core_type<tc>, window_params = [{transform_indices = @transform_0, window_bounds = array<i64: 1, 1024, 27>}, {pipeline_mode = #tpu.pipeline_mode<synchronous>, transform_indices = @transform_1, window_bounds = array<i64: 27, 16>}, {pipeline_mode = #tpu.pipeline_mode<synchronous>, transform_indices = @transform_2, window_bounds = array<i64: 1, 16>}, {pipeline_mode = #tpu.pipeline_mode<synchronous>, transform_indices = @transform_3, window_bounds = array<i64: 144, 32>}, {pipeline_mode = #tpu.pipeline_mode<synchronous>, transform_indices = @transform_4, window_bounds = array<i64: 1, 32>}, {pipeline_mode = #tpu.pipeline_mode<synchronous>, transform_indices = @transform_5, window_bounds = array<i64: 32, 32>}, {pipeline_mode = #tpu.pipeline_mode<synchronous>, transform_indices = @transform_6, window_bounds = array<i64: 1, 32>}, {pipeline_mode = #tpu.pipeline_mode<synchronous>, transform_indices = @transform_7, window_bounds = array<i64: 288, 16>}, {pipeline_mode = #tpu.pipeline_mode<synchronous>, transform_indices = @transform_8, window_bounds = array<i64: 1, 16>}, {pipeline_mode = #tpu.pipeline_mode<synchronous>, transform_indices = @transform_9, window_bounds = array<i64: 1, 16>}, {pipeline_mode = #tpu.pipeline_mode<synchronous>, transform_indices = @transform_10, window_bounds = array<i64: 1, 1>}, {pipeline_mode = #tpu.pipeline_mode<synchronous>, transform_indices = @transform_11, window_bounds = array<i64: 32, 256>}, {pipeline_mode = #tpu.pipeline_mode<synchronous>, transform_indices = @transform_12, window_bounds = array<i64: 256, 16>}, {pipeline_mode = #tpu.pipeline_mode<synchronous>, transform_indices = @transform_13, window_bounds = array<i64: 16, 128>}, {transform_indices = @transform_14, window_bounds = array<i64: 1, 256, 32>}, {transform_indices = @transform_15, window_bounds = array<i64: 1, 32, 128>}]} {
    %c0_i32 = arith.constant 0 : i32
    %0 = arith.cmpi eq, %arg0, %c0_i32 : i32
    %1 = arith.extui %0 : i1 to i32
    %c0_i32_0 = arith.constant 0 : i32
    %2 = arith.cmpi ne, %1, %c0_i32_0 : i32
    scf.if %2 {
      %cst_125 = arith.constant 0.000000e+00 : bf16
      %131 = vector.broadcast %cst_125 : bf16 to vector<4x17x17x16xbf16>
      %c0_126 = arith.constant 0 : index
      %c0_127 = arith.constant 0 : index
      %c0_128 = arith.constant 0 : index
      %c0_129 = arith.constant 0 : index
      %132 = vector.load %arg17[%c0_126, %c0_127, %c0_128, %c0_129] : memref<4x17x17x16xbf16, #tpu.memory_space<vmem>>, vector<4x17x17x16xbf16>
      tpu.vector_store %arg17[%c0_126, %c0_127, %c0_128, %c0_129], %131 {strides = array<i32>} : memref<4x17x17x16xbf16, #tpu.memory_space<vmem>>, vector<4x17x17x16xbf16>,
      %cst_130 = arith.constant 0.000000e+00 : bf16
      %133 = vector.broadcast %cst_130 : bf16 to vector<18x18x32xbf16>
      %c0_131 = arith.constant 0 : index
      %c0_132 = arith.constant 0 : index
      %c0_133 = arith.constant 0 : index
      %134 = vector.load %arg18[%c0_131, %c0_132, %c0_133] : memref<18x18x32xbf16, #tpu.memory_space<vmem>>, vector<18x18x32xbf16>
      tpu.vector_store %arg18[%c0_131, %c0_132, %c0_133], %133 {strides = array<i32>} : memref<18x18x32xbf16, #tpu.memory_space<vmem>>, vector<18x18x32xbf16>,
    } else {
    }
    %c0 = arith.constant 0 : index
    %c0_1 = arith.constant 0 : index
    %c0_2 = arith.constant 0 : index
    %3 = vector.load %arg1[%c0, %c0_1, %c0_2] : memref<1x1024x27xbf16, #tpu.memory_space<vmem>>, vector<1x1024x27xbf16>
    %4 = vector.shape_cast %3 : vector<1x1024x27xbf16> to vector<1024x27xbf16>
    %c0_3 = arith.constant 0 : index
    %c0_4 = arith.constant 0 : index
    %5 = vector.load %arg2[%c0_3, %c0_4] : memref<27x16xbf16, #tpu.memory_space<vmem>>, vector<27x16xbf16>
    %cst = arith.constant dense<0.000000e+00> : vector<1024x16xf32>
    %6 = tpu.matmul %4, %5, %cst {dimension_numbers = #tpu.dot_dimension_numbers<[1], [0], [0], [1], [0, 0, 1, 1], [], []>} : vector<1024x27xbf16>, vector<27x16xbf16>, vector<1024x16xf32> -> vector<1024x16xf32>
    %c0_5 = arith.constant 0 : index
    %c0_6 = arith.constant 0 : index
    %7 = vector.load %arg3[%c0_5, %c0_6] : memref<1x16xf32, #tpu.memory_space<vmem>>, vector<1x16xf32>
    %8 = vector.broadcast %7 : vector<1x16xf32> to vector<1024x16xf32>
    %9 = arith.addf %6, %8 : vector<1024x16xf32>
    %cst_7 = arith.constant 0.000000e+00 : f32
    %10 = vector.broadcast %cst_7 : f32 to vector<1024x16xf32>
    %11 = arith.maximumf %9, %10 : vector<1024x16xf32>
    %12 = arith.truncf %11 : vector<1024x16xf32> to vector<1024x16xbf16>
    %13 = vector.extract_strided_slice %12 {offsets = [768, 0], sizes = [256, 16], strides = [1, 1]} : vector<1024x16xbf16> to vector<256x16xbf16>
    %14 = vector.shape_cast %13 : vector<256x16xbf16> to vector<16x16x16xbf16>
    %c0_8 = arith.constant 0 : index
    %c1 = arith.constant 1 : index
    %c1_9 = arith.constant 1 : index
    %c0_10 = arith.constant 0 : index
    %15 = vector.load %arg17[%c0_8, %c1, %c1_9, %c0_10] : memref<4x17x17x16xbf16, #tpu.memory_space<vmem>>, vector<1x16x16x16xbf16>
    %16 = vector.shape_cast %15 : vector<1x16x16x16xbf16> to vector<16x16x16xbf16>
    %17 = vector.shape_cast %14 : vector<16x16x16xbf16> to vector<1x16x16x16xbf16>
    tpu.vector_store %arg17[%c0_8, %c1, %c1_9, %c0_10], %17 {strides = array<i32>} : memref<4x17x17x16xbf16, #tpu.memory_space<vmem>>, vector<1x16x16x16xbf16>,
    %18 = vector.extract_strided_slice %12 {offsets = [512, 0], sizes = [256, 16], strides = [1, 1]} : vector<1024x16xbf16> to vector<256x16xbf16>
    %19 = vector.shape_cast %18 : vector<256x16xbf16> to vector<16x16x16xbf16>
    %c1_11 = arith.constant 1 : index
    %c1_12 = arith.constant 1 : index
    %c0_13 = arith.constant 0 : index
    %c0_14 = arith.constant 0 : index
    %20 = vector.load %arg17[%c1_11, %c1_12, %c0_13, %c0_14] : memref<4x17x17x16xbf16, #tpu.memory_space<vmem>>, vector<1x16x16x16xbf16>
    %21 = vector.shape_cast %20 : vector<1x16x16x16xbf16> to vector<16x16x16xbf16>
    %22 = vector.shape_cast %19 : vector<16x16x16xbf16> to vector<1x16x16x16xbf16>
    tpu.vector_store %arg17[%c1_11, %c1_12, %c0_13, %c0_14], %22 {strides = array<i32>} : memref<4x17x17x16xbf16, #tpu.memory_space<vmem>>, vector<1x16x16x16xbf16>,
    %23 = vector.extract_strided_slice %12 {offsets = [256, 0], sizes = [256, 16], strides = [1, 1]} : vector<1024x16xbf16> to vector<256x16xbf16>
    %24 = vector.shape_cast %23 : vector<256x16xbf16> to vector<16x16x16xbf16>
    %c2 = arith.constant 2 : index
    %c0_15 = arith.constant 0 : index
    %c1_16 = arith.constant 1 : index
    %c0_17 = arith.constant 0 : index
    %25 = vector.load %arg17[%c2, %c0_15, %c1_16, %c0_17] : memref<4x17x17x16xbf16, #tpu.memory_space<vmem>>, vector<1x16x16x16xbf16>
    %26 = vector.shape_cast %25 : vector<1x16x16x16xbf16> to vector<16x16x16xbf16>
    %27 = vector.shape_cast %24 : vector<16x16x16xbf16> to vector<1x16x16x16xbf16>
    tpu.vector_store %arg17[%c2, %c0_15, %c1_16, %c0_17], %27 {strides = array<i32>} : memref<4x17x17x16xbf16, #tpu.memory_space<vmem>>, vector<1x16x16x16xbf16>,
    %28 = vector.extract_strided_slice %12 {offsets = [0, 0], sizes = [256, 16], strides = [1, 1]} : vector<1024x16xbf16> to vector<256x16xbf16>
    %29 = vector.shape_cast %28 : vector<256x16xbf16> to vector<16x16x16xbf16>
    %c3 = arith.constant 3 : index
    %c0_18 = arith.constant 0 : index
    %c0_19 = arith.constant 0 : index
    %c0_20 = arith.constant 0 : index
    %30 = vector.load %arg17[%c3, %c0_18, %c0_19, %c0_20] : memref<4x17x17x16xbf16, #tpu.memory_space<vmem>>, vector<1x16x16x16xbf16>
    %31 = vector.shape_cast %30 : vector<1x16x16x16xbf16> to vector<16x16x16xbf16>
    %32 = vector.shape_cast %29 : vector<16x16x16xbf16> to vector<1x16x16x16xbf16>
    tpu.vector_store %arg17[%c3, %c0_18, %c0_19, %c0_20], %32 {strides = array<i32>} : memref<4x17x17x16xbf16, #tpu.memory_space<vmem>>, vector<1x16x16x16xbf16>,
    %c0_21 = arith.constant 0 : index
    %c0_22 = arith.constant 0 : index
    %c0_23 = arith.constant 0 : index
    %c0_24 = arith.constant 0 : index
    %33 = vector.load %arg17[%c0_21, %c0_22, %c0_23, %c0_24] : memref<4x17x17x16xbf16, #tpu.memory_space<vmem>>, vector<1x16x16x16xbf16>
    %34 = vector.shape_cast %33 : vector<1x16x16x16xbf16> to vector<16x16x16xbf16>
    %35 = vector.shape_cast %34 : vector<16x16x16xbf16> to vector<256x16xbf16>
    %c1_25 = arith.constant 1 : index
    %c0_26 = arith.constant 0 : index
    %c0_27 = arith.constant 0 : index
    %c0_28 = arith.constant 0 : index
    %36 = vector.load %arg17[%c1_25, %c0_26, %c0_27, %c0_28] : memref<4x17x17x16xbf16, #tpu.memory_space<vmem>>, vector<1x16x16x16xbf16>
    %37 = vector.shape_cast %36 : vector<1x16x16x16xbf16> to vector<16x16x16xbf16>
    %38 = vector.shape_cast %37 : vector<16x16x16xbf16> to vector<256x16xbf16>
    %c0_29 = arith.constant 0 : index
    %c0_30 = arith.constant 0 : index
    %c1_31 = arith.constant 1 : index
    %c0_32 = arith.constant 0 : index
    %39 = vector.load %arg17[%c0_29, %c0_30, %c1_31, %c0_32] : memref<4x17x17x16xbf16, #tpu.memory_space<vmem>>, vector<1x16x16x16xbf16>
    %40 = vector.shape_cast %39 : vector<1x16x16x16xbf16> to vector<16x16x16xbf16>
    %41 = vector.shape_cast %40 : vector<16x16x16xbf16> to vector<256x16xbf16>
    %c2_33 = arith.constant 2 : index
    %c0_34 = arith.constant 0 : index
    %c0_35 = arith.constant 0 : index
    %c0_36 = arith.constant 0 : index
    %42 = vector.load %arg17[%c2_33, %c0_34, %c0_35, %c0_36] : memref<4x17x17x16xbf16, #tpu.memory_space<vmem>>, vector<1x16x16x16xbf16>
    %43 = vector.shape_cast %42 : vector<1x16x16x16xbf16> to vector<16x16x16xbf16>
    %44 = vector.shape_cast %43 : vector<16x16x16xbf16> to vector<256x16xbf16>
    %c3_37 = arith.constant 3 : index
    %c0_38 = arith.constant 0 : index
    %c0_39 = arith.constant 0 : index
    %c0_40 = arith.constant 0 : index
    %45 = vector.load %arg17[%c3_37, %c0_38, %c0_39, %c0_40] : memref<4x17x17x16xbf16, #tpu.memory_space<vmem>>, vector<1x16x16x16xbf16>
    %46 = vector.shape_cast %45 : vector<1x16x16x16xbf16> to vector<16x16x16xbf16>
    %47 = vector.shape_cast %46 : vector<16x16x16xbf16> to vector<256x16xbf16>
    %c2_41 = arith.constant 2 : index
    %c0_42 = arith.constant 0 : index
    %c1_43 = arith.constant 1 : index
    %c0_44 = arith.constant 0 : index
    %48 = vector.load %arg17[%c2_41, %c0_42, %c1_43, %c0_44] : memref<4x17x17x16xbf16, #tpu.memory_space<vmem>>, vector<1x16x16x16xbf16>
    %49 = vector.shape_cast %48 : vector<1x16x16x16xbf16> to vector<16x16x16xbf16>
    %50 = vector.shape_cast %49 : vector<16x16x16xbf16> to vector<256x16xbf16>
    %c0_45 = arith.constant 0 : index
    %c1_46 = arith.constant 1 : index
    %c0_47 = arith.constant 0 : index
    %c0_48 = arith.constant 0 : index
    %51 = vector.load %arg17[%c0_45, %c1_46, %c0_47, %c0_48] : memref<4x17x17x16xbf16, #tpu.memory_space<vmem>>, vector<1x16x16x16xbf16>
    %52 = vector.shape_cast %51 : vector<1x16x16x16xbf16> to vector<16x16x16xbf16>
    %53 = vector.shape_cast %52 : vector<16x16x16xbf16> to vector<256x16xbf16>
    %c1_49 = arith.constant 1 : index
    %c1_50 = arith.constant 1 : index
    %c0_51 = arith.constant 0 : index
    %c0_52 = arith.constant 0 : index
    %54 = vector.load %arg17[%c1_49, %c1_50, %c0_51, %c0_52] : memref<4x17x17x16xbf16, #tpu.memory_space<vmem>>, vector<1x16x16x16xbf16>
    %55 = vector.shape_cast %54 : vector<1x16x16x16xbf16> to vector<16x16x16xbf16>
    %56 = vector.shape_cast %55 : vector<16x16x16xbf16> to vector<256x16xbf16>
    %c0_53 = arith.constant 0 : index
    %c1_54 = arith.constant 1 : index
    %c1_55 = arith.constant 1 : index
    %c0_56 = arith.constant 0 : index
    %57 = vector.load %arg17[%c0_53, %c1_54, %c1_55, %c0_56] : memref<4x17x17x16xbf16, #tpu.memory_space<vmem>>, vector<1x16x16x16xbf16>
    %58 = vector.shape_cast %57 : vector<1x16x16x16xbf16> to vector<16x16x16xbf16>
    %59 = vector.shape_cast %58 : vector<16x16x16xbf16> to vector<256x16xbf16>
    %60 = tpu.concatenate %35, %38, %41, %44, %47, %50, %53, %56, %59 in 1 : vector<256x16xbf16>, vector<256x16xbf16>, vector<256x16xbf16>, vector<256x16xbf16>, vector<256x16xbf16>, vector<256x16xbf16>, vector<256x16xbf16>, vector<256x16xbf16>, vector<256x16xbf16> -> vector<256x144xbf16>
    %c0_57 = arith.constant 0 : index
    %c0_58 = arith.constant 0 : index
    %61 = vector.load %arg4[%c0_57, %c0_58] : memref<144x32xbf16, #tpu.memory_space<vmem>>, vector<144x32xbf16>
    %cst_59 = arith.constant dense<0.000000e+00> : vector<256x32xf32>
    %62 = tpu.matmul %60, %61, %cst_59 {dimension_numbers = #tpu.dot_dimension_numbers<[1], [0], [0], [1], [0, 0, 1, 1], [], []>} : vector<256x144xbf16>, vector<144x32xbf16>, vector<256x32xf32> -> vector<256x32xf32>
    %c0_60 = arith.constant 0 : index
    %c0_61 = arith.constant 0 : index
    %63 = vector.load %arg5[%c0_60, %c0_61] : memref<1x32xf32, #tpu.memory_space<vmem>>, vector<1x32xf32>
    %64 = vector.broadcast %63 : vector<1x32xf32> to vector<256x32xf32>
    %65 = arith.addf %62, %64 : vector<256x32xf32>
    %cst_62 = arith.constant 0.000000e+00 : f32
    %66 = vector.broadcast %cst_62 : f32 to vector<256x32xf32>
    %67 = arith.maximumf %65, %66 : vector<256x32xf32>
    %68 = arith.truncf %67 : vector<256x32xf32> to vector<256x32xbf16>
    %c0_63 = arith.constant 0 : index
    %c0_64 = arith.constant 0 : index
    %69 = vector.load %arg6[%c0_63, %c0_64] : memref<32x32xbf16, #tpu.memory_space<vmem>>, vector<32x32xbf16>
    %cst_65 = arith.constant dense<0.000000e+00> : vector<256x32xf32>
    %70 = tpu.matmul %68, %69, %cst_65 {dimension_numbers = #tpu.dot_dimension_numbers<[1], [0], [0], [1], [0, 0, 1, 1], [], []>} : vector<256x32xbf16>, vector<32x32xbf16>, vector<256x32xf32> -> vector<256x32xf32>
    %c0_66 = arith.constant 0 : index
    %c0_67 = arith.constant 0 : index
    %71 = vector.load %arg7[%c0_66, %c0_67] : memref<1x32xf32, #tpu.memory_space<vmem>>, vector<1x32xf32>
    %72 = vector.broadcast %71 : vector<1x32xf32> to vector<256x32xf32>
    %73 = arith.addf %70, %72 : vector<256x32xf32>
    %cst_68 = arith.constant 0.000000e+00 : f32
    %74 = vector.broadcast %cst_68 : f32 to vector<256x32xf32>
    %75 = arith.maximumf %73, %74 : vector<256x32xf32>
    %76 = arith.truncf %75 : vector<256x32xf32> to vector<256x32xbf16>
    %c0_69 = arith.constant 0 : index
    %c0_70 = arith.constant 0 : index
    %c0_71 = arith.constant 0 : index
    %77 = vector.load %arg15[%c0_69, %c0_70, %c0_71] : memref<1x256x32xbf16, #tpu.memory_space<vmem>>, vector<1x256x32xbf16>
    %78 = vector.shape_cast %77 : vector<1x256x32xbf16> to vector<256x32xbf16>
    %79 = vector.shape_cast %76 : vector<256x32xbf16> to vector<1x256x32xbf16>
    tpu.vector_store %arg15[%c0_69, %c0_70, %c0_71], %79 {strides = array<i32>} : memref<1x256x32xbf16, #tpu.memory_space<vmem>>, vector<1x256x32xbf16>,
    %80 = vector.shape_cast %76 : vector<256x32xbf16> to vector<16x16x32xbf16>
    %c1_72 = arith.constant 1 : index
    %c1_73 = arith.constant 1 : index
    %c0_74 = arith.constant 0 : index
    %81 = vector.load %arg18[%c1_72, %c1_73, %c0_74] : memref<18x18x32xbf16, #tpu.memory_space<vmem>>, vector<16x16x32xbf16>
    tpu.vector_store %arg18[%c1_72, %c1_73, %c0_74], %80 {strides = array<i32>} : memref<18x18x32xbf16, #tpu.memory_space<vmem>>, vector<16x16x32xbf16>,
    %c0_75 = arith.constant 0 : index
    %c0_76 = arith.constant 0 : index
    %c0_77 = arith.constant 0 : index
    %82 = vector.load %arg18[%c0_75, %c0_76, %c0_77] : memref<18x18x32xbf16, #tpu.memory_space<vmem>>, vector<16x16x32xbf16>
    %83 = vector.shape_cast %82 : vector<16x16x32xbf16> to vector<256x32xbf16>
    %c0_78 = arith.constant 0 : index
    %c1_79 = arith.constant 1 : index
    %c0_80 = arith.constant 0 : index
    %84 = vector.load %arg18[%c0_78, %c1_79, %c0_80] : memref<18x18x32xbf16, #tpu.memory_space<vmem>>, vector<16x16x32xbf16>
    %85 = vector.shape_cast %84 : vector<16x16x32xbf16> to vector<256x32xbf16>
    %c0_81 = arith.constant 0 : index
    %c2_82 = arith.constant 2 : index
    %c0_83 = arith.constant 0 : index
    %86 = vector.load %arg18[%c0_81, %c2_82, %c0_83] : memref<18x18x32xbf16, #tpu.memory_space<vmem>>, vector<16x16x32xbf16>
    %87 = vector.shape_cast %86 : vector<16x16x32xbf16> to vector<256x32xbf16>
    %c1_84 = arith.constant 1 : index
    %c0_85 = arith.constant 0 : index
    %c0_86 = arith.constant 0 : index
    %88 = vector.load %arg18[%c1_84, %c0_85, %c0_86] : memref<18x18x32xbf16, #tpu.memory_space<vmem>>, vector<16x16x32xbf16>
    %89 = vector.shape_cast %88 : vector<16x16x32xbf16> to vector<256x32xbf16>
    %c1_87 = arith.constant 1 : index
    %c1_88 = arith.constant 1 : index
    %c0_89 = arith.constant 0 : index
    %90 = vector.load %arg18[%c1_87, %c1_88, %c0_89] : memref<18x18x32xbf16, #tpu.memory_space<vmem>>, vector<16x16x32xbf16>
    %91 = vector.shape_cast %90 : vector<16x16x32xbf16> to vector<256x32xbf16>
    %c1_90 = arith.constant 1 : index
    %c2_91 = arith.constant 2 : index
    %c0_92 = arith.constant 0 : index
    %92 = vector.load %arg18[%c1_90, %c2_91, %c0_92] : memref<18x18x32xbf16, #tpu.memory_space<vmem>>, vector<16x16x32xbf16>
    %93 = vector.shape_cast %92 : vector<16x16x32xbf16> to vector<256x32xbf16>
    %c2_93 = arith.constant 2 : index
    %c0_94 = arith.constant 0 : index
    %c0_95 = arith.constant 0 : index
    %94 = vector.load %arg18[%c2_93, %c0_94, %c0_95] : memref<18x18x32xbf16, #tpu.memory_space<vmem>>, vector<16x16x32xbf16>
    %95 = vector.shape_cast %94 : vector<16x16x32xbf16> to vector<256x32xbf16>
    %c2_96 = arith.constant 2 : index
    %c1_97 = arith.constant 1 : index
    %c0_98 = arith.constant 0 : index
    %96 = vector.load %arg18[%c2_96, %c1_97, %c0_98] : memref<18x18x32xbf16, #tpu.memory_space<vmem>>, vector<16x16x32xbf16>
    %97 = vector.shape_cast %96 : vector<16x16x32xbf16> to vector<256x32xbf16>
    %c2_99 = arith.constant 2 : index
    %c2_100 = arith.constant 2 : index
    %c0_101 = arith.constant 0 : index
    %98 = vector.load %arg18[%c2_99, %c2_100, %c0_101] : memref<18x18x32xbf16, #tpu.memory_space<vmem>>, vector<16x16x32xbf16>
    %99 = vector.shape_cast %98 : vector<16x16x32xbf16> to vector<256x32xbf16>
    %100 = tpu.concatenate %83, %85, %87, %89, %91, %93, %95, %97, %99 in 1 : vector<256x32xbf16>, vector<256x32xbf16>, vector<256x32xbf16>, vector<256x32xbf16>, vector<256x32xbf16>, vector<256x32xbf16>, vector<256x32xbf16>, vector<256x32xbf16>, vector<256x32xbf16> -> vector<256x288xbf16>
    %c0_102 = arith.constant 0 : index
    %c0_103 = arith.constant 0 : index
    %101 = vector.load %arg8[%c0_102, %c0_103] : memref<288x16xbf16, #tpu.memory_space<vmem>>, vector<288x16xbf16>
    %cst_104 = arith.constant dense<0.000000e+00> : vector<256x16xf32>
    %102 = tpu.matmul %100, %101, %cst_104 {dimension_numbers = #tpu.dot_dimension_numbers<[1], [0], [0], [1], [0, 0, 1, 1], [], []>} : vector<256x288xbf16>, vector<288x16xbf16>, vector<256x16xf32> -> vector<256x16xf32>
    %c0_105 = arith.constant 0 : index
    %c0_106 = arith.constant 0 : index
    %103 = vector.load %arg9[%c0_105, %c0_106] : memref<1x16xf32, #tpu.memory_space<vmem>>, vector<1x16xf32>
    %104 = vector.broadcast %103 : vector<1x16xf32> to vector<256x16xf32>
    %105 = arith.addf %102, %104 : vector<256x16xf32>
    %cst_107 = arith.constant 0.000000e+00 : f32
    %106 = vector.broadcast %cst_107 : f32 to vector<256x16xf32>
    %107 = arith.maximumf %105, %106 : vector<256x16xf32>
    %c0_108 = arith.constant 0 : index
    %c0_109 = arith.constant 0 : index
    %108 = vector.load %arg10[%c0_108, %c0_109] : memref<1x16xf32, #tpu.memory_space<vmem>>, vector<1x16xf32>
    %109 = vector.broadcast %108 : vector<1x16xf32> to vector<256x16xf32>
    %110 = arith.mulf %107, %109 : vector<256x16xf32>
    %cst_110 = arith.constant dense<0.000000e+00> : vector<256xf32>
    %111 = vector.multi_reduction <add>, %110, %cst_110 [1] : vector<256x16xf32> to vector<256xf32>
    %112 = vector.shape_cast %111 : vector<256xf32> to vector<256x1xf32>
    %c0_111 = arith.constant 0 : index
    %c0_112 = arith.constant 0 : index
    %113 = vector.load %arg11[%c0_111, %c0_112] : memref<1x1xf32, #tpu.memory_space<vmem>>, vector<1x1xf32>
    %114 = vector.broadcast %113 : vector<1x1xf32> to vector<256x1xf32>
    %115 = arith.addf %112, %114 : vector<256x1xf32>
    %116 = arith.negf %115 : vector<256x1xf32>
    %117 = math.exp %116 : vector<256x1xf32>
    %cst_113 = arith.constant 1.000000e+00 : f32
    %118 = vector.broadcast %cst_113 : f32 to vector<256x1xf32>
    %119 = arith.addf %118, %117 : vector<256x1xf32>
    %120 = arith.divf %118, %119 : vector<256x1xf32>
    %c0_114 = arith.constant 0 : index
    %c0_115 = arith.constant 0 : index
    %121 = vector.load %arg12[%c0_114, %c0_115] : memref<32x256xf32, #tpu.memory_space<vmem>>, vector<32x256xf32>
    %c0_116 = arith.constant 0 : index
    %c0_117 = arith.constant 0 : index
    %122 = vector.load %arg13[%c0_116, %c0_117] : memref<256x16xf32, #tpu.memory_space<vmem>>, vector<256x16xf32>
    %123 = vector.broadcast %120 : vector<256x1xf32> to vector<256x16xf32>
    %124 = arith.mulf %123, %122 : vector<256x16xf32>
    %cst_118 = arith.constant dense<0.000000e+00> : vector<32x16xf32>
    %125 = tpu.matmul %121, %124, %cst_118 {dimension_numbers = #tpu.dot_dimension_numbers<[1], [0], [0], [1], [0, 0, 1, 1], [], []>} : vector<32x256xf32>, vector<256x16xf32>, vector<32x16xf32> -> vector<32x16xf32>
    %c0_119 = arith.constant 0 : index
    %c0_120 = arith.constant 0 : index
    %126 = vector.load %arg14[%c0_119, %c0_120] : memref<16x128xf32, #tpu.memory_space<vmem>>, vector<16x128xf32>
    %cst_121 = arith.constant dense<0.000000e+00> : vector<32x128xf32>
    %127 = tpu.matmul %125, %126, %cst_121 {dimension_numbers = #tpu.dot_dimension_numbers<[1], [0], [0], [1], [0, 0, 1, 1], [], []>} : vector<32x16xf32>, vector<16x128xf32>, vector<32x128xf32> -> vector<32x128xf32>
    %c0_122 = arith.constant 0 : index
    %c0_123 = arith.constant 0 : index
    %c0_124 = arith.constant 0 : index
    %128 = vector.load %arg16[%c0_122, %c0_123, %c0_124] : memref<1x32x128xf32, #tpu.memory_space<vmem>>, vector<1x32x128xf32>
    %129 = vector.shape_cast %128 : vector<1x32x128xf32> to vector<32x128xf32>
    %130 = vector.shape_cast %127 : vector<32x128xf32> to vector<1x32x128xf32>
    tpu.vector_store %arg16[%c0_122, %c0_123, %c0_124], %130 {strides = array<i32>} : memref<1x32x128xf32, #tpu.memory_space<vmem>>, vector<1x32x128xf32>,
    return
  }
  func.func @transform_0(%arg0: i32) -> (i32, i32, i32) {
    %c0_i32 = arith.constant 0 : i32
    %c0_i32_0 = arith.constant 0 : i32
    %c0_i32_1 = arith.constant 0 : i32
    return %arg0, %c0_i32, %c0_i32_0 : i32, i32, i32
  }
  func.func @transform_1(%arg0: i32) -> (i32, i32) {
    %c0_i32 = arith.constant 0 : i32
    %c0_i32_0 = arith.constant 0 : i32
    %c0_i32_1 = arith.constant 0 : i32
    return %c0_i32, %c0_i32_0 : i32, i32
  }
  func.func @transform_2(%arg0: i32) -> (i32, i32) {
    %c0_i32 = arith.constant 0 : i32
    %c0_i32_0 = arith.constant 0 : i32
    %c0_i32_1 = arith.constant 0 : i32
    return %c0_i32, %c0_i32_0 : i32, i32
  }
  func.func @transform_3(%arg0: i32) -> (i32, i32) {
    %c0_i32 = arith.constant 0 : i32
    %c0_i32_0 = arith.constant 0 : i32
    %c0_i32_1 = arith.constant 0 : i32
    return %c0_i32, %c0_i32_0 : i32, i32
  }
  func.func @transform_4(%arg0: i32) -> (i32, i32) {
    %c0_i32 = arith.constant 0 : i32
    %c0_i32_0 = arith.constant 0 : i32
    %c0_i32_1 = arith.constant 0 : i32
    return %c0_i32, %c0_i32_0 : i32, i32
  }
  func.func @transform_5(%arg0: i32) -> (i32, i32) {
    %c0_i32 = arith.constant 0 : i32
    %c0_i32_0 = arith.constant 0 : i32
    %c0_i32_1 = arith.constant 0 : i32
    return %c0_i32, %c0_i32_0 : i32, i32
  }
  func.func @transform_6(%arg0: i32) -> (i32, i32) {
    %c0_i32 = arith.constant 0 : i32
    %c0_i32_0 = arith.constant 0 : i32
    %c0_i32_1 = arith.constant 0 : i32
    return %c0_i32, %c0_i32_0 : i32, i32
  }
  func.func @transform_7(%arg0: i32) -> (i32, i32) {
    %c0_i32 = arith.constant 0 : i32
    %c0_i32_0 = arith.constant 0 : i32
    %c0_i32_1 = arith.constant 0 : i32
    return %c0_i32, %c0_i32_0 : i32, i32
  }
  func.func @transform_8(%arg0: i32) -> (i32, i32) {
    %c0_i32 = arith.constant 0 : i32
    %c0_i32_0 = arith.constant 0 : i32
    %c0_i32_1 = arith.constant 0 : i32
    return %c0_i32, %c0_i32_0 : i32, i32
  }
  func.func @transform_9(%arg0: i32) -> (i32, i32) {
    %c0_i32 = arith.constant 0 : i32
    %c0_i32_0 = arith.constant 0 : i32
    %c0_i32_1 = arith.constant 0 : i32
    return %c0_i32, %c0_i32_0 : i32, i32
  }
  func.func @transform_10(%arg0: i32) -> (i32, i32) {
    %c0_i32 = arith.constant 0 : i32
    %c0_i32_0 = arith.constant 0 : i32
    %c0_i32_1 = arith.constant 0 : i32
    return %c0_i32, %c0_i32_0 : i32, i32
  }
  func.func @transform_11(%arg0: i32) -> (i32, i32) {
    %c0_i32 = arith.constant 0 : i32
    %c0_i32_0 = arith.constant 0 : i32
    %c0_i32_1 = arith.constant 0 : i32
    return %c0_i32, %c0_i32_0 : i32, i32
  }
  func.func @transform_12(%arg0: i32) -> (i32, i32) {
    %c0_i32 = arith.constant 0 : i32
    %c0_i32_0 = arith.constant 0 : i32
    %c0_i32_1 = arith.constant 0 : i32
    return %c0_i32, %c0_i32_0 : i32, i32
  }
  func.func @transform_13(%arg0: i32) -> (i32, i32) {
    %c0_i32 = arith.constant 0 : i32
    %c0_i32_0 = arith.constant 0 : i32
    %c0_i32_1 = arith.constant 0 : i32
    return %c0_i32, %c0_i32_0 : i32, i32
  }
  func.func @transform_14(%arg0: i32) -> (i32, i32, i32) {
    %c0_i32 = arith.constant 0 : i32
    %c0_i32_0 = arith.constant 0 : i32
    %c0_i32_1 = arith.constant 0 : i32
    return %arg0, %c0_i32, %c0_i32_0 : i32, i32, i32
  }
  func.func @transform_15(%arg0: i32) -> (i32, i32, i32) {
    %c0_i32 = arith.constant 0 : i32
    %c0_i32_0 = arith.constant 0 : i32
    %c0_i32_1 = arith.constant 0 : i32
    return %arg0, %c0_i32, %c0_i32_0 : i32, i32, i32
  }
}

</mosaic_0001>

<llo_original>
// kernel: tpu_custom_call.1
$region0: #{tpu_custom_call.1}
  #allocation0 [shape = 'u32[]', space=smem, size = 0x4, offset = 0x4, fixed_abs, tag = 'smem constant byte address 0x4 - core index']
  #allocation1 [shape = 'u32[144,128]{1,0:T(1,128)}', space=vmem, size = 0x12000, scoped, tag = 'internal scratch']
  #allocation2 [shape = 'bf16[4,17,17,16]{3,2,1,0:T(8,128)(2,1)}', space=vmem, size = 0x66000, scoped, tag = 'scratch operand']
  #allocation3 [shape = 'bf16[18,18,32]{2,1,0:T(8,128)(2,1)}', space=vmem, size = 0x1b000, scoped, tag = 'scratch operand']
  #allocation4 [shape = 'f32[1,1]{1,0:T(1,128)S(1)}', space=vmem, size = 0x200, scoped, tag = 'scoped memory for tpu_custom_call.1']
  %s0 = inlined_call_operand.vmem [shape: bf16[2,1024,27], index: 0, kind: input, shape index: {}]
  %s1 = inlined_call_operand.vmem [shape: bf16[27,16], index: 1, kind: input, shape index: {}]
  %s2 = inlined_call_operand.vmem [shape: f32[1,16], index: 2, kind: input, shape index: {}]
  %s3 = inlined_call_operand.vmem [shape: bf16[144,32], index: 3, kind: input, shape index: {}]
  %s4 = inlined_call_operand.vmem [shape: f32[1,32], index: 4, kind: input, shape index: {}]
  %s5 = inlined_call_operand.vmem [shape: bf16[32,32], index: 5, kind: input, shape index: {}]
  %s6 = inlined_call_operand.vmem [shape: f32[1,32], index: 6, kind: input, shape index: {}]
  %s7 = inlined_call_operand.vmem [shape: bf16[288,16], index: 7, kind: input, shape index: {}]
  %s8 = inlined_call_operand.vmem [shape: f32[1,16], index: 8, kind: input, shape index: {}]
  %s9 = inlined_call_operand.vmem [shape: f32[1,16], index: 9, kind: input, shape index: {}]
  %s10 = inlined_call_operand.<no memory space> [shape: f32[1,1], index: 10, kind: input, shape index: {}]
  %s11 = inlined_call_operand.vmem [shape: f32[32,256], index: 11, kind: input, shape index: {}]
  %s12 = inlined_call_operand.vmem [shape: f32[256,16], index: 12, kind: input, shape index: {}]
  %s13 = inlined_call_operand.vmem [shape: f32[16,128], index: 13, kind: input, shape index: {}]
  %s14 = inlined_call_operand.vmem [shape: bf16[2,256,32], index: 14, kind: output, shape index: {0}]
  %s15 = inlined_call_operand.hbm [shape: f32[2,32,128], index: 15, kind: output, shape index: {1}]
  %16 = xla_tuple %s14, %s15
  %s17 = sld [smem:[#allocation0]]
  $region101: #{tpu_custom_call.1} parent=0
    _
  %s19 = ssub.s32 1, %s17
  %s20 = scalar_select 0, %s19, %s17
  %v21 = vstv %s10
  %22 = vst [vmem:[#allocation4] sm:$0x1] %v21
  $region1: #{tpu_custom_call.1} parent=0
    #allocation5 [shape = 'u8[32768]{0}', space=vmem, size = 0x8000, scoped, tag = 'output window, operand 1']
    #allocation6 [shape = 's32[2]{0}', space=sflag, size = 0x8, scoped, tag = 'scoped memory for tpu_custom_call.1']
    %23 = vsyncpa [#allocation6], 0
    %s24 = scalar_lea.sflag [#allocation6], 1
    %25 = vsyncpa %s24, 0
    loop: start=0, step=1, limit=4
    $region2: #{tpu_custom_call.1} parent=1 // loop_pre_header
      _
    $region3: #{tpu_custom_call.1} parent=1 // loop_header
      %s27 = sphi 0, %s31
      %p28 = scmp.ge.s32.totalorder %s27, 4
      %s37 = sphi 0, %s39
      %s40 = sphi 0, %s37
      %s41 = sphi 0, %s40
      %s57 = sphi 0, %s41
      %s61 = sphi 0, %s61
      %s63 = sphi 0, %s61
      %s64 = sphi 0, %s63
      %s78 = sphi 0, %s64
      %s82 = sphi 0, %s82
      %s84 = sphi 0, %s82
      %s85 = sphi 0, %s84
      %s99 = sphi 0, %s85
      %s103 = sphi 0, %s103
      %s105 = sphi 0, %s103
      %s106 = sphi 0, %s105
      %s120 = sphi 0, %s106
      %s124 = sphi 0, %s124
      %s126 = sphi 0, %s124
      %s127 = sphi 0, %s126
      %s141 = sphi 0, %s127
      %s145 = sphi 0, %s145
      %s147 = sphi 0, %s145
      %s148 = sphi 0, %s147
      %s162 = sphi 0, %s148
      %s166 = sphi 0, %s166
      %s168 = sphi 0, %s166
      %s169 = sphi 0, %s168
      %s183 = sphi 0, %s169
      %s187 = sphi 0, %s187
      %s189 = sphi 0, %s187
      %s190 = sphi 0, %s189
      %s204 = sphi 0, %s190
      %s208 = sphi 0, %s208
      %s210 = sphi 0, %s208
      %s211 = sphi 0, %s210
      %s225 = sphi 0, %s211
      %s229 = sphi 0, %s229
      %s231 = sphi 0, %s229
      %s232 = sphi 0, %s231
      %s246 = sphi 0, %s232
      %s250 = sphi 0, %s250
      %s252 = sphi 0, %s250
      %s253 = sphi 0, %s252
      %s267 = sphi 0, %s253
      %s271 = sphi 0, %s271
      %s273 = sphi 0, %s271
      %s274 = sphi 0, %s273
      %s288 = sphi 0, %s274
      %s292 = sphi 0, %s292
      %s294 = sphi 0, %s292
      %s295 = sphi 0, %s294
      %s309 = sphi 0, %s295
      %s313 = sphi 0, %s313
      %s315 = sphi 0, %s313
      %s316 = sphi 0, %s315
      %s330 = sphi 0, %s316
      %s336 = sphi 0, %s338
      %s339 = sphi 0, %s336
      %s340 = sphi 0, %s339
      %s356 = sphi 0, %s340
      %s362 = sphi 0, %s364
      %s365 = sphi 0, %s362
      %s366 = sphi 0, %s365
      %s382 = sphi 0, %s366
    $region4: #{tpu_custom_call.1} parent=1 // loop_header_branch
      %30 = sbr.rel (%p28) target = $region8
    $region5: #{tpu_custom_call.1} parent=1 // loop_body
      %s32 = ssub.s32 %s27, 1
      %s33 = ssub.s32 %s27, 2
      %s34 = sadd.s32 %s27, 1
      %s35 = ssub.s32 %s27, %s34
      %p36 = scmp.eq.s32.totalorder %s35, 0
      %s38 = sadd.s32 %s37, 1
      %s39 = scalar_select %p36, %s37, %s38
      %p42 = pneg %p36
      %p43 = scmp.eq.s32.totalorder %s27, 1
      %p44 = por %p42, %p43
      %p45 = scmp.ne.s32.totalorder %s37, %s40
      %p46 = scmp.eq.s32.totalorder %s27, 0
      %p47 = por %p45, %p46
      %p48 = scmp.ne.s32.totalorder %s37, %s40
      %p49 = scmp.eq.s32.totalorder %s32, 1
      %p50 = por %p48, %p49
      %p51 = scmp.ne.s32.totalorder %s40, %s41
      %p52 = scmp.eq.s32.totalorder %s32, 0
      %p53 = por %p51, %p52
      %p54 = scmp.ne.s32.totalorder %s40, %s41
      %p55 = scmp.eq.s32.totalorder %s33, 1
      %p56 = por %p54, %p55
      %p58 = scmp.ne.s32.totalorder %s41, %s57
      %p59 = scmp.eq.s32.totalorder %s33, 0
      %p60 = por %p58, %p59
      %s62 = sadd.s32 %s61, 1
      %p65 = scmp.eq.s32.totalorder %s27, 1
      %p66 = scmp.ne.s32.totalorder %s61, %s63
      %p67 = scmp.eq.s32.totalorder %s27, 0
      %p68 = por %p66, %p67
      %p69 = scmp.ne.s32.totalorder %s61, %s63
      %p70 = scmp.eq.s32.totalorder %s32, 1
      %p71 = por %p69, %p70
      %p72 = scmp.ne.s32.totalorder %s63, %s64
      %p73 = scmp.eq.s32.totalorder %s32, 0
      %p74 = por %p72, %p73
      %p75 = scmp.ne.s32.totalorder %s63, %s64
      %p76 = scmp.eq.s32.totalorder %s33, 1
      %p77 = por %p75, %p76
      %p79 = scmp.ne.s32.totalorder %s64, %s78
      %p80 = scmp.eq.s32.totalorder %s33, 0
      %p81 = por %p79, %p80
      %s83 = sadd.s32 %s82, 1
      %p86 = scmp.eq.s32.totalorder %s27, 1
      %p87 = scmp.ne.s32.totalorder %s82, %s84
      %p88 = scmp.eq.s32.totalorder %s27, 0
      %p89 = por %p87, %p88
      %p90 = scmp.ne.s32.totalorder %s82, %s84
      %p91 = scmp.eq.s32.totalorder %s32, 1
      %p92 = por %p90, %p91
      %p93 = scmp.ne.s32.totalorder %s84, %s85
      %p94 = scmp.eq.s32.totalorder %s32, 0
      %p95 = por %p93, %p94
      %p96 = scmp.ne.s32.totalorder %s84, %s85
      %p97 = scmp.eq.s32.totalorder %s33, 1
      %p98 = por %p96, %p97
      %p100 = scmp.ne.s32.totalorder %s85, %s99
      %p101 = scmp.eq.s32.totalorder %s33, 0
      %p102 = por %p100, %p101
      %s104 = sadd.s32 %s103, 1
      %p107 = scmp.eq.s32.totalorder %s27, 1
      %p108 = scmp.ne.s32.totalorder %s103, %s105
      %p109 = scmp.eq.s32.totalorder %s27, 0
      %p110 = por %p108, %p109
      %p111 = scmp.ne.s32.totalorder %s103, %s105
      %p112 = scmp.eq.s32.totalorder %s32, 1
      %p113 = por %p111, %p112
      %p114 = scmp.ne.s32.totalorder %s105, %s106
      %p115 = scmp.eq.s32.totalorder %s32, 0
      %p116 = por %p114, %p115
      %p117 = scmp.ne.s32.totalorder %s105, %s106
      %p118 = scmp.eq.s32.totalorder %s33, 1
      %p119 = por %p117, %p118
      %p121 = scmp.ne.s32.totalorder %s106, %s120
      %p122 = scmp.eq.s32.totalorder %s33, 0
      %p123 = por %p121, %p122
      %s125 = sadd.s32 %s124, 1
      %p128 = scmp.eq.s32.totalorder %s27, 1
      %p129 = scmp.ne.s32.totalorder %s124, %s126
      %p130 = scmp.eq.s32.totalorder %s27, 0
      %p131 = por %p129, %p130
      %p132 = scmp.ne.s32.totalorder %s124, %s126
      %p133 = scmp.eq.s32.totalorder %s32, 1
      %p134 = por %p132, %p133
      %p135 = scmp.ne.s32.totalorder %s126, %s127
      %p136 = scmp.eq.s32.totalorder %s32, 0
      %p137 = por %p135, %p136
      %p138 = scmp.ne.s32.totalorder %s126, %s127
      %p139 = scmp.eq.s32.totalorder %s33, 1
      %p140 = por %p138, %p139
      %p142 = scmp.ne.s32.totalorder %s127, %s141
      %p143 = scmp.eq.s32.totalorder %s33, 0
      %p144 = por %p142, %p143
      %s146 = sadd.s32 %s145, 1
      %p149 = scmp.eq.s32.totalorder %s27, 1
      %p150 = scmp.ne.s32.totalorder %s145, %s147
      %p151 = scmp.eq.s32.totalorder %s27, 0
      %p152 = por %p150, %p151
      %p153 = scmp.ne.s32.totalorder %s145, %s147
      %p154 = scmp.eq.s32.totalorder %s32, 1
      %p155 = por %p153, %p154
      %p156 = scmp.ne.s32.totalorder %s147, %s148
      %p157 = scmp.eq.s32.totalorder %s32, 0
      %p158 = por %p156, %p157
      %p159 = scmp.ne.s32.totalorder %s147, %s148
      %p160 = scmp.eq.s32.totalorder %s33, 1
      %p161 = por %p159, %p160
      %p163 = scmp.ne.s32.totalorder %s148, %s162
      %p164 = scmp.eq.s32.totalorder %s33, 0
      %p165 = por %p163, %p164
      %s167 = sadd.s32 %s166, 1
      %p170 = scmp.eq.s32.totalorder %s27, 1
      %p171 = scmp.ne.s32.totalorder %s166, %s168
      %p172 = scmp.eq.s32.totalorder %s27, 0
      %p173 = por %p171, %p172
      %p174 = scmp.ne.s32.totalorder %s166, %s168
      %p175 = scmp.eq.s32.totalorder %s32, 1
      %p176 = por %p174, %p175
      %p177 = scmp.ne.s32.totalorder %s168, %s169
      %p178 = scmp.eq.s32.totalorder %s32, 0
      %p179 = por %p177, %p178
      %p180 = scmp.ne.s32.totalorder %s168, %s169
      %p181 = scmp.eq.s32.totalorder %s33, 1
      %p182 = por %p180, %p181
      %p184 = scmp.ne.s32.totalorder %s169, %s183
      %p185 = scmp.eq.s32.totalorder %s33, 0
      %p186 = por %p184, %p185
      %s188 = sadd.s32 %s187, 1
      %p191 = scmp.eq.s32.totalorder %s27, 1
      %p192 = scmp.ne.s32.totalorder %s187, %s189
      %p193 = scmp.eq.s32.totalorder %s27, 0
      %p194 = por %p192, %p193
      %p195 = scmp.ne.s32.totalorder %s187, %s189
      %p196 = scmp.eq.s32.totalorder %s32, 1
      %p197 = por %p195, %p196
      %p198 = scmp.ne.s32.totalorder %s189, %s190
      %p199 = scmp.eq.s32.totalorder %s32, 0
      %p200 = por %p198, %p199
      %p201 = scmp.ne.s32.totalorder %s189, %s190
      %p202 = scmp.eq.s32.totalorder %s33, 1
      %p203 = por %p201, %p202
      %p205 = scmp.ne.s32.totalorder %s190, %s204
      %p206 = scmp.eq.s32.totalorder %s33, 0
      %p207 = por %p205, %p206
      %s209 = sadd.s32 %s208, 1
      %p212 = scmp.eq.s32.totalorder %s27, 1
      %p213 = scmp.ne.s32.totalorder %s208, %s210
      %p214 = scmp.eq.s32.totalorder %s27, 0
      %p215 = por %p213, %p214
      %p216 = scmp.ne.s32.totalorder %s208, %s210
      %p217 = scmp.eq.s32.totalorder %s32, 1
      %p218 = por %p216, %p217
      %p219 = scmp.ne.s32.totalorder %s210, %s211
      %p220 = scmp.eq.s32.totalorder %s32, 0
      %p221 = por %p219, %p220
      %p222 = scmp.ne.s32.totalorder %s210, %s211
      %p223 = scmp.eq.s32.totalorder %s33, 1
      %p224 = por %p222, %p223
      %p226 = scmp.ne.s32.totalorder %s211, %s225
      %p227 = scmp.eq.s32.totalorder %s33, 0
      %p228 = por %p226, %p227
      %s230 = sadd.s32 %s229, 1
      %p233 = scmp.eq.s32.totalorder %s27, 1
      %p234 = scmp.ne.s32.totalorder %s229, %s231
      %p235 = scmp.eq.s32.totalorder %s27, 0
      %p236 = por %p234, %p235
      %p237 = scmp.ne.s32.totalorder %s229, %s231
      %p238 = scmp.eq.s32.totalorder %s32, 1
      %p239 = por %p237, %p238
      %p240 = scmp.ne.s32.totalorder %s231, %s232
      %p241 = scmp.eq.s32.totalorder %s32, 0
      %p242 = por %p240, %p241
      %p243 = scmp.ne.s32.totalorder %s231, %s232
      %p244 = scmp.eq.s32.totalorder %s33, 1
      %p245 = por %p243, %p244
      %p247 = scmp.ne.s32.totalorder %s232, %s246
      %p248 = scmp.eq.s32.totalorder %s33, 0
      %p249 = por %p247, %p248
      %s251 = sadd.s32 %s250, 1
      %p254 = scmp.eq.s32.totalorder %s27, 1
      %p255 = scmp.ne.s32.totalorder %s250, %s252
      %p256 = scmp.eq.s32.totalorder %s27, 0
      %p257 = por %p255, %p256
      %p258 = scmp.ne.s32.totalorder %s250, %s252
      %p259 = scmp.eq.s32.totalorder %s32, 1
      %p260 = por %p258, %p259
      %p261 = scmp.ne.s32.totalorder %s252, %s253
      %p262 = scmp.eq.s32.totalorder %s32, 0
      %p263 = por %p261, %p262
      %p264 = scmp.ne.s32.totalorder %s252, %s253
      %p265 = scmp.eq.s32.totalorder %s33, 1
      %p266 = por %p264, %p265
      %p268 = scmp.ne.s32.totalorder %s253, %s267
      %p269 = scmp.eq.s32.totalorder %s33, 0
      %p270 = por %p268, %p269
      %s272 = sadd.s32 %s271, 1
      %p275 = scmp.eq.s32.totalorder %s27, 1
      %p276 = scmp.ne.s32.totalorder %s271, %s273
      %p277 = scmp.eq.s32.totalorder %s27, 0
      %p278 = por %p276, %p277
      %p279 = scmp.ne.s32.totalorder %s271, %s273
      %p280 = scmp.eq.s32.totalorder %s32, 1
      %p281 = por %p279, %p280
      %p282 = scmp.ne.s32.totalorder %s273, %s274
      %p283 = scmp.eq.s32.totalorder %s32, 0
      %p284 = por %p282, %p283
      %p285 = scmp.ne.s32.totalorder %s273, %s274
      %p286 = scmp.eq.s32.totalorder %s33, 1
      %p287 = por %p285, %p286
      %p289 = scmp.ne.s32.totalorder %s274, %s288
      %p290 = scmp.eq.s32.totalorder %s33, 0
      %p291 = por %p289, %p290
      %s293 = sadd.s32 %s292, 1
      %p296 = scmp.eq.s32.totalorder %s27, 1
      %p297 = scmp.ne.s32.totalorder %s292, %s294
      %p298 = scmp.eq.s32.totalorder %s27, 0
      %p299 = por %p297, %p298
      %p300 = scmp.ne.s32.totalorder %s292, %s294
      %p301 = scmp.eq.s32.totalorder %s32, 1
      %p302 = por %p300, %p301
      %p303 = scmp.ne.s32.totalorder %s294, %s295
      %p304 = scmp.eq.s32.totalorder %s32, 0
      %p305 = por %p303, %p304
      %p306 = scmp.ne.s32.totalorder %s294, %s295
      %p307 = scmp.eq.s32.totalorder %s33, 1
      %p308 = por %p306, %p307
      %p310 = scmp.ne.s32.totalorder %s295, %s309
      %p311 = scmp.eq.s32.totalorder %s33, 0
      %p312 = por %p310, %p311
      %s314 = sadd.s32 %s313, 1
      %p317 = scmp.eq.s32.totalorder %s27, 1
      %p318 = scmp.ne.s32.totalorder %s313, %s315
      %p319 = scmp.eq.s32.totalorder %s27, 0
      %p320 = por %p318, %p319
      %p321 = scmp.ne.s32.totalorder %s313, %s315
      %p322 = scmp.eq.s32.totalorder %s32, 1
      %p323 = por %p321, %p322
      %p324 = scmp.ne.s32.totalorder %s315, %s316
      %p325 = scmp.eq.s32.totalorder %s32, 0
      %p326 = por %p324, %p325
      %p327 = scmp.ne.s32.totalorder %s315, %s316
      %p328 = scmp.eq.s32.totalorder %s33, 1
      %p329 = por %p327, %p328
      %p331 = scmp.ne.s32.totalorder %s316, %s330
      %p332 = scmp.eq.s32.totalorder %s33, 0
      %p333 = por %p331, %p332
      %s334 = ssub.s32 %s27, %s34
      %p335 = scmp.eq.s32.totalorder %s334, 0
      %s337 = sadd.s32 %s336, 1
      %s338 = scalar_select %p335, %s336, %s337
      %p341 = pneg %p335
      %p342 = scmp.eq.s32.totalorder %s27, 1
      %p343 = por %p341, %p342
      %p344 = scmp.ne.s32.totalorder %s336, %s339
      %p345 = scmp.eq.s32.totalorder %s27, 0
      %p346 = por %p344, %p345
      %p347 = scmp.ne.s32.totalorder %s336, %s339
      %p348 = scmp.eq.s32.totalorder %s32, 1
      %p349 = por %p347, %p348
      %p350 = scmp.ne.s32.totalorder %s339, %s340
      %p351 = scmp.eq.s32.totalorder %s32, 0
      %p352 = por %p350, %p351
      %p353 = scmp.ne.s32.totalorder %s339, %s340
      %p354 = scmp.eq.s32.totalorder %s33, 1
      %p355 = por %p353, %p354
      %p357 = scmp.ne.s32.totalorder %s340, %s356
      %p358 = scmp.eq.s32.totalorder %s33, 0
      %p359 = por %p357, %p358
      %s360 = ssub.s32 %s27, %s34
      %p361 = scmp.eq.s32.totalorder %s360, 0
      %s363 = sadd.s32 %s362, 1
      %s364 = scalar_select %p361, %s362, %s363
      %p367 = pneg %p361
      %p368 = scmp.eq.s32.totalorder %s27, 1
      %p369 = por %p367, %p368
      %p370 = scmp.ne.s32.totalorder %s362, %s365
      %p371 = scmp.eq.s32.totalorder %s27, 0
      %p372 = por %p370, %p371
      %p373 = scmp.ne.s32.totalorder %s362, %s365
      %p374 = scmp.eq.s32.totalorder %s32, 1
      %p375 = por %p373, %p374
      %p376 = scmp.ne.s32.totalorder %s365, %s366
      %p377 = scmp.eq.s32.totalorder %s32, 0
      %p378 = por %p376, %p377
      %p379 = scmp.ne.s32.totalorder %s365, %s366
      %p380 = scmp.eq.s32.totalorder %s33, 1
      %p381 = por %p379, %p380
      %p383 = scmp.ne.s32.totalorder %s366, %s382
      %p384 = scmp.eq.s32.totalorder %s33, 0
      %p385 = por %p383, %p384
      %p386 = scmp.le.s32.totalorder 1, %s27
      %p387 = scmp.lt.s32.totalorder %s27, 3
      %p388 = pnand %p386, %p387
      %p389 = pneg %p388
      // Predicated region
      $region9: #{tpu_custom_call.1} parent=5 // pred_check
        _
      $region10: #{tpu_custom_call.1} parent=5 // pred_check_branch
        %391 = sbr.rel (%p388) target = $region12
      $region11: #{tpu_custom_call.1} parent=5 // pred_region
        %s392 = ssub.s32 %s27, 1
        // Predicated region
        $region13: #{tpu_custom_call.1} parent=11 // pred_check
          %p393 = pneg %p74
        $region14: #{tpu_custom_call.1} parent=11 // pred_check_branch
          %395 = sbr.rel (%p393) target = $region16
        $region15: #{tpu_custom_call.1} parent=11 // pred_region
          _
        $region16: #{tpu_custom_call.1} parent=11 // pred_fallthru
          _
        // Predicated region
        $region17: #{tpu_custom_call.1} parent=11 // pred_check
          %p396 = pneg %p95
        $region18: #{tpu_custom_call.1} parent=11 // pred_check_branch
          %398 = sbr.rel (%p396) target = $region20
        $region19: #{tpu_custom_call.1} parent=11 // pred_region
          _
        $region20: #{tpu_custom_call.1} parent=11 // pred_fallthru
          _
        // Predicated region
        $region21: #{tpu_custom_call.1} parent=11 // pred_check
          %p399 = pneg %p116
        $region22: #{tpu_custom_call.1} parent=11 // pred_check_branch
          %401 = sbr.rel (%p399) target = $region24
        $region23: #{tpu_custom_call.1} parent=11 // pred_region
          _
        $region24: #{tpu_custom_call.1} parent=11 // pred_fallthru
          _
        // Predicated region
        $region25: #{tpu_custom_call.1} parent=11 // pred_check
          %p402 = pneg %p137
        $region26: #{tpu_custom_call.1} parent=11 // pred_check_branch
          %404 = sbr.rel (%p402) target = $region28
        $region27: #{tpu_custom_call.1} parent=11 // pred_region
          _
        $region28: #{tpu_custom_call.1} parent=11 // pred_fallthru
          _
        // Predicated region
        $region29: #{tpu_custom_call.1} parent=11 // pred_check
          %p405 = pneg %p158
        $region30: #{tpu_custom_call.1} parent=11 // pred_check_branch
          %407 = sbr.rel (%p405) target = $region32
        $region31: #{tpu_custom_call.1} parent=11 // pred_region
          _
        $region32: #{tpu_custom_call.1} parent=11 // pred_fallthru
          _
        // Predicated region
        $region33: #{tpu_custom_call.1} parent=11 // pred_check
          %p408 = pneg %p179
        $region34: #{tpu_custom_call.1} parent=11 // pred_check_branch
          %410 = sbr.rel (%p408) target = $region36
        $region35: #{tpu_custom_call.1} parent=11 // pred_region
          _
        $region36: #{tpu_custom_call.1} parent=11 // pred_fallthru
          _
        // Predicated region
        $region37: #{tpu_custom_call.1} parent=11 // pred_check
          %p411 = pneg %p200
        $region38: #{tpu_custom_call.1} parent=11 // pred_check_branch
          %413 = sbr.rel (%p411) target = $region40
        $region39: #{tpu_custom_call.1} parent=11 // pred_region
          _
        $region40: #{tpu_custom_call.1} parent=11 // pred_fallthru
          _
        // Predicated region
        $region41: #{tpu_custom_call.1} parent=11 // pred_check
          %p414 = pneg %p221
        $region42: #{tpu_custom_call.1} parent=11 // pred_check_branch
          %416 = sbr.rel (%p414) target = $region44
        $region43: #{tpu_custom_call.1} parent=11 // pred_region
          _
        $region44: #{tpu_custom_call.1} parent=11 // pred_fallthru
          _
        // Predicated region
        $region45: #{tpu_custom_call.1} parent=11 // pred_check
          %p417 = pneg %p242
        $region46: #{tpu_custom_call.1} parent=11 // pred_check_branch
          %419 = sbr.rel (%p417) target = $region48
        $region47: #{tpu_custom_call.1} parent=11 // pred_region
          _
        $region48: #{tpu_custom_call.1} parent=11 // pred_fallthru
          _
        // Predicated region
        $region49: #{tpu_custom_call.1} parent=11 // pred_check
          %p420 = pneg %p263
        $region50: #{tpu_custom_call.1} parent=11 // pred_check_branch
          %422 = sbr.rel (%p420) target = $region52
        $region51: #{tpu_custom_call.1} parent=11 // pred_region
          _
        $region52: #{tpu_custom_call.1} parent=11 // pred_fallthru
          _
        // Predicated region
        $region53: #{tpu_custom_call.1} parent=11 // pred_check
          %p423 = pneg %p284
        $region54: #{tpu_custom_call.1} parent=11 // pred_check_branch
          %425 = sbr.rel (%p423) target = $region56
        $region55: #{tpu_custom_call.1} parent=11 // pred_region
          _
        $region56: #{tpu_custom_call.1} parent=11 // pred_fallthru
          _
        // Predicated region
        $region57: #{tpu_custom_call.1} parent=11 // pred_check
          %p426 = pneg %p305
        $region58: #{tpu_custom_call.1} parent=11 // pred_check_branch
          %428 = sbr.rel (%p426) target = $region60
        $region59: #{tpu_custom_call.1} parent=11 // pred_region
          _
        $region60: #{tpu_custom_call.1} parent=11 // pred_fallthru
          _
        // Predicated region
        $region61: #{tpu_custom_call.1} parent=11 // pred_check
          %p429 = pneg %p326
        $region62: #{tpu_custom_call.1} parent=11 // pred_check_branch
          %431 = sbr.rel (%p429) target = $region64
        $region63: #{tpu_custom_call.1} parent=11 // pred_region
          _
        $region64: #{tpu_custom_call.1} parent=11 // pred_fallthru
          _
      $region12: #{tpu_custom_call.1} parent=5 // pred_fallthru
        _
      %p432 = scmp.lt.s32.totalorder %s27, 2
      // Predicated region
      $region65: #{tpu_custom_call.1} parent=5 // pred_check
        %p433 = pneg %p432
      $region66: #{tpu_custom_call.1} parent=5 // pred_check_branch
        %435 = sbr.rel (%p433) target = $region68
      $region67: #{tpu_custom_call.1} parent=5 // pred_region
        // Predicated region
        $region69: #{tpu_custom_call.1} parent=67 // pred_check
          %p436 = pneg %p47
        $region70: #{tpu_custom_call.1} parent=67 // pred_check_branch
          %438 = sbr.rel (%p436) target = $region72
        $region71: #{tpu_custom_call.1} parent=67 // pred_region
          %p439 = scmp.lt.s32.totalorder %s27, 1
          %s440 = scalar_select %p439, %s27, 1
          %s441 = smul.addr %s440, 128
          %s442 = smul.addr %s441, 4
          %s443 = scalar_lea.vmem %s0, %s442
        $region72: #{tpu_custom_call.1} parent=67 // pred_fallthru
          _
      $region68: #{tpu_custom_call.1} parent=5 // pred_fallthru
        _
      %p444 = scmp.le.s32.totalorder 1, %s27
      %p445 = scmp.lt.s32.totalorder %s27, 3
      %p446 = pnand %p444, %p445
      %p447 = pneg %p446
      // Predicated region
      $region73: #{tpu_custom_call.1} parent=5 // pred_check
        _
      $region74: #{tpu_custom_call.1} parent=5 // pred_check_branch
        %449 = sbr.rel (%p446) target = $region76
      $region75: #{tpu_custom_call.1} parent=5 // pred_region
        %s450 = ssub.s32 %s27, 1
        %p451 = scmp.lt.s32.totalorder %s32, 1
        %s452 = scalar_select %p451, %s32, 1
        %s453 = smul.addr %s452, 128
        %s454 = smul.addr %s453, 4
        %s455 = scalar_lea.vmem %s0, %s454
        %p456 = pneg %p53
        %p457 = pneg %p50
        %p458 = pneg %p74
        %p459 = pneg %p71
        %p460 = pneg %p95
        %p461 = pneg %p92
        %p462 = pneg %p116
        %p463 = pneg %p113
        %p464 = pneg %p137
        %p465 = pneg %p134
        %p466 = pneg %p158
        %p467 = pneg %p155
        %p468 = pneg %p179
        %p469 = pneg %p176
        %p470 = pneg %p200
        %p471 = pneg %p197
        %p472 = pneg %p221
        %p473 = pneg %p218
        %p474 = pneg %p242
        %p475 = pneg %p239
        %p476 = pneg %p263
        %p477 = pneg %p260
        %p478 = pneg %p284
        %p479 = pneg %p281
        %p480 = pneg %p305
        %p481 = pneg %p302
        %p482 = pneg %p326
        %p483 = pneg %p323
        %p484 = pneg %p352
        %p485 = pneg %p349
        %p486 = scmp.lt.s32.totalorder %s32, 1
        %s487 = scalar_select %p486, %s32, 1
        %s488 = smul.addr %s487, 32
        %s489 = smul.addr %s488, 4
        %s490 = scalar_lea.vmem %s14, %s489
        %p491 = pneg %p378
        %p492 = pneg %p375
        %s493 = sand.u32 %s365, 1
        %s494 = scalar_lea.sflag [#allocation6], %s493
        %s495 = sand.u32 %s365, 1
        %s496 = smul.addr %s495, 32
        %s497 = scalar_lea.vmem [#allocation5], %s496
        %p498 = scmp.lt.s32.totalorder %s32, 1
        %s499 = scalar_select %p498, %s32, 1
        %s500 = smul.addr %s499, 128
        %s501 = smul.addr %s500, 4
        %s502 = scalar_lea.vmem %s0, %s501
        %p503 = scmp.lt.s32.totalorder %s32, 1
        %s504 = scalar_select %p503, %s32, 1
        %s505 = smul.addr %s504, 32
        %s506 = smul.addr %s505, 4
        %s507 = scalar_lea.vmem %s14, %s506
        %p509 = scmp.eq.s32.totalorder %s32, 0
        // Predicated region
        $region77: #{tpu_custom_call.1} parent=75 // pred_check
          %p510 = pneg %p509
        $region78: #{tpu_custom_call.1} parent=75 // pred_check_branch
          %512 = sbr.rel (%p510) target = $region80
        $region79: #{tpu_custom_call.1} parent=75 // pred_region
          %vm513 = vcmask 125952
          %514 = vst.msk [vmem:[#allocation2] sm:$0xf] %vm513, 0
          %515 = vst.msk [vmem:[#allocation2 + $0x4] sm:$0xf] %vm513, 0
          %vm516 = vcmask 122880
          %vm517 = vsmask.f32 256
          %vm518 = vmand %vm516, %vm517
          %v519 = vld [vmem:[#allocation2 + $0x8] sm:$0x1]
          %v520 = vsel %vm518, 0, %v519
          %521 = vst [vmem:[#allocation2 + $0x8] sm:$0x1] %v520
          %522 = vst.msk [vmem:[#allocation2 + $0xc] sm:$0xf] %vm513, 0
          %523 = vst.msk [vmem:[#allocation2 + $0x10] sm:$0xf] %vm513, 0
          %v524 = vld [vmem:[#allocation2 + $0x14] sm:$0x1]
          %v525 = vsel %vm518, 0, %v524
          %526 = vst [vmem:[#allocation2 + $0x14] sm:$0x1] %v525
          %527 = vst.msk [vmem:[#allocation2 + $0x18] sm:$0xf] %vm513, 0
          %528 = vst.msk [vmem:[#allocation2 + $0x1c] sm:$0xf] %vm513, 0
          %v529 = vld [vmem:[#allocation2 + $0x20] sm:$0x1]
          %v530 = vsel %vm518, 0, %v529
          %531 = vst [vmem:[#allocation2 + $0x20] sm:$0x1] %v530
          %532 = vst.msk [vmem:[#allocation2 + $0x24] sm:$0xf] %vm513, 0
          %533 = vst.msk [vmem:[#allocation2 + $0x28] sm:$0xf] %vm513, 0
          %v534 = vld [vmem:[#allocation2 + $0x2c] sm:$0x1]
          %v535 = vsel %vm518, 0, %v534
          %536 = vst [vmem:[#allocation2 + $0x2c] sm:$0x1] %v535
          %537 = vst.msk [vmem:[#allocation2 + $0x30] sm:$0xf] %vm513, 0
          %538 = vst.msk [vmem:[#allocation2 + $0x34] sm:$0xf] %vm513, 0
          %v539 = vld [vmem:[#allocation2 + $0x38] sm:$0x1]
          %v540 = vsel %vm518, 0, %v539
          %541 = vst [vmem:[#allocation2 + $0x38] sm:$0x1] %v540
          %542 = vst.msk [vmem:[#allocation2 + $0x3c] sm:$0xf] %vm513, 0
          %543 = vst.msk [vmem:[#allocation2 + $0x40] sm:$0xf] %vm513, 0
          %v544 = vld [vmem:[#allocation2 + $0x44] sm:$0x1]
          %v545 = vsel %vm518, 0, %v544
          %546 = vst [vmem:[#allocation2 + $0x44] sm:$0x1] %v545
          %547 = vst.msk [vmem:[#allocation2 + $0x48] sm:$0xf] %vm513, 0
          %548 = vst.msk [vmem:[#allocation2 + $0x4c] sm:$0xf] %vm513, 0
          %v549 = vld [vmem:[#allocation2 + $0x50] sm:$0x1]
          %v550 = vsel %vm518, 0, %v549
          %551 = vst [vmem:[#allocation2 + $0x50] sm:$0x1] %v550
          %552 = vst.msk [vmem:[#allocation2 + $0x54] sm:$0xf] %vm513, 0
          %553 = vst.msk [vmem:[#allocation2 + $0x58] sm:$0xf] %vm513, 0
          %v554 = vld [vmem:[#allocation2 + $0x5c] sm:$0x1]
          %v555 = vsel %vm518, 0, %v554
          %556 = vst [vmem:[#allocation2 + $0x5c] sm:$0x1] %v555
          %557 = vst.msk [vmem:[#allocation2 + $0x60] sm:$0xf] %vm513, 0
          %558 = vst.msk [vmem:[#allocation2 + $0x64] sm:$0xf] %vm513, 0
          %v559 = vld [vmem:[#allocation2 + $0x68] sm:$0x1]
          %v560 = vsel %vm518, 0, %v559
          %561 = vst [vmem:[#allocation2 + $0x68] sm:$0x1] %v560
          %562 = vst.msk [vmem:[#allocation2 + $0x6c] sm:$0xf] %vm513, 0
          %563 = vst.msk [vmem:[#allocation2 + $0x70] sm:$0xf] %vm513, 0
          %v564 = vld [vmem:[#allocation2 + $0x74] sm:$0x1]
          %v565 = vsel %vm518, 0, %v564
          %566 = vst [vmem:[#allocation2 + $0x74] sm:$0x1] %v565
          %567 = vst.msk [vmem:[#allocation2 + $0x78] sm:$0xf] %vm513, 0
          %568 = vst.msk [vmem:[#allocation2 + $0x7c] sm:$0xf] %vm513, 0
          %v569 = vld [vmem:[#allocation2 + $0x80] sm:$0x1]
          %v570 = vsel %vm518, 0, %v569
          %571 = vst [vmem:[#allocation2 + $0x80] sm:$0x1] %v570
          %572 = vst.msk [vmem:[#allocation2 + $0x84] sm:$0xf] %vm513, 0
          %573 = vst.msk [vmem:[#allocation2 + $0x88] sm:$0xf] %vm513, 0
          %v574 = vld [vmem:[#allocation2 + $0x8c] sm:$0x1]
          %v575 = vsel %vm518, 0, %v574
          %576 = vst [vmem:[#allocation2 + $0x8c] sm:$0x1] %v575
          %577 = vst.msk [vmem:[#allocation2 + $0x90] sm:$0xf] %vm513, 0
          %578 = vst.msk [vmem:[#allocation2 + $0x94] sm:$0xf] %vm513, 0
          %v579 = vld [vmem:[#allocation2 + $0x98] sm:$0x1]
          %v580 = vsel %vm518, 0, %v579
          %581 = vst [vmem:[#allocation2 + $0x98] sm:$0x1] %v580
          %582 = vst.msk [vmem:[#allocation2 + $0x9c] sm:$0xf] %vm513, 0
          %583 = vst.msk [vmem:[#allocation2 + $0xa0] sm:$0xf] %vm513, 0
          %v584 = vld [vmem:[#allocation2 + $0xa4] sm:$0x1]
          %v585 = vsel %vm518, 0, %v584
          %586 = vst [vmem:[#allocation2 + $0xa4] sm:$0x1] %v585
          %587 = vst.msk [vmem:[#allocation2 + $0xa8] sm:$0xf] %vm513, 0
          %588 = vst.msk [vmem:[#allocation2 + $0xac] sm:$0xf] %vm513, 0
          %v589 = vld [vmem:[#allocation2 + $0xb0] sm:$0x1]
          %v590 = vsel %vm518, 0, %v589
          %591 = vst [vmem:[#allocation2 + $0xb0] sm:$0x1] %v590
          %592 = vst.msk [vmem:[#allocation2 + $0xb4] sm:$0xf] %vm513, 0
          %593 = vst.msk [vmem:[#allocation2 + $0xb8] sm:$0xf] %vm513, 0
          %v594 = vld [vmem:[#allocation2 + $0xbc] sm:$0x1]
          %v595 = vsel %vm518, 0, %v594
          %596 = vst [vmem:[#allocation2 + $0xbc] sm:$0x1] %v595
          %597 = vst.msk [vmem:[#allocation2 + $0xc0] sm:$0xf] %vm513, 0
          %598 = vst.msk [vmem:[#allocation2 + $0xc4] sm:$0xf] %vm513, 0
          %v599 = vld [vmem:[#allocation2 + $0xc8] sm:$0x1]
          %v600 = vsel %vm518, 0, %v599
          %601 = vst [vmem:[#allocation2 + $0xc8] sm:$0x1] %v600
          %602 = vst.msk [vmem:[#allocation2 + $0xcc] sm:$0xf] %vm513, 0
          %603 = vst.msk [vmem:[#allocation2 + $0xd0] sm:$0xf] %vm513, 0
          %v604 = vld [vmem:[#allocation2 + $0xd4] sm:$0x1]
          %v605 = vsel %vm518, 0, %v604
          %606 = vst [vmem:[#allocation2 + $0xd4] sm:$0x1] %v605
          %607 = vst.msk [vmem:[#allocation2 + $0xd8] sm:$0xf] %vm513, 0
          %608 = vst.msk [vmem:[#allocation2 + $0xdc] sm:$0xf] %vm513, 0
          %v609 = vld [vmem:[#allocation2 + $0xe0] sm:$0x1]
          %v610 = vsel %vm518, 0, %v609
          %611 = vst [vmem:[#allocation2 + $0xe0] sm:$0x1] %v610
          %612 = vst.msk [vmem:[#allocation2 + $0xe4] sm:$0xf] %vm513, 0
          %613 = vst.msk [vmem:[#allocation2 + $0xe8] sm:$0xf] %vm513, 0
          %v614 = vld [vmem:[#allocation2 + $0xec] sm:$0x1]
          %v615 = vsel %vm518, 0, %v614
          %616 = vst [vmem:[#allocation2 + $0xec] sm:$0x1] %v615
          %617 = vst.msk [vmem:[#allocation2 + $0xf0] sm:$0xf] %vm513, 0
          %618 = vst.msk [vmem:[#allocation2 + $0xf4] sm:$0xf] %vm513, 0
          %v619 = vld [vmem:[#allocation2 + $0xf8] sm:$0x1]
          %v620 = vsel %vm518, 0, %v619
          %621 = vst [vmem:[#allocation2 + $0xf8] sm:$0x1] %v620
          %622 = vst.msk [vmem:[#allocation2 + $0xfc] sm:$0xf] %vm513, 0
          %623 = vst.msk [vmem:[#allocation2 + $0x100] sm:$0xf] %vm513, 0
          %v624 = vld [vmem:[#allocation2 + $0x104] sm:$0x1]
          %v625 = vsel %vm518, 0, %v624
          %626 = vst [vmem:[#allocation2 + $0x104] sm:$0x1] %v625
          %627 = vst.msk [vmem:[#allocation2 + $0x108] sm:$0xf] %vm513, 0
          %628 = vst.msk [vmem:[#allocation2 + $0x10c] sm:$0xf] %vm513, 0
          %v629 = vld [vmem:[#allocation2 + $0x110] sm:$0x1]
          %v630 = vsel %vm518, 0, %v629
          %631 = vst [vmem:[#allocation2 + $0x110] sm:$0x1] %v630
          %632 = vst.msk [vmem:[#allocation2 + $0x114] sm:$0xf] %vm513, 0
          %633 = vst.msk [vmem:[#allocation2 + $0x118] sm:$0xf] %vm513, 0
          %v634 = vld [vmem:[#allocation2 + $0x11c] sm:$0x1]
          %v635 = vsel %vm518, 0, %v634
          %636 = vst [vmem:[#allocation2 + $0x11c] sm:$0x1] %v635
          %637 = vst.msk [vmem:[#allocation2 + $0x120] sm:$0xf] %vm513, 0
          %638 = vst.msk [vmem:[#allocation2 + $0x124] sm:$0xf] %vm513, 0
          %v639 = vld [vmem:[#allocation2 + $0x128] sm:$0x1]
          %v640 = vsel %vm518, 0, %v639
          %641 = vst [vmem:[#allocation2 + $0x128] sm:$0x1] %v640
          %642 = vst.msk [vmem:[#allocation2 + $0x12c] sm:$0xf] %vm513, 0
          %643 = vst.msk [vmem:[#allocation2 + $0x130] sm:$0xf] %vm513, 0
          %v644 = vld [vmem:[#allocation2 + $0x134] sm:$0x1]
          %v645 = vsel %vm518, 0, %v644
          %646 = vst [vmem:[#allocation2 + $0x134] sm:$0x1] %v645
          %647 = vst.msk [vmem:[#allocation2 + $0x138] sm:$0xf] %vm513, 0
          %648 = vst.msk [vmem:[#allocation2 + $0x13c] sm:$0xf] %vm513, 0
          %v649 = vld [vmem:[#allocation2 + $0x140] sm:$0x1]
          %v650 = vsel %vm518, 0, %v649
          %651 = vst [vmem:[#allocation2 + $0x140] sm:$0x1] %v650
          %652 = vst.msk [vmem:[#allocation2 + $0x144] sm:$0xf] %vm513, 0
          %653 = vst.msk [vmem:[#allocation2 + $0x148] sm:$0xf] %vm513, 0
          %v654 = vld [vmem:[#allocation2 + $0x14c] sm:$0x1]
          %v655 = vsel %vm518, 0, %v654
          %656 = vst [vmem:[#allocation2 + $0x14c] sm:$0x1] %v655
          %657 = vst.msk [vmem:[#allocation2 + $0x150] sm:$0xf] %vm513, 0
          %658 = vst.msk [vmem:[#allocation2 + $0x154] sm:$0xf] %vm513, 0
          %v659 = vld [vmem:[#allocation2 + $0x158] sm:$0x1]
          %v660 = vsel %vm518, 0, %v659
          %661 = vst [vmem:[#allocation2 + $0x158] sm:$0x1] %v660
          %662 = vst.msk [vmem:[#allocation2 + $0x15c] sm:$0xf] %vm513, 0
          %663 = vst.msk [vmem:[#allocation2 + $0x160] sm:$0xf] %vm513, 0
          %v664 = vld [vmem:[#allocation2 + $0x164] sm:$0x1]
          %v665 = vsel %vm518, 0, %v664
          %666 = vst [vmem:[#allocation2 + $0x164] sm:$0x1] %v665
          %667 = vst.msk [vmem:[#allocation2 + $0x168] sm:$0xf] %vm513, 0
          %668 = vst.msk [vmem:[#allocation2 + $0x16c] sm:$0xf] %vm513, 0
          %v669 = vld [vmem:[#allocation2 + $0x170] sm:$0x1]
          %v670 = vsel %vm518, 0, %v669
          %671 = vst [vmem:[#allocation2 + $0x170] sm:$0x1] %v670
          %672 = vst.msk [vmem:[#allocation2 + $0x174] sm:$0xf] %vm513, 0
          %673 = vst.msk [vmem:[#allocation2 + $0x178] sm:$0xf] %vm513, 0
          %v674 = vld [vmem:[#allocation2 + $0x17c] sm:$0x1]
          %v675 = vsel %vm518, 0, %v674
          %676 = vst [vmem:[#allocation2 + $0x17c] sm:$0x1] %v675
          %677 = vst.msk [vmem:[#allocation2 + $0x180] sm:$0xf] %vm513, 0
          %678 = vst.msk [vmem:[#allocation2 + $0x184] sm:$0xf] %vm513, 0
          %v679 = vld [vmem:[#allocation2 + $0x188] sm:$0x1]
          %v680 = vsel %vm518, 0, %v679
          %681 = vst [vmem:[#allocation2 + $0x188] sm:$0x1] %v680
          %682 = vst.msk [vmem:[#allocation2 + $0x18c] sm:$0xf] %vm513, 0
          %683 = vst.msk [vmem:[#allocation2 + $0x190] sm:$0xf] %vm513, 0
          %v684 = vld [vmem:[#allocation2 + $0x194] sm:$0x1]
          %v685 = vsel %vm518, 0, %v684
          %686 = vst [vmem:[#allocation2 + $0x194] sm:$0x1] %v685
          %687 = vst.msk [vmem:[#allocation2 + $0x198] sm:$0xf] %vm513, 0
          %688 = vst.msk [vmem:[#allocation2 + $0x19c] sm:$0xf] %vm513, 0
          %v689 = vld [vmem:[#allocation2 + $0x1a0] sm:$0x1]
          %v690 = vsel %vm518, 0, %v689
          %691 = vst [vmem:[#allocation2 + $0x1a0] sm:$0x1] %v690
          %692 = vst.msk [vmem:[#allocation2 + $0x1a4] sm:$0xf] %vm513, 0
          %693 = vst.msk [vmem:[#allocation2 + $0x1a8] sm:$0xf] %vm513, 0
          %v694 = vld [vmem:[#allocation2 + $0x1ac] sm:$0x1]
          %v695 = vsel %vm518, 0, %v694
          %696 = vst [vmem:[#allocation2 + $0x1ac] sm:$0x1] %v695
          %697 = vst.msk [vmem:[#allocation2 + $0x1b0] sm:$0xf] %vm513, 0
          %698 = vst.msk [vmem:[#allocation2 + $0x1b4] sm:$0xf] %vm513, 0
          %v699 = vld [vmem:[#allocation2 + $0x1b8] sm:$0x1]
          %v700 = vsel %vm518, 0, %v699
          %701 = vst [vmem:[#allocation2 + $0x1b8] sm:$0x1] %v700
          %702 = vst.msk [vmem:[#allocation2 + $0x1bc] sm:$0xf] %vm513, 0
          %703 = vst.msk [vmem:[#allocation2 + $0x1c0] sm:$0xf] %vm513, 0
          %v704 = vld [vmem:[#allocation2 + $0x1c4] sm:$0x1]
          %v705 = vsel %vm518, 0, %v704
          %706 = vst [vmem:[#allocation2 + $0x1c4] sm:$0x1] %v705
          %707 = vst.msk [vmem:[#allocation2 + $0x1c8] sm:$0xf] %vm513, 0
          %708 = vst.msk [vmem:[#allocation2 + $0x1cc] sm:$0xf] %vm513, 0
          %v709 = vld [vmem:[#allocation2 + $0x1d0] sm:$0x1]
          %v710 = vsel %vm518, 0, %v709
          %711 = vst [vmem:[#allocation2 + $0x1d0] sm:$0x1] %v710
          %712 = vst.msk [vmem:[#allocation2 + $0x1d4] sm:$0xf] %vm513, 0
          %713 = vst.msk [vmem:[#allocation2 + $0x1d8] sm:$0xf] %vm513, 0
          %v714 = vld [vmem:[#allocation2 + $0x1dc] sm:$0x1]
          %v715 = vsel %vm518, 0, %v714
          %716 = vst [vmem:[#allocation2 + $0x1dc] sm:$0x1] %v715
          %717 = vst.msk [vmem:[#allocation2 + $0x1e0] sm:$0xf] %vm513, 0
          %718 = vst.msk [vmem:[#allocation2 + $0x1e4] sm:$0xf] %vm513, 0
          %v719 = vld [vmem:[#allocation2 + $0x1e8] sm:$0x1]
          %v720 = vsel %vm518, 0, %v719
          %721 = vst [vmem:[#allocation2 + $0x1e8] sm:$0x1] %v720
          %722 = vst.msk [vmem:[#allocation2 + $0x1ec] sm:$0xf] %vm513, 0
          %723 = vst.msk [vmem:[#allocation2 + $0x1f0] sm:$0xf] %vm513, 0
          %v724 = vld [vmem:[#allocation2 + $0x1f4] sm:$0x1]
          %v725 = vsel %vm518, 0, %v724
          %726 = vst [vmem:[#allocation2 + $0x1f4] sm:$0x1] %v725
          %727 = vst.msk [vmem:[#allocation2 + $0x1f8] sm:$0xf] %vm513, 0
          %728 = vst.msk [vmem:[#allocation2 + $0x1fc] sm:$0xf] %vm513, 0
          %v729 = vld [vmem:[#allocation2 + $0x200] sm:$0x1]
          %v730 = vsel %vm518, 0, %v729
          %731 = vst [vmem:[#allocation2 + $0x200] sm:$0x1] %v730
          %732 = vst.msk [vmem:[#allocation2 + $0x204] sm:$0xf] %vm513, 0
          %733 = vst.msk [vmem:[#allocation2 + $0x208] sm:$0xf] %vm513, 0
          %v734 = vld [vmem:[#allocation2 + $0x20c] sm:$0x1]
          %v735 = vsel %vm518, 0, %v734
          %736 = vst [vmem:[#allocation2 + $0x20c] sm:$0x1] %v735
          %737 = vst.msk [vmem:[#allocation2 + $0x210] sm:$0xf] %vm513, 0
          %738 = vst.msk [vmem:[#allocation2 + $0x214] sm:$0xf] %vm513, 0
          %v739 = vld [vmem:[#allocation2 + $0x218] sm:$0x1]
          %v740 = vsel %vm518, 0, %v739
          %741 = vst [vmem:[#allocation2 + $0x218] sm:$0x1] %v740
          %742 = vst.msk [vmem:[#allocation2 + $0x21c] sm:$0xf] %vm513, 0
          %743 = vst.msk [vmem:[#allocation2 + $0x220] sm:$0xf] %vm513, 0
          %v744 = vld [vmem:[#allocation2 + $0x224] sm:$0x1]
          %v745 = vsel %vm518, 0, %v744
          %746 = vst [vmem:[#allocation2 + $0x224] sm:$0x1] %v745
          %747 = vst.msk [vmem:[#allocation2 + $0x228] sm:$0xf] %vm513, 0
          %748 = vst.msk [vmem:[#allocation2 + $0x22c] sm:$0xf] %vm513, 0
          %v749 = vld [vmem:[#allocation2 + $0x230] sm:$0x1]
          %v750 = vsel %vm518, 0, %v749
          %751 = vst [vmem:[#allocation2 + $0x230] sm:$0x1] %v750
          %752 = vst.msk [vmem:[#allocation2 + $0x234] sm:$0xf] %vm513, 0
          %753 = vst.msk [vmem:[#allocation2 + $0x238] sm:$0xf] %vm513, 0
          %v754 = vld [vmem:[#allocation2 + $0x23c] sm:$0x1]
          %v755 = vsel %vm518, 0, %v754
          %756 = vst [vmem:[#allocation2 + $0x23c] sm:$0x1] %v755
          %757 = vst.msk [vmem:[#allocation2 + $0x240] sm:$0xf] %vm513, 0
          %758 = vst.msk [vmem:[#allocation2 + $0x244] sm:$0xf] %vm513, 0
          %v759 = vld [vmem:[#allocation2 + $0x248] sm:$0x1]
          %v760 = vsel %vm518, 0, %v759
          %761 = vst [vmem:[#allocation2 + $0x248] sm:$0x1] %v760
          %762 = vst.msk [vmem:[#allocation2 + $0x24c] sm:$0xf] %vm513, 0
          %763 = vst.msk [vmem:[#allocation2 + $0x250] sm:$0xf] %vm513, 0
          %v764 = vld [vmem:[#allocation2 + $0x254] sm:$0x1]
          %v765 = vsel %vm518, 0, %v764
          %766 = vst [vmem:[#allocation2 + $0x254] sm:$0x1] %v765
          %767 = vst.msk [vmem:[#allocation2 + $0x258] sm:$0xf] %vm513, 0
          %768 = vst.msk [vmem:[#allocation2 + $0x25c] sm:$0xf] %vm513, 0
          %v769 = vld [vmem:[#allocation2 + $0x260] sm:$0x1]
          %v770 = vsel %vm518, 0, %v769
          %771 = vst [vmem:[#allocation2 + $0x260] sm:$0x1] %v770
          %772 = vst.msk [vmem:[#allocation2 + $0x264] sm:$0xf] %vm513, 0
          %773 = vst.msk [vmem:[#allocation2 + $0x268] sm:$0xf] %vm513, 0
          %v774 = vld [vmem:[#allocation2 + $0x26c] sm:$0x1]
          %v775 = vsel %vm518, 0, %v774
          %776 = vst [vmem:[#allocation2 + $0x26c] sm:$0x1] %v775
          %777 = vst.msk [vmem:[#allocation2 + $0x270] sm:$0xf] %vm513, 0
          %778 = vst.msk [vmem:[#allocation2 + $0x274] sm:$0xf] %vm513, 0
          %v779 = vld [vmem:[#allocation2 + $0x278] sm:$0x1]
          %v780 = vsel %vm518, 0, %v779
          %781 = vst [vmem:[#allocation2 + $0x278] sm:$0x1] %v780
          %782 = vst.msk [vmem:[#allocation2 + $0x27c] sm:$0xf] %vm513, 0
          %783 = vst.msk [vmem:[#allocation2 + $0x280] sm:$0xf] %vm513, 0
          %v784 = vld [vmem:[#allocation2 + $0x284] sm:$0x1]
          %v785 = vsel %vm518, 0, %v784
          %786 = vst [vmem:[#allocation2 + $0x284] sm:$0x1] %v785
          %787 = vst.msk [vmem:[#allocation2 + $0x288] sm:$0xf] %vm513, 0
          %788 = vst.msk [vmem:[#allocation2 + $0x28c] sm:$0xf] %vm513, 0
          %v789 = vld [vmem:[#allocation2 + $0x290] sm:$0x1]
          %v790 = vsel %vm518, 0, %v789
          %791 = vst [vmem:[#allocation2 + $0x290] sm:$0x1] %v790
          %792 = vst.msk [vmem:[#allocation2 + $0x294] sm:$0xf] %vm513, 0
          %793 = vst.msk [vmem:[#allocation2 + $0x298] sm:$0xf] %vm513, 0
          %v794 = vld [vmem:[#allocation2 + $0x29c] sm:$0x1]
          %v795 = vsel %vm518, 0, %v794
          %796 = vst [vmem:[#allocation2 + $0x29c] sm:$0x1] %v795
          %797 = vst.msk [vmem:[#allocation2 + $0x2a0] sm:$0xf] %vm513, 0
          %798 = vst.msk [vmem:[#allocation2 + $0x2a4] sm:$0xf] %vm513, 0
          %v799 = vld [vmem:[#allocation2 + $0x2a8] sm:$0x1]
          %v800 = vsel %vm518, 0, %v799
          %801 = vst [vmem:[#allocation2 + $0x2a8] sm:$0x1] %v800
          %802 = vst.msk [vmem:[#allocation2 + $0x2ac] sm:$0xf] %vm513, 0
          %803 = vst.msk [vmem:[#allocation2 + $0x2b0] sm:$0xf] %vm513, 0
          %v804 = vld [vmem:[#allocation2 + $0x2b4] sm:$0x1]
          %v805 = vsel %vm518, 0, %v804
          %806 = vst [vmem:[#allocation2 + $0x2b4] sm:$0x1] %v805
          %807 = vst.msk [vmem:[#allocation2 + $0x2b8] sm:$0xf] %vm513, 0
          %808 = vst.msk [vmem:[#allocation2 + $0x2bc] sm:$0xf] %vm513, 0
          %v809 = vld [vmem:[#allocation2 + $0x2c0] sm:$0x1]
          %v810 = vsel %vm518, 0, %v809
          %811 = vst [vmem:[#allocation2 + $0x2c0] sm:$0x1] %v810
          %812 = vst.msk [vmem:[#allocation2 + $0x2c4] sm:$0xf] %vm513, 0
          %813 = vst.msk [vmem:[#allocation2 + $0x2c8] sm:$0xf] %vm513, 0
          %v814 = vld [vmem:[#allocation2 + $0x2cc] sm:$0x1]
          %v815 = vsel %vm518, 0, %v814
          %816 = vst [vmem:[#allocation2 + $0x2cc] sm:$0x1] %v815
          %817 = vst.msk [vmem:[#allocation2 + $0x2d0] sm:$0xf] %vm513, 0
          %818 = vst.msk [vmem:[#allocation2 + $0x2d4] sm:$0xf] %vm513, 0
          %v819 = vld [vmem:[#allocation2 + $0x2d8] sm:$0x1]
          %v820 = vsel %vm518, 0, %v819
          %821 = vst [vmem:[#allocation2 + $0x2d8] sm:$0x1] %v820
          %822 = vst.msk [vmem:[#allocation2 + $0x2dc] sm:$0xf] %vm513, 0
          %823 = vst.msk [vmem:[#allocation2 + $0x2e0] sm:$0xf] %vm513, 0
          %v824 = vld [vmem:[#allocation2 + $0x2e4] sm:$0x1]
          %v825 = vsel %vm518, 0, %v824
          %826 = vst [vmem:[#allocation2 + $0x2e4] sm:$0x1] %v825
          %827 = vst.msk [vmem:[#allocation2 + $0x2e8] sm:$0xf] %vm513, 0
          %828 = vst.msk [vmem:[#allocation2 + $0x2ec] sm:$0xf] %vm513, 0
          %v829 = vld [vmem:[#allocation2 + $0x2f0] sm:$0x1]
          %v830 = vsel %vm518, 0, %v829
          %831 = vst [vmem:[#allocation2 + $0x2f0] sm:$0x1] %v830
          %832 = vst.msk [vmem:[#allocation2 + $0x2f4] sm:$0xf] %vm513, 0
          %833 = vst.msk [vmem:[#allocation2 + $0x2f8] sm:$0xf] %vm513, 0
          %v834 = vld [vmem:[#allocation2 + $0x2fc] sm:$0x1]
          %v835 = vsel %vm518, 0, %v834
          %836 = vst [vmem:[#allocation2 + $0x2fc] sm:$0x1] %v835
          %837 = vst.msk [vmem:[#allocation2 + $0x300] sm:$0xf] %vm513, 0
          %838 = vst.msk [vmem:[#allocation2 + $0x304] sm:$0xf] %vm513, 0
          %v839 = vld [vmem:[#allocation2 + $0x308] sm:$0x1]
          %v840 = vsel %vm518, 0, %v839
          %841 = vst [vmem:[#allocation2 + $0x308] sm:$0x1] %v840
          %842 = vst.msk [vmem:[#allocation2 + $0x30c] sm:$0xf] %vm513, 0
          %843 = vst.msk [vmem:[#allocation2 + $0x310] sm:$0xf] %vm513, 0
          %v844 = vld [vmem:[#allocation2 + $0x314] sm:$0x1]
          %v845 = vsel %vm518, 0, %v844
          %846 = vst [vmem:[#allocation2 + $0x314] sm:$0x1] %v845
          %847 = vst.msk [vmem:[#allocation2 + $0x318] sm:$0xf] %vm513, 0
          %848 = vst.msk [vmem:[#allocation2 + $0x31c] sm:$0xf] %vm513, 0
          %v849 = vld [vmem:[#allocation2 + $0x320] sm:$0x1]
          %v850 = vsel %vm518, 0, %v849
          %851 = vst [vmem:[#allocation2 + $0x320] sm:$0x1] %v850
          %852 = vst.msk [vmem:[#allocation2 + $0x324] sm:$0xf] %vm513, 0
          %853 = vst.msk [vmem:[#allocation2 + $0x328] sm:$0xf] %vm513, 0
          %v854 = vld [vmem:[#allocation2 + $0x32c] sm:$0x1]
          %v855 = vsel %vm518, 0, %v854
          %856 = vst [vmem:[#allocation2 + $0x32c] sm:$0x1] %v855
          %vm857 = vcmask 257024
          %858 = vst.msk [vmem:[#allocation3] sm:$0xf] %vm857, 0
          %859 = vst.msk [vmem:[#allocation3 + $0x4] sm:$0xf] %vm857, 0
          %vm860 = vcmask 253952
          %861 = vst.msk [vmem:[#allocation3 + $0x8] sm:$0x1] %vm860, 0
          %862 = vst.msk [vmem:[#allocation3 + $0xc] sm:$0xf] %vm857, 0
          %863 = vst.msk [vmem:[#allocation3 + $0x10] sm:$0xf] %vm857, 0
          %864 = vst.msk [vmem:[#allocation3 + $0x14] sm:$0x1] %vm860, 0
          %865 = vst.msk [vmem:[#allocation3 + $0x18] sm:$0xf] %vm857, 0
          %866 = vst.msk [vmem:[#allocation3 + $0x1c] sm:$0xf] %vm857, 0
          %867 = vst.msk [vmem:[#allocation3 + $0x20] sm:$0x1] %vm860, 0
          %868 = vst.msk [vmem:[#allocation3 + $0x24] sm:$0xf] %vm857, 0
          %869 = vst.msk [vmem:[#allocation3 + $0x28] sm:$0xf] %vm857, 0
          %870 = vst.msk [vmem:[#allocation3 + $0x2c] sm:$0x1] %vm860, 0
          %871 = vst.msk [vmem:[#allocation3 + $0x30] sm:$0xf] %vm857, 0
          %872 = vst.msk [vmem:[#allocation3 + $0x34] sm:$0xf] %vm857, 0
          %873 = vst.msk [vmem:[#allocation3 + $0x38] sm:$0x1] %vm860, 0
          %874 = vst.msk [vmem:[#allocation3 + $0x3c] sm:$0xf] %vm857, 0
          %875 = vst.msk [vmem:[#allocation3 + $0x40] sm:$0xf] %vm857, 0
          %876 = vst.msk [vmem:[#allocation3 + $0x44] sm:$0x1] %vm860, 0
          %877 = vst.msk [vmem:[#allocation3 + $0x48] sm:$0xf] %vm857, 0
          %878 = vst.msk [vmem:[#allocation3 + $0x4c] sm:$0xf] %vm857, 0
          %879 = vst.msk [vmem:[#allocation3 + $0x50] sm:$0x1] %vm860, 0
          %880 = vst.msk [vmem:[#allocation3 + $0x54] sm:$0xf] %vm857, 0
          %881 = vst.msk [vmem:[#allocation3 + $0x58] sm:$0xf] %vm857, 0
          %882 = vst.msk [vmem:[#allocation3 + $0x5c] sm:$0x1] %vm860, 0
          %883 = vst.msk [vmem:[#allocation3 + $0x60] sm:$0xf] %vm857, 0
          %884 = vst.msk [vmem:[#allocation3 + $0x64] sm:$0xf] %vm857, 0
          %885 = vst.msk [vmem:[#allocation3 + $0x68] sm:$0x1] %vm860, 0
          %886 = vst.msk [vmem:[#allocation3 + $0x6c] sm:$0xf] %vm857, 0
          %887 = vst.msk [vmem:[#allocation3 + $0x70] sm:$0xf] %vm857, 0
          %888 = vst.msk [vmem:[#allocation3 + $0x74] sm:$0x1] %vm860, 0
          %889 = vst.msk [vmem:[#allocation3 + $0x78] sm:$0xf] %vm857, 0
          %890 = vst.msk [vmem:[#allocation3 + $0x7c] sm:$0xf] %vm857, 0
          %891 = vst.msk [vmem:[#allocation3 + $0x80] sm:$0x1] %vm860, 0
          %892 = vst.msk [vmem:[#allocation3 + $0x84] sm:$0xf] %vm857, 0
          %893 = vst.msk [vmem:[#allocation3 + $0x88] sm:$0xf] %vm857, 0
          %894 = vst.msk [vmem:[#allocation3 + $0x8c] sm:$0x1] %vm860, 0
          %895 = vst.msk [vmem:[#allocation3 + $0x90] sm:$0xf] %vm857, 0
          %896 = vst.msk [vmem:[#allocation3 + $0x94] sm:$0xf] %vm857, 0
          %897 = vst.msk [vmem:[#allocation3 + $0x98] sm:$0x1] %vm860, 0
          %898 = vst.msk [vmem:[#allocation3 + $0x9c] sm:$0xf] %vm857, 0
          %899 = vst.msk [vmem:[#allocation3 + $0xa0] sm:$0xf] %vm857, 0
          %900 = vst.msk [vmem:[#allocation3 + $0xa4] sm:$0x1] %vm860, 0
          %901 = vst.msk [vmem:[#allocation3 + $0xa8] sm:$0xf] %vm857, 0
          %902 = vst.msk [vmem:[#allocation3 + $0xac] sm:$0xf] %vm857, 0
          %903 = vst.msk [vmem:[#allocation3 + $0xb0] sm:$0x1] %vm860, 0
          %904 = vst.msk [vmem:[#allocation3 + $0xb4] sm:$0xf] %vm857, 0
          %905 = vst.msk [vmem:[#allocation3 + $0xb8] sm:$0xf] %vm857, 0
          %906 = vst.msk [vmem:[#allocation3 + $0xbc] sm:$0x1] %vm860, 0
          %907 = vst.msk [vmem:[#allocation3 + $0xc0] sm:$0xf] %vm857, 0
          %908 = vst.msk [vmem:[#allocation3 + $0xc4] sm:$0xf] %vm857, 0
          %909 = vst.msk [vmem:[#allocation3 + $0xc8] sm:$0x1] %vm860, 0
          %910 = vst.msk [vmem:[#allocation3 + $0xcc] sm:$0xf] %vm857, 0
          %911 = vst.msk [vmem:[#allocation3 + $0xd0] sm:$0xf] %vm857, 0
          %912 = vst.msk [vmem:[#allocation3 + $0xd4] sm:$0x1] %vm860, 0
        $region80: #{tpu_custom_call.1} parent=75 // pred_fallthru
          _
        %v913 = vld [vmem:[%s502] sm:$0xf]
        %v914 = vld [vmem:[%s502 + $0x4] sm:$0xf]
        %v915 = vld [vmem:[%s502 + $0x8] sm:$0xf]
        %v916 = vld [vmem:[%s502 + $0xc] sm:$0xf]
        %v917 = vld [vmem:[%s502 + $0x10] sm:$0xf]
        %v918 = vld [vmem:[%s502 + $0x14] sm:$0xf]
        %v919 = vld [vmem:[%s502 + $0x18] sm:$0xf]
        %v920 = vld [vmem:[%s502 + $0x1c] sm:$0xf]
        %v921 = vld [vmem:[%s502 + $0x20] sm:$0xf]
        %v922 = vld [vmem:[%s502 + $0x24] sm:$0xf]
        %v923 = vld [vmem:[%s502 + $0x28] sm:$0xf]
        %v924 = vld [vmem:[%s502 + $0x2c] sm:$0xf]
        %v925 = vld [vmem:[%s502 + $0x30] sm:$0xf]
        %v926 = vld [vmem:[%s502 + $0x34] sm:$0xf]
        %v927 = vld [vmem:[%s502 + $0x38] sm:$0xf]
        %v928 = vld [vmem:[%s502 + $0x3c] sm:$0xf]
        %v929 = vld [vmem:[%s502 + $0x40] sm:$0xf]
        %v930 = vld [vmem:[%s502 + $0x44] sm:$0xf]
        %v931 = vld [vmem:[%s502 + $0x48] sm:$0xf]
        %v932 = vld [vmem:[%s502 + $0x4c] sm:$0xf]
        %v933 = vld [vmem:[%s502 + $0x50] sm:$0xf]
        %v934 = vld [vmem:[%s502 + $0x54] sm:$0xf]
        %v935 = vld [vmem:[%s502 + $0x58] sm:$0xf]
        %v936 = vld [vmem:[%s502 + $0x5c] sm:$0xf]
        %v937 = vld [vmem:[%s502 + $0x60] sm:$0xf]
        %v938 = vld [vmem:[%s502 + $0x64] sm:$0xf]
        %v939 = vld [vmem:[%s502 + $0x68] sm:$0xf]
        %v940 = vld [vmem:[%s502 + $0x6c] sm:$0xf]
        %v941 = vld [vmem:[%s502 + $0x70] sm:$0xf]
        %v942 = vld [vmem:[%s502 + $0x74] sm:$0xf]
        %v943 = vld [vmem:[%s502 + $0x78] sm:$0xf]
        %v944 = vld [vmem:[%s502 + $0x7c] sm:$0xf]
        %v945 = vld [vmem:[%s502 + $0x80] sm:$0xf]
        %v946 = vld [vmem:[%s502 + $0x84] sm:$0xf]
        %v947 = vld [vmem:[%s502 + $0x88] sm:$0xf]
        %v948 = vld [vmem:[%s502 + $0x8c] sm:$0xf]
        %v949 = vld [vmem:[%s502 + $0x90] sm:$0xf]
        %v950 = vld [vmem:[%s502 + $0x94] sm:$0xf]
        %v951 = vld [vmem:[%s502 + $0x98] sm:$0xf]
        %v952 = vld [vmem:[%s502 + $0x9c] sm:$0xf]
        %v953 = vld [vmem:[%s502 + $0xa0] sm:$0xf]
        %v954 = vld [vmem:[%s502 + $0xa4] sm:$0xf]
        %v955 = vld [vmem:[%s502 + $0xa8] sm:$0xf]
        %v956 = vld [vmem:[%s502 + $0xac] sm:$0xf]
        %v957 = vld [vmem:[%s502 + $0xb0] sm:$0xf]
        %v958 = vld [vmem:[%s502 + $0xb4] sm:$0xf]
        %v959 = vld [vmem:[%s502 + $0xb8] sm:$0xf]
        %v960 = vld [vmem:[%s502 + $0xbc] sm:$0xf]
        %v961 = vld [vmem:[%s502 + $0xc0] sm:$0xf]
        %v962 = vld [vmem:[%s502 + $0xc4] sm:$0xf]
        %v963 = vld [vmem:[%s502 + $0xc8] sm:$0xf]
        %v964 = vld [vmem:[%s502 + $0xcc] sm:$0xf]
        %v965 = vld [vmem:[%s502 + $0xd0] sm:$0xf]
        %v966 = vld [vmem:[%s502 + $0xd4] sm:$0xf]
        %v967 = vld [vmem:[%s502 + $0xd8] sm:$0xf]
        %v968 = vld [vmem:[%s502 + $0xdc] sm:$0xf]
        %v969 = vld [vmem:[%s502 + $0xe0] sm:$0xf]
        %v970 = vld [vmem:[%s502 + $0xe4] sm:$0xf]
        %v971 = vld [vmem:[%s502 + $0xe8] sm:$0xf]
        %v972 = vld [vmem:[%s502 + $0xec] sm:$0xf]
        %v973 = vld [vmem:[%s502 + $0xf0] sm:$0xf]
        %v974 = vld [vmem:[%s502 + $0xf4] sm:$0xf]
        %v975 = vld [vmem:[%s502 + $0xf8] sm:$0xf]
        %v976 = vld [vmem:[%s502 + $0xfc] sm:$0xf]
        %v977 = vld [vmem:[%s502 + $0x100] sm:$0xf]
        %v978 = vld [vmem:[%s502 + $0x104] sm:$0xf]
        %v979 = vld [vmem:[%s502 + $0x108] sm:$0xf]
        %v980 = vld [vmem:[%s502 + $0x10c] sm:$0xf]
        %v981 = vld [vmem:[%s502 + $0x110] sm:$0xf]
        %v982 = vld [vmem:[%s502 + $0x114] sm:$0xf]
        %v983 = vld [vmem:[%s502 + $0x118] sm:$0xf]
        %v984 = vld [vmem:[%s502 + $0x11c] sm:$0xf]
        %v985 = vld [vmem:[%s502 + $0x120] sm:$0xf]
        %v986 = vld [vmem:[%s502 + $0x124] sm:$0xf]
        %v987 = vld [vmem:[%s502 + $0x128] sm:$0xf]
        %v988 = vld [vmem:[%s502 + $0x12c] sm:$0xf]
        %v989 = vld [vmem:[%s502 + $0x130] sm:$0xf]
        %v990 = vld [vmem:[%s502 + $0x134] sm:$0xf]
        %v991 = vld [vmem:[%s502 + $0x138] sm:$0xf]
        %v992 = vld [vmem:[%s502 + $0x13c] sm:$0xf]
        %v993 = vld [vmem:[%s502 + $0x140] sm:$0xf]
        %v994 = vld [vmem:[%s502 + $0x144] sm:$0xf]
        %v995 = vld [vmem:[%s502 + $0x148] sm:$0xf]
        %v996 = vld [vmem:[%s502 + $0x14c] sm:$0xf]
        %v997 = vld [vmem:[%s502 + $0x150] sm:$0xf]
        %v998 = vld [vmem:[%s502 + $0x154] sm:$0xf]
        %v999 = vld [vmem:[%s502 + $0x158] sm:$0xf]
        %v1000 = vld [vmem:[%s502 + $0x15c] sm:$0xf]
        %v1001 = vld [vmem:[%s502 + $0x160] sm:$0xf]
        %v1002 = vld [vmem:[%s502 + $0x164] sm:$0xf]
        %v1003 = vld [vmem:[%s502 + $0x168] sm:$0xf]
        %v1004 = vld [vmem:[%s502 + $0x16c] sm:$0xf]
        %v1005 = vld [vmem:[%s502 + $0x170] sm:$0xf]
        %v1006 = vld [vmem:[%s502 + $0x174] sm:$0xf]
        %v1007 = vld [vmem:[%s502 + $0x178] sm:$0xf]
        %v1008 = vld [vmem:[%s502 + $0x17c] sm:$0xf]
        %v1009 = vld [vmem:[%s502 + $0x180] sm:$0xf]
        %v1010 = vld [vmem:[%s502 + $0x184] sm:$0xf]
        %v1011 = vld [vmem:[%s502 + $0x188] sm:$0xf]
        %v1012 = vld [vmem:[%s502 + $0x18c] sm:$0xf]
        %v1013 = vld [vmem:[%s502 + $0x190] sm:$0xf]
        %v1014 = vld [vmem:[%s502 + $0x194] sm:$0xf]
        %v1015 = vld [vmem:[%s502 + $0x198] sm:$0xf]
        %v1016 = vld [vmem:[%s502 + $0x19c] sm:$0xf]
        %v1017 = vld [vmem:[%s502 + $0x1a0] sm:$0xf]
        %v1018 = vld [vmem:[%s502 + $0x1a4] sm:$0xf]
        %v1019 = vld [vmem:[%s502 + $0x1a8] sm:$0xf]
        %v1020 = vld [vmem:[%s502 + $0x1ac] sm:$0xf]
        %v1021 = vld [vmem:[%s502 + $0x1b0] sm:$0xf]
        %v1022 = vld [vmem:[%s502 + $0x1b4] sm:$0xf]
        %v1023 = vld [vmem:[%s502 + $0x1b8] sm:$0xf]
        %v1024 = vld [vmem:[%s502 + $0x1bc] sm:$0xf]
        %v1025 = vld [vmem:[%s502 + $0x1c0] sm:$0xf]
        %v1026 = vld [vmem:[%s502 + $0x1c4] sm:$0xf]
        %v1027 = vld [vmem:[%s502 + $0x1c8] sm:$0xf]
        %v1028 = vld [vmem:[%s502 + $0x1cc] sm:$0xf]
        %v1029 = vld [vmem:[%s502 + $0x1d0] sm:$0xf]
        %v1030 = vld [vmem:[%s502 + $0x1d4] sm:$0xf]
        %v1031 = vld [vmem:[%s502 + $0x1d8] sm:$0xf]
        %v1032 = vld [vmem:[%s502 + $0x1dc] sm:$0xf]
        %v1033 = vld [vmem:[%s502 + $0x1e0] sm:$0xf]
        %v1034 = vld [vmem:[%s502 + $0x1e4] sm:$0xf]
        %v1035 = vld [vmem:[%s502 + $0x1e8] sm:$0xf]
        %v1036 = vld [vmem:[%s502 + $0x1ec] sm:$0xf]
        %v1037 = vld [vmem:[%s502 + $0x1f0] sm:$0xf]
        %v1038 = vld [vmem:[%s502 + $0x1f4] sm:$0xf]
        %v1039 = vld [vmem:[%s502 + $0x1f8] sm:$0xf]
        %v1040 = vld [vmem:[%s502 + $0x1fc] sm:$0xf]
        %v1041 = vld [vmem:[%s1] sm:$0xf]
        %v1042 = vld [vmem:[%s1 + $0x4] sm:$0xf]
        %v1043 = vld [vmem:[%s1 + $0x8] sm:$0xf]
        %v1044 = vld [vmem:[%s1 + $0xc] sm:$0x3]
        %v1045 = vld [vmem:[%s2] sm:$0x1]
        %v1047 = vlaneseq
        %v1048 = vshrl.u32 %v1047, 7
        %v1049 = vsub.s32 0, %v1048
        %v1050 = vrot.slane %v1045, %v1049
        %v1180 = vunpack.c.l.b16 %v913
        %v1181 = vunpack.c.l.b16 %v914
        %v1182 = vunpack.c.l.b16 %v915
        %v1183 = vunpack.c.l.b16 %v916
        %v1184 = vunpack.c.l.b16 %v917
        %v1185 = vunpack.c.l.b16 %v918
        %v1186 = vunpack.c.l.b16 %v919
        %v1187 = vunpack.c.l.b16 %v920
        %v1188 = vunpack.c.l.b16 %v921
        %v1189 = vunpack.c.l.b16 %v922
        %v1190 = vunpack.c.l.b16 %v923
        %v1191 = vunpack.c.l.b16 %v924
        %v1192 = vunpack.c.l.b16 %v925
        %v1193 = vunpack.c.l.b16 %v926
        %v1194 = vunpack.c.l.b16 %v927
        %v1195 = vunpack.c.l.b16 %v928
        %v1196 = vunpack.c.l.b16 %v929
        %v1197 = vunpack.c.l.b16 %v930
        %v1198 = vunpack.c.l.b16 %v931
        %v1199 = vunpack.c.l.b16 %v932
        %v1200 = vunpack.c.l.b16 %v933
        %v1201 = vunpack.c.l.b16 %v934
        %v1202 = vunpack.c.l.b16 %v935
        %v1203 = vunpack.c.l.b16 %v936
        %v1204 = vunpack.c.l.b16 %v937
        %v1205 = vunpack.c.l.b16 %v938
        %v1206 = vunpack.c.l.b16 %v939
        %v1207 = vunpack.c.l.b16 %v940
        %v1208 = vunpack.c.l.b16 %v941
        %v1209 = vunpack.c.l.b16 %v942
        %v1210 = vunpack.c.l.b16 %v943
        %v1211 = vunpack.c.l.b16 %v944
        %v1212 = vunpack.c.l.b16 %v945
        %v1213 = vunpack.c.l.b16 %v946
        %v1214 = vunpack.c.l.b16 %v947
        %v1215 = vunpack.c.l.b16 %v948
        %v1216 = vunpack.c.l.b16 %v949
        %v1217 = vunpack.c.l.b16 %v950
        %v1218 = vunpack.c.l.b16 %v951
        %v1219 = vunpack.c.l.b16 %v952
        %v1220 = vunpack.c.l.b16 %v953
        %v1221 = vunpack.c.l.b16 %v954
        %v1222 = vunpack.c.l.b16 %v955
        %v1223 = vunpack.c.l.b16 %v956
        %v1224 = vunpack.c.l.b16 %v957
        %v1225 = vunpack.c.l.b16 %v958
        %v1226 = vunpack.c.l.b16 %v959
        %v1227 = vunpack.c.l.b16 %v960
        %v1228 = vunpack.c.l.b16 %v961
        %v1229 = vunpack.c.l.b16 %v962
        %v1230 = vunpack.c.l.b16 %v963
        %v1231 = vunpack.c.l.b16 %v964
        %v1232 = vunpack.c.l.b16 %v965
        %v1233 = vunpack.c.l.b16 %v966
        %v1234 = vunpack.c.l.b16 %v967
        %v1235 = vunpack.c.l.b16 %v968
        %v1236 = vunpack.c.l.b16 %v969
        %v1237 = vunpack.c.l.b16 %v970
        %v1238 = vunpack.c.l.b16 %v971
        %v1239 = vunpack.c.l.b16 %v972
        %v1240 = vunpack.c.l.b16 %v973
        %v1241 = vunpack.c.l.b16 %v974
        %v1242 = vunpack.c.l.b16 %v975
        %v1243 = vunpack.c.l.b16 %v976
        %v1244 = vunpack.c.l.b16 %v977
        %v1245 = vunpack.c.l.b16 %v978
        %v1246 = vunpack.c.l.b16 %v979
        %v1247 = vunpack.c.l.b16 %v980
        %v1248 = vunpack.c.l.b16 %v981
        %v1249 = vunpack.c.l.b16 %v982
        %v1250 = vunpack.c.l.b16 %v983
        %v1251 = vunpack.c.l.b16 %v984
        %v1252 = vunpack.c.l.b16 %v985
        %v1253 = vunpack.c.l.b16 %v986
        %v1254 = vunpack.c.l.b16 %v987
        %v1255 = vunpack.c.l.b16 %v988
        %v1256 = vunpack.c.l.b16 %v989
        %v1257 = vunpack.c.l.b16 %v990
        %v1258 = vunpack.c.l.b16 %v991
        %v1259 = vunpack.c.l.b16 %v992
        %v1260 = vunpack.c.l.b16 %v993
        %v1261 = vunpack.c.l.b16 %v994
        %v1262 = vunpack.c.l.b16 %v995
        %v1263 = vunpack.c.l.b16 %v996
        %v1264 = vunpack.c.l.b16 %v997
        %v1265 = vunpack.c.l.b16 %v998
        %v1266 = vunpack.c.l.b16 %v999
        %v1267 = vunpack.c.l.b16 %v1000
        %v1268 = vunpack.c.l.b16 %v1001
        %v1269 = vunpack.c.l.b16 %v1002
        %v1270 = vunpack.c.l.b16 %v1003
        %v1271 = vunpack.c.l.b16 %v1004
        %v1272 = vunpack.c.l.b16 %v1005
        %v1273 = vunpack.c.l.b16 %v1006
        %v1274 = vunpack.c.l.b16 %v1007
        %v1275 = vunpack.c.l.b16 %v1008
        %v1276 = vunpack.c.l.b16 %v1009
        %v1277 = vunpack.c.l.b16 %v1010
        %v1278 = vunpack.c.l.b16 %v1011
        %v1279 = vunpack.c.l.b16 %v1012
        %v1280 = vunpack.c.l.b16 %v1013
        %v1281 = vunpack.c.l.b16 %v1014
        %v1282 = vunpack.c.l.b16 %v1015
        %v1283 = vunpack.c.l.b16 %v1016
        %v1284 = vunpack.c.l.b16 %v1017
        %v1285 = vunpack.c.l.b16 %v1018
        %v1286 = vunpack.c.l.b16 %v1019
        %v1287 = vunpack.c.l.b16 %v1020
        %v1288 = vunpack.c.l.b16 %v1021
        %v1289 = vunpack.c.l.b16 %v1022
        %v1290 = vunpack.c.l.b16 %v1023
        %v1291 = vunpack.c.l.b16 %v1024
        %v1292 = vunpack.c.l.b16 %v1025
        %v1293 = vunpack.c.l.b16 %v1026
        %v1294 = vunpack.c.l.b16 %v1027
        %v1295 = vunpack.c.l.b16 %v1028
        %v1296 = vunpack.c.l.b16 %v1029
        %v1297 = vunpack.c.l.b16 %v1030
        %v1298 = vunpack.c.l.b16 %v1031
        %v1299 = vunpack.c.l.b16 %v1032
        %v1300 = vunpack.c.l.b16 %v1033
        %v1301 = vunpack.c.l.b16 %v1034
        %v1302 = vunpack.c.l.b16 %v1035
        %v1303 = vunpack.c.l.b16 %v1036
        %v1304 = vunpack.c.l.b16 %v1037
        %v1305 = vunpack.c.l.b16 %v1038
        %v1306 = vunpack.c.l.b16 %v1039
        %v1307 = vunpack.c.l.b16 %v1040
        %v1308 = vpack.c.b16 %v1181, %v1180
        %v1309 = vpack.c.b16 %v1183, %v1182
        %v1310 = vpack.c.b16 %v1185, %v1184
        %v1311 = vpack.c.b16 %v1187, %v1186
        %v1312 = vpack.c.b16 %v1189, %v1188
        %v1313 = vpack.c.b16 %v1191, %v1190
        %v1314 = vpack.c.b16 %v1193, %v1192
        %v1315 = vpack.c.b16 %v1195, %v1194
        %v1316 = vpack.c.b16 %v1197, %v1196
        %v1317 = vpack.c.b16 %v1199, %v1198
        %v1318 = vpack.c.b16 %v1201, %v1200
        %v1319 = vpack.c.b16 %v1203, %v1202
        %v1320 = vpack.c.b16 %v1205, %v1204
        %v1321 = vpack.c.b16 %v1207, %v1206
        %v1322 = vpack.c.b16 %v1209, %v1208
        %v1323 = vpack.c.b16 %v1211, %v1210
        %v1324 = vpack.c.b16 %v1213, %v1212
        %v1325 = vpack.c.b16 %v1215, %v1214
        %v1326 = vpack.c.b16 %v1217, %v1216
        %v1327 = vpack.c.b16 %v1219, %v1218
        %v1328 = vpack.c.b16 %v1221, %v1220
        %v1329 = vpack.c.b16 %v1223, %v1222
        %v1330 = vpack.c.b16 %v1225, %v1224
        %v1331 = vpack.c.b16 %v1227, %v1226
        %v1332 = vpack.c.b16 %v1229, %v1228
        %v1333 = vpack.c.b16 %v1231, %v1230
        %v1334 = vpack.c.b16 %v1233, %v1232
        %v1335 = vpack.c.b16 %v1235, %v1234
        %v1336 = vpack.c.b16 %v1237, %v1236
        %v1337 = vpack.c.b16 %v1239, %v1238
        %v1338 = vpack.c.b16 %v1241, %v1240
        %v1339 = vpack.c.b16 %v1243, %v1242
        %v1340 = vpack.c.b16 %v1245, %v1244
        %v1341 = vpack.c.b16 %v1247, %v1246
        %v1342 = vpack.c.b16 %v1249, %v1248
        %v1343 = vpack.c.b16 %v1251, %v1250
        %v1344 = vpack.c.b16 %v1253, %v1252
        %v1345 = vpack.c.b16 %v1255, %v1254
        %v1346 = vpack.c.b16 %v1257, %v1256
        %v1347 = vpack.c.b16 %v1259, %v1258
        %v1348 = vpack.c.b16 %v1261, %v1260
        %v1349 = vpack.c.b16 %v1263, %v1262
        %v1350 = vpack.c.b16 %v1265, %v1264
        %v1351 = vpack.c.b16 %v1267, %v1266
        %v1352 = vpack.c.b16 %v1269, %v1268
        %v1353 = vpack.c.b16 %v1271, %v1270
        %v1354 = vpack.c.b16 %v1273, %v1272
        %v1355 = vpack.c.b16 %v1275, %v1274
        %v1356 = vpack.c.b16 %v1277, %v1276
        %v1357 = vpack.c.b16 %v1279, %v1278
        %v1358 = vpack.c.b16 %v1281, %v1280
        %v1359 = vpack.c.b16 %v1283, %v1282
        %v1360 = vpack.c.b16 %v1285, %v1284
        %v1361 = vpack.c.b16 %v1287, %v1286
        %v1362 = vpack.c.b16 %v1289, %v1288
        %v1363 = vpack.c.b16 %v1291, %v1290
        %v1364 = vpack.c.b16 %v1293, %v1292
        %v1365 = vpack.c.b16 %v1295, %v1294
        %v1366 = vpack.c.b16 %v1297, %v1296
        %v1367 = vpack.c.b16 %v1299, %v1298
        %v1368 = vpack.c.b16 %v1301, %v1300
        %v1369 = vpack.c.b16 %v1303, %v1302
        %v1370 = vpack.c.b16 %v1305, %v1304
        %v1371 = vpack.c.b16 %v1307, %v1306
        %v1376 = vunpack.c.l.b16 %v1041
        %v1377 = vunpack.c.l.b16 %v1042
        %v1378 = vunpack.c.l.b16 %v1043
        %v1379 = vunpack.c.l.b16 %v1044
        %v1380 = vpack.c.b16 %v1377, %v1376
        %v1381 = vpack.c.b16 %v1379, %v1378
        %vm1383 = vcmask 220160
        %v1385 = vsel %vm1383, %v1308, 0
        %v1388 = vsel %vm1383, %v1309, 0
        %v1391 = vsel %vm1383, %v1310, 0
        %v1394 = vsel %vm1383, %v1311, 0
        %v1397 = vsel %vm1383, %v1312, 0
        %v1400 = vsel %vm1383, %v1313, 0
        %v1403 = vsel %vm1383, %v1314, 0
        %v1406 = vsel %vm1383, %v1315, 0
        %v1409 = vsel %vm1383, %v1316, 0
        %v1412 = vsel %vm1383, %v1317, 0
        %v1415 = vsel %vm1383, %v1318, 0
        %v1418 = vsel %vm1383, %v1319, 0
        %v1421 = vsel %vm1383, %v1320, 0
        %v1424 = vsel %vm1383, %v1321, 0
        %v1427 = vsel %vm1383, %v1322, 0
        %v1430 = vsel %vm1383, %v1323, 0
        %v1433 = vsel %vm1383, %v1324, 0
        %v1436 = vsel %vm1383, %v1325, 0
        %v1439 = vsel %vm1383, %v1326, 0
        %v1442 = vsel %vm1383, %v1327, 0
        %v1445 = vsel %vm1383, %v1328, 0
        %v1448 = vsel %vm1383, %v1329, 0
        %v1451 = vsel %vm1383, %v1330, 0
        %v1454 = vsel %vm1383, %v1331, 0
        %v1457 = vsel %vm1383, %v1332, 0
        %v1460 = vsel %vm1383, %v1333, 0
        %v1463 = vsel %vm1383, %v1334, 0
        %v1466 = vsel %vm1383, %v1335, 0
        %v1469 = vsel %vm1383, %v1336, 0
        %v1472 = vsel %vm1383, %v1337, 0
        %v1475 = vsel %vm1383, %v1338, 0
        %v1478 = vsel %vm1383, %v1339, 0
        %v1481 = vsel %vm1383, %v1340, 0
        %v1484 = vsel %vm1383, %v1341, 0
        %v1487 = vsel %vm1383, %v1342, 0
        %v1490 = vsel %vm1383, %v1343, 0
        %v1493 = vsel %vm1383, %v1344, 0
        %v1496 = vsel %vm1383, %v1345, 0
        %v1499 = vsel %vm1383, %v1346, 0
        %v1502 = vsel %vm1383, %v1347, 0
        %v1505 = vsel %vm1383, %v1348, 0
        %v1508 = vsel %vm1383, %v1349, 0
        %v1511 = vsel %vm1383, %v1350, 0
        %v1514 = vsel %vm1383, %v1351, 0
        %v1517 = vsel %vm1383, %v1352, 0
        %v1520 = vsel %vm1383, %v1353, 0
        %v1523 = vsel %vm1383, %v1354, 0
        %v1526 = vsel %vm1383, %v1355, 0
        %v1529 = vsel %vm1383, %v1356, 0
        %v1532 = vsel %vm1383, %v1357, 0
        %v1535 = vsel %vm1383, %v1358, 0
        %v1538 = vsel %vm1383, %v1359, 0
        %v1541 = vsel %vm1383, %v1360, 0
        %v1544 = vsel %vm1383, %v1361, 0
        %v1547 = vsel %vm1383, %v1362, 0
        %v1550 = vsel %vm1383, %v1363, 0
        %v1553 = vsel %vm1383, %v1364, 0
        %v1556 = vsel %vm1383, %v1365, 0
        %v1559 = vsel %vm1383, %v1366, 0
        %v1562 = vsel %vm1383, %v1367, 0
        %v1565 = vsel %vm1383, %v1368, 0
        %v1568 = vsel %vm1383, %v1369, 0
        %v1571 = vsel %vm1383, %v1370, 0
        %v1574 = vsel %vm1383, %v1371, 0
        %vm1576 = vcmask 1044480
        %vm1577 = vcmask 1045504
        %v1578 = vsel %vm1576, 4294967295, 65535
        %v1579 = vsel %vm1577, %v1578, 0
        %v1581 = vand.u32 %v1381, %v1579
        %1583 = vmatprep.subr.bf16.mxu0 0
        %1584 = vmatpush1.bf16.msra.mxu0 %v1380
        %1585 = vmatprep.subr.bf16.mxu0 0
        %1586 = vmatpush1.bf16.msra.mxu0 %v1581
        %1587 = vmatprep.subr.bf16.mxu0 0
        %1588 = vmatpush1.bf16.msra.mxu0 0
        %1589 = vmatprep.subr.bf16.mxu0 0
        %1590 = vmatpush1.bf16.msra.mxu0 0
        %1591 = vmatprep.subr.bf16.mxu0 0
        %1592 = vmatpush1.bf16.msra.mxu0 0
        %1593 = vmatprep.subr.bf16.mxu0 0
        %1594 = vmatpush1.bf16.msra.mxu0 0
        %1595 = vmatprep.subr.bf16.mxu0 0
        %1596 = vmatpush1.bf16.msra.mxu0 0
        %1597 = vmatprep.subr.bf16.mxu0 0
        %1598 = vmatpush1.bf16.msra.mxu0 0
        %1599 = vmatprep.subr.bf16.mxu0 0
        %1600 = vmatpush1.bf16.msra.mxu0 0
        %1601 = vmatprep.subr.bf16.mxu0 0
        %1602 = vmatpush1.bf16.msra.mxu0 0
        %1603 = vmatprep.subr.bf16.mxu0 0
        %1604 = vmatpush1.bf16.msra.mxu0 0
        %1605 = vmatprep.subr.bf16.mxu0 0
        %1606 = vmatpush1.bf16.msra.mxu0 0
        %1607 = vmatprep.subr.bf16.mxu0 0
        %1608 = vmatpush1.bf16.msra.mxu0 0
        %1609 = vmatprep.subr.bf16.mxu0 0
        %1610 = vmatpush1.bf16.msra.mxu0 0
        %1611 = vmatprep.subr.bf16.mxu0 0
        %1612 = vmatpush1.bf16.msra.mxu0 0
        %1613 = vmatprep.subr.bf16.mxu0 0
        %1614 = vmatpush1.bf16.msra.mxu0 0
        %1615 = vmatprep.mubr.bf16.mxu0 0
        %1616 = vmatmul.mubr.bf16.gmra.mrb[0].mxu0 %v1385
        %v1617 = vpop.f32.mrb[0].mxu0
        %v1618 = vadd.f32 %v1050, %v1617
        %v1619 = vpop.f32.mrb[0].mxu0
        %v1620 = vpop.f32.mrb[0].mxu0
        %v1621 = vadd.f32 %v1050, %v1620
        %v1622 = vpop.f32.mrb[0].mxu0
        %1623 = vmatprep.mubr.bf16.mxu0 0
        %1624 = vmatmul.mubr.bf16.gmra.mrb[0].mxu0 %v1388
        %v1625 = vpop.f32.mrb[0].mxu0
        %v1626 = vadd.f32 %v1050, %v1625
        %v1627 = vpop.f32.mrb[0].mxu0
        %v1628 = vpop.f32.mrb[0].mxu0
        %v1629 = vadd.f32 %v1050, %v1628
        %v1630 = vpop.f32.mrb[0].mxu0
        %1631 = vmatprep.mubr.bf16.mxu0 0
        %1632 = vmatmul.mubr.bf16.gmra.mrb[0].mxu0 %v1391
        %v1633 = vpop.f32.mrb[0].mxu0
        %v1634 = vadd.f32 %v1050, %v1633
        %v1635 = vpop.f32.mrb[0].mxu0
        %v1636 = vpop.f32.mrb[0].mxu0
        %v1637 = vadd.f32 %v1050, %v1636
        %v1638 = vpop.f32.mrb[0].mxu0
        %1639 = vmatprep.mubr.bf16.mxu0 0
        %1640 = vmatmul.mubr.bf16.gmra.mrb[0].mxu0 %v1394
        %v1641 = vpop.f32.mrb[0].mxu0
        %v1642 = vadd.f32 %v1050, %v1641
        %v1643 = vpop.f32.mrb[0].mxu0
        %v1644 = vpop.f32.mrb[0].mxu0
        %v1645 = vadd.f32 %v1050, %v1644
        %v1646 = vpop.f32.mrb[0].mxu0
        %1647 = vmatprep.mubr.bf16.mxu0 0
        %1648 = vmatmul.mubr.bf16.gmra.mrb[0].mxu0 %v1397
        %v1649 = vpop.f32.mrb[0].mxu0
        %v1650 = vadd.f32 %v1050, %v1649
        %v1651 = vpop.f32.mrb[0].mxu0
        %v1652 = vpop.f32.mrb[0].mxu0
        %v1653 = vadd.f32 %v1050, %v1652
        %v1654 = vpop.f32.mrb[0].mxu0
        %1655 = vmatprep.mubr.bf16.mxu0 0
        %1656 = vmatmul.mubr.bf16.gmra.mrb[0].mxu0 %v1400
        %v1657 = vpop.f32.mrb[0].mxu0
        %v1658 = vadd.f32 %v1050, %v1657
        %v1659 = vpop.f32.mrb[0].mxu0
        %v1660 = vpop.f32.mrb[0].mxu0
        %v1661 = vadd.f32 %v1050, %v1660
        %v1662 = vpop.f32.mrb[0].mxu0
        %1663 = vmatprep.mubr.bf16.mxu0 0
        %1664 = vmatmul.mubr.bf16.gmra.mrb[0].mxu0 %v1403
        %v1665 = vpop.f32.mrb[0].mxu0
        %v1666 = vadd.f32 %v1050, %v1665
        %v1667 = vpop.f32.mrb[0].mxu0
        %v1668 = vpop.f32.mrb[0].mxu0
        %v1669 = vadd.f32 %v1050, %v1668
        %v1670 = vpop.f32.mrb[0].mxu0
        %1671 = vmatprep.mubr.bf16.mxu0 0
        %1672 = vmatmul.mubr.bf16.gmra.mrb[0].mxu0 %v1406
        %v1673 = vpop.f32.mrb[0].mxu0
        %v1674 = vadd.f32 %v1050, %v1673
        %v1675 = vpop.f32.mrb[0].mxu0
        %v1676 = vpop.f32.mrb[0].mxu0
        %v1677 = vadd.f32 %v1050, %v1676
        %v1678 = vpop.f32.mrb[0].mxu0
        %1679 = vmatprep.mubr.bf16.mxu0 0
        %1680 = vmatmul.mubr.bf16.gmra.mrb[0].mxu0 %v1409
        %v1681 = vpop.f32.mrb[0].mxu0
        %v1682 = vadd.f32 %v1050, %v1681
        %v1683 = vpop.f32.mrb[0].mxu0
        %v1684 = vpop.f32.mrb[0].mxu0
        %v1685 = vadd.f32 %v1050, %v1684
        %v1686 = vpop.f32.mrb[0].mxu0
        %1687 = vmatprep.mubr.bf16.mxu0 0
        %1688 = vmatmul.mubr.bf16.gmra.mrb[0].mxu0 %v1412
        %v1689 = vpop.f32.mrb[0].mxu0
        %v1690 = vadd.f32 %v1050, %v1689
        %v1691 = vpop.f32.mrb[0].mxu0
        %v1692 = vpop.f32.mrb[0].mxu0
        %v1693 = vadd.f32 %v1050, %v1692
        %v1694 = vpop.f32.mrb[0].mxu0
        %1695 = vmatprep.mubr.bf16.mxu0 0
        %1696 = vmatmul.mubr.bf16.gmra.mrb[0].mxu0 %v1415
        %v1697 = vpop.f32.mrb[0].mxu0
        %v1698 = vadd.f32 %v1050, %v1697
        %v1699 = vpop.f32.mrb[0].mxu0
        %v1700 = vpop.f32.mrb[0].mxu0
        %v1701 = vadd.f32 %v1050, %v1700
        %v1702 = vpop.f32.mrb[0].mxu0
        %1703 = vmatprep.mubr.bf16.mxu0 0
        %1704 = vmatmul.mubr.bf16.gmra.mrb[0].mxu0 %v1418
        %v1705 = vpop.f32.mrb[0].mxu0
        %v1706 = vadd.f32 %v1050, %v1705
        %v1707 = vpop.f32.mrb[0].mxu0
        %v1708 = vpop.f32.mrb[0].mxu0
        %v1709 = vadd.f32 %v1050, %v1708
        %v1710 = vpop.f32.mrb[0].mxu0
        %1711 = vmatprep.mubr.bf16.mxu0 0
        %1712 = vmatmul.mubr.bf16.gmra.mrb[0].mxu0 %v1421
        %v1713 = vpop.f32.mrb[0].mxu0
        %v1714 = vadd.f32 %v1050, %v1713
        %v1715 = vpop.f32.mrb[0].mxu0
        %v1716 = vpop.f32.mrb[0].mxu0
        %v1717 = vadd.f32 %v1050, %v1716
        %v1718 = vpop.f32.mrb[0].mxu0
        %1719 = vmatprep.mubr.bf16.mxu0 0
        %1720 = vmatmul.mubr.bf16.gmra.mrb[0].mxu0 %v1424
        %v1721 = vpop.f32.mrb[0].mxu0
        %v1722 = vadd.f32 %v1050, %v1721
        %v1723 = vpop.f32.mrb[0].mxu0
        %v1724 = vpop.f32.mrb[0].mxu0
        %v1725 = vadd.f32 %v1050, %v1724
        %v1726 = vpop.f32.mrb[0].mxu0
        %1727 = vmatprep.mubr.bf16.mxu0 0
        %1728 = vmatmul.mubr.bf16.gmra.mrb[0].mxu0 %v1427
        %v1729 = vpop.f32.mrb[0].mxu0
        %v1730 = vadd.f32 %v1050, %v1729
        %v1731 = vpop.f32.mrb[0].mxu0
        %v1732 = vpop.f32.mrb[0].mxu0
        %v1733 = vadd.f32 %v1050, %v1732
        %v1734 = vpop.f32.mrb[0].mxu0
        %1735 = vmatprep.mubr.bf16.mxu0 0
        %1736 = vmatmul.mubr.bf16.gmra.mrb[0].mxu0 %v1430
        %v1737 = vpop.f32.mrb[0].mxu0
        %v1738 = vadd.f32 %v1050, %v1737
        %v1739 = vpop.f32.mrb[0].mxu0
        %v1740 = vpop.f32.mrb[0].mxu0
        %v1741 = vadd.f32 %v1050, %v1740
        %v1742 = vpop.f32.mrb[0].mxu0
        %1743 = vmatprep.mubr.bf16.mxu0 0
        %1744 = vmatmul.mubr.bf16.gmra.mrb[0].mxu0 %v1433
        %v1745 = vpop.f32.mrb[0].mxu0
        %v1746 = vadd.f32 %v1050, %v1745
        %v1747 = vpop.f32.mrb[0].mxu0
        %v1748 = vpop.f32.mrb[0].mxu0
        %v1749 = vadd.f32 %v1050, %v1748
        %v1750 = vpop.f32.mrb[0].mxu0
        %1751 = vmatprep.mubr.bf16.mxu0 0
        %1752 = vmatmul.mubr.bf16.gmra.mrb[0].mxu0 %v1436
        %v1753 = vpop.f32.mrb[0].mxu0
        %v1754 = vadd.f32 %v1050, %v1753
        %v1755 = vpop.f32.mrb[0].mxu0
        %v1756 = vpop.f32.mrb[0].mxu0
        %v1757 = vadd.f32 %v1050, %v1756
        %v1758 = vpop.f32.mrb[0].mxu0
        %1759 = vmatprep.mubr.bf16.mxu0 0
        %1760 = vmatmul.mubr.bf16.gmra.mrb[0].mxu0 %v1439
        %v1761 = vpop.f32.mrb[0].mxu0
        %v1762 = vadd.f32 %v1050, %v1761
        %v1763 = vpop.f32.mrb[0].mxu0
        %v1764 = vpop.f32.mrb[0].mxu0
        %v1765 = vadd.f32 %v1050, %v1764
        %v1766 = vpop.f32.mrb[0].mxu0
        %1767 = vmatprep.mubr.bf16.mxu0 0
        %1768 = vmatmul.mubr.bf16.gmra.mrb[0].mxu0 %v1442
        %v1769 = vpop.f32.mrb[0].mxu0
        %v1770 = vadd.f32 %v1050, %v1769
        %v1771 = vpop.f32.mrb[0].mxu0
        %v1772 = vpop.f32.mrb[0].mxu0
        %v1773 = vadd.f32 %v1050, %v1772
        %v1774 = vpop.f32.mrb[0].mxu0
        %1775 = vmatprep.mubr.bf16.mxu0 0
        %1776 = vmatmul.mubr.bf16.gmra.mrb[0].mxu0 %v1445
        %v1777 = vpop.f32.mrb[0].mxu0
        %v1778 = vadd.f32 %v1050, %v1777
        %v1779 = vpop.f32.mrb[0].mxu0
        %v1780 = vpop.f32.mrb[0].mxu0
        %v1781 = vadd.f32 %v1050, %v1780
        %v1782 = vpop.f32.mrb[0].mxu0
        %1783 = vmatprep.mubr.bf16.mxu0 0
        %1784 = vmatmul.mubr.bf16.gmra.mrb[0].mxu0 %v1448
        %v1785 = vpop.f32.mrb[0].mxu0
        %v1786 = vadd.f32 %v1050, %v1785
        %v1787 = vpop.f32.mrb[0].mxu0
        %v1788 = vpop.f32.mrb[0].mxu0
        %v1789 = vadd.f32 %v1050, %v1788
        %v1790 = vpop.f32.mrb[0].mxu0
        %1791 = vmatprep.mubr.bf16.mxu0 0
        %1792 = vmatmul.mubr.bf16.gmra.mrb[0].mxu0 %v1451
        %v1793 = vpop.f32.mrb[0].mxu0
        %v1794 = vadd.f32 %v1050, %v1793
        %v1795 = vpop.f32.mrb[0].mxu0
        %v1796 = vpop.f32.mrb[0].mxu0
        %v1797 = vadd.f32 %v1050, %v1796
        %v1798 = vpop.f32.mrb[0].mxu0
        %1799 = vmatprep.mubr.bf16.mxu0 0
        %1800 = vmatmul.mubr.bf16.gmra.mrb[0].mxu0 %v1454
        %v1801 = vpop.f32.mrb[0].mxu0
        %v1802 = vadd.f32 %v1050, %v1801
        %v1803 = vpop.f32.mrb[0].mxu0
        %v1804 = vpop.f32.mrb[0].mxu0
        %v1805 = vadd.f32 %v1050, %v1804
        %v1806 = vpop.f32.mrb[0].mxu0
        %1807 = vmatprep.mubr.bf16.mxu0 0
        %1808 = vmatmul.mubr.bf16.gmra.mrb[0].mxu0 %v1457
        %v1809 = vpop.f32.mrb[0].mxu0
        %v1810 = vadd.f32 %v1050, %v1809
        %v1811 = vpop.f32.mrb[0].mxu0
        %v1812 = vpop.f32.mrb[0].mxu0
        %v1813 = vadd.f32 %v1050, %v1812
        %v1814 = vpop.f32.mrb[0].mxu0
        %1815 = vmatprep.mubr.bf16.mxu0 0
        %1816 = vmatmul.mubr.bf16.gmra.mrb[0].mxu0 %v1460
        %v1817 = vpop.f32.mrb[0].mxu0
        %v1818 = vadd.f32 %v1050, %v1817
        %v1819 = vpop.f32.mrb[0].mxu0
        %v1820 = vpop.f32.mrb[0].mxu0
        %v1821 = vadd.f32 %v1050, %v1820
        %v1822 = vpop.f32.mrb[0].mxu0
        %1823 = vmatprep.mubr.bf16.mxu0 0
        %1824 = vmatmul.mubr.bf16.gmra.mrb[0].mxu0 %v1463
        %v1825 = vpop.f32.mrb[0].mxu0
        %v1826 = vadd.f32 %v1050, %v1825
        %v1827 = vpop.f32.mrb[0].mxu0
        %v1828 = vpop.f32.mrb[0].mxu0
        %v1829 = vadd.f32 %v1050, %v1828
        %v1830 = vpop.f32.mrb[0].mxu0
        %1831 = vmatprep.mubr.bf16.mxu0 0
        %1832 = vmatmul.mubr.bf16.gmra.mrb[0].mxu0 %v1466
        %v1833 = vpop.f32.mrb[0].mxu0
        %v1834 = vadd.f32 %v1050, %v1833
        %v1835 = vpop.f32.mrb[0].mxu0
        %v1836 = vpop.f32.mrb[0].mxu0
        %v1837 = vadd.f32 %v1050, %v1836
        %v1838 = vpop.f32.mrb[0].mxu0
        %1839 = vmatprep.mubr.bf16.mxu0 0
        %1840 = vmatmul.mubr.bf16.gmra.mrb[0].mxu0 %v1469
        %v1841 = vpop.f32.mrb[0].mxu0
        %v1842 = vadd.f32 %v1050, %v1841
        %v1843 = vpop.f32.mrb[0].mxu0
        %v1844 = vpop.f32.mrb[0].mxu0
        %v1845 = vadd.f32 %v1050, %v1844
        %v1846 = vpop.f32.mrb[0].mxu0
        %1847 = vmatprep.mubr.bf16.mxu0 0
        %1848 = vmatmul.mubr.bf16.gmra.mrb[0].mxu0 %v1472
        %v1849 = vpop.f32.mrb[0].mxu0
        %v1850 = vadd.f32 %v1050, %v1849
        %v1851 = vpop.f32.mrb[0].mxu0
        %v1852 = vpop.f32.mrb[0].mxu0
        %v1853 = vadd.f32 %v1050, %v1852
        %v1854 = vpop.f32.mrb[0].mxu0
        %1855 = vmatprep.mubr.bf16.mxu0 0
        %1856 = vmatmul.mubr.bf16.gmra.mrb[0].mxu0 %v1475
        %v1857 = vpop.f32.mrb[0].mxu0
        %v1858 = vadd.f32 %v1050, %v1857
        %v1859 = vpop.f32.mrb[0].mxu0
        %v1860 = vpop.f32.mrb[0].mxu0
        %v1861 = vadd.f32 %v1050, %v1860
        %v1862 = vpop.f32.mrb[0].mxu0
        %1863 = vmatprep.mubr.bf16.mxu0 0
        %1864 = vmatmul.mubr.bf16.gmra.mrb[0].mxu0 %v1478
        %v1865 = vpop.f32.mrb[0].mxu0
        %v1866 = vadd.f32 %v1050, %v1865
        %v1867 = vpop.f32.mrb[0].mxu0
        %v1868 = vpop.f32.mrb[0].mxu0
        %v1869 = vadd.f32 %v1050, %v1868
        %v1870 = vpop.f32.mrb[0].mxu0
        %1871 = vmatprep.mubr.bf16.mxu0 0
        %1872 = vmatmul.mubr.bf16.gmra.mrb[0].mxu0 %v1481
        %v1873 = vpop.f32.mrb[0].mxu0
        %v1874 = vadd.f32 %v1050, %v1873
        %v1875 = vpop.f32.mrb[0].mxu0
        %v1876 = vpop.f32.mrb[0].mxu0
        %v1877 = vadd.f32 %v1050, %v1876
        %v1878 = vpop.f32.mrb[0].mxu0
        %1879 = vmatprep.mubr.bf16.mxu0 0
        %1880 = vmatmul.mubr.bf16.gmra.mrb[0].mxu0 %v1484
        %v1881 = vpop.f32.mrb[0].mxu0
        %v1882 = vadd.f32 %v1050, %v1881
        %v1883 = vpop.f32.mrb[0].mxu0
        %v1884 = vpop.f32.mrb[0].mxu0
        %v1885 = vadd.f32 %v1050, %v1884
        %v1886 = vpop.f32.mrb[0].mxu0
        %1887 = vmatprep.mubr.bf16.mxu0 0
        %1888 = vmatmul.mubr.bf16.gmra.mrb[0].mxu0 %v1487
        %v1889 = vpop.f32.mrb[0].mxu0
        %v1890 = vadd.f32 %v1050, %v1889
        %v1891 = vpop.f32.mrb[0].mxu0
        %v1892 = vpop.f32.mrb[0].mxu0
        %v1893 = vadd.f32 %v1050, %v1892
        %v1894 = vpop.f32.mrb[0].mxu0
        %1895 = vmatprep.mubr.bf16.mxu0 0
        %1896 = vmatmul.mubr.bf16.gmra.mrb[0].mxu0 %v1490
        %v1897 = vpop.f32.mrb[0].mxu0
        %v1898 = vadd.f32 %v1050, %v1897
        %v1899 = vpop.f32.mrb[0].mxu0
        %v1900 = vpop.f32.mrb[0].mxu0
        %v1901 = vadd.f32 %v1050, %v1900
        %v1902 = vpop.f32.mrb[0].mxu0
        %1903 = vmatprep.mubr.bf16.mxu0 0
        %1904 = vmatmul.mubr.bf16.gmra.mrb[0].mxu0 %v1493
        %v1905 = vpop.f32.mrb[0].mxu0
        %v1906 = vadd.f32 %v1050, %v1905
        %v1907 = vpop.f32.mrb[0].mxu0
        %v1908 = vpop.f32.mrb[0].mxu0
        %v1909 = vadd.f32 %v1050, %v1908
        %v1910 = vpop.f32.mrb[0].mxu0
        %1911 = vmatprep.mubr.bf16.mxu0 0
        %1912 = vmatmul.mubr.bf16.gmra.mrb[0].mxu0 %v1496
        %v1913 = vpop.f32.mrb[0].mxu0
        %v1914 = vadd.f32 %v1050, %v1913
        %v1915 = vpop.f32.mrb[0].mxu0
        %v1916 = vpop.f32.mrb[0].mxu0
        %v1917 = vadd.f32 %v1050, %v1916
        %v1918 = vpop.f32.mrb[0].mxu0
        %1919 = vmatprep.mubr.bf16.mxu0 0
        %1920 = vmatmul.mubr.bf16.gmra.mrb[0].mxu0 %v1499
        %v1921 = vpop.f32.mrb[0].mxu0
        %v1922 = vadd.f32 %v1050, %v1921
        %v1923 = vpop.f32.mrb[0].mxu0
        %v1924 = vpop.f32.mrb[0].mxu0
        %v1925 = vadd.f32 %v1050, %v1924
        %v1926 = vpop.f32.mrb[0].mxu0
        %1927 = vmatprep.mubr.bf16.mxu0 0
        %1928 = vmatmul.mubr.bf16.gmra.mrb[0].mxu0 %v1502
        %v1929 = vpop.f32.mrb[0].mxu0
        %v1930 = vadd.f32 %v1050, %v1929
        %v1931 = vpop.f32.mrb[0].mxu0
        %v1932 = vpop.f32.mrb[0].mxu0
        %v1933 = vadd.f32 %v1050, %v1932
        %v1934 = vpop.f32.mrb[0].mxu0
        %1935 = vmatprep.mubr.bf16.mxu0 0
        %1936 = vmatmul.mubr.bf16.gmra.mrb[0].mxu0 %v1505
        %v1937 = vpop.f32.mrb[0].mxu0
        %v1938 = vadd.f32 %v1050, %v1937
        %v1939 = vpop.f32.mrb[0].mxu0
        %v1940 = vpop.f32.mrb[0].mxu0
        %v1941 = vadd.f32 %v1050, %v1940
        %v1942 = vpop.f32.mrb[0].mxu0
        %1943 = vmatprep.mubr.bf16.mxu0 0
        %1944 = vmatmul.mubr.bf16.gmra.mrb[0].mxu0 %v1508
        %v1945 = vpop.f32.mrb[0].mxu0
        %v1946 = vadd.f32 %v1050, %v1945
        %v1947 = vpop.f32.mrb[0].mxu0
        %v1948 = vpop.f32.mrb[0].mxu0
        %v1949 = vadd.f32 %v1050, %v1948
        %v1950 = vpop.f32.mrb[0].mxu0
        %1951 = vmatprep.mubr.bf16.mxu0 0
        %1952 = vmatmul.mubr.bf16.gmra.mrb[0].mxu0 %v1511
        %v1953 = vpop.f32.mrb[0].mxu0
        %v1954 = vadd.f32 %v1050, %v1953
        %v1955 = vpop.f32.mrb[0].mxu0
        %v1956 = vpop.f32.mrb[0].mxu0
        %v1957 = vadd.f32 %v1050, %v1956
        %v1958 = vpop.f32.mrb[0].mxu0
        %1959 = vmatprep.mubr.bf16.mxu0 0
        %1960 = vmatmul.mubr.bf16.gmra.mrb[0].mxu0 %v1514
        %v1961 = vpop.f32.mrb[0].mxu0
        %v1962 = vadd.f32 %v1050, %v1961
        %v1963 = vpop.f32.mrb[0].mxu0
        %v1964 = vpop.f32.mrb[0].mxu0
        %v1965 = vadd.f32 %v1050, %v1964
        %v1966 = vpop.f32.mrb[0].mxu0
        %1967 = vmatprep.mubr.bf16.mxu0 0
        %1968 = vmatmul.mubr.bf16.gmra.mrb[0].mxu0 %v1517
        %v1969 = vpop.f32.mrb[0].mxu0
        %v1970 = vadd.f32 %v1050, %v1969
        %v1971 = vpop.f32.mrb[0].mxu0
        %v1972 = vpop.f32.mrb[0].mxu0
        %v1973 = vadd.f32 %v1050, %v1972
        %v1974 = vpop.f32.mrb[0].mxu0
        %1975 = vmatprep.mubr.bf16.mxu0 0
        %1976 = vmatmul.mubr.bf16.gmra.mrb[0].mxu0 %v1520
        %v1977 = vpop.f32.mrb[0].mxu0
        %v1978 = vadd.f32 %v1050, %v1977
        %v1979 = vpop.f32.mrb[0].mxu0
        %v1980 = vpop.f32.mrb[0].mxu0
        %v1981 = vadd.f32 %v1050, %v1980
        %v1982 = vpop.f32.mrb[0].mxu0
        %1983 = vmatprep.mubr.bf16.mxu0 0
        %1984 = vmatmul.mubr.bf16.gmra.mrb[0].mxu0 %v1523
        %v1985 = vpop.f32.mrb[0].mxu0
        %v1986 = vadd.f32 %v1050, %v1985
        %v1987 = vpop.f32.mrb[0].mxu0
        %v1988 = vpop.f32.mrb[0].mxu0
        %v1989 = vadd.f32 %v1050, %v1988
        %v1990 = vpop.f32.mrb[0].mxu0
        %1991 = vmatprep.mubr.bf16.mxu0 0
        %1992 = vmatmul.mubr.bf16.gmra.mrb[0].mxu0 %v1526
        %v1993 = vpop.f32.mrb[0].mxu0
        %v1994 = vadd.f32 %v1050, %v1993
        %v1995 = vpop.f32.mrb[0].mxu0
        %v1996 = vpop.f32.mrb[0].mxu0
        %v1997 = vadd.f32 %v1050, %v1996
        %v1998 = vpop.f32.mrb[0].mxu0
        %1999 = vmatprep.mubr.bf16.mxu0 0
        %2000 = vmatmul.mubr.bf16.gmra.mrb[0].mxu0 %v1529
        %v2001 = vpop.f32.mrb[0].mxu0
        %v2002 = vadd.f32 %v1050, %v2001
        %v2003 = vpop.f32.mrb[0].mxu0
        %v2004 = vpop.f32.mrb[0].mxu0
        %v2005 = vadd.f32 %v1050, %v2004
        %v2006 = vpop.f32.mrb[0].mxu0
        %2007 = vmatprep.mubr.bf16.mxu0 0
        %2008 = vmatmul.mubr.bf16.gmra.mrb[0].mxu0 %v1532
        %v2009 = vpop.f32.mrb[0].mxu0
        %v2010 = vadd.f32 %v1050, %v2009
        %v2011 = vpop.f32.mrb[0].mxu0
        %v2012 = vpop.f32.mrb[0].mxu0
        %v2013 = vadd.f32 %v1050, %v2012
        %v2014 = vpop.f32.mrb[0].mxu0
        %2015 = vmatprep.mubr.bf16.mxu0 0
        %2016 = vmatmul.mubr.bf16.gmra.mrb[0].mxu0 %v1535
        %v2017 = vpop.f32.mrb[0].mxu0
        %v2018 = vadd.f32 %v1050, %v2017
        %v2019 = vpop.f32.mrb[0].mxu0
        %v2020 = vpop.f32.mrb[0].mxu0
        %v2021 = vadd.f32 %v1050, %v2020
        %v2022 = vpop.f32.mrb[0].mxu0
        %2023 = vmatprep.mubr.bf16.mxu0 0
        %2024 = vmatmul.mubr.bf16.gmra.mrb[0].mxu0 %v1538
        %v2025 = vpop.f32.mrb[0].mxu0
        %v2026 = vadd.f32 %v1050, %v2025
        %v2027 = vpop.f32.mrb[0].mxu0
        %v2028 = vpop.f32.mrb[0].mxu0
        %v2029 = vadd.f32 %v1050, %v2028
        %v2030 = vpop.f32.mrb[0].mxu0
        %2031 = vmatprep.mubr.bf16.mxu0 0
        %2032 = vmatmul.mubr.bf16.gmra.mrb[0].mxu0 %v1541
        %v2033 = vpop.f32.mrb[0].mxu0
        %v2034 = vadd.f32 %v1050, %v2033
        %v2035 = vpop.f32.mrb[0].mxu0
        %v2036 = vpop.f32.mrb[0].mxu0
        %v2037 = vadd.f32 %v1050, %v2036
        %v2038 = vpop.f32.mrb[0].mxu0
        %2039 = vmatprep.mubr.bf16.mxu0 0
        %2040 = vmatmul.mubr.bf16.gmra.mrb[0].mxu0 %v1544
        %v2041 = vpop.f32.mrb[0].mxu0
        %v2042 = vadd.f32 %v1050, %v2041
        %v2043 = vpop.f32.mrb[0].mxu0
        %v2044 = vpop.f32.mrb[0].mxu0
        %v2045 = vadd.f32 %v1050, %v2044
        %v2046 = vpop.f32.mrb[0].mxu0
        %2047 = vmatprep.mubr.bf16.mxu0 0
        %2048 = vmatmul.mubr.bf16.gmra.mrb[0].mxu0 %v1547
        %v2049 = vpop.f32.mrb[0].mxu0
        %v2050 = vadd.f32 %v1050, %v2049
        %v2051 = vpop.f32.mrb[0].mxu0
        %v2052 = vpop.f32.mrb[0].mxu0
        %v2053 = vadd.f32 %v1050, %v2052
        %v2054 = vpop.f32.mrb[0].mxu0
        %2055 = vmatprep.mubr.bf16.mxu0 0
        %2056 = vmatmul.mubr.bf16.gmra.mrb[0].mxu0 %v1550
        %v2057 = vpop.f32.mrb[0].mxu0
        %v2058 = vadd.f32 %v1050, %v2057
        %v2059 = vpop.f32.mrb[0].mxu0
        %v2060 = vpop.f32.mrb[0].mxu0
        %v2061 = vadd.f32 %v1050, %v2060
        %v2062 = vpop.f32.mrb[0].mxu0
        %2063 = vmatprep.mubr.bf16.mxu0 0
        %2064 = vmatmul.mubr.bf16.gmra.mrb[0].mxu0 %v1553
        %v2065 = vpop.f32.mrb[0].mxu0
        %v2066 = vadd.f32 %v1050, %v2065
        %v2067 = vpop.f32.mrb[0].mxu0
        %v2068 = vpop.f32.mrb[0].mxu0
        %v2069 = vadd.f32 %v1050, %v2068
        %v2070 = vpop.f32.mrb[0].mxu0
        %2071 = vmatprep.mubr.bf16.mxu0 0
        %2072 = vmatmul.mubr.bf16.gmra.mrb[0].mxu0 %v1556
        %v2073 = vpop.f32.mrb[0].mxu0
        %v2074 = vadd.f32 %v1050, %v2073
        %v2075 = vpop.f32.mrb[0].mxu0
        %v2076 = vpop.f32.mrb[0].mxu0
        %v2077 = vadd.f32 %v1050, %v2076
        %v2078 = vpop.f32.mrb[0].mxu0
        %2079 = vmatprep.mubr.bf16.mxu0 0
        %2080 = vmatmul.mubr.bf16.gmra.mrb[0].mxu0 %v1559
        %v2081 = vpop.f32.mrb[0].mxu0
        %v2082 = vadd.f32 %v1050, %v2081
        %v2083 = vpop.f32.mrb[0].mxu0
        %v2084 = vpop.f32.mrb[0].mxu0
        %v2085 = vadd.f32 %v1050, %v2084
        %v2086 = vpop.f32.mrb[0].mxu0
        %2087 = vmatprep.mubr.bf16.mxu0 0
        %2088 = vmatmul.mubr.bf16.gmra.mrb[0].mxu0 %v1562
        %v2089 = vpop.f32.mrb[0].mxu0
        %v2090 = vadd.f32 %v1050, %v2089
        %v2091 = vpop.f32.mrb[0].mxu0
        %v2092 = vpop.f32.mrb[0].mxu0
        %v2093 = vadd.f32 %v1050, %v2092
        %v2094 = vpop.f32.mrb[0].mxu0
        %2095 = vmatprep.mubr.bf16.mxu0 0
        %2096 = vmatmul.mubr.bf16.gmra.mrb[0].mxu0 %v1565
        %v2097 = vpop.f32.mrb[0].mxu0
        %v2098 = vadd.f32 %v1050, %v2097
        %v2099 = vpop.f32.mrb[0].mxu0
        %v2100 = vpop.f32.mrb[0].mxu0
        %v2101 = vadd.f32 %v1050, %v2100
        %v2102 = vpop.f32.mrb[0].mxu0
        %2103 = vmatprep.mubr.bf16.mxu0 0
        %2104 = vmatmul.mubr.bf16.gmra.mrb[0].mxu0 %v1568
        %v2105 = vpop.f32.mrb[0].mxu0
        %v2106 = vadd.f32 %v1050, %v2105
        %v2107 = vpop.f32.mrb[0].mxu0
        %v2108 = vpop.f32.mrb[0].mxu0
        %v2109 = vadd.f32 %v1050, %v2108
        %v2110 = vpop.f32.mrb[0].mxu0
        %2111 = vmatprep.mubr.bf16.mxu0 0
        %2112 = vmatmul.mubr.bf16.gmra.mrb[0].mxu0 %v1571
        %v2113 = vpop.f32.mrb[0].mxu0
        %v2114 = vadd.f32 %v1050, %v2113
        %v2115 = vpop.f32.mrb[0].mxu0
        %v2116 = vpop.f32.mrb[0].mxu0
        %v2117 = vadd.f32 %v1050, %v2116
        %v2118 = vpop.f32.mrb[0].mxu0
        %2119 = vmatprep.mubr.bf16.mxu0 0
        %2120 = vmatmul.mubr.bf16.gmra.mrb[0].mxu0 %v1574
        %v2121 = vpop.f32.mrb[0].mxu0
        %v2122 = vadd.f32 %v1050, %v2121
        %v2123 = vpop.f32.mrb[0].mxu0
        %v2124 = vpop.f32.mrb[0].mxu0
        %v2125 = vadd.f32 %v1050, %v2124
        %v2126 = vpop.f32.mrb[0].mxu0
        %2127 = vdwg.mxu0
        %v2128 = vmax.f32 %v1618, 0.0
        %v2129 = vmax.f32 %v1621, 0.0
        %v2130 = vmax.f32 %v1626, 0.0
        %v2131 = vmax.f32 %v1629, 0.0
        %v2132 = vmax.f32 %v1634, 0.0
        %v2133 = vmax.f32 %v1637, 0.0
        %v2134 = vmax.f32 %v1642, 0.0
        %v2135 = vmax.f32 %v1645, 0.0
        %v2136 = vmax.f32 %v1650, 0.0
        %v2137 = vmax.f32 %v1653, 0.0
        %v2138 = vmax.f32 %v1658, 0.0
        %v2139 = vmax.f32 %v1661, 0.0
        %v2140 = vmax.f32 %v1666, 0.0
        %v2141 = vmax.f32 %v1669, 0.0
        %v2142 = vmax.f32 %v1674, 0.0
        %v2143 = vmax.f32 %v1677, 0.0
        %v2144 = vmax.f32 %v1682, 0.0
        %v2145 = vmax.f32 %v1685, 0.0
        %v2146 = vmax.f32 %v1690, 0.0
        %v2147 = vmax.f32 %v1693, 0.0
        %v2148 = vmax.f32 %v1698, 0.0
        %v2149 = vmax.f32 %v1701, 0.0
        %v2150 = vmax.f32 %v1706, 0.0
        %v2151 = vmax.f32 %v1709, 0.0
        %v2152 = vmax.f32 %v1714, 0.0
        %v2153 = vmax.f32 %v1717, 0.0
        %v2154 = vmax.f32 %v1722, 0.0
        %v2155 = vmax.f32 %v1725, 0.0
        %v2156 = vmax.f32 %v1730, 0.0
        %v2157 = vmax.f32 %v1733, 0.0
        %v2158 = vmax.f32 %v1738, 0.0
        %v2159 = vmax.f32 %v1741, 0.0
        %v2160 = vmax.f32 %v1746, 0.0
        %v2161 = vmax.f32 %v1749, 0.0
        %v2162 = vmax.f32 %v1754, 0.0
        %v2163 = vmax.f32 %v1757, 0.0
        %v2164 = vmax.f32 %v1762, 0.0
        %v2165 = vmax.f32 %v1765, 0.0
        %v2166 = vmax.f32 %v1770, 0.0
        %v2167 = vmax.f32 %v1773, 0.0
        %v2168 = vmax.f32 %v1778, 0.0
        %v2169 = vmax.f32 %v1781, 0.0
        %v2170 = vmax.f32 %v1786, 0.0
        %v2171 = vmax.f32 %v1789, 0.0
        %v2172 = vmax.f32 %v1794, 0.0
        %v2173 = vmax.f32 %v1797, 0.0
        %v2174 = vmax.f32 %v1802, 0.0
        %v2175 = vmax.f32 %v1805, 0.0
        %v2176 = vmax.f32 %v1810, 0.0
        %v2177 = vmax.f32 %v1813, 0.0
        %v2178 = vmax.f32 %v1818, 0.0
        %v2179 = vmax.f32 %v1821, 0.0
        %v2180 = vmax.f32 %v1826, 0.0
        %v2181 = vmax.f32 %v1829, 0.0
        %v2182 = vmax.f32 %v1834, 0.0
        %v2183 = vmax.f32 %v1837, 0.0
        %v2184 = vmax.f32 %v1842, 0.0
        %v2185 = vmax.f32 %v1845, 0.0
        %v2186 = vmax.f32 %v1850, 0.0
        %v2187 = vmax.f32 %v1853, 0.0
        %v2188 = vmax.f32 %v1858, 0.0
        %v2189 = vmax.f32 %v1861, 0.0
        %v2190 = vmax.f32 %v1866, 0.0
        %v2191 = vmax.f32 %v1869, 0.0
        %v2192 = vmax.f32 %v1874, 0.0
        %v2193 = vmax.f32 %v1877, 0.0
        %v2194 = vmax.f32 %v1882, 0.0
        %v2195 = vmax.f32 %v1885, 0.0
        %v2196 = vmax.f32 %v1890, 0.0
        %v2197 = vmax.f32 %v1893, 0.0
        %v2198 = vmax.f32 %v1898, 0.0
        %v2199 = vmax.f32 %v1901, 0.0
        %v2200 = vmax.f32 %v1906, 0.0
        %v2201 = vmax.f32 %v1909, 0.0
        %v2202 = vmax.f32 %v1914, 0.0
        %v2203 = vmax.f32 %v1917, 0.0
        %v2204 = vmax.f32 %v1922, 0.0
        %v2205 = vmax.f32 %v1925, 0.0
        %v2206 = vmax.f32 %v1930, 0.0
        %v2207 = vmax.f32 %v1933, 0.0
        %v2208 = vmax.f32 %v1938, 0.0
        %v2209 = vmax.f32 %v1941, 0.0
        %v2210 = vmax.f32 %v1946, 0.0
        %v2211 = vmax.f32 %v1949, 0.0
        %v2212 = vmax.f32 %v1954, 0.0
        %v2213 = vmax.f32 %v1957, 0.0
        %v2214 = vmax.f32 %v1962, 0.0
        %v2215 = vmax.f32 %v1965, 0.0
        %v2216 = vmax.f32 %v1970, 0.0
        %v2217 = vmax.f32 %v1973, 0.0
        %v2218 = vmax.f32 %v1978, 0.0
        %v2219 = vmax.f32 %v1981, 0.0
        %v2220 = vmax.f32 %v1986, 0.0
        %v2221 = vmax.f32 %v1989, 0.0
        %v2222 = vmax.f32 %v1994, 0.0
        %v2223 = vmax.f32 %v1997, 0.0
        %v2224 = vmax.f32 %v2002, 0.0
        %v2225 = vmax.f32 %v2005, 0.0
        %v2226 = vmax.f32 %v2010, 0.0
        %v2227 = vmax.f32 %v2013, 0.0
        %v2228 = vmax.f32 %v2018, 0.0
        %v2229 = vmax.f32 %v2021, 0.0
        %v2230 = vmax.f32 %v2026, 0.0
        %v2231 = vmax.f32 %v2029, 0.0
        %v2232 = vmax.f32 %v2034, 0.0
        %v2233 = vmax.f32 %v2037, 0.0
        %v2234 = vmax.f32 %v2042, 0.0
        %v2235 = vmax.f32 %v2045, 0.0
        %v2236 = vmax.f32 %v2050, 0.0
        %v2237 = vmax.f32 %v2053, 0.0
        %v2238 = vmax.f32 %v2058, 0.0
        %v2239 = vmax.f32 %v2061, 0.0
        %v2240 = vmax.f32 %v2066, 0.0
        %v2241 = vmax.f32 %v2069, 0.0
        %v2242 = vmax.f32 %v2074, 0.0
        %v2243 = vmax.f32 %v2077, 0.0
        %v2244 = vmax.f32 %v2082, 0.0
        %v2245 = vmax.f32 %v2085, 0.0
        %v2246 = vmax.f32 %v2090, 0.0
        %v2247 = vmax.f32 %v2093, 0.0
        %v2248 = vmax.f32 %v2098, 0.0
        %v2249 = vmax.f32 %v2101, 0.0
        %v2250 = vmax.f32 %v2106, 0.0
        %v2251 = vmax.f32 %v2109, 0.0
        %v2252 = vmax.f32 %v2114, 0.0
        %v2253 = vmax.f32 %v2117, 0.0
        %v2254 = vmax.f32 %v2122, 0.0
        %v2255 = vmax.f32 %v2125, 0.0
        %v2256 = vpack.c.bf16 %v2129, %v2128
        %v2257 = vpack.c.bf16 %v2131, %v2130
        %v2258 = vpack.c.bf16 %v2133, %v2132
        %v2259 = vpack.c.bf16 %v2135, %v2134
        %v2260 = vpack.c.bf16 %v2137, %v2136
        %v2261 = vpack.c.bf16 %v2139, %v2138
        %v2262 = vpack.c.bf16 %v2141, %v2140
        %v2263 = vpack.c.bf16 %v2143, %v2142
        %v2264 = vpack.c.bf16 %v2145, %v2144
        %v2265 = vpack.c.bf16 %v2147, %v2146
        %v2266 = vpack.c.bf16 %v2149, %v2148
        %v2267 = vpack.c.bf16 %v2151, %v2150
        %v2268 = vpack.c.bf16 %v2153, %v2152
        %v2269 = vpack.c.bf16 %v2155, %v2154
        %v2270 = vpack.c.bf16 %v2157, %v2156
        %v2271 = vpack.c.bf16 %v2159, %v2158
        %v2272 = vpack.c.bf16 %v2161, %v2160
        %v2273 = vpack.c.bf16 %v2163, %v2162
        %v2274 = vpack.c.bf16 %v2165, %v2164
        %v2275 = vpack.c.bf16 %v2167, %v2166
        %v2276 = vpack.c.bf16 %v2169, %v2168
        %v2277 = vpack.c.bf16 %v2171, %v2170
        %v2278 = vpack.c.bf16 %v2173, %v2172
        %v2279 = vpack.c.bf16 %v2175, %v2174
        %v2280 = vpack.c.bf16 %v2177, %v2176
        %v2281 = vpack.c.bf16 %v2179, %v2178
        %v2282 = vpack.c.bf16 %v2181, %v2180
        %v2283 = vpack.c.bf16 %v2183, %v2182
        %v2284 = vpack.c.bf16 %v2185, %v2184
        %v2285 = vpack.c.bf16 %v2187, %v2186
        %v2286 = vpack.c.bf16 %v2189, %v2188
        %v2287 = vpack.c.bf16 %v2191, %v2190
        %v2288 = vpack.c.bf16 %v2193, %v2192
        %v2289 = vpack.c.bf16 %v2195, %v2194
        %v2290 = vpack.c.bf16 %v2197, %v2196
        %v2291 = vpack.c.bf16 %v2199, %v2198
        %v2292 = vpack.c.bf16 %v2201, %v2200
        %v2293 = vpack.c.bf16 %v2203, %v2202
        %v2294 = vpack.c.bf16 %v2205, %v2204
        %v2295 = vpack.c.bf16 %v2207, %v2206
        %v2296 = vpack.c.bf16 %v2209, %v2208
        %v2297 = vpack.c.bf16 %v2211, %v2210
        %v2298 = vpack.c.bf16 %v2213, %v2212
        %v2299 = vpack.c.bf16 %v2215, %v2214
        %v2300 = vpack.c.bf16 %v2217, %v2216
        %v2301 = vpack.c.bf16 %v2219, %v2218
        %v2302 = vpack.c.bf16 %v2221, %v2220
        %v2303 = vpack.c.bf16 %v2223, %v2222
        %v2304 = vpack.c.bf16 %v2225, %v2224
        %v2305 = vpack.c.bf16 %v2227, %v2226
        %v2306 = vpack.c.bf16 %v2229, %v2228
        %v2307 = vpack.c.bf16 %v2231, %v2230
        %v2308 = vpack.c.bf16 %v2233, %v2232
        %v2309 = vpack.c.bf16 %v2235, %v2234
        %v2310 = vpack.c.bf16 %v2237, %v2236
        %v2311 = vpack.c.bf16 %v2239, %v2238
        %v2312 = vpack.c.bf16 %v2241, %v2240
        %v2313 = vpack.c.bf16 %v2243, %v2242
        %v2314 = vpack.c.bf16 %v2245, %v2244
        %v2315 = vpack.c.bf16 %v2247, %v2246
        %v2316 = vpack.c.bf16 %v2249, %v2248
        %v2317 = vpack.c.bf16 %v2251, %v2250
        %v2318 = vpack.c.bf16 %v2253, %v2252
        %v2319 = vpack.c.bf16 %v2255, %v2254
        %v2336 = vunpack.c.l.b16 %v2304
        %v2337 = vunpack.c.h.b16 %v2304
        %v2338 = vunpack.c.l.b16 %v2305
        %v2339 = vunpack.c.h.b16 %v2305
        %v2340 = vunpack.c.l.b16 %v2306
        %v2341 = vunpack.c.h.b16 %v2306
        %v2342 = vunpack.c.l.b16 %v2307
        %v2343 = vunpack.c.h.b16 %v2307
        %v2344 = vunpack.c.l.b16 %v2308
        %v2345 = vunpack.c.h.b16 %v2308
        %v2346 = vunpack.c.l.b16 %v2309
        %v2347 = vunpack.c.h.b16 %v2309
        %v2348 = vunpack.c.l.b16 %v2310
        %v2349 = vunpack.c.h.b16 %v2310
        %v2350 = vunpack.c.l.b16 %v2311
        %v2351 = vunpack.c.h.b16 %v2311
        %v2352 = vunpack.c.l.b16 %v2312
        %v2353 = vunpack.c.h.b16 %v2312
        %v2354 = vunpack.c.l.b16 %v2313
        %v2355 = vunpack.c.h.b16 %v2313
        %v2356 = vunpack.c.l.b16 %v2314
        %v2357 = vunpack.c.h.b16 %v2314
        %v2358 = vunpack.c.l.b16 %v2315
        %v2359 = vunpack.c.h.b16 %v2315
        %v2360 = vunpack.c.l.b16 %v2316
        %v2361 = vunpack.c.h.b16 %v2316
        %v2362 = vunpack.c.l.b16 %v2317
        %v2363 = vunpack.c.h.b16 %v2317
        %v2364 = vunpack.c.l.b16 %v2318
        %v2365 = vunpack.c.h.b16 %v2318
        %v2366 = vunpack.c.l.b16 %v2319
        %v2367 = vunpack.c.h.b16 %v2319
        %v2368 = vpack.c.b16 %v2336, %v2336
        %v2369 = vpack.c.b16 %v2337, %v2337
        %v2370 = vpack.c.b16 %v2338, %v2338
        %v2371 = vpack.c.b16 %v2339, %v2339
        %v2372 = vpack.c.b16 %v2340, %v2340
        %v2373 = vpack.c.b16 %v2341, %v2341
        %v2374 = vpack.c.b16 %v2342, %v2342
        %v2375 = vpack.c.b16 %v2343, %v2343
        %v2376 = vpack.c.b16 %v2344, %v2344
        %v2377 = vpack.c.b16 %v2345, %v2345
        %v2378 = vpack.c.b16 %v2346, %v2346
        %v2379 = vpack.c.b16 %v2347, %v2347
        %v2380 = vpack.c.b16 %v2348, %v2348
        %v2381 = vpack.c.b16 %v2349, %v2349
        %v2382 = vpack.c.b16 %v2350, %v2350
        %v2383 = vpack.c.b16 %v2351, %v2351
        %v2384 = vpack.c.b16 %v2352, %v2352
        %v2385 = vpack.c.b16 %v2353, %v2353
        %v2386 = vpack.c.b16 %v2354, %v2354
        %v2387 = vpack.c.b16 %v2355, %v2355
        %v2388 = vpack.c.b16 %v2356, %v2356
        %v2389 = vpack.c.b16 %v2357, %v2357
        %v2390 = vpack.c.b16 %v2358, %v2358
        %v2391 = vpack.c.b16 %v2359, %v2359
        %v2392 = vpack.c.b16 %v2360, %v2360
        %v2393 = vpack.c.b16 %v2361, %v2361
        %v2394 = vpack.c.b16 %v2362, %v2362
        %v2395 = vpack.c.b16 %v2363, %v2363
        %v2396 = vpack.c.b16 %v2364, %v2364
        %v2397 = vpack.c.b16 %v2365, %v2365
        %v2398 = vpack.c.b16 %v2366, %v2366
        %v2399 = vpack.c.b16 %v2367, %v2367
        %vm2400 = vsmask.f32 256
        %vm2401 = vsmask.f32 4368
        %vm2402 = vmor %vm2400, %vm2401
        %v2404 = vshrl.u32 %v2368, 16
        %v2406 = vrot.slane %v2404, 7
        %v2407 = vshll.u32 %v2368, 16
        %v2409 = vor.u32 %v2406, %v2407
        %v2410 = vrot.slane %v2406, 4
        %v2412 = vshrl.u32 %v2369, 16
        %v2414 = vrot.slane %v2412, 7
        %v2415 = vshll.u32 %v2369, 16
        %v2417 = vor.u32 %v2414, %v2415
        %v2418 = vsel %vm2402, %v2410, %v2417
        %v2419 = vrot.slane %v2414, 4
        %v2421 = vshrl.u32 %v2370, 16
        %v2423 = vrot.slane %v2421, 7
        %v2424 = vshll.u32 %v2370, 16
        %v2426 = vor.u32 %v2423, %v2424
        %v2427 = vrot.slane %v2423, 4
        %v2429 = vshrl.u32 %v2371, 16
        %v2431 = vrot.slane %v2429, 7
        %v2432 = vshll.u32 %v2371, 16
        %v2434 = vor.u32 %v2431, %v2432
        %v2435 = vsel %vm2402, %v2427, %v2434
        %v2436 = vrot.slane %v2431, 4
        %v2438 = vshrl.u32 %v2372, 16
        %v2440 = vrot.slane %v2438, 7
        %v2441 = vshll.u32 %v2372, 16
        %v2443 = vor.u32 %v2440, %v2441
        %v2444 = vrot.slane %v2440, 4
        %v2446 = vshrl.u32 %v2373, 16
        %v2448 = vrot.slane %v2446, 7
        %v2449 = vshll.u32 %v2373, 16
        %v2451 = vor.u32 %v2448, %v2449
        %v2452 = vsel %vm2402, %v2444, %v2451
        %v2453 = vrot.slane %v2448, 4
        %v2455 = vshrl.u32 %v2374, 16
        %v2457 = vrot.slane %v2455, 7
        %v2458 = vshll.u32 %v2374, 16
        %v2460 = vor.u32 %v2457, %v2458
        %v2461 = vrot.slane %v2457, 4
        %v2463 = vshrl.u32 %v2375, 16
        %v2465 = vrot.slane %v2463, 7
        %v2466 = vshll.u32 %v2375, 16
        %v2468 = vor.u32 %v2465, %v2466
        %v2469 = vsel %vm2402, %v2461, %v2468
        %v2470 = vrot.slane %v2465, 4
        %v2472 = vshrl.u32 %v2376, 16
        %v2474 = vrot.slane %v2472, 7
        %v2475 = vshll.u32 %v2376, 16
        %v2477 = vor.u32 %v2474, %v2475
        %v2478 = vrot.slane %v2474, 4
        %v2480 = vshrl.u32 %v2377, 16
        %v2482 = vrot.slane %v2480, 7
        %v2483 = vshll.u32 %v2377, 16
        %v2485 = vor.u32 %v2482, %v2483
        %v2486 = vsel %vm2402, %v2478, %v2485
        %v2487 = vrot.slane %v2482, 4
        %v2489 = vshrl.u32 %v2378, 16
        %v2491 = vrot.slane %v2489, 7
        %v2492 = vshll.u32 %v2378, 16
        %v2494 = vor.u32 %v2491, %v2492
        %v2495 = vrot.slane %v2491, 4
        %v2497 = vshrl.u32 %v2379, 16
        %v2499 = vrot.slane %v2497, 7
        %v2500 = vshll.u32 %v2379, 16
        %v2502 = vor.u32 %v2499, %v2500
        %v2503 = vsel %vm2402, %v2495, %v2502
        %v2504 = vrot.slane %v2499, 4
        %v2506 = vshrl.u32 %v2380, 16
        %v2508 = vrot.slane %v2506, 7
        %v2509 = vshll.u32 %v2380, 16
        %v2511 = vor.u32 %v2508, %v2509
        %v2512 = vrot.slane %v2508, 4
        %v2514 = vshrl.u32 %v2381, 16
        %v2516 = vrot.slane %v2514, 7
        %v2517 = vshll.u32 %v2381, 16
        %v2519 = vor.u32 %v2516, %v2517
        %v2520 = vsel %vm2402, %v2512, %v2519
        %v2521 = vrot.slane %v2516, 4
        %v2523 = vshrl.u32 %v2382, 16
        %v2525 = vrot.slane %v2523, 7
        %v2526 = vshll.u32 %v2382, 16
        %v2528 = vor.u32 %v2525, %v2526
        %v2529 = vrot.slane %v2525, 4
        %v2531 = vshrl.u32 %v2383, 16
        %v2533 = vrot.slane %v2531, 7
        %v2534 = vshll.u32 %v2383, 16
        %v2536 = vor.u32 %v2533, %v2534
        %v2537 = vsel %vm2402, %v2529, %v2536
        %v2538 = vrot.slane %v2533, 4
        %v2540 = vshrl.u32 %v2384, 16
        %v2542 = vrot.slane %v2540, 7
        %v2543 = vshll.u32 %v2384, 16
        %v2545 = vor.u32 %v2542, %v2543
        %v2546 = vrot.slane %v2542, 4
        %v2548 = vshrl.u32 %v2385, 16
        %v2550 = vrot.slane %v2548, 7
        %v2551 = vshll.u32 %v2385, 16
        %v2553 = vor.u32 %v2550, %v2551
        %v2554 = vsel %vm2402, %v2546, %v2553
        %v2555 = vrot.slane %v2550, 4
        %v2557 = vshrl.u32 %v2386, 16
        %v2559 = vrot.slane %v2557, 7
        %v2560 = vshll.u32 %v2386, 16
        %v2562 = vor.u32 %v2559, %v2560
        %v2563 = vrot.slane %v2559, 4
        %v2565 = vshrl.u32 %v2387, 16
        %v2567 = vrot.slane %v2565, 7
        %v2568 = vshll.u32 %v2387, 16
        %v2570 = vor.u32 %v2567, %v2568
        %v2571 = vsel %vm2402, %v2563, %v2570
        %v2572 = vrot.slane %v2567, 4
        %v2574 = vshrl.u32 %v2388, 16
        %v2576 = vrot.slane %v2574, 7
        %v2577 = vshll.u32 %v2388, 16
        %v2579 = vor.u32 %v2576, %v2577
        %v2580 = vrot.slane %v2576, 4
        %v2582 = vshrl.u32 %v2389, 16
        %v2584 = vrot.slane %v2582, 7
        %v2585 = vshll.u32 %v2389, 16
        %v2587 = vor.u32 %v2584, %v2585
        %v2588 = vsel %vm2402, %v2580, %v2587
        %v2589 = vrot.slane %v2584, 4
        %v2591 = vshrl.u32 %v2390, 16
        %v2593 = vrot.slane %v2591, 7
        %v2594 = vshll.u32 %v2390, 16
        %v2596 = vor.u32 %v2593, %v2594
        %v2597 = vrot.slane %v2593, 4
        %v2599 = vshrl.u32 %v2391, 16
        %v2601 = vrot.slane %v2599, 7
        %v2602 = vshll.u32 %v2391, 16
        %v2604 = vor.u32 %v2601, %v2602
        %v2605 = vsel %vm2402, %v2597, %v2604
        %v2606 = vrot.slane %v2601, 4
        %v2608 = vshrl.u32 %v2392, 16
        %v2610 = vrot.slane %v2608, 7
        %v2611 = vshll.u32 %v2392, 16
        %v2613 = vor.u32 %v2610, %v2611
        %v2614 = vrot.slane %v2610, 4
        %v2616 = vshrl.u32 %v2393, 16
        %v2618 = vrot.slane %v2616, 7
        %v2619 = vshll.u32 %v2393, 16
        %v2621 = vor.u32 %v2618, %v2619
        %v2622 = vsel %vm2402, %v2614, %v2621
        %v2623 = vrot.slane %v2618, 4
        %v2625 = vshrl.u32 %v2394, 16
        %v2627 = vrot.slane %v2625, 7
        %v2628 = vshll.u32 %v2394, 16
        %v2630 = vor.u32 %v2627, %v2628
        %v2631 = vrot.slane %v2627, 4
        %v2633 = vshrl.u32 %v2395, 16
        %v2635 = vrot.slane %v2633, 7
        %v2636 = vshll.u32 %v2395, 16
        %v2638 = vor.u32 %v2635, %v2636
        %v2639 = vsel %vm2402, %v2631, %v2638
        %v2640 = vrot.slane %v2635, 4
        %v2642 = vshrl.u32 %v2396, 16
        %v2644 = vrot.slane %v2642, 7
        %v2645 = vshll.u32 %v2396, 16
        %v2647 = vor.u32 %v2644, %v2645
        %v2648 = vrot.slane %v2644, 4
        %v2650 = vshrl.u32 %v2397, 16
        %v2652 = vrot.slane %v2650, 7
        %v2653 = vshll.u32 %v2397, 16
        %v2655 = vor.u32 %v2652, %v2653
        %v2656 = vsel %vm2402, %v2648, %v2655
        %v2657 = vrot.slane %v2652, 4
        %v2659 = vshrl.u32 %v2398, 16
        %v2661 = vrot.slane %v2659, 7
        %v2662 = vshll.u32 %v2398, 16
        %v2664 = vor.u32 %v2661, %v2662
        %v2665 = vrot.slane %v2661, 4
        %v2667 = vshrl.u32 %v2399, 16
        %v2669 = vrot.slane %v2667, 7
        %v2670 = vshll.u32 %v2399, 16
        %v2672 = vor.u32 %v2669, %v2670
        %v2673 = vsel %vm2402, %v2665, %v2672
        %v2674 = vrot.slane %v2669, 4
        %s2723 = scalar_lea.vmem [#allocation2], 12
        %vm2724 = vcmask 125952
        %vm2725 = vsmask.f32 7938
        %vm2726 = vmand %vm2724, %vm2725
        %v2727 = vld [vmem:[%s2723] sm:$0xf]
        %v2728 = vsel %vm2726, %v2409, %v2727
        %2729 = vst [vmem:[%s2723] sm:$0xf] %v2728
        %vm2730 = vcmask 125952
        %2731 = vst.msk [vmem:[%s2723 + $0x4] sm:$0xf] %vm2730, %v2418
        %vm2732 = vcmask 122880
        %vm2733 = vmand %vm2732, %vm2400
        %v2734 = vld [vmem:[%s2723 + $0x8] sm:$0x1]
        %v2735 = vsel %vm2733, %v2419, %v2734
        %2736 = vst [vmem:[%s2723 + $0x8] sm:$0x1] %v2735
        %v2737 = vld [vmem:[%s2723 + $0xc] sm:$0xf]
        %v2738 = vsel %vm2726, %v2426, %v2737
        %2739 = vst [vmem:[%s2723 + $0xc] sm:$0xf] %v2738
        %2740 = vst.msk [vmem:[%s2723 + $0x10] sm:$0xf] %vm2730, %v2435
        %v2741 = vld [vmem:[%s2723 + $0x14] sm:$0x1]
        %v2742 = vsel %vm2733, %v2436, %v2741
        %2743 = vst [vmem:[%s2723 + $0x14] sm:$0x1] %v2742
        %v2744 = vld [vmem:[%s2723 + $0x18] sm:$0xf]
        %v2745 = vsel %vm2726, %v2443, %v2744
        %2746 = vst [vmem:[%s2723 + $0x18] sm:$0xf] %v2745
        %2747 = vst.msk [vmem:[%s2723 + $0x1c] sm:$0xf] %vm2730, %v2452
        %v2748 = vld [vmem:[%s2723 + $0x20] sm:$0x1]
        %v2749 = vsel %vm2733, %v2453, %v2748
        %2750 = vst [vmem:[%s2723 + $0x20] sm:$0x1] %v2749
        %v2751 = vld [vmem:[%s2723 + $0x24] sm:$0xf]
        %v2752 = vsel %vm2726, %v2460, %v2751
        %2753 = vst [vmem:[%s2723 + $0x24] sm:$0xf] %v2752
        %2754 = vst.msk [vmem:[%s2723 + $0x28] sm:$0xf] %vm2730, %v2469
        %v2755 = vld [vmem:[%s2723 + $0x2c] sm:$0x1]
        %v2756 = vsel %vm2733, %v2470, %v2755
        %2757 = vst [vmem:[%s2723 + $0x2c] sm:$0x1] %v2756
        %v2758 = vld [vmem:[%s2723 + $0x30] sm:$0xf]
        %v2759 = vsel %vm2726, %v2477, %v2758
        %2760 = vst [vmem:[%s2723 + $0x30] sm:$0xf] %v2759
        %2761 = vst.msk [vmem:[%s2723 + $0x34] sm:$0xf] %vm2730, %v2486
        %v2762 = vld [vmem:[%s2723 + $0x38] sm:$0x1]
        %v2763 = vsel %vm2733, %v2487, %v2762
        %2764 = vst [vmem:[%s2723 + $0x38] sm:$0x1] %v2763
        %v2765 = vld [vmem:[%s2723 + $0x3c] sm:$0xf]
        %v2766 = vsel %vm2726, %v2494, %v2765
        %2767 = vst [vmem:[%s2723 + $0x3c] sm:$0xf] %v2766
        %2768 = vst.msk [vmem:[%s2723 + $0x40] sm:$0xf] %vm2730, %v2503
        %v2769 = vld [vmem:[%s2723 + $0x44] sm:$0x1]
        %v2770 = vsel %vm2733, %v2504, %v2769
        %2771 = vst [vmem:[%s2723 + $0x44] sm:$0x1] %v2770
        %v2772 = vld [vmem:[%s2723 + $0x48] sm:$0xf]
        %v2773 = vsel %vm2726, %v2511, %v2772
        %2774 = vst [vmem:[%s2723 + $0x48] sm:$0xf] %v2773
        %2775 = vst.msk [vmem:[%s2723 + $0x4c] sm:$0xf] %vm2730, %v2520
        %v2776 = vld [vmem:[%s2723 + $0x50] sm:$0x1]
        %v2777 = vsel %vm2733, %v2521, %v2776
        %2778 = vst [vmem:[%s2723 + $0x50] sm:$0x1] %v2777
        %v2779 = vld [vmem:[%s2723 + $0x54] sm:$0xf]
        %v2780 = vsel %vm2726, %v2528, %v2779
        %2781 = vst [vmem:[%s2723 + $0x54] sm:$0xf] %v2780
        %2782 = vst.msk [vmem:[%s2723 + $0x58] sm:$0xf] %vm2730, %v2537
        %v2783 = vld [vmem:[%s2723 + $0x5c] sm:$0x1]
        %v2784 = vsel %vm2733, %v2538, %v2783
        %2785 = vst [vmem:[%s2723 + $0x5c] sm:$0x1] %v2784
        %v2786 = vld [vmem:[%s2723 + $0x60] sm:$0xf]
        %v2787 = vsel %vm2726, %v2545, %v2786
        %2788 = vst [vmem:[%s2723 + $0x60] sm:$0xf] %v2787
        %2789 = vst.msk [vmem:[%s2723 + $0x64] sm:$0xf] %vm2730, %v2554
        %v2790 = vld [vmem:[%s2723 + $0x68] sm:$0x1]
        %v2791 = vsel %vm2733, %v2555, %v2790
        %2792 = vst [vmem:[%s2723 + $0x68] sm:$0x1] %v2791
        %v2793 = vld [vmem:[%s2723 + $0x6c] sm:$0xf]
        %v2794 = vsel %vm2726, %v2562, %v2793
        %2795 = vst [vmem:[%s2723 + $0x6c] sm:$0xf] %v2794
        %2796 = vst.msk [vmem:[%s2723 + $0x70] sm:$0xf] %vm2730, %v2571
        %v2797 = vld [vmem:[%s2723 + $0x74] sm:$0x1]
        %v2798 = vsel %vm2733, %v2572, %v2797
        %2799 = vst [vmem:[%s2723 + $0x74] sm:$0x1] %v2798
        %v2800 = vld [vmem:[%s2723 + $0x78] sm:$0xf]
        %v2801 = vsel %vm2726, %v2579, %v2800
        %2802 = vst [vmem:[%s2723 + $0x78] sm:$0xf] %v2801
        %2803 = vst.msk [vmem:[%s2723 + $0x7c] sm:$0xf] %vm2730, %v2588
        %v2804 = vld [vmem:[%s2723 + $0x80] sm:$0x1]
        %v2805 = vsel %vm2733, %v2589, %v2804
        %2806 = vst [vmem:[%s2723 + $0x80] sm:$0x1] %v2805
        %v2807 = vld [vmem:[%s2723 + $0x84] sm:$0xf]
        %v2808 = vsel %vm2726, %v2596, %v2807
        %2809 = vst [vmem:[%s2723 + $0x84] sm:$0xf] %v2808
        %2810 = vst.msk [vmem:[%s2723 + $0x88] sm:$0xf] %vm2730, %v2605
        %v2811 = vld [vmem:[%s2723 + $0x8c] sm:$0x1]
        %v2812 = vsel %vm2733, %v2606, %v2811
        %2813 = vst [vmem:[%s2723 + $0x8c] sm:$0x1] %v2812
        %v2814 = vld [vmem:[%s2723 + $0x90] sm:$0xf]
        %v2815 = vsel %vm2726, %v2613, %v2814
        %2816 = vst [vmem:[%s2723 + $0x90] sm:$0xf] %v2815
        %2817 = vst.msk [vmem:[%s2723 + $0x94] sm:$0xf] %vm2730, %v2622
        %v2818 = vld [vmem:[%s2723 + $0x98] sm:$0x1]
        %v2819 = vsel %vm2733, %v2623, %v2818
        %2820 = vst [vmem:[%s2723 + $0x98] sm:$0x1] %v2819
        %v2821 = vld [vmem:[%s2723 + $0x9c] sm:$0xf]
        %v2822 = vsel %vm2726, %v2630, %v2821
        %2823 = vst [vmem:[%s2723 + $0x9c] sm:$0xf] %v2822
        %2824 = vst.msk [vmem:[%s2723 + $0xa0] sm:$0xf] %vm2730, %v2639
        %v2825 = vld [vmem:[%s2723 + $0xa4] sm:$0x1]
        %v2826 = vsel %vm2733, %v2640, %v2825
        %2827 = vst [vmem:[%s2723 + $0xa4] sm:$0x1] %v2826
        %v2828 = vld [vmem:[%s2723 + $0xa8] sm:$0xf]
        %v2829 = vsel %vm2726, %v2647, %v2828
        %2830 = vst [vmem:[%s2723 + $0xa8] sm:$0xf] %v2829
        %2831 = vst.msk [vmem:[%s2723 + $0xac] sm:$0xf] %vm2730, %v2656
        %v2832 = vld [vmem:[%s2723 + $0xb0] sm:$0x1]
        %v2833 = vsel %vm2733, %v2657, %v2832
        %2834 = vst [vmem:[%s2723 + $0xb0] sm:$0x1] %v2833
        %v2835 = vld [vmem:[%s2723 + $0xb4] sm:$0xf]
        %v2836 = vsel %vm2726, %v2664, %v2835
        %2837 = vst [vmem:[%s2723 + $0xb4] sm:$0xf] %v2836
        %2838 = vst.msk [vmem:[%s2723 + $0xb8] sm:$0xf] %vm2730, %v2673
        %v2839 = vld [vmem:[%s2723 + $0xbc] sm:$0x1]
        %v2840 = vsel %vm2733, %v2674, %v2839
        %2841 = vst [vmem:[%s2723 + $0xbc] sm:$0x1] %v2840
        %v2858 = vunpack.c.l.b16 %v2288
        %v2859 = vunpack.c.h.b16 %v2288
        %v2860 = vunpack.c.l.b16 %v2289
        %v2861 = vunpack.c.h.b16 %v2289
        %v2862 = vunpack.c.l.b16 %v2290
        %v2863 = vunpack.c.h.b16 %v2290
        %v2864 = vunpack.c.l.b16 %v2291
        %v2865 = vunpack.c.h.b16 %v2291
        %v2866 = vunpack.c.l.b16 %v2292
        %v2867 = vunpack.c.h.b16 %v2292
        %v2868 = vunpack.c.l.b16 %v2293
        %v2869 = vunpack.c.h.b16 %v2293
        %v2870 = vunpack.c.l.b16 %v2294
        %v2871 = vunpack.c.h.b16 %v2294
        %v2872 = vunpack.c.l.b16 %v2295
        %v2873 = vunpack.c.h.b16 %v2295
        %v2874 = vunpack.c.l.b16 %v2296
        %v2875 = vunpack.c.h.b16 %v2296
        %v2876 = vunpack.c.l.b16 %v2297
        %v2877 = vunpack.c.h.b16 %v2297
        %v2878 = vunpack.c.l.b16 %v2298
        %v2879 = vunpack.c.h.b16 %v2298
        %v2880 = vunpack.c.l.b16 %v2299
        %v2881 = vunpack.c.h.b16 %v2299
        %v2882 = vunpack.c.l.b16 %v2300
        %v2883 = vunpack.c.h.b16 %v2300
        %v2884 = vunpack.c.l.b16 %v2301
        %v2885 = vunpack.c.h.b16 %v2301
        %v2886 = vunpack.c.l.b16 %v2302
        %v2887 = vunpack.c.h.b16 %v2302
        %v2888 = vunpack.c.l.b16 %v2303
        %v2889 = vunpack.c.h.b16 %v2303
        %v2890 = vpack.c.b16 %v2858, %v2858
        %v2891 = vpack.c.b16 %v2859, %v2859
        %v2892 = vpack.c.b16 %v2860, %v2860
        %v2893 = vpack.c.b16 %v2861, %v2861
        %v2894 = vpack.c.b16 %v2862, %v2862
        %v2895 = vpack.c.b16 %v2863, %v2863
        %v2896 = vpack.c.b16 %v2864, %v2864
        %v2897 = vpack.c.b16 %v2865, %v2865
        %v2898 = vpack.c.b16 %v2866, %v2866
        %v2899 = vpack.c.b16 %v2867, %v2867
        %v2900 = vpack.c.b16 %v2868, %v2868
        %v2901 = vpack.c.b16 %v2869, %v2869
        %v2902 = vpack.c.b16 %v2870, %v2870
        %v2903 = vpack.c.b16 %v2871, %v2871
        %v2904 = vpack.c.b16 %v2872, %v2872
        %v2905 = vpack.c.b16 %v2873, %v2873
        %v2906 = vpack.c.b16 %v2874, %v2874
        %v2907 = vpack.c.b16 %v2875, %v2875
        %v2908 = vpack.c.b16 %v2876, %v2876
        %v2909 = vpack.c.b16 %v2877, %v2877
        %v2910 = vpack.c.b16 %v2878, %v2878
        %v2911 = vpack.c.b16 %v2879, %v2879
        %v2912 = vpack.c.b16 %v2880, %v2880
        %v2913 = vpack.c.b16 %v2881, %v2881
        %v2914 = vpack.c.b16 %v2882, %v2882
        %v2915 = vpack.c.b16 %v2883, %v2883
        %v2916 = vpack.c.b16 %v2884, %v2884
        %v2917 = vpack.c.b16 %v2885, %v2885
        %v2918 = vpack.c.b16 %v2886, %v2886
        %v2919 = vpack.c.b16 %v2887, %v2887
        %v2920 = vpack.c.b16 %v2888, %v2888
        %v2921 = vpack.c.b16 %v2889, %v2889
        %s2954 = scalar_lea.vmem [#allocation2], 216
        %2955 = vst.msk [vmem:[%s2954] sm:$0xf] %vm2730, %v2890
        %2956 = vst.msk [vmem:[%s2954 + $0x4] sm:$0xf] %vm2730, %v2891
        %2957 = vst.msk [vmem:[%s2954 + $0xc] sm:$0xf] %vm2730, %v2892
        %2958 = vst.msk [vmem:[%s2954 + $0x10] sm:$0xf] %vm2730, %v2893
        %2959 = vst.msk [vmem:[%s2954 + $0x18] sm:$0xf] %vm2730, %v2894
        %2960 = vst.msk [vmem:[%s2954 + $0x1c] sm:$0xf] %vm2730, %v2895
        %2961 = vst.msk [vmem:[%s2954 + $0x24] sm:$0xf] %vm2730, %v2896
        %2962 = vst.msk [vmem:[%s2954 + $0x28] sm:$0xf] %vm2730, %v2897
        %2963 = vst.msk [vmem:[%s2954 + $0x30] sm:$0xf] %vm2730, %v2898
        %2964 = vst.msk [vmem:[%s2954 + $0x34] sm:$0xf] %vm2730, %v2899
        %2965 = vst.msk [vmem:[%s2954 + $0x3c] sm:$0xf] %vm2730, %v2900
        %2966 = vst.msk [vmem:[%s2954 + $0x40] sm:$0xf] %vm2730, %v2901
        %2967 = vst.msk [vmem:[%s2954 + $0x48] sm:$0xf] %vm2730, %v2902
        %2968 = vst.msk [vmem:[%s2954 + $0x4c] sm:$0xf] %vm2730, %v2903
        %2969 = vst.msk [vmem:[%s2954 + $0x54] sm:$0xf] %vm2730, %v2904
        %2970 = vst.msk [vmem:[%s2954 + $0x58] sm:$0xf] %vm2730, %v2905
        %2971 = vst.msk [vmem:[%s2954 + $0x60] sm:$0xf] %vm2730, %v2906
        %2972 = vst.msk [vmem:[%s2954 + $0x64] sm:$0xf] %vm2730, %v2907
        %2973 = vst.msk [vmem:[%s2954 + $0x6c] sm:$0xf] %vm2730, %v2908
        %2974 = vst.msk [vmem:[%s2954 + $0x70] sm:$0xf] %vm2730, %v2909
        %2975 = vst.msk [vmem:[%s2954 + $0x78] sm:$0xf] %vm2730, %v2910
        %2976 = vst.msk [vmem:[%s2954 + $0x7c] sm:$0xf] %vm2730, %v2911
        %2977 = vst.msk [vmem:[%s2954 + $0x84] sm:$0xf] %vm2730, %v2912
        %2978 = vst.msk [vmem:[%s2954 + $0x88] sm:$0xf] %vm2730, %v2913
        %2979 = vst.msk [vmem:[%s2954 + $0x90] sm:$0xf] %vm2730, %v2914
        %2980 = vst.msk [vmem:[%s2954 + $0x94] sm:$0xf] %vm2730, %v2915
        %2981 = vst.msk [vmem:[%s2954 + $0x9c] sm:$0xf] %vm2730, %v2916
        %2982 = vst.msk [vmem:[%s2954 + $0xa0] sm:$0xf] %vm2730, %v2917
        %2983 = vst.msk [vmem:[%s2954 + $0xa8] sm:$0xf] %vm2730, %v2918
        %2984 = vst.msk [vmem:[%s2954 + $0xac] sm:$0xf] %vm2730, %v2919
        %2985 = vst.msk [vmem:[%s2954 + $0xb4] sm:$0xf] %vm2730, %v2920
        %2986 = vst.msk [vmem:[%s2954 + $0xb8] sm:$0xf] %vm2730, %v2921
        %v3003 = vunpack.c.l.b16 %v2272
        %v3004 = vunpack.c.h.b16 %v2272
        %v3005 = vunpack.c.l.b16 %v2273
        %v3006 = vunpack.c.h.b16 %v2273
        %v3007 = vunpack.c.l.b16 %v2274
        %v3008 = vunpack.c.h.b16 %v2274
        %v3009 = vunpack.c.l.b16 %v2275
        %v3010 = vunpack.c.h.b16 %v2275
        %v3011 = vunpack.c.l.b16 %v2276
        %v3012 = vunpack.c.h.b16 %v2276
        %v3013 = vunpack.c.l.b16 %v2277
        %v3014 = vunpack.c.h.b16 %v2277
        %v3015 = vunpack.c.l.b16 %v2278
        %v3016 = vunpack.c.h.b16 %v2278
        %v3017 = vunpack.c.l.b16 %v2279
        %v3018 = vunpack.c.h.b16 %v2279
        %v3019 = vunpack.c.l.b16 %v2280
        %v3020 = vunpack.c.h.b16 %v2280
        %v3021 = vunpack.c.l.b16 %v2281
        %v3022 = vunpack.c.h.b16 %v2281
        %v3023 = vunpack.c.l.b16 %v2282
        %v3024 = vunpack.c.h.b16 %v2282
        %v3025 = vunpack.c.l.b16 %v2283
        %v3026 = vunpack.c.h.b16 %v2283
        %v3027 = vunpack.c.l.b16 %v2284
        %v3028 = vunpack.c.h.b16 %v2284
        %v3029 = vunpack.c.l.b16 %v2285
        %v3030 = vunpack.c.h.b16 %v2285
        %v3031 = vunpack.c.l.b16 %v2286
        %v3032 = vunpack.c.h.b16 %v2286
        %v3033 = vunpack.c.l.b16 %v2287
        %v3034 = vunpack.c.h.b16 %v2287
        %v3035 = vpack.c.b16 %v3003, %v3003
        %v3036 = vpack.c.b16 %v3004, %v3004
        %v3037 = vpack.c.b16 %v3005, %v3005
        %v3038 = vpack.c.b16 %v3006, %v3006
        %v3039 = vpack.c.b16 %v3007, %v3007
        %v3040 = vpack.c.b16 %v3008, %v3008
        %v3041 = vpack.c.b16 %v3009, %v3009
        %v3042 = vpack.c.b16 %v3010, %v3010
        %v3043 = vpack.c.b16 %v3011, %v3011
        %v3044 = vpack.c.b16 %v3012, %v3012
        %v3045 = vpack.c.b16 %v3013, %v3013
        %v3046 = vpack.c.b16 %v3014, %v3014
        %v3047 = vpack.c.b16 %v3015, %v3015
        %v3048 = vpack.c.b16 %v3016, %v3016
        %v3049 = vpack.c.b16 %v3017, %v3017
        %v3050 = vpack.c.b16 %v3018, %v3018
        %v3051 = vpack.c.b16 %v3019, %v3019
        %v3052 = vpack.c.b16 %v3020, %v3020
        %v3053 = vpack.c.b16 %v3021, %v3021
        %v3054 = vpack.c.b16 %v3022, %v3022
        %v3055 = vpack.c.b16 %v3023, %v3023
        %v3056 = vpack.c.b16 %v3024, %v3024
        %v3057 = vpack.c.b16 %v3025, %v3025
        %v3058 = vpack.c.b16 %v3026, %v3026
        %v3059 = vpack.c.b16 %v3027, %v3027
        %v3060 = vpack.c.b16 %v3028, %v3028
        %v3061 = vpack.c.b16 %v3029, %v3029
        %v3062 = vpack.c.b16 %v3030, %v3030
        %v3063 = vpack.c.b16 %v3031, %v3031
        %v3064 = vpack.c.b16 %v3032, %v3032
        %v3065 = vpack.c.b16 %v3033, %v3033
        %v3066 = vpack.c.b16 %v3034, %v3034
        %v3068 = vshrl.u32 %v3035, 16
        %v3070 = vrot.slane %v3068, 7
        %v3071 = vshll.u32 %v3035, 16
        %v3073 = vor.u32 %v3070, %v3071
        %v3074 = vrot.slane %v3070, 4
        %v3076 = vshrl.u32 %v3036, 16
        %v3078 = vrot.slane %v3076, 7
        %v3079 = vshll.u32 %v3036, 16
        %v3081 = vor.u32 %v3078, %v3079
        %v3082 = vsel %vm2402, %v3074, %v3081
        %v3083 = vrot.slane %v3078, 4
        %v3085 = vshrl.u32 %v3037, 16
        %v3087 = vrot.slane %v3085, 7
        %v3088 = vshll.u32 %v3037, 16
        %v3090 = vor.u32 %v3087, %v3088
        %v3091 = vrot.slane %v3087, 4
        %v3093 = vshrl.u32 %v3038, 16
        %v3095 = vrot.slane %v3093, 7
        %v3096 = vshll.u32 %v3038, 16
        %v3098 = vor.u32 %v3095, %v3096
        %v3099 = vsel %vm2402, %v3091, %v3098
        %v3100 = vrot.slane %v3095, 4
        %v3102 = vshrl.u32 %v3039, 16
        %v3104 = vrot.slane %v3102, 7
        %v3105 = vshll.u32 %v3039, 16
        %v3107 = vor.u32 %v3104, %v3105
        %v3108 = vrot.slane %v3104, 4
        %v3110 = vshrl.u32 %v3040, 16
        %v3112 = vrot.slane %v3110, 7
        %v3113 = vshll.u32 %v3040, 16
        %v3115 = vor.u32 %v3112, %v3113
        %v3116 = vsel %vm2402, %v3108, %v3115
        %v3117 = vrot.slane %v3112, 4
        %v3119 = vshrl.u32 %v3041, 16
        %v3121 = vrot.slane %v3119, 7
        %v3122 = vshll.u32 %v3041, 16
        %v3124 = vor.u32 %v3121, %v3122
        %v3125 = vrot.slane %v3121, 4
        %v3127 = vshrl.u32 %v3042, 16
        %v3129 = vrot.slane %v3127, 7
        %v3130 = vshll.u32 %v3042, 16
        %v3132 = vor.u32 %v3129, %v3130
        %v3133 = vsel %vm2402, %v3125, %v3132
        %v3134 = vrot.slane %v3129, 4
        %v3136 = vshrl.u32 %v3043, 16
        %v3138 = vrot.slane %v3136, 7
        %v3139 = vshll.u32 %v3043, 16
        %v3141 = vor.u32 %v3138, %v3139
        %v3142 = vrot.slane %v3138, 4
        %v3144 = vshrl.u32 %v3044, 16
        %v3146 = vrot.slane %v3144, 7
        %v3147 = vshll.u32 %v3044, 16
        %v3149 = vor.u32 %v3146, %v3147
        %v3150 = vsel %vm2402, %v3142, %v3149
        %v3151 = vrot.slane %v3146, 4
        %v3153 = vshrl.u32 %v3045, 16
        %v3155 = vrot.slane %v3153, 7
        %v3156 = vshll.u32 %v3045, 16
        %v3158 = vor.u32 %v3155, %v3156
        %v3159 = vrot.slane %v3155, 4
        %v3161 = vshrl.u32 %v3046, 16
        %v3163 = vrot.slane %v3161, 7
        %v3164 = vshll.u32 %v3046, 16
        %v3166 = vor.u32 %v3163, %v3164
        %v3167 = vsel %vm2402, %v3159, %v3166
        %v3168 = vrot.slane %v3163, 4
        %v3170 = vshrl.u32 %v3047, 16
        %v3172 = vrot.slane %v3170, 7
        %v3173 = vshll.u32 %v3047, 16
        %v3175 = vor.u32 %v3172, %v3173
        %v3176 = vrot.slane %v3172, 4
        %v3178 = vshrl.u32 %v3048, 16
        %v3180 = vrot.slane %v3178, 7
        %v3181 = vshll.u32 %v3048, 16
        %v3183 = vor.u32 %v3180, %v3181
        %v3184 = vsel %vm2402, %v3176, %v3183
        %v3185 = vrot.slane %v3180, 4
        %v3187 = vshrl.u32 %v3049, 16
        %v3189 = vrot.slane %v3187, 7
        %v3190 = vshll.u32 %v3049, 16
        %v3192 = vor.u32 %v3189, %v3190
        %v3193 = vrot.slane %v3189, 4
        %v3195 = vshrl.u32 %v3050, 16
        %v3197 = vrot.slane %v3195, 7
        %v3198 = vshll.u32 %v3050, 16
        %v3200 = vor.u32 %v3197, %v3198
        %v3201 = vsel %vm2402, %v3193, %v3200
        %v3202 = vrot.slane %v3197, 4
        %v3204 = vshrl.u32 %v3051, 16
        %v3206 = vrot.slane %v3204, 7
        %v3207 = vshll.u32 %v3051, 16
        %v3209 = vor.u32 %v3206, %v3207
        %v3210 = vrot.slane %v3206, 4
        %v3212 = vshrl.u32 %v3052, 16
        %v3214 = vrot.slane %v3212, 7
        %v3215 = vshll.u32 %v3052, 16
        %v3217 = vor.u32 %v3214, %v3215
        %v3218 = vsel %vm2402, %v3210, %v3217
        %v3219 = vrot.slane %v3214, 4
        %v3221 = vshrl.u32 %v3053, 16
        %v3223 = vrot.slane %v3221, 7
        %v3224 = vshll.u32 %v3053, 16
        %v3226 = vor.u32 %v3223, %v3224
        %v3227 = vrot.slane %v3223, 4
        %v3229 = vshrl.u32 %v3054, 16
        %v3231 = vrot.slane %v3229, 7
        %v3232 = vshll.u32 %v3054, 16
        %v3234 = vor.u32 %v3231, %v3232
        %v3235 = vsel %vm2402, %v3227, %v3234
        %v3236 = vrot.slane %v3231, 4
        %v3238 = vshrl.u32 %v3055, 16
        %v3240 = vrot.slane %v3238, 7
        %v3241 = vshll.u32 %v3055, 16
        %v3243 = vor.u32 %v3240, %v3241
        %v3244 = vrot.slane %v3240, 4
        %v3246 = vshrl.u32 %v3056, 16
        %v3248 = vrot.slane %v3246, 7
        %v3249 = vshll.u32 %v3056, 16
        %v3251 = vor.u32 %v3248, %v3249
        %v3252 = vsel %vm2402, %v3244, %v3251
        %v3253 = vrot.slane %v3248, 4
        %v3255 = vshrl.u32 %v3057, 16
        %v3257 = vrot.slane %v3255, 7
        %v3258 = vshll.u32 %v3057, 16
        %v3260 = vor.u32 %v3257, %v3258
        %v3261 = vrot.slane %v3257, 4
        %v3263 = vshrl.u32 %v3058, 16
        %v3265 = vrot.slane %v3263, 7
        %v3266 = vshll.u32 %v3058, 16
        %v3268 = vor.u32 %v3265, %v3266
        %v3269 = vsel %vm2402, %v3261, %v3268
        %v3270 = vrot.slane %v3265, 4
        %v3272 = vshrl.u32 %v3059, 16
        %v3274 = vrot.slane %v3272, 7
        %v3275 = vshll.u32 %v3059, 16
        %v3277 = vor.u32 %v3274, %v3275
        %v3278 = vrot.slane %v3274, 4
        %v3280 = vshrl.u32 %v3060, 16
        %v3282 = vrot.slane %v3280, 7
        %v3283 = vshll.u32 %v3060, 16
        %v3285 = vor.u32 %v3282, %v3283
        %v3286 = vsel %vm2402, %v3278, %v3285
        %v3287 = vrot.slane %v3282, 4
        %v3289 = vshrl.u32 %v3061, 16
        %v3291 = vrot.slane %v3289, 7
        %v3292 = vshll.u32 %v3061, 16
        %v3294 = vor.u32 %v3291, %v3292
        %v3295 = vrot.slane %v3291, 4
        %v3297 = vshrl.u32 %v3062, 16
        %v3299 = vrot.slane %v3297, 7
        %v3300 = vshll.u32 %v3062, 16
        %v3302 = vor.u32 %v3299, %v3300
        %v3303 = vsel %vm2402, %v3295, %v3302
        %v3304 = vrot.slane %v3299, 4
        %v3306 = vshrl.u32 %v3063, 16
        %v3308 = vrot.slane %v3306, 7
        %v3309 = vshll.u32 %v3063, 16
        %v3311 = vor.u32 %v3308, %v3309
        %v3312 = vrot.slane %v3308, 4
        %v3314 = vshrl.u32 %v3064, 16
        %v3316 = vrot.slane %v3314, 7
        %v3317 = vshll.u32 %v3064, 16
        %v3319 = vor.u32 %v3316, %v3317
        %v3320 = vsel %vm2402, %v3312, %v3319
        %v3321 = vrot.slane %v3316, 4
        %v3323 = vshrl.u32 %v3065, 16
        %v3325 = vrot.slane %v3323, 7
        %v3326 = vshll.u32 %v3065, 16
        %v3328 = vor.u32 %v3325, %v3326
        %v3329 = vrot.slane %v3325, 4
        %v3331 = vshrl.u32 %v3066, 16
        %v3333 = vrot.slane %v3331, 7
        %v3334 = vshll.u32 %v3066, 16
        %v3336 = vor.u32 %v3333, %v3334
        %v3337 = vsel %vm2402, %v3329, %v3336
        %v3338 = vrot.slane %v3333, 4
        %s3387 = scalar_lea.vmem [#allocation2], 408
        %v3388 = vld [vmem:[%s3387] sm:$0xf]
        %v3389 = vsel %vm2726, %v3073, %v3388
        %3390 = vst [vmem:[%s3387] sm:$0xf] %v3389
        %3391 = vst.msk [vmem:[%s3387 + $0x4] sm:$0xf] %vm2730, %v3082
        %v3392 = vld [vmem:[%s3387 + $0x8] sm:$0x1]
        %v3393 = vsel %vm2733, %v3083, %v3392
        %3394 = vst [vmem:[%s3387 + $0x8] sm:$0x1] %v3393
        %v3395 = vld [vmem:[%s3387 + $0xc] sm:$0xf]
        %v3396 = vsel %vm2726, %v3090, %v3395
        %3397 = vst [vmem:[%s3387 + $0xc] sm:$0xf] %v3396
        %3398 = vst.msk [vmem:[%s3387 + $0x10] sm:$0xf] %vm2730, %v3099
        %v3399 = vld [vmem:[%s3387 + $0x14] sm:$0x1]
        %v3400 = vsel %vm2733, %v3100, %v3399
        %3401 = vst [vmem:[%s3387 + $0x14] sm:$0x1] %v3400
        %v3402 = vld [vmem:[%s3387 + $0x18] sm:$0xf]
        %v3403 = vsel %vm2726, %v3107, %v3402
        %3404 = vst [vmem:[%s3387 + $0x18] sm:$0xf] %v3403
        %3405 = vst.msk [vmem:[%s3387 + $0x1c] sm:$0xf] %vm2730, %v3116
        %v3406 = vld [vmem:[%s3387 + $0x20] sm:$0x1]
        %v3407 = vsel %vm2733, %v3117, %v3406
        %3408 = vst [vmem:[%s3387 + $0x20] sm:$0x1] %v3407
        %v3409 = vld [vmem:[%s3387 + $0x24] sm:$0xf]
        %v3410 = vsel %vm2726, %v3124, %v3409
        %3411 = vst [vmem:[%s3387 + $0x24] sm:$0xf] %v3410
        %3412 = vst.msk [vmem:[%s3387 + $0x28] sm:$0xf] %vm2730, %v3133
        %v3413 = vld [vmem:[%s3387 + $0x2c] sm:$0x1]
        %v3414 = vsel %vm2733, %v3134, %v3413
        %3415 = vst [vmem:[%s3387 + $0x2c] sm:$0x1] %v3414
        %v3416 = vld [vmem:[%s3387 + $0x30] sm:$0xf]
        %v3417 = vsel %vm2726, %v3141, %v3416
        %3418 = vst [vmem:[%s3387 + $0x30] sm:$0xf] %v3417
        %3419 = vst.msk [vmem:[%s3387 + $0x34] sm:$0xf] %vm2730, %v3150
        %v3420 = vld [vmem:[%s3387 + $0x38] sm:$0x1]
        %v3421 = vsel %vm2733, %v3151, %v3420
        %3422 = vst [vmem:[%s3387 + $0x38] sm:$0x1] %v3421
        %v3423 = vld [vmem:[%s3387 + $0x3c] sm:$0xf]
        %v3424 = vsel %vm2726, %v3158, %v3423
        %3425 = vst [vmem:[%s3387 + $0x3c] sm:$0xf] %v3424
        %3426 = vst.msk [vmem:[%s3387 + $0x40] sm:$0xf] %vm2730, %v3167
        %v3427 = vld [vmem:[%s3387 + $0x44] sm:$0x1]
        %v3428 = vsel %vm2733, %v3168, %v3427
        %3429 = vst [vmem:[%s3387 + $0x44] sm:$0x1] %v3428
        %v3430 = vld [vmem:[%s3387 + $0x48] sm:$0xf]
        %v3431 = vsel %vm2726, %v3175, %v3430
        %3432 = vst [vmem:[%s3387 + $0x48] sm:$0xf] %v3431
        %3433 = vst.msk [vmem:[%s3387 + $0x4c] sm:$0xf] %vm2730, %v3184
        %v3434 = vld [vmem:[%s3387 + $0x50] sm:$0x1]
        %v3435 = vsel %vm2733, %v3185, %v3434
        %3436 = vst [vmem:[%s3387 + $0x50] sm:$0x1] %v3435
        %v3437 = vld [vmem:[%s3387 + $0x54] sm:$0xf]
        %v3438 = vsel %vm2726, %v3192, %v3437
        %3439 = vst [vmem:[%s3387 + $0x54] sm:$0xf] %v3438
        %3440 = vst.msk [vmem:[%s3387 + $0x58] sm:$0xf] %vm2730, %v3201
        %v3441 = vld [vmem:[%s3387 + $0x5c] sm:$0x1]
        %v3442 = vsel %vm2733, %v3202, %v3441
        %3443 = vst [vmem:[%s3387 + $0x5c] sm:$0x1] %v3442
        %v3444 = vld [vmem:[%s3387 + $0x60] sm:$0xf]
        %v3445 = vsel %vm2726, %v3209, %v3444
        %3446 = vst [vmem:[%s3387 + $0x60] sm:$0xf] %v3445
        %3447 = vst.msk [vmem:[%s3387 + $0x64] sm:$0xf] %vm2730, %v3218
        %v3448 = vld [vmem:[%s3387 + $0x68] sm:$0x1]
        %v3449 = vsel %vm2733, %v3219, %v3448
        %3450 = vst [vmem:[%s3387 + $0x68] sm:$0x1] %v3449
        %v3451 = vld [vmem:[%s3387 + $0x6c] sm:$0xf]
        %v3452 = vsel %vm2726, %v3226, %v3451
        %3453 = vst [vmem:[%s3387 + $0x6c] sm:$0xf] %v3452
        %3454 = vst.msk [vmem:[%s3387 + $0x70] sm:$0xf] %vm2730, %v3235
        %v3455 = vld [vmem:[%s3387 + $0x74] sm:$0x1]
        %v3456 = vsel %vm2733, %v3236, %v3455
        %3457 = vst [vmem:[%s3387 + $0x74] sm:$0x1] %v3456
        %v3458 = vld [vmem:[%s3387 + $0x78] sm:$0xf]
        %v3459 = vsel %vm2726, %v3243, %v3458
        %3460 = vst [vmem:[%s3387 + $0x78] sm:$0xf] %v3459
        %3461 = vst.msk [vmem:[%s3387 + $0x7c] sm:$0xf] %vm2730, %v3252
        %v3462 = vld [vmem:[%s3387 + $0x80] sm:$0x1]
        %v3463 = vsel %vm2733, %v3253, %v3462
        %3464 = vst [vmem:[%s3387 + $0x80] sm:$0x1] %v3463
        %v3465 = vld [vmem:[%s3387 + $0x84] sm:$0xf]
        %v3466 = vsel %vm2726, %v3260, %v3465
        %3467 = vst [vmem:[%s3387 + $0x84] sm:$0xf] %v3466
        %3468 = vst.msk [vmem:[%s3387 + $0x88] sm:$0xf] %vm2730, %v3269
        %v3469 = vld [vmem:[%s3387 + $0x8c] sm:$0x1]
        %v3470 = vsel %vm2733, %v3270, %v3469
        %3471 = vst [vmem:[%s3387 + $0x8c] sm:$0x1] %v3470
        %v3472 = vld [vmem:[%s3387 + $0x90] sm:$0xf]
        %v3473 = vsel %vm2726, %v3277, %v3472
        %3474 = vst [vmem:[%s3387 + $0x90] sm:$0xf] %v3473
        %3475 = vst.msk [vmem:[%s3387 + $0x94] sm:$0xf] %vm2730, %v3286
        %v3476 = vld [vmem:[%s3387 + $0x98] sm:$0x1]
        %v3477 = vsel %vm2733, %v3287, %v3476
        %3478 = vst [vmem:[%s3387 + $0x98] sm:$0x1] %v3477
        %v3479 = vld [vmem:[%s3387 + $0x9c] sm:$0xf]
        %v3480 = vsel %vm2726, %v3294, %v3479
        %3481 = vst [vmem:[%s3387 + $0x9c] sm:$0xf] %v3480
        %3482 = vst.msk [vmem:[%s3387 + $0xa0] sm:$0xf] %vm2730, %v3303
        %v3483 = vld [vmem:[%s3387 + $0xa4] sm:$0x1]
        %v3484 = vsel %vm2733, %v3304, %v3483
        %3485 = vst [vmem:[%s3387 + $0xa4] sm:$0x1] %v3484
        %v3486 = vld [vmem:[%s3387 + $0xa8] sm:$0xf]
        %v3487 = vsel %vm2726, %v3311, %v3486
        %3488 = vst [vmem:[%s3387 + $0xa8] sm:$0xf] %v3487
        %3489 = vst.msk [vmem:[%s3387 + $0xac] sm:$0xf] %vm2730, %v3320
        %v3490 = vld [vmem:[%s3387 + $0xb0] sm:$0x1]
        %v3491 = vsel %vm2733, %v3321, %v3490
        %3492 = vst [vmem:[%s3387 + $0xb0] sm:$0x1] %v3491
        %v3493 = vld [vmem:[%s3387 + $0xb4] sm:$0xf]
        %v3494 = vsel %vm2726, %v3328, %v3493
        %3495 = vst [vmem:[%s3387 + $0xb4] sm:$0xf] %v3494
        %3496 = vst.msk [vmem:[%s3387 + $0xb8] sm:$0xf] %vm2730, %v3337
        %v3497 = vld [vmem:[%s3387 + $0xbc] sm:$0x1]
        %v3498 = vsel %vm2733, %v3338, %v3497
        %3499 = vst [vmem:[%s3387 + $0xbc] sm:$0x1] %v3498
        %v3516 = vunpack.c.l.b16 %v2256
        %v3517 = vunpack.c.h.b16 %v2256
        %v3518 = vunpack.c.l.b16 %v2257
        %v3519 = vunpack.c.h.b16 %v2257
        %v3520 = vunpack.c.l.b16 %v2258
        %v3521 = vunpack.c.h.b16 %v2258
        %v3522 = vunpack.c.l.b16 %v2259
        %v3523 = vunpack.c.h.b16 %v2259
        %v3524 = vunpack.c.l.b16 %v2260
        %v3525 = vunpack.c.h.b16 %v2260
        %v3526 = vunpack.c.l.b16 %v2261
        %v3527 = vunpack.c.h.b16 %v2261
        %v3528 = vunpack.c.l.b16 %v2262
        %v3529 = vunpack.c.h.b16 %v2262
        %v3530 = vunpack.c.l.b16 %v2263
        %v3531 = vunpack.c.h.b16 %v2263
        %v3532 = vunpack.c.l.b16 %v2264
        %v3533 = vunpack.c.h.b16 %v2264
        %v3534 = vunpack.c.l.b16 %v2265
        %v3535 = vunpack.c.h.b16 %v2265
        %v3536 = vunpack.c.l.b16 %v2266
        %v3537 = vunpack.c.h.b16 %v2266
        %v3538 = vunpack.c.l.b16 %v2267
        %v3539 = vunpack.c.h.b16 %v2267
        %v3540 = vunpack.c.l.b16 %v2268
        %v3541 = vunpack.c.h.b16 %v2268
        %v3542 = vunpack.c.l.b16 %v2269
        %v3543 = vunpack.c.h.b16 %v2269
        %v3544 = vunpack.c.l.b16 %v2270
        %v3545 = vunpack.c.h.b16 %v2270
        %v3546 = vunpack.c.l.b16 %v2271
        %v3547 = vunpack.c.h.b16 %v2271
        %v3548 = vpack.c.b16 %v3516, %v3516
        %v3549 = vpack.c.b16 %v3517, %v3517
        %v3550 = vpack.c.b16 %v3518, %v3518
        %v3551 = vpack.c.b16 %v3519, %v3519
        %v3552 = vpack.c.b16 %v3520, %v3520
        %v3553 = vpack.c.b16 %v3521, %v3521
        %v3554 = vpack.c.b16 %v3522, %v3522
        %v3555 = vpack.c.b16 %v3523, %v3523
        %v3556 = vpack.c.b16 %v3524, %v3524
        %v3557 = vpack.c.b16 %v3525, %v3525
        %v3558 = vpack.c.b16 %v3526, %v3526
        %v3559 = vpack.c.b16 %v3527, %v3527
        %v3560 = vpack.c.b16 %v3528, %v3528
        %v3561 = vpack.c.b16 %v3529, %v3529
        %v3562 = vpack.c.b16 %v3530, %v3530
        %v3563 = vpack.c.b16 %v3531, %v3531
        %v3564 = vpack.c.b16 %v3532, %v3532
        %v3565 = vpack.c.b16 %v3533, %v3533
        %v3566 = vpack.c.b16 %v3534, %v3534
        %v3567 = vpack.c.b16 %v3535, %v3535
        %v3568 = vpack.c.b16 %v3536, %v3536
        %v3569 = vpack.c.b16 %v3537, %v3537
        %v3570 = vpack.c.b16 %v3538, %v3538
        %v3571 = vpack.c.b16 %v3539, %v3539
        %v3572 = vpack.c.b16 %v3540, %v3540
        %v3573 = vpack.c.b16 %v3541, %v3541
        %v3574 = vpack.c.b16 %v3542, %v3542
        %v3575 = vpack.c.b16 %v3543, %v3543
        %v3576 = vpack.c.b16 %v3544, %v3544
        %v3577 = vpack.c.b16 %v3545, %v3545
        %v3578 = vpack.c.b16 %v3546, %v3546
        %v3579 = vpack.c.b16 %v3547, %v3547
        %s3612 = scalar_lea.vmem [#allocation2], 612
        %3613 = vst.msk [vmem:[%s3612] sm:$0xf] %vm2730, %v3548
        %3614 = vst.msk [vmem:[%s3612 + $0x4] sm:$0xf] %vm2730, %v3549
        %3615 = vst.msk [vmem:[%s3612 + $0xc] sm:$0xf] %vm2730, %v3550
        %3616 = vst.msk [vmem:[%s3612 + $0x10] sm:$0xf] %vm2730, %v3551
        %3617 = vst.msk [vmem:[%s3612 + $0x18] sm:$0xf] %vm2730, %v3552
        %3618 = vst.msk [vmem:[%s3612 + $0x1c] sm:$0xf] %vm2730, %v3553
        %3619 = vst.msk [vmem:[%s3612 + $0x24] sm:$0xf] %vm2730, %v3554
        %3620 = vst.msk [vmem:[%s3612 + $0x28] sm:$0xf] %vm2730, %v3555
        %3621 = vst.msk [vmem:[%s3612 + $0x30] sm:$0xf] %vm2730, %v3556
        %3622 = vst.msk [vmem:[%s3612 + $0x34] sm:$0xf] %vm2730, %v3557
        %3623 = vst.msk [vmem:[%s3612 + $0x3c] sm:$0xf] %vm2730, %v3558
        %3624 = vst.msk [vmem:[%s3612 + $0x40] sm:$0xf] %vm2730, %v3559
        %3625 = vst.msk [vmem:[%s3612 + $0x48] sm:$0xf] %vm2730, %v3560
        %3626 = vst.msk [vmem:[%s3612 + $0x4c] sm:$0xf] %vm2730, %v3561
        %3627 = vst.msk [vmem:[%s3612 + $0x54] sm:$0xf] %vm2730, %v3562
        %3628 = vst.msk [vmem:[%s3612 + $0x58] sm:$0xf] %vm2730, %v3563
        %3629 = vst.msk [vmem:[%s3612 + $0x60] sm:$0xf] %vm2730, %v3564
        %3630 = vst.msk [vmem:[%s3612 + $0x64] sm:$0xf] %vm2730, %v3565
        %3631 = vst.msk [vmem:[%s3612 + $0x6c] sm:$0xf] %vm2730, %v3566
        %3632 = vst.msk [vmem:[%s3612 + $0x70] sm:$0xf] %vm2730, %v3567
        %3633 = vst.msk [vmem:[%s3612 + $0x78] sm:$0xf] %vm2730, %v3568
        %3634 = vst.msk [vmem:[%s3612 + $0x7c] sm:$0xf] %vm2730, %v3569
        %3635 = vst.msk [vmem:[%s3612 + $0x84] sm:$0xf] %vm2730, %v3570
        %3636 = vst.msk [vmem:[%s3612 + $0x88] sm:$0xf] %vm2730, %v3571
        %3637 = vst.msk [vmem:[%s3612 + $0x90] sm:$0xf] %vm2730, %v3572
        %3638 = vst.msk [vmem:[%s3612 + $0x94] sm:$0xf] %vm2730, %v3573
        %3639 = vst.msk [vmem:[%s3612 + $0x9c] sm:$0xf] %vm2730, %v3574
        %3640 = vst.msk [vmem:[%s3612 + $0xa0] sm:$0xf] %vm2730, %v3575
        %3641 = vst.msk [vmem:[%s3612 + $0xa8] sm:$0xf] %vm2730, %v3576
        %3642 = vst.msk [vmem:[%s3612 + $0xac] sm:$0xf] %vm2730, %v3577
        %3643 = vst.msk [vmem:[%s3612 + $0xb4] sm:$0xf] %vm2730, %v3578
        %3644 = vst.msk [vmem:[%s3612 + $0xb8] sm:$0xf] %vm2730, %v3579
        %v3645 = vld [vmem:[#allocation2] sm:$0xf]
        %v3646 = vld [vmem:[#allocation2 + $0x4] sm:$0xf]
        %v3647 = vld [vmem:[#allocation2 + $0xc] sm:$0xf]
        %v3648 = vld [vmem:[#allocation2 + $0x10] sm:$0xf]
        %v3649 = vld [vmem:[#allocation2 + $0x18] sm:$0xf]
        %v3650 = vld [vmem:[#allocation2 + $0x1c] sm:$0xf]
        %v3651 = vld [vmem:[#allocation2 + $0x24] sm:$0xf]
        %v3652 = vld [vmem:[#allocation2 + $0x28] sm:$0xf]
        %v3653 = vld [vmem:[#allocation2 + $0x30] sm:$0xf]
        %v3654 = vld [vmem:[#allocation2 + $0x34] sm:$0xf]
        %v3655 = vld [vmem:[#allocation2 + $0x3c] sm:$0xf]
        %v3656 = vld [vmem:[#allocation2 + $0x40] sm:$0xf]
        %v3657 = vld [vmem:[#allocation2 + $0x48] sm:$0xf]
        %v3658 = vld [vmem:[#allocation2 + $0x4c] sm:$0xf]
        %v3659 = vld [vmem:[#allocation2 + $0x54] sm:$0xf]
        %v3660 = vld [vmem:[#allocation2 + $0x58] sm:$0xf]
        %v3661 = vld [vmem:[#allocation2 + $0x60] sm:$0xf]
        %v3662 = vld [vmem:[#allocation2 + $0x64] sm:$0xf]
        %v3663 = vld [vmem:[#allocation2 + $0x6c] sm:$0xf]
        %v3664 = vld [vmem:[#allocation2 + $0x70] sm:$0xf]
        %v3665 = vld [vmem:[#allocation2 + $0x78] sm:$0xf]
        %v3666 = vld [vmem:[#allocation2 + $0x7c] sm:$0xf]
        %v3667 = vld [vmem:[#allocation2 + $0x84] sm:$0xf]
        %v3668 = vld [vmem:[#allocation2 + $0x88] sm:$0xf]
        %v3669 = vld [vmem:[#allocation2 + $0x90] sm:$0xf]
        %v3670 = vld [vmem:[#allocation2 + $0x94] sm:$0xf]
        %v3671 = vld [vmem:[#allocation2 + $0x9c] sm:$0xf]
        %v3672 = vld [vmem:[#allocation2 + $0xa0] sm:$0xf]
        %v3673 = vld [vmem:[#allocation2 + $0xa8] sm:$0xf]
        %v3674 = vld [vmem:[#allocation2 + $0xac] sm:$0xf]
        %v3675 = vld [vmem:[#allocation2 + $0xb4] sm:$0xf]
        %v3676 = vld [vmem:[#allocation2 + $0xb8] sm:$0xf]
        %s3677 = scalar_lea.vmem [#allocation2], 204
        %v3678 = vld [vmem:[%s3677] sm:$0xf]
        %v3679 = vld [vmem:[%s3677 + $0x4] sm:$0xf]
        %v3680 = vld [vmem:[%s3677 + $0xc] sm:$0xf]
        %v3681 = vld [vmem:[%s3677 + $0x10] sm:$0xf]
        %v3682 = vld [vmem:[%s3677 + $0x18] sm:$0xf]
        %v3683 = vld [vmem:[%s3677 + $0x1c] sm:$0xf]
        %v3684 = vld [vmem:[%s3677 + $0x24] sm:$0xf]
        %v3685 = vld [vmem:[%s3677 + $0x28] sm:$0xf]
        %v3686 = vld [vmem:[%s3677 + $0x30] sm:$0xf]
        %v3687 = vld [vmem:[%s3677 + $0x34] sm:$0xf]
        %v3688 = vld [vmem:[%s3677 + $0x3c] sm:$0xf]
        %v3689 = vld [vmem:[%s3677 + $0x40] sm:$0xf]
        %v3690 = vld [vmem:[%s3677 + $0x48] sm:$0xf]
        %v3691 = vld [vmem:[%s3677 + $0x4c] sm:$0xf]
        %v3692 = vld [vmem:[%s3677 + $0x54] sm:$0xf]
        %v3693 = vld [vmem:[%s3677 + $0x58] sm:$0xf]
        %v3694 = vld [vmem:[%s3677 + $0x60] sm:$0xf]
        %v3695 = vld [vmem:[%s3677 + $0x64] sm:$0xf]
        %v3696 = vld [vmem:[%s3677 + $0x6c] sm:$0xf]
        %v3697 = vld [vmem:[%s3677 + $0x70] sm:$0xf]
        %v3698 = vld [vmem:[%s3677 + $0x78] sm:$0xf]
        %v3699 = vld [vmem:[%s3677 + $0x7c] sm:$0xf]
        %v3700 = vld [vmem:[%s3677 + $0x84] sm:$0xf]
        %v3701 = vld [vmem:[%s3677 + $0x88] sm:$0xf]
        %v3702 = vld [vmem:[%s3677 + $0x90] sm:$0xf]
        %v3703 = vld [vmem:[%s3677 + $0x94] sm:$0xf]
        %v3704 = vld [vmem:[%s3677 + $0x9c] sm:$0xf]
        %v3705 = vld [vmem:[%s3677 + $0xa0] sm:$0xf]
        %v3706 = vld [vmem:[%s3677 + $0xa8] sm:$0xf]
        %v3707 = vld [vmem:[%s3677 + $0xac] sm:$0xf]
        %v3708 = vld [vmem:[%s3677 + $0xb4] sm:$0xf]
        %v3709 = vld [vmem:[%s3677 + $0xb8] sm:$0xf]
        %v3710 = vld [vmem:[#allocation2 + $0x8] sm:$0x1]
        %v3711 = vld [vmem:[#allocation2 + $0x14] sm:$0x1]
        %v3712 = vld [vmem:[#allocation2 + $0x20] sm:$0x1]
        %v3713 = vld [vmem:[#allocation2 + $0x2c] sm:$0x1]
        %v3714 = vld [vmem:[#allocation2 + $0x38] sm:$0x1]
        %v3715 = vld [vmem:[#allocation2 + $0x44] sm:$0x1]
        %v3716 = vld [vmem:[#allocation2 + $0x50] sm:$0x1]
        %v3717 = vld [vmem:[#allocation2 + $0x5c] sm:$0x1]
        %v3718 = vld [vmem:[#allocation2 + $0x68] sm:$0x1]
        %v3719 = vld [vmem:[#allocation2 + $0x74] sm:$0x1]
        %v3720 = vld [vmem:[#allocation2 + $0x80] sm:$0x1]
        %v3721 = vld [vmem:[#allocation2 + $0x8c] sm:$0x1]
        %v3722 = vld [vmem:[#allocation2 + $0x98] sm:$0x1]
        %v3723 = vld [vmem:[#allocation2 + $0xa4] sm:$0x1]
        %v3724 = vld [vmem:[#allocation2 + $0xb0] sm:$0x1]
        %v3725 = vld [vmem:[#allocation2 + $0xbc] sm:$0x1]
        %vm3726 = vsmask.f32 3328
        %vm3727 = vsmask.f32 7440
        %vm3728 = vmor %vm3726, %vm3727
        %v3730 = vshrl.u32 %v3645, 16
        %v3732 = vrot.slane %v3730, 4
        %v3733 = vshll.u32 %v3645, 16
        %v3735 = vrot.slane %v3733, 5
        %v3736 = vor.u32 %v3732, %v3735
        %v3737 = vrot.slane %v3736, 4
        %v3739 = vshll.u32 %v3646, 16
        %v3741 = vrot.slane %v3739, 5
        %v3742 = vsel %vm3728, %v3737, %v3741
        %v3743 = vshrl.u32 %v3646, 16
        %v3745 = vrot.slane %v3743, 4
        %v3746 = vor.u32 %v3745, %v3741
        %v3747 = vrot.slane %v3746, 4
        %v3749 = vshll.u32 %v3710, 16
        %v3751 = vrot.slane %v3749, 5
        %v3752 = vsel %vm3728, %v3747, %v3751
        %v3754 = vshrl.u32 %v3647, 16
        %v3756 = vrot.slane %v3754, 4
        %v3757 = vshll.u32 %v3647, 16
        %v3759 = vrot.slane %v3757, 5
        %v3760 = vor.u32 %v3756, %v3759
        %v3761 = vrot.slane %v3760, 4
        %v3763 = vshll.u32 %v3648, 16
        %v3765 = vrot.slane %v3763, 5
        %v3766 = vsel %vm3728, %v3761, %v3765
        %v3767 = vshrl.u32 %v3648, 16
        %v3769 = vrot.slane %v3767, 4
        %v3770 = vor.u32 %v3769, %v3765
        %v3771 = vrot.slane %v3770, 4
        %v3773 = vshll.u32 %v3711, 16
        %v3775 = vrot.slane %v3773, 5
        %v3776 = vsel %vm3728, %v3771, %v3775
        %v3778 = vshrl.u32 %v3649, 16
        %v3780 = vrot.slane %v3778, 4
        %v3781 = vshll.u32 %v3649, 16
        %v3783 = vrot.slane %v3781, 5
        %v3784 = vor.u32 %v3780, %v3783
        %v3785 = vrot.slane %v3784, 4
        %v3787 = vshll.u32 %v3650, 16
        %v3789 = vrot.slane %v3787, 5
        %v3790 = vsel %vm3728, %v3785, %v3789
        %v3791 = vshrl.u32 %v3650, 16
        %v3793 = vrot.slane %v3791, 4
        %v3794 = vor.u32 %v3793, %v3789
        %v3795 = vrot.slane %v3794, 4
        %v3797 = vshll.u32 %v3712, 16
        %v3799 = vrot.slane %v3797, 5
        %v3800 = vsel %vm3728, %v3795, %v3799
        %v3802 = vshrl.u32 %v3651, 16
        %v3804 = vrot.slane %v3802, 4
        %v3805 = vshll.u32 %v3651, 16
        %v3807 = vrot.slane %v3805, 5
        %v3808 = vor.u32 %v3804, %v3807
        %v3809 = vrot.slane %v3808, 4
        %v3811 = vshll.u32 %v3652, 16
        %v3813 = vrot.slane %v3811, 5
        %v3814 = vsel %vm3728, %v3809, %v3813
        %v3815 = vshrl.u32 %v3652, 16
        %v3817 = vrot.slane %v3815, 4
        %v3818 = vor.u32 %v3817, %v3813
        %v3819 = vrot.slane %v3818, 4
        %v3821 = vshll.u32 %v3713, 16
        %v3823 = vrot.slane %v3821, 5
        %v3824 = vsel %vm3728, %v3819, %v3823
        %v3826 = vshrl.u32 %v3653, 16
        %v3828 = vrot.slane %v3826, 4
        %v3829 = vshll.u32 %v3653, 16
        %v3831 = vrot.slane %v3829, 5
        %v3832 = vor.u32 %v3828, %v3831
        %v3833 = vrot.slane %v3832, 4
        %v3835 = vshll.u32 %v3654, 16
        %v3837 = vrot.slane %v3835, 5
        %v3838 = vsel %vm3728, %v3833, %v3837
        %v3839 = vshrl.u32 %v3654, 16
        %v3841 = vrot.slane %v3839, 4
        %v3842 = vor.u32 %v3841, %v3837
        %v3843 = vrot.slane %v3842, 4
        %v3845 = vshll.u32 %v3714, 16
        %v3847 = vrot.slane %v3845, 5
        %v3848 = vsel %vm3728, %v3843, %v3847
        %v3850 = vshrl.u32 %v3655, 16
        %v3852 = vrot.slane %v3850, 4
        %v3853 = vshll.u32 %v3655, 16
        %v3855 = vrot.slane %v3853, 5
        %v3856 = vor.u32 %v3852, %v3855
        %v3857 = vrot.slane %v3856, 4
        %v3859 = vshll.u32 %v3656, 16
        %v3861 = vrot.slane %v3859, 5
        %v3862 = vsel %vm3728, %v3857, %v3861
        %v3863 = vshrl.u32 %v3656, 16
        %v3865 = vrot.slane %v3863, 4
        %v3866 = vor.u32 %v3865, %v3861
        %v3867 = vrot.slane %v3866, 4
        %v3869 = vshll.u32 %v3715, 16
        %v3871 = vrot.slane %v3869, 5
        %v3872 = vsel %vm3728, %v3867, %v3871
        %v3874 = vshrl.u32 %v3657, 16
        %v3876 = vrot.slane %v3874, 4
        %v3877 = vshll.u32 %v3657, 16
        %v3879 = vrot.slane %v3877, 5
        %v3880 = vor.u32 %v3876, %v3879
        %v3881 = vrot.slane %v3880, 4
        %v3883 = vshll.u32 %v3658, 16
        %v3885 = vrot.slane %v3883, 5
        %v3886 = vsel %vm3728, %v3881, %v3885
        %v3887 = vshrl.u32 %v3658, 16
        %v3889 = vrot.slane %v3887, 4
        %v3890 = vor.u32 %v3889, %v3885
        %v3891 = vrot.slane %v3890, 4
        %v3893 = vshll.u32 %v3716, 16
        %v3895 = vrot.slane %v3893, 5
        %v3896 = vsel %vm3728, %v3891, %v3895
        %v3898 = vshrl.u32 %v3659, 16
        %v3900 = vrot.slane %v3898, 4
        %v3901 = vshll.u32 %v3659, 16
        %v3903 = vrot.slane %v3901, 5
        %v3904 = vor.u32 %v3900, %v3903
        %v3905 = vrot.slane %v3904, 4
        %v3907 = vshll.u32 %v3660, 16
        %v3909 = vrot.slane %v3907, 5
        %v3910 = vsel %vm3728, %v3905, %v3909
        %v3911 = vshrl.u32 %v3660, 16
        %v3913 = vrot.slane %v3911, 4
        %v3914 = vor.u32 %v3913, %v3909
        %v3915 = vrot.slane %v3914, 4
        %v3917 = vshll.u32 %v3717, 16
        %v3919 = vrot.slane %v3917, 5
        %v3920 = vsel %vm3728, %v3915, %v3919
        %v3922 = vshrl.u32 %v3661, 16
        %v3924 = vrot.slane %v3922, 4
        %v3925 = vshll.u32 %v3661, 16
        %v3927 = vrot.slane %v3925, 5
        %v3928 = vor.u32 %v3924, %v3927
        %v3929 = vrot.slane %v3928, 4
        %v3931 = vshll.u32 %v3662, 16
        %v3933 = vrot.slane %v3931, 5
        %v3934 = vsel %vm3728, %v3929, %v3933
        %v3935 = vshrl.u32 %v3662, 16
        %v3937 = vrot.slane %v3935, 4
        %v3938 = vor.u32 %v3937, %v3933
        %v3939 = vrot.slane %v3938, 4
        %v3941 = vshll.u32 %v3718, 16
        %v3943 = vrot.slane %v3941, 5
        %v3944 = vsel %vm3728, %v3939, %v3943
        %v3946 = vshrl.u32 %v3663, 16
        %v3948 = vrot.slane %v3946, 4
        %v3949 = vshll.u32 %v3663, 16
        %v3951 = vrot.slane %v3949, 5
        %v3952 = vor.u32 %v3948, %v3951
        %v3953 = vrot.slane %v3952, 4
        %v3955 = vshll.u32 %v3664, 16
        %v3957 = vrot.slane %v3955, 5
        %v3958 = vsel %vm3728, %v3953, %v3957
        %v3959 = vshrl.u32 %v3664, 16
        %v3961 = vrot.slane %v3959, 4
        %v3962 = vor.u32 %v3961, %v3957
        %v3963 = vrot.slane %v3962, 4
        %v3965 = vshll.u32 %v3719, 16
        %v3967 = vrot.slane %v3965, 5
        %v3968 = vsel %vm3728, %v3963, %v3967
        %v3970 = vshrl.u32 %v3665, 16
        %v3972 = vrot.slane %v3970, 4
        %v3973 = vshll.u32 %v3665, 16
        %v3975 = vrot.slane %v3973, 5
        %v3976 = vor.u32 %v3972, %v3975
        %v3977 = vrot.slane %v3976, 4
        %v3979 = vshll.u32 %v3666, 16
        %v3981 = vrot.slane %v3979, 5
        %v3982 = vsel %vm3728, %v3977, %v3981
        %v3983 = vshrl.u32 %v3666, 16
        %v3985 = vrot.slane %v3983, 4
        %v3986 = vor.u32 %v3985, %v3981
        %v3987 = vrot.slane %v3986, 4
        %v3989 = vshll.u32 %v3720, 16
        %v3991 = vrot.slane %v3989, 5
        %v3992 = vsel %vm3728, %v3987, %v3991
        %v3994 = vshrl.u32 %v3667, 16
        %v3996 = vrot.slane %v3994, 4
        %v3997 = vshll.u32 %v3667, 16
        %v3999 = vrot.slane %v3997, 5
        %v4000 = vor.u32 %v3996, %v3999
        %v4001 = vrot.slane %v4000, 4
        %v4003 = vshll.u32 %v3668, 16
        %v4005 = vrot.slane %v4003, 5
        %v4006 = vsel %vm3728, %v4001, %v4005
        %v4007 = vshrl.u32 %v3668, 16
        %v4009 = vrot.slane %v4007, 4
        %v4010 = vor.u32 %v4009, %v4005
        %v4011 = vrot.slane %v4010, 4
        %v4013 = vshll.u32 %v3721, 16
        %v4015 = vrot.slane %v4013, 5
        %v4016 = vsel %vm3728, %v4011, %v4015
        %v4018 = vshrl.u32 %v3669, 16
        %v4020 = vrot.slane %v4018, 4
        %v4021 = vshll.u32 %v3669, 16
        %v4023 = vrot.slane %v4021, 5
        %v4024 = vor.u32 %v4020, %v4023
        %v4025 = vrot.slane %v4024, 4
        %v4027 = vshll.u32 %v3670, 16
        %v4029 = vrot.slane %v4027, 5
        %v4030 = vsel %vm3728, %v4025, %v4029
        %v4031 = vshrl.u32 %v3670, 16
        %v4033 = vrot.slane %v4031, 4
        %v4034 = vor.u32 %v4033, %v4029
        %v4035 = vrot.slane %v4034, 4
        %v4037 = vshll.u32 %v3722, 16
        %v4039 = vrot.slane %v4037, 5
        %v4040 = vsel %vm3728, %v4035, %v4039
        %v4042 = vshrl.u32 %v3671, 16
        %v4044 = vrot.slane %v4042, 4
        %v4045 = vshll.u32 %v3671, 16
        %v4047 = vrot.slane %v4045, 5
        %v4048 = vor.u32 %v4044, %v4047
        %v4049 = vrot.slane %v4048, 4
        %v4051 = vshll.u32 %v3672, 16
        %v4053 = vrot.slane %v4051, 5
        %v4054 = vsel %vm3728, %v4049, %v4053
        %v4055 = vshrl.u32 %v3672, 16
        %v4057 = vrot.slane %v4055, 4
        %v4058 = vor.u32 %v4057, %v4053
        %v4059 = vrot.slane %v4058, 4
        %v4061 = vshll.u32 %v3723, 16
        %v4063 = vrot.slane %v4061, 5
        %v4064 = vsel %vm3728, %v4059, %v4063
        %v4066 = vshrl.u32 %v3673, 16
        %v4068 = vrot.slane %v4066, 4
        %v4069 = vshll.u32 %v3673, 16
        %v4071 = vrot.slane %v4069, 5
        %v4072 = vor.u32 %v4068, %v4071
        %v4073 = vrot.slane %v4072, 4
        %v4075 = vshll.u32 %v3674, 16
        %v4077 = vrot.slane %v4075, 5
        %v4078 = vsel %vm3728, %v4073, %v4077
        %v4079 = vshrl.u32 %v3674, 16
        %v4081 = vrot.slane %v4079, 4
        %v4082 = vor.u32 %v4081, %v4077
        %v4083 = vrot.slane %v4082, 4
        %v4085 = vshll.u32 %v3724, 16
        %v4087 = vrot.slane %v4085, 5
        %v4088 = vsel %vm3728, %v4083, %v4087
        %v4090 = vshrl.u32 %v3675, 16
        %v4092 = vrot.slane %v4090, 4
        %v4093 = vshll.u32 %v3675, 16
        %v4095 = vrot.slane %v4093, 5
        %v4096 = vor.u32 %v4092, %v4095
        %v4097 = vrot.slane %v4096, 4
        %v4099 = vshll.u32 %v3676, 16
        %v4101 = vrot.slane %v4099, 5
        %v4102 = vsel %vm3728, %v4097, %v4101
        %v4103 = vshrl.u32 %v3676, 16
        %v4105 = vrot.slane %v4103, 4
        %v4106 = vor.u32 %v4105, %v4101
        %v4107 = vrot.slane %v4106, 4
        %v4109 = vshll.u32 %v3725, 16
        %v4111 = vrot.slane %v4109, 5
        %v4112 = vsel %vm3728, %v4107, %v4111
        %v4113 = vld [vmem:[%s3387] sm:$0xf]
        %v4114 = vld [vmem:[%s3387 + $0x4] sm:$0xf]
        %v4115 = vld [vmem:[%s3387 + $0xc] sm:$0xf]
        %v4116 = vld [vmem:[%s3387 + $0x10] sm:$0xf]
        %v4117 = vld [vmem:[%s3387 + $0x18] sm:$0xf]
        %v4118 = vld [vmem:[%s3387 + $0x1c] sm:$0xf]
        %v4119 = vld [vmem:[%s3387 + $0x24] sm:$0xf]
        %v4120 = vld [vmem:[%s3387 + $0x28] sm:$0xf]
        %v4121 = vld [vmem:[%s3387 + $0x30] sm:$0xf]
        %v4122 = vld [vmem:[%s3387 + $0x34] sm:$0xf]
        %v4123 = vld [vmem:[%s3387 + $0x3c] sm:$0xf]
        %v4124 = vld [vmem:[%s3387 + $0x40] sm:$0xf]
        %v4125 = vld [vmem:[%s3387 + $0x48] sm:$0xf]
        %v4126 = vld [vmem:[%s3387 + $0x4c] sm:$0xf]
        %v4127 = vld [vmem:[%s3387 + $0x54] sm:$0xf]
        %v4128 = vld [vmem:[%s3387 + $0x58] sm:$0xf]
        %v4129 = vld [vmem:[%s3387 + $0x60] sm:$0xf]
        %v4130 = vld [vmem:[%s3387 + $0x64] sm:$0xf]
        %v4131 = vld [vmem:[%s3387 + $0x6c] sm:$0xf]
        %v4132 = vld [vmem:[%s3387 + $0x70] sm:$0xf]
        %v4133 = vld [vmem:[%s3387 + $0x78] sm:$0xf]
        %v4134 = vld [vmem:[%s3387 + $0x7c] sm:$0xf]
        %v4135 = vld [vmem:[%s3387 + $0x84] sm:$0xf]
        %v4136 = vld [vmem:[%s3387 + $0x88] sm:$0xf]
        %v4137 = vld [vmem:[%s3387 + $0x90] sm:$0xf]
        %v4138 = vld [vmem:[%s3387 + $0x94] sm:$0xf]
        %v4139 = vld [vmem:[%s3387 + $0x9c] sm:$0xf]
        %v4140 = vld [vmem:[%s3387 + $0xa0] sm:$0xf]
        %v4141 = vld [vmem:[%s3387 + $0xa8] sm:$0xf]
        %v4142 = vld [vmem:[%s3387 + $0xac] sm:$0xf]
        %v4143 = vld [vmem:[%s3387 + $0xb4] sm:$0xf]
        %v4144 = vld [vmem:[%s3387 + $0xb8] sm:$0xf]
        %v4145 = vld [vmem:[%s3612] sm:$0xf]
        %v4146 = vld [vmem:[%s3612 + $0x4] sm:$0xf]
        %v4147 = vld [vmem:[%s3612 + $0xc] sm:$0xf]
        %v4148 = vld [vmem:[%s3612 + $0x10] sm:$0xf]
        %v4149 = vld [vmem:[%s3612 + $0x18] sm:$0xf]
        %v4150 = vld [vmem:[%s3612 + $0x1c] sm:$0xf]
        %v4151 = vld [vmem:[%s3612 + $0x24] sm:$0xf]
        %v4152 = vld [vmem:[%s3612 + $0x28] sm:$0xf]
        %v4153 = vld [vmem:[%s3612 + $0x30] sm:$0xf]
        %v4154 = vld [vmem:[%s3612 + $0x34] sm:$0xf]
        %v4155 = vld [vmem:[%s3612 + $0x3c] sm:$0xf]
        %v4156 = vld [vmem:[%s3612 + $0x40] sm:$0xf]
        %v4157 = vld [vmem:[%s3612 + $0x48] sm:$0xf]
        %v4158 = vld [vmem:[%s3612 + $0x4c] sm:$0xf]
        %v4159 = vld [vmem:[%s3612 + $0x54] sm:$0xf]
        %v4160 = vld [vmem:[%s3612 + $0x58] sm:$0xf]
        %v4161 = vld [vmem:[%s3612 + $0x60] sm:$0xf]
        %v4162 = vld [vmem:[%s3612 + $0x64] sm:$0xf]
        %v4163 = vld [vmem:[%s3612 + $0x6c] sm:$0xf]
        %v4164 = vld [vmem:[%s3612 + $0x70] sm:$0xf]
        %v4165 = vld [vmem:[%s3612 + $0x78] sm:$0xf]
        %v4166 = vld [vmem:[%s3612 + $0x7c] sm:$0xf]
        %v4167 = vld [vmem:[%s3612 + $0x84] sm:$0xf]
        %v4168 = vld [vmem:[%s3612 + $0x88] sm:$0xf]
        %v4169 = vld [vmem:[%s3612 + $0x90] sm:$0xf]
        %v4170 = vld [vmem:[%s3612 + $0x94] sm:$0xf]
        %v4171 = vld [vmem:[%s3612 + $0x9c] sm:$0xf]
        %v4172 = vld [vmem:[%s3612 + $0xa0] sm:$0xf]
        %v4173 = vld [vmem:[%s3612 + $0xa8] sm:$0xf]
        %v4174 = vld [vmem:[%s3612 + $0xac] sm:$0xf]
        %v4175 = vld [vmem:[%s3612 + $0xb4] sm:$0xf]
        %v4176 = vld [vmem:[%s3612 + $0xb8] sm:$0xf]
        %v4177 = vld [vmem:[%s3387 + $0x8] sm:$0x1]
        %v4178 = vld [vmem:[%s3387 + $0x14] sm:$0x1]
        %v4179 = vld [vmem:[%s3387 + $0x20] sm:$0x1]
        %v4180 = vld [vmem:[%s3387 + $0x2c] sm:$0x1]
        %v4181 = vld [vmem:[%s3387 + $0x38] sm:$0x1]
        %v4182 = vld [vmem:[%s3387 + $0x44] sm:$0x1]
        %v4183 = vld [vmem:[%s3387 + $0x50] sm:$0x1]
        %v4184 = vld [vmem:[%s3387 + $0x5c] sm:$0x1]
        %v4185 = vld [vmem:[%s3387 + $0x68] sm:$0x1]
        %v4186 = vld [vmem:[%s3387 + $0x74] sm:$0x1]
        %v4187 = vld [vmem:[%s3387 + $0x80] sm:$0x1]
        %v4188 = vld [vmem:[%s3387 + $0x8c] sm:$0x1]
        %v4189 = vld [vmem:[%s3387 + $0x98] sm:$0x1]
        %v4190 = vld [vmem:[%s3387 + $0xa4] sm:$0x1]
        %v4191 = vld [vmem:[%s3387 + $0xb0] sm:$0x1]
        %v4192 = vld [vmem:[%s3387 + $0xbc] sm:$0x1]
        %v4194 = vshrl.u32 %v4113, 16
        %v4196 = vrot.slane %v4194, 4
        %v4197 = vshll.u32 %v4113, 16
        %v4199 = vrot.slane %v4197, 5
        %v4200 = vor.u32 %v4196, %v4199
        %v4201 = vrot.slane %v4200, 4
        %v4203 = vshll.u32 %v4114, 16
        %v4205 = vrot.slane %v4203, 5
        %v4206 = vsel %vm3728, %v4201, %v4205
        %v4207 = vshrl.u32 %v4114, 16
        %v4209 = vrot.slane %v4207, 4
        %v4210 = vor.u32 %v4209, %v4205
        %v4211 = vrot.slane %v4210, 4
        %v4213 = vshll.u32 %v4177, 16
        %v4215 = vrot.slane %v4213, 5
        %v4216 = vsel %vm3728, %v4211, %v4215
        %v4218 = vshrl.u32 %v4115, 16
        %v4220 = vrot.slane %v4218, 4
        %v4221 = vshll.u32 %v4115, 16
        %v4223 = vrot.slane %v4221, 5
        %v4224 = vor.u32 %v4220, %v4223
        %v4225 = vrot.slane %v4224, 4
        %v4227 = vshll.u32 %v4116, 16
        %v4229 = vrot.slane %v4227, 5
        %v4230 = vsel %vm3728, %v4225, %v4229
        %v4231 = vshrl.u32 %v4116, 16
        %v4233 = vrot.slane %v4231, 4
        %v4234 = vor.u32 %v4233, %v4229
        %v4235 = vrot.slane %v4234, 4
        %v4237 = vshll.u32 %v4178, 16
        %v4239 = vrot.slane %v4237, 5
        %v4240 = vsel %vm3728, %v4235, %v4239
        %v4242 = vshrl.u32 %v4117, 16
        %v4244 = vrot.slane %v4242, 4
        %v4245 = vshll.u32 %v4117, 16
        %v4247 = vrot.slane %v4245, 5
        %v4248 = vor.u32 %v4244, %v4247
        %v4249 = vrot.slane %v4248, 4
        %v4251 = vshll.u32 %v4118, 16
        %v4253 = vrot.slane %v4251, 5
        %v4254 = vsel %vm3728, %v4249, %v4253
        %v4255 = vshrl.u32 %v4118, 16
        %v4257 = vrot.slane %v4255, 4
        %v4258 = vor.u32 %v4257, %v4253
        %v4259 = vrot.slane %v4258, 4
        %v4261 = vshll.u32 %v4179, 16
        %v4263 = vrot.slane %v4261, 5
        %v4264 = vsel %vm3728, %v4259, %v4263
        %v4266 = vshrl.u32 %v4119, 16
        %v4268 = vrot.slane %v4266, 4
        %v4269 = vshll.u32 %v4119, 16
        %v4271 = vrot.slane %v4269, 5
        %v4272 = vor.u32 %v4268, %v4271
        %v4273 = vrot.slane %v4272, 4
        %v4275 = vshll.u32 %v4120, 16
        %v4277 = vrot.slane %v4275, 5
        %v4278 = vsel %vm3728, %v4273, %v4277
        %v4279 = vshrl.u32 %v4120, 16
        %v4281 = vrot.slane %v4279, 4
        %v4282 = vor.u32 %v4281, %v4277
        %v4283 = vrot.slane %v4282, 4
        %v4285 = vshll.u32 %v4180, 16
        %v4287 = vrot.slane %v4285, 5
        %v4288 = vsel %vm3728, %v4283, %v4287
        %v4290 = vshrl.u32 %v4121, 16
        %v4292 = vrot.slane %v4290, 4
        %v4293 = vshll.u32 %v4121, 16
        %v4295 = vrot.slane %v4293, 5
        %v4296 = vor.u32 %v4292, %v4295
        %v4297 = vrot.slane %v4296, 4
        %v4299 = vshll.u32 %v4122, 16
        %v4301 = vrot.slane %v4299, 5
        %v4302 = vsel %vm3728, %v4297, %v4301
        %v4303 = vshrl.u32 %v4122, 16
        %v4305 = vrot.slane %v4303, 4
        %v4306 = vor.u32 %v4305, %v4301
        %v4307 = vrot.slane %v4306, 4
        %v4309 = vshll.u32 %v4181, 16
        %v4311 = vrot.slane %v4309, 5
        %v4312 = vsel %vm3728, %v4307, %v4311
        %v4314 = vshrl.u32 %v4123, 16
        %v4316 = vrot.slane %v4314, 4
        %v4317 = vshll.u32 %v4123, 16
        %v4319 = vrot.slane %v4317, 5
        %v4320 = vor.u32 %v4316, %v4319
        %v4321 = vrot.slane %v4320, 4
        %v4323 = vshll.u32 %v4124, 16
        %v4325 = vrot.slane %v4323, 5
        %v4326 = vsel %vm3728, %v4321, %v4325
        %v4327 = vshrl.u32 %v4124, 16
        %v4329 = vrot.slane %v4327, 4
        %v4330 = vor.u32 %v4329, %v4325
        %v4331 = vrot.slane %v4330, 4
        %v4333 = vshll.u32 %v4182, 16
        %v4335 = vrot.slane %v4333, 5
        %v4336 = vsel %vm3728, %v4331, %v4335
        %v4338 = vshrl.u32 %v4125, 16
        %v4340 = vrot.slane %v4338, 4
        %v4341 = vshll.u32 %v4125, 16
        %v4343 = vrot.slane %v4341, 5
        %v4344 = vor.u32 %v4340, %v4343
        %v4345 = vrot.slane %v4344, 4
        %v4347 = vshll.u32 %v4126, 16
        %v4349 = vrot.slane %v4347, 5
        %v4350 = vsel %vm3728, %v4345, %v4349
        %v4351 = vshrl.u32 %v4126, 16
        %v4353 = vrot.slane %v4351, 4
        %v4354 = vor.u32 %v4353, %v4349
        %v4355 = vrot.slane %v4354, 4
        %v4357 = vshll.u32 %v4183, 16
        %v4359 = vrot.slane %v4357, 5
        %v4360 = vsel %vm3728, %v4355, %v4359
        %v4362 = vshrl.u32 %v4127, 16
        %v4364 = vrot.slane %v4362, 4
        %v4365 = vshll.u32 %v4127, 16
        %v4367 = vrot.slane %v4365, 5
        %v4368 = vor.u32 %v4364, %v4367
        %v4369 = vrot.slane %v4368, 4
        %v4371 = vshll.u32 %v4128, 16
        %v4373 = vrot.slane %v4371, 5
        %v4374 = vsel %vm3728, %v4369, %v4373
        %v4375 = vshrl.u32 %v4128, 16
        %v4377 = vrot.slane %v4375, 4
        %v4378 = vor.u32 %v4377, %v4373
        %v4379 = vrot.slane %v4378, 4
        %v4381 = vshll.u32 %v4184, 16
        %v4383 = vrot.slane %v4381, 5
        %v4384 = vsel %vm3728, %v4379, %v4383
        %v4386 = vshrl.u32 %v4129, 16
        %v4388 = vrot.slane %v4386, 4
        %v4389 = vshll.u32 %v4129, 16
        %v4391 = vrot.slane %v4389, 5
        %v4392 = vor.u32 %v4388, %v4391
        %v4393 = vrot.slane %v4392, 4
        %v4395 = vshll.u32 %v4130, 16
        %v4397 = vrot.slane %v4395, 5
        %v4398 = vsel %vm3728, %v4393, %v4397
        %v4399 = vshrl.u32 %v4130, 16
        %v4401 = vrot.slane %v4399, 4
        %v4402 = vor.u32 %v4401, %v4397
        %v4403 = vrot.slane %v4402, 4
        %v4405 = vshll.u32 %v4185, 16
        %v4407 = vrot.slane %v4405, 5
        %v4408 = vsel %vm3728, %v4403, %v4407
        %v4410 = vshrl.u32 %v4131, 16
        %v4412 = vrot.slane %v4410, 4
        %v4413 = vshll.u32 %v4131, 16
        %v4415 = vrot.slane %v4413, 5
        %v4416 = vor.u32 %v4412, %v4415
        %v4417 = vrot.slane %v4416, 4
        %v4419 = vshll.u32 %v4132, 16
        %v4421 = vrot.slane %v4419, 5
        %v4422 = vsel %vm3728, %v4417, %v4421
        %v4423 = vshrl.u32 %v4132, 16
        %v4425 = vrot.slane %v4423, 4
        %v4426 = vor.u32 %v4425, %v4421
        %v4427 = vrot.slane %v4426, 4
        %v4429 = vshll.u32 %v4186, 16
        %v4431 = vrot.slane %v4429, 5
        %v4432 = vsel %vm3728, %v4427, %v4431
        %v4434 = vshrl.u32 %v4133, 16
        %v4436 = vrot.slane %v4434, 4
        %v4437 = vshll.u32 %v4133, 16
        %v4439 = vrot.slane %v4437, 5
        %v4440 = vor.u32 %v4436, %v4439
        %v4441 = vrot.slane %v4440, 4
        %v4443 = vshll.u32 %v4134, 16
        %v4445 = vrot.slane %v4443, 5
        %v4446 = vsel %vm3728, %v4441, %v4445
        %v4447 = vshrl.u32 %v4134, 16
        %v4449 = vrot.slane %v4447, 4
        %v4450 = vor.u32 %v4449, %v4445
        %v4451 = vrot.slane %v4450, 4
        %v4453 = vshll.u32 %v4187, 16
        %v4455 = vrot.slane %v4453, 5
        %v4456 = vsel %vm3728, %v4451, %v4455
        %v4458 = vshrl.u32 %v4135, 16
        %v4460 = vrot.slane %v4458, 4
        %v4461 = vshll.u32 %v4135, 16
        %v4463 = vrot.slane %v4461, 5
        %v4464 = vor.u32 %v4460, %v4463
        %v4465 = vrot.slane %v4464, 4
        %v4467 = vshll.u32 %v4136, 16
        %v4469 = vrot.slane %v4467, 5
        %v4470 = vsel %vm3728, %v4465, %v4469
        %v4471 = vshrl.u32 %v4136, 16
        %v4473 = vrot.slane %v4471, 4
        %v4474 = vor.u32 %v4473, %v4469
        %v4475 = vrot.slane %v4474, 4
        %v4477 = vshll.u32 %v4188, 16
        %v4479 = vrot.slane %v4477, 5
        %v4480 = vsel %vm3728, %v4475, %v4479
        %v4482 = vshrl.u32 %v4137, 16
        %v4484 = vrot.slane %v4482, 4
        %v4485 = vshll.u32 %v4137, 16
        %v4487 = vrot.slane %v4485, 5
        %v4488 = vor.u32 %v4484, %v4487
        %v4489 = vrot.slane %v4488, 4
        %v4491 = vshll.u32 %v4138, 16
        %v4493 = vrot.slane %v4491, 5
        %v4494 = vsel %vm3728, %v4489, %v4493
        %v4495 = vshrl.u32 %v4138, 16
        %v4497 = vrot.slane %v4495, 4
        %v4498 = vor.u32 %v4497, %v4493
        %v4499 = vrot.slane %v4498, 4
        %v4501 = vshll.u32 %v4189, 16
        %v4503 = vrot.slane %v4501, 5
        %v4504 = vsel %vm3728, %v4499, %v4503
        %v4506 = vshrl.u32 %v4139, 16
        %v4508 = vrot.slane %v4506, 4
        %v4509 = vshll.u32 %v4139, 16
        %v4511 = vrot.slane %v4509, 5
        %v4512 = vor.u32 %v4508, %v4511
        %v4513 = vrot.slane %v4512, 4
        %v4515 = vshll.u32 %v4140, 16
        %v4517 = vrot.slane %v4515, 5
        %v4518 = vsel %vm3728, %v4513, %v4517
        %v4519 = vshrl.u32 %v4140, 16
        %v4521 = vrot.slane %v4519, 4
        %v4522 = vor.u32 %v4521, %v4517
        %v4523 = vrot.slane %v4522, 4
        %v4525 = vshll.u32 %v4190, 16
        %v4527 = vrot.slane %v4525, 5
        %v4528 = vsel %vm3728, %v4523, %v4527
        %v4530 = vshrl.u32 %v4141, 16
        %v4532 = vrot.slane %v4530, 4
        %v4533 = vshll.u32 %v4141, 16
        %v4535 = vrot.slane %v4533, 5
        %v4536 = vor.u32 %v4532, %v4535
        %v4537 = vrot.slane %v4536, 4
        %v4539 = vshll.u32 %v4142, 16
        %v4541 = vrot.slane %v4539, 5
        %v4542 = vsel %vm3728, %v4537, %v4541
        %v4543 = vshrl.u32 %v4142, 16
        %v4545 = vrot.slane %v4543, 4
        %v4546 = vor.u32 %v4545, %v4541
        %v4547 = vrot.slane %v4546, 4
        %v4549 = vshll.u32 %v4191, 16
        %v4551 = vrot.slane %v4549, 5
        %v4552 = vsel %vm3728, %v4547, %v4551
        %v4554 = vshrl.u32 %v4143, 16
        %v4556 = vrot.slane %v4554, 4
        %v4557 = vshll.u32 %v4143, 16
        %v4559 = vrot.slane %v4557, 5
        %v4560 = vor.u32 %v4556, %v4559
        %v4561 = vrot.slane %v4560, 4
        %v4563 = vshll.u32 %v4144, 16
        %v4565 = vrot.slane %v4563, 5
        %v4566 = vsel %vm3728, %v4561, %v4565
        %v4567 = vshrl.u32 %v4144, 16
        %v4569 = vrot.slane %v4567, 4
        %v4570 = vor.u32 %v4569, %v4565
        %v4571 = vrot.slane %v4570, 4
        %v4573 = vshll.u32 %v4192, 16
        %v4575 = vrot.slane %v4573, 5
        %v4576 = vsel %vm3728, %v4571, %v4575
        %v4577 = vld [vmem:[%s2723] sm:$0xf]
        %v4578 = vld [vmem:[%s2723 + $0x4] sm:$0xf]
        %v4579 = vld [vmem:[%s2723 + $0xc] sm:$0xf]
        %v4580 = vld [vmem:[%s2723 + $0x10] sm:$0xf]
        %v4581 = vld [vmem:[%s2723 + $0x18] sm:$0xf]
        %v4582 = vld [vmem:[%s2723 + $0x1c] sm:$0xf]
        %v4583 = vld [vmem:[%s2723 + $0x24] sm:$0xf]
        %v4584 = vld [vmem:[%s2723 + $0x28] sm:$0xf]
        %v4585 = vld [vmem:[%s2723 + $0x30] sm:$0xf]
        %v4586 = vld [vmem:[%s2723 + $0x34] sm:$0xf]
        %v4587 = vld [vmem:[%s2723 + $0x3c] sm:$0xf]
        %v4588 = vld [vmem:[%s2723 + $0x40] sm:$0xf]
        %v4589 = vld [vmem:[%s2723 + $0x48] sm:$0xf]
        %v4590 = vld [vmem:[%s2723 + $0x4c] sm:$0xf]
        %v4591 = vld [vmem:[%s2723 + $0x54] sm:$0xf]
        %v4592 = vld [vmem:[%s2723 + $0x58] sm:$0xf]
        %v4593 = vld [vmem:[%s2723 + $0x60] sm:$0xf]
        %v4594 = vld [vmem:[%s2723 + $0x64] sm:$0xf]
        %v4595 = vld [vmem:[%s2723 + $0x6c] sm:$0xf]
        %v4596 = vld [vmem:[%s2723 + $0x70] sm:$0xf]
        %v4597 = vld [vmem:[%s2723 + $0x78] sm:$0xf]
        %v4598 = vld [vmem:[%s2723 + $0x7c] sm:$0xf]
        %v4599 = vld [vmem:[%s2723 + $0x84] sm:$0xf]
        %v4600 = vld [vmem:[%s2723 + $0x88] sm:$0xf]
        %v4601 = vld [vmem:[%s2723 + $0x90] sm:$0xf]
        %v4602 = vld [vmem:[%s2723 + $0x94] sm:$0xf]
        %v4603 = vld [vmem:[%s2723 + $0x9c] sm:$0xf]
        %v4604 = vld [vmem:[%s2723 + $0xa0] sm:$0xf]
        %v4605 = vld [vmem:[%s2723 + $0xa8] sm:$0xf]
        %v4606 = vld [vmem:[%s2723 + $0xac] sm:$0xf]
        %v4607 = vld [vmem:[%s2723 + $0xb4] sm:$0xf]
        %v4608 = vld [vmem:[%s2723 + $0xb8] sm:$0xf]
        %v4609 = vld [vmem:[%s2954] sm:$0xf]
        %v4610 = vld [vmem:[%s2954 + $0x4] sm:$0xf]
        %v4611 = vld [vmem:[%s2954 + $0xc] sm:$0xf]
        %v4612 = vld [vmem:[%s2954 + $0x10] sm:$0xf]
        %v4613 = vld [vmem:[%s2954 + $0x18] sm:$0xf]
        %v4614 = vld [vmem:[%s2954 + $0x1c] sm:$0xf]
        %v4615 = vld [vmem:[%s2954 + $0x24] sm:$0xf]
        %v4616 = vld [vmem:[%s2954 + $0x28] sm:$0xf]
        %v4617 = vld [vmem:[%s2954 + $0x30] sm:$0xf]
        %v4618 = vld [vmem:[%s2954 + $0x34] sm:$0xf]
        %v4619 = vld [vmem:[%s2954 + $0x3c] sm:$0xf]
        %v4620 = vld [vmem:[%s2954 + $0x40] sm:$0xf]
        %v4621 = vld [vmem:[%s2954 + $0x48] sm:$0xf]
        %v4622 = vld [vmem:[%s2954 + $0x4c] sm:$0xf]
        %v4623 = vld [vmem:[%s2954 + $0x54] sm:$0xf]
        %v4624 = vld [vmem:[%s2954 + $0x58] sm:$0xf]
        %v4625 = vld [vmem:[%s2954 + $0x60] sm:$0xf]
        %v4626 = vld [vmem:[%s2954 + $0x64] sm:$0xf]
        %v4627 = vld [vmem:[%s2954 + $0x6c] sm:$0xf]
        %v4628 = vld [vmem:[%s2954 + $0x70] sm:$0xf]
        %v4629 = vld [vmem:[%s2954 + $0x78] sm:$0xf]
        %v4630 = vld [vmem:[%s2954 + $0x7c] sm:$0xf]
        %v4631 = vld [vmem:[%s2954 + $0x84] sm:$0xf]
        %v4632 = vld [vmem:[%s2954 + $0x88] sm:$0xf]
        %v4633 = vld [vmem:[%s2954 + $0x90] sm:$0xf]
        %v4634 = vld [vmem:[%s2954 + $0x94] sm:$0xf]
        %v4635 = vld [vmem:[%s2954 + $0x9c] sm:$0xf]
        %v4636 = vld [vmem:[%s2954 + $0xa0] sm:$0xf]
        %v4637 = vld [vmem:[%s2954 + $0xa8] sm:$0xf]
        %v4638 = vld [vmem:[%s2954 + $0xac] sm:$0xf]
        %v4639 = vld [vmem:[%s2954 + $0xb4] sm:$0xf]
        %v4640 = vld [vmem:[%s2954 + $0xb8] sm:$0xf]
        %v4641 = vld [vmem:[%s2723 + $0x8] sm:$0x1]
        %v4642 = vld [vmem:[%s2723 + $0x14] sm:$0x1]
        %v4643 = vld [vmem:[%s2723 + $0x20] sm:$0x1]
        %v4644 = vld [vmem:[%s2723 + $0x2c] sm:$0x1]
        %v4645 = vld [vmem:[%s2723 + $0x38] sm:$0x1]
        %v4646 = vld [vmem:[%s2723 + $0x44] sm:$0x1]
        %v4647 = vld [vmem:[%s2723 + $0x50] sm:$0x1]
        %v4648 = vld [vmem:[%s2723 + $0x5c] sm:$0x1]
        %v4649 = vld [vmem:[%s2723 + $0x68] sm:$0x1]
        %v4650 = vld [vmem:[%s2723 + $0x74] sm:$0x1]
        %v4651 = vld [vmem:[%s2723 + $0x80] sm:$0x1]
        %v4652 = vld [vmem:[%s2723 + $0x8c] sm:$0x1]
        %v4653 = vld [vmem:[%s2723 + $0x98] sm:$0x1]
        %v4654 = vld [vmem:[%s2723 + $0xa4] sm:$0x1]
        %v4655 = vld [vmem:[%s2723 + $0xb0] sm:$0x1]
        %v4656 = vld [vmem:[%s2723 + $0xbc] sm:$0x1]
        %v4658 = vshrl.u32 %v4577, 16
        %v4660 = vrot.slane %v4658, 4
        %v4661 = vshll.u32 %v4577, 16
        %v4663 = vrot.slane %v4661, 5
        %v4664 = vor.u32 %v4660, %v4663
        %v4665 = vrot.slane %v4664, 4
        %v4667 = vshll.u32 %v4578, 16
        %v4669 = vrot.slane %v4667, 5
        %v4670 = vsel %vm3728, %v4665, %v4669
        %v4671 = vshrl.u32 %v4578, 16
        %v4673 = vrot.slane %v4671, 4
        %v4674 = vor.u32 %v4673, %v4669
        %v4675 = vrot.slane %v4674, 4
        %v4677 = vshll.u32 %v4641, 16
        %v4679 = vrot.slane %v4677, 5
        %v4680 = vsel %vm3728, %v4675, %v4679
        %v4682 = vshrl.u32 %v4579, 16
        %v4684 = vrot.slane %v4682, 4
        %v4685 = vshll.u32 %v4579, 16
        %v4687 = vrot.slane %v4685, 5
        %v4688 = vor.u32 %v4684, %v4687
        %v4689 = vrot.slane %v4688, 4
        %v4691 = vshll.u32 %v4580, 16
        %v4693 = vrot.slane %v4691, 5
        %v4694 = vsel %vm3728, %v4689, %v4693
        %v4695 = vshrl.u32 %v4580, 16
        %v4697 = vrot.slane %v4695, 4
        %v4698 = vor.u32 %v4697, %v4693
        %v4699 = vrot.slane %v4698, 4
        %v4701 = vshll.u32 %v4642, 16
        %v4703 = vrot.slane %v4701, 5
        %v4704 = vsel %vm3728, %v4699, %v4703
        %v4706 = vshrl.u32 %v4581, 16
        %v4708 = vrot.slane %v4706, 4
        %v4709 = vshll.u32 %v4581, 16
        %v4711 = vrot.slane %v4709, 5
        %v4712 = vor.u32 %v4708, %v4711
        %v4713 = vrot.slane %v4712, 4
        %v4715 = vshll.u32 %v4582, 16
        %v4717 = vrot.slane %v4715, 5
        %v4718 = vsel %vm3728, %v4713, %v4717
        %v4719 = vshrl.u32 %v4582, 16
        %v4721 = vrot.slane %v4719, 4
        %v4722 = vor.u32 %v4721, %v4717
        %v4723 = vrot.slane %v4722, 4
        %v4725 = vshll.u32 %v4643, 16
        %v4727 = vrot.slane %v4725, 5
        %v4728 = vsel %vm3728, %v4723, %v4727
        %v4730 = vshrl.u32 %v4583, 16
        %v4732 = vrot.slane %v4730, 4
        %v4733 = vshll.u32 %v4583, 16
        %v4735 = vrot.slane %v4733, 5
        %v4736 = vor.u32 %v4732, %v4735
        %v4737 = vrot.slane %v4736, 4
        %v4739 = vshll.u32 %v4584, 16
        %v4741 = vrot.slane %v4739, 5
        %v4742 = vsel %vm3728, %v4737, %v4741
        %v4743 = vshrl.u32 %v4584, 16
        %v4745 = vrot.slane %v4743, 4
        %v4746 = vor.u32 %v4745, %v4741
        %v4747 = vrot.slane %v4746, 4
        %v4749 = vshll.u32 %v4644, 16
        %v4751 = vrot.slane %v4749, 5
        %v4752 = vsel %vm3728, %v4747, %v4751
        %v4754 = vshrl.u32 %v4585, 16
        %v4756 = vrot.slane %v4754, 4
        %v4757 = vshll.u32 %v4585, 16
        %v4759 = vrot.slane %v4757, 5
        %v4760 = vor.u32 %v4756, %v4759
        %v4761 = vrot.slane %v4760, 4
        %v4763 = vshll.u32 %v4586, 16
        %v4765 = vrot.slane %v4763, 5
        %v4766 = vsel %vm3728, %v4761, %v4765
        %v4767 = vshrl.u32 %v4586, 16
        %v4769 = vrot.slane %v4767, 4
        %v4770 = vor.u32 %v4769, %v4765
        %v4771 = vrot.slane %v4770, 4
        %v4773 = vshll.u32 %v4645, 16
        %v4775 = vrot.slane %v4773, 5
        %v4776 = vsel %vm3728, %v4771, %v4775
        %v4778 = vshrl.u32 %v4587, 16
        %v4780 = vrot.slane %v4778, 4
        %v4781 = vshll.u32 %v4587, 16
        %v4783 = vrot.slane %v4781, 5
        %v4784 = vor.u32 %v4780, %v4783
        %v4785 = vrot.slane %v4784, 4
        %v4787 = vshll.u32 %v4588, 16
        %v4789 = vrot.slane %v4787, 5
        %v4790 = vsel %vm3728, %v4785, %v4789
        %v4791 = vshrl.u32 %v4588, 16
        %v4793 = vrot.slane %v4791, 4
        %v4794 = vor.u32 %v4793, %v4789
        %v4795 = vrot.slane %v4794, 4
        %v4797 = vshll.u32 %v4646, 16
        %v4799 = vrot.slane %v4797, 5
        %v4800 = vsel %vm3728, %v4795, %v4799
        %v4802 = vshrl.u32 %v4589, 16
        %v4804 = vrot.slane %v4802, 4
        %v4805 = vshll.u32 %v4589, 16
        %v4807 = vrot.slane %v4805, 5
        %v4808 = vor.u32 %v4804, %v4807
        %v4809 = vrot.slane %v4808, 4
        %v4811 = vshll.u32 %v4590, 16
        %v4813 = vrot.slane %v4811, 5
        %v4814 = vsel %vm3728, %v4809, %v4813
        %v4815 = vshrl.u32 %v4590, 16
        %v4817 = vrot.slane %v4815, 4
        %v4818 = vor.u32 %v4817, %v4813
        %v4819 = vrot.slane %v4818, 4
        %v4821 = vshll.u32 %v4647, 16
        %v4823 = vrot.slane %v4821, 5
        %v4824 = vsel %vm3728, %v4819, %v4823
        %v4826 = vshrl.u32 %v4591, 16
        %v4828 = vrot.slane %v4826, 4
        %v4829 = vshll.u32 %v4591, 16
        %v4831 = vrot.slane %v4829, 5
        %v4832 = vor.u32 %v4828, %v4831
        %v4833 = vrot.slane %v4832, 4
        %v4835 = vshll.u32 %v4592, 16
        %v4837 = vrot.slane %v4835, 5
        %v4838 = vsel %vm3728, %v4833, %v4837
        %v4839 = vshrl.u32 %v4592, 16
        %v4841 = vrot.slane %v4839, 4
        %v4842 = vor.u32 %v4841, %v4837
        %v4843 = vrot.slane %v4842, 4
        %v4845 = vshll.u32 %v4648, 16
        %v4847 = vrot.slane %v4845, 5
        %v4848 = vsel %vm3728, %v4843, %v4847
        %v4850 = vshrl.u32 %v4593, 16
        %v4852 = vrot.slane %v4850, 4
        %v4853 = vshll.u32 %v4593, 16
        %v4855 = vrot.slane %v4853, 5
        %v4856 = vor.u32 %v4852, %v4855
        %v4857 = vrot.slane %v4856, 4
        %v4859 = vshll.u32 %v4594, 16
        %v4861 = vrot.slane %v4859, 5
        %v4862 = vsel %vm3728, %v4857, %v4861
        %v4863 = vshrl.u32 %v4594, 16
        %v4865 = vrot.slane %v4863, 4
        %v4866 = vor.u32 %v4865, %v4861
        %v4867 = vrot.slane %v4866, 4
        %v4869 = vshll.u32 %v4649, 16
        %v4871 = vrot.slane %v4869, 5
        %v4872 = vsel %vm3728, %v4867, %v4871
        %v4874 = vshrl.u32 %v4595, 16
        %v4876 = vrot.slane %v4874, 4
        %v4877 = vshll.u32 %v4595, 16
        %v4879 = vrot.slane %v4877, 5
        %v4880 = vor.u32 %v4876, %v4879
        %v4881 = vrot.slane %v4880, 4
        %v4883 = vshll.u32 %v4596, 16
        %v4885 = vrot.slane %v4883, 5
        %v4886 = vsel %vm3728, %v4881, %v4885
        %v4887 = vshrl.u32 %v4596, 16
        %v4889 = vrot.slane %v4887, 4
        %v4890 = vor.u32 %v4889, %v4885
        %v4891 = vrot.slane %v4890, 4
        %v4893 = vshll.u32 %v4650, 16
        %v4895 = vrot.slane %v4893, 5
        %v4896 = vsel %vm3728, %v4891, %v4895
        %v4898 = vshrl.u32 %v4597, 16
        %v4900 = vrot.slane %v4898, 4
        %v4901 = vshll.u32 %v4597, 16
        %v4903 = vrot.slane %v4901, 5
        %v4904 = vor.u32 %v4900, %v4903
        %v4905 = vrot.slane %v4904, 4
        %v4907 = vshll.u32 %v4598, 16
        %v4909 = vrot.slane %v4907, 5
        %v4910 = vsel %vm3728, %v4905, %v4909
        %v4911 = vshrl.u32 %v4598, 16
        %v4913 = vrot.slane %v4911, 4
        %v4914 = vor.u32 %v4913, %v4909
        %v4915 = vrot.slane %v4914, 4
        %v4917 = vshll.u32 %v4651, 16
        %v4919 = vrot.slane %v4917, 5
        %v4920 = vsel %vm3728, %v4915, %v4919
        %v4922 = vshrl.u32 %v4599, 16
        %v4924 = vrot.slane %v4922, 4
        %v4925 = vshll.u32 %v4599, 16
        %v4927 = vrot.slane %v4925, 5
        %v4928 = vor.u32 %v4924, %v4927
        %v4929 = vrot.slane %v4928, 4
        %v4931 = vshll.u32 %v4600, 16
        %v4933 = vrot.slane %v4931, 5
        %v4934 = vsel %vm3728, %v4929, %v4933
        %v4935 = vshrl.u32 %v4600, 16
        %v4937 = vrot.slane %v4935, 4
        %v4938 = vor.u32 %v4937, %v4933
        %v4939 = vrot.slane %v4938, 4
        %v4941 = vshll.u32 %v4652, 16
        %v4943 = vrot.slane %v4941, 5
        %v4944 = vsel %vm3728, %v4939, %v4943
        %v4946 = vshrl.u32 %v4601, 16
        %v4948 = vrot.slane %v4946, 4
        %v4949 = vshll.u32 %v4601, 16
        %v4951 = vrot.slane %v4949, 5
        %v4952 = vor.u32 %v4948, %v4951
        %v4953 = vrot.slane %v4952, 4
        %v4955 = vshll.u32 %v4602, 16
        %v4957 = vrot.slane %v4955, 5
        %v4958 = vsel %vm3728, %v4953, %v4957
        %v4959 = vshrl.u32 %v4602, 16
        %v4961 = vrot.slane %v4959, 4
        %v4962 = vor.u32 %v4961, %v4957
        %v4963 = vrot.slane %v4962, 4
        %v4965 = vshll.u32 %v4653, 16
        %v4967 = vrot.slane %v4965, 5
        %v4968 = vsel %vm3728, %v4963, %v4967
        %v4970 = vshrl.u32 %v4603, 16
        %v4972 = vrot.slane %v4970, 4
        %v4973 = vshll.u32 %v4603, 16
        %v4975 = vrot.slane %v4973, 5
        %v4976 = vor.u32 %v4972, %v4975
        %v4977 = vrot.slane %v4976, 4
        %v4979 = vshll.u32 %v4604, 16
        %v4981 = vrot.slane %v4979, 5
        %v4982 = vsel %vm3728, %v4977, %v4981
        %v4983 = vshrl.u32 %v4604, 16
        %v4985 = vrot.slane %v4983, 4
        %v4986 = vor.u32 %v4985, %v4981
        %v4987 = vrot.slane %v4986, 4
        %v4989 = vshll.u32 %v4654, 16
        %v4991 = vrot.slane %v4989, 5
        %v4992 = vsel %vm3728, %v4987, %v4991
        %v4994 = vshrl.u32 %v4605, 16
        %v4996 = vrot.slane %v4994, 4
        %v4997 = vshll.u32 %v4605, 16
        %v4999 = vrot.slane %v4997, 5
        %v5000 = vor.u32 %v4996, %v4999
        %v5001 = vrot.slane %v5000, 4
        %v5003 = vshll.u32 %v4606, 16
        %v5005 = vrot.slane %v5003, 5
        %v5006 = vsel %vm3728, %v5001, %v5005
        %v5007 = vshrl.u32 %v4606, 16
        %v5009 = vrot.slane %v5007, 4
        %v5010 = vor.u32 %v5009, %v5005
        %v5011 = vrot.slane %v5010, 4
        %v5013 = vshll.u32 %v4655, 16
        %v5015 = vrot.slane %v5013, 5
        %v5016 = vsel %vm3728, %v5011, %v5015
        %v5018 = vshrl.u32 %v4607, 16
        %v5020 = vrot.slane %v5018, 4
        %v5021 = vshll.u32 %v4607, 16
        %v5023 = vrot.slane %v5021, 5
        %v5024 = vor.u32 %v5020, %v5023
        %v5025 = vrot.slane %v5024, 4
        %v5027 = vshll.u32 %v4608, 16
        %v5029 = vrot.slane %v5027, 5
        %v5030 = vsel %vm3728, %v5025, %v5029
        %v5031 = vshrl.u32 %v4608, 16
        %v5033 = vrot.slane %v5031, 4
        %v5034 = vor.u32 %v5033, %v5029
        %v5035 = vrot.slane %v5034, 4
        %v5037 = vshll.u32 %v4656, 16
        %v5039 = vrot.slane %v5037, 5
        %v5040 = vsel %vm3728, %v5035, %v5039
        %v5073 = vunpack.c.l.b16 %v3645
        %v5074 = vunpack.c.l.b16 %v3646
        %v5075 = vunpack.c.l.b16 %v3647
        %v5076 = vunpack.c.l.b16 %v3648
        %v5077 = vunpack.c.l.b16 %v3649
        %v5078 = vunpack.c.l.b16 %v3650
        %v5079 = vunpack.c.l.b16 %v3651
        %v5080 = vunpack.c.l.b16 %v3652
        %v5081 = vunpack.c.l.b16 %v3653
        %v5082 = vunpack.c.l.b16 %v3654
        %v5083 = vunpack.c.l.b16 %v3655
        %v5084 = vunpack.c.l.b16 %v3656
        %v5085 = vunpack.c.l.b16 %v3657
        %v5086 = vunpack.c.l.b16 %v3658
        %v5087 = vunpack.c.l.b16 %v3659
        %v5088 = vunpack.c.l.b16 %v3660
        %v5089 = vunpack.c.l.b16 %v3661
        %v5090 = vunpack.c.l.b16 %v3662
        %v5091 = vunpack.c.l.b16 %v3663
        %v5092 = vunpack.c.l.b16 %v3664
        %v5093 = vunpack.c.l.b16 %v3665
        %v5094 = vunpack.c.l.b16 %v3666
        %v5095 = vunpack.c.l.b16 %v3667
        %v5096 = vunpack.c.l.b16 %v3668
        %v5097 = vunpack.c.l.b16 %v3669
        %v5098 = vunpack.c.l.b16 %v3670
        %v5099 = vunpack.c.l.b16 %v3671
        %v5100 = vunpack.c.l.b16 %v3672
        %v5101 = vunpack.c.l.b16 %v3673
        %v5102 = vunpack.c.l.b16 %v3674
        %v5103 = vunpack.c.l.b16 %v3675
        %v5104 = vunpack.c.l.b16 %v3676
        %v5105 = vpack.c.b16 %v5074, %v5073
        %v5106 = vpack.c.b16 %v5076, %v5075
        %v5107 = vpack.c.b16 %v5078, %v5077
        %v5108 = vpack.c.b16 %v5080, %v5079
        %v5109 = vpack.c.b16 %v5082, %v5081
        %v5110 = vpack.c.b16 %v5084, %v5083
        %v5111 = vpack.c.b16 %v5086, %v5085
        %v5112 = vpack.c.b16 %v5088, %v5087
        %v5113 = vpack.c.b16 %v5090, %v5089
        %v5114 = vpack.c.b16 %v5092, %v5091
        %v5115 = vpack.c.b16 %v5094, %v5093
        %v5116 = vpack.c.b16 %v5096, %v5095
        %v5117 = vpack.c.b16 %v5098, %v5097
        %v5118 = vpack.c.b16 %v5100, %v5099
        %v5119 = vpack.c.b16 %v5102, %v5101
        %v5120 = vpack.c.b16 %v5104, %v5103
        %v5153 = vunpack.c.l.b16 %v3678
        %v5154 = vunpack.c.l.b16 %v3679
        %v5155 = vunpack.c.l.b16 %v3680
        %v5156 = vunpack.c.l.b16 %v3681
        %v5157 = vunpack.c.l.b16 %v3682
        %v5158 = vunpack.c.l.b16 %v3683
        %v5159 = vunpack.c.l.b16 %v3684
        %v5160 = vunpack.c.l.b16 %v3685
        %v5161 = vunpack.c.l.b16 %v3686
        %v5162 = vunpack.c.l.b16 %v3687
        %v5163 = vunpack.c.l.b16 %v3688
        %v5164 = vunpack.c.l.b16 %v3689
        %v5165 = vunpack.c.l.b16 %v3690
        %v5166 = vunpack.c.l.b16 %v3691
        %v5167 = vunpack.c.l.b16 %v3692
        %v5168 = vunpack.c.l.b16 %v3693
        %v5169 = vunpack.c.l.b16 %v3694
        %v5170 = vunpack.c.l.b16 %v3695
        %v5171 = vunpack.c.l.b16 %v3696
        %v5172 = vunpack.c.l.b16 %v3697
        %v5173 = vunpack.c.l.b16 %v3698
        %v5174 = vunpack.c.l.b16 %v3699
        %v5175 = vunpack.c.l.b16 %v3700
        %v5176 = vunpack.c.l.b16 %v3701
        %v5177 = vunpack.c.l.b16 %v3702
        %v5178 = vunpack.c.l.b16 %v3703
        %v5179 = vunpack.c.l.b16 %v3704
        %v5180 = vunpack.c.l.b16 %v3705
        %v5181 = vunpack.c.l.b16 %v3706
        %v5182 = vunpack.c.l.b16 %v3707
        %v5183 = vunpack.c.l.b16 %v3708
        %v5184 = vunpack.c.l.b16 %v3709
        %v5185 = vpack.c.b16 %v5154, %v5153
        %v5186 = vpack.c.b16 %v5156, %v5155
        %v5187 = vpack.c.b16 %v5158, %v5157
        %v5188 = vpack.c.b16 %v5160, %v5159
        %v5189 = vpack.c.b16 %v5162, %v5161
        %v5190 = vpack.c.b16 %v5164, %v5163
        %v5191 = vpack.c.b16 %v5166, %v5165
        %v5192 = vpack.c.b16 %v5168, %v5167
        %v5193 = vpack.c.b16 %v5170, %v5169
        %v5194 = vpack.c.b16 %v5172, %v5171
        %v5195 = vpack.c.b16 %v5174, %v5173
        %v5196 = vpack.c.b16 %v5176, %v5175
        %v5197 = vpack.c.b16 %v5178, %v5177
        %v5198 = vpack.c.b16 %v5180, %v5179
        %v5199 = vpack.c.b16 %v5182, %v5181
        %v5200 = vpack.c.b16 %v5184, %v5183
        %5201 = vrot.lane.b32.xlu0 %v5185, 16
        %v5202 = vpop.permute.xlu0 %5201
        %5203 = vrot.lane.b32.xlu0 %v5186, 16
        %v5204 = vpop.permute.xlu0 %5203
        %5205 = vrot.lane.b32.xlu0 %v5187, 16
        %v5206 = vpop.permute.xlu0 %5205
        %5207 = vrot.lane.b32.xlu0 %v5188, 16
        %v5208 = vpop.permute.xlu0 %5207
        %5209 = vrot.lane.b32.xlu0 %v5189, 16
        %v5210 = vpop.permute.xlu0 %5209
        %5211 = vrot.lane.b32.xlu0 %v5190, 16
        %v5212 = vpop.permute.xlu0 %5211
        %5213 = vrot.lane.b32.xlu0 %v5191, 16
        %v5214 = vpop.permute.xlu0 %5213
        %5215 = vrot.lane.b32.xlu0 %v5192, 16
        %v5216 = vpop.permute.xlu0 %5215
        %5217 = vrot.lane.b32.xlu0 %v5193, 16
        %v5218 = vpop.permute.xlu0 %5217
        %5219 = vrot.lane.b32.xlu0 %v5194, 16
        %v5220 = vpop.permute.xlu0 %5219
        %5221 = vrot.lane.b32.xlu0 %v5195, 16
        %v5222 = vpop.permute.xlu0 %5221
        %5223 = vrot.lane.b32.xlu0 %v5196, 16
        %v5224 = vpop.permute.xlu0 %5223
        %5225 = vrot.lane.b32.xlu0 %v5197, 16
        %v5226 = vpop.permute.xlu0 %5225
        %5227 = vrot.lane.b32.xlu0 %v5198, 16
        %v5228 = vpop.permute.xlu0 %5227
        %5229 = vrot.lane.b32.xlu0 %v5199, 16
        %v5230 = vpop.permute.xlu0 %5229
        %5231 = vrot.lane.b32.xlu0 %v5200, 16
        %v5232 = vpop.permute.xlu0 %5231
        %v5233 = vunpack.c.l.b16 %v3742
        %v5234 = vunpack.c.l.b16 %v3752
        %v5235 = vunpack.c.l.b16 %v3766
        %v5236 = vunpack.c.l.b16 %v3776
        %v5237 = vunpack.c.l.b16 %v3790
        %v5238 = vunpack.c.l.b16 %v3800
        %v5239 = vunpack.c.l.b16 %v3814
        %v5240 = vunpack.c.l.b16 %v3824
        %v5241 = vunpack.c.l.b16 %v3838
        %v5242 = vunpack.c.l.b16 %v3848
        %v5243 = vunpack.c.l.b16 %v3862
        %v5244 = vunpack.c.l.b16 %v3872
        %v5245 = vunpack.c.l.b16 %v3886
        %v5246 = vunpack.c.l.b16 %v3896
        %v5247 = vunpack.c.l.b16 %v3910
        %v5248 = vunpack.c.l.b16 %v3920
        %v5249 = vunpack.c.l.b16 %v3934
        %v5250 = vunpack.c.l.b16 %v3944
        %v5251 = vunpack.c.l.b16 %v3958
        %v5252 = vunpack.c.l.b16 %v3968
        %v5253 = vunpack.c.l.b16 %v3982
        %v5254 = vunpack.c.l.b16 %v3992
        %v5255 = vunpack.c.l.b16 %v4006
        %v5256 = vunpack.c.l.b16 %v4016
        %v5257 = vunpack.c.l.b16 %v4030
        %v5258 = vunpack.c.l.b16 %v4040
        %v5259 = vunpack.c.l.b16 %v4054
        %v5260 = vunpack.c.l.b16 %v4064
        %v5261 = vunpack.c.l.b16 %v4078
        %v5262 = vunpack.c.l.b16 %v4088
        %v5263 = vunpack.c.l.b16 %v4102
        %v5264 = vunpack.c.l.b16 %v4112
        %v5265 = vpack.c.b16 %v5234, %v5233
        %v5266 = vpack.c.b16 %v5236, %v5235
        %v5267 = vpack.c.b16 %v5238, %v5237
        %v5268 = vpack.c.b16 %v5240, %v5239
        %v5269 = vpack.c.b16 %v5242, %v5241
        %v5270 = vpack.c.b16 %v5244, %v5243
        %v5271 = vpack.c.b16 %v5246, %v5245
        %v5272 = vpack.c.b16 %v5248, %v5247
        %v5273 = vpack.c.b16 %v5250, %v5249
        %v5274 = vpack.c.b16 %v5252, %v5251
        %v5275 = vpack.c.b16 %v5254, %v5253
        %v5276 = vpack.c.b16 %v5256, %v5255
        %v5277 = vpack.c.b16 %v5258, %v5257
        %v5278 = vpack.c.b16 %v5260, %v5259
        %v5279 = vpack.c.b16 %v5262, %v5261
        %v5280 = vpack.c.b16 %v5264, %v5263
        %5281 = vrot.lane.b32.xlu0 %v5265, 32
        %v5282 = vpop.permute.xlu0 %5281
        %5283 = vrot.lane.b32.xlu0 %v5266, 32
        %v5284 = vpop.permute.xlu0 %5283
        %5285 = vrot.lane.b32.xlu0 %v5267, 32
        %v5286 = vpop.permute.xlu0 %5285
        %5287 = vrot.lane.b32.xlu0 %v5268, 32
        %v5288 = vpop.permute.xlu0 %5287
        %5289 = vrot.lane.b32.xlu0 %v5269, 32
        %v5290 = vpop.permute.xlu0 %5289
        %5291 = vrot.lane.b32.xlu0 %v5270, 32
        %v5292 = vpop.permute.xlu0 %5291
        %5293 = vrot.lane.b32.xlu0 %v5271, 32
        %v5294 = vpop.permute.xlu0 %5293
        %5295 = vrot.lane.b32.xlu0 %v5272, 32
        %v5296 = vpop.permute.xlu0 %5295
        %5297 = vrot.lane.b32.xlu0 %v5273, 32
        %v5298 = vpop.permute.xlu0 %5297
        %5299 = vrot.lane.b32.xlu0 %v5274, 32
        %v5300 = vpop.permute.xlu0 %5299
        %5301 = vrot.lane.b32.xlu0 %v5275, 32
        %v5302 = vpop.permute.xlu0 %5301
        %5303 = vrot.lane.b32.xlu0 %v5276, 32
        %v5304 = vpop.permute.xlu0 %5303
        %5305 = vrot.lane.b32.xlu0 %v5277, 32
        %v5306 = vpop.permute.xlu0 %5305
        %5307 = vrot.lane.b32.xlu0 %v5278, 32
        %v5308 = vpop.permute.xlu0 %5307
        %5309 = vrot.lane.b32.xlu0 %v5279, 32
        %v5310 = vpop.permute.xlu0 %5309
        %5311 = vrot.lane.b32.xlu0 %v5280, 32
        %v5312 = vpop.permute.xlu0 %5311
        %v5345 = vunpack.c.l.b16 %v4113
        %v5346 = vunpack.c.l.b16 %v4114
        %v5347 = vunpack.c.l.b16 %v4115
        %v5348 = vunpack.c.l.b16 %v4116
        %v5349 = vunpack.c.l.b16 %v4117
        %v5350 = vunpack.c.l.b16 %v4118
        %v5351 = vunpack.c.l.b16 %v4119
        %v5352 = vunpack.c.l.b16 %v4120
        %v5353 = vunpack.c.l.b16 %v4121
        %v5354 = vunpack.c.l.b16 %v4122
        %v5355 = vunpack.c.l.b16 %v4123
        %v5356 = vunpack.c.l.b16 %v4124
        %v5357 = vunpack.c.l.b16 %v4125
        %v5358 = vunpack.c.l.b16 %v4126
        %v5359 = vunpack.c.l.b16 %v4127
        %v5360 = vunpack.c.l.b16 %v4128
        %v5361 = vunpack.c.l.b16 %v4129
        %v5362 = vunpack.c.l.b16 %v4130
        %v5363 = vunpack.c.l.b16 %v4131
        %v5364 = vunpack.c.l.b16 %v4132
        %v5365 = vunpack.c.l.b16 %v4133
        %v5366 = vunpack.c.l.b16 %v4134
        %v5367 = vunpack.c.l.b16 %v4135
        %v5368 = vunpack.c.l.b16 %v4136
        %v5369 = vunpack.c.l.b16 %v4137
        %v5370 = vunpack.c.l.b16 %v4138
        %v5371 = vunpack.c.l.b16 %v4139
        %v5372 = vunpack.c.l.b16 %v4140
        %v5373 = vunpack.c.l.b16 %v4141
        %v5374 = vunpack.c.l.b16 %v4142
        %v5375 = vunpack.c.l.b16 %v4143
        %v5376 = vunpack.c.l.b16 %v4144
        %v5377 = vpack.c.b16 %v5346, %v5345
        %v5378 = vpack.c.b16 %v5348, %v5347
        %v5379 = vpack.c.b16 %v5350, %v5349
        %v5380 = vpack.c.b16 %v5352, %v5351
        %v5381 = vpack.c.b16 %v5354, %v5353
        %v5382 = vpack.c.b16 %v5356, %v5355
        %v5383 = vpack.c.b16 %v5358, %v5357
        %v5384 = vpack.c.b16 %v5360, %v5359
        %v5385 = vpack.c.b16 %v5362, %v5361
        %v5386 = vpack.c.b16 %v5364, %v5363
        %v5387 = vpack.c.b16 %v5366, %v5365
        %v5388 = vpack.c.b16 %v5368, %v5367
        %v5389 = vpack.c.b16 %v5370, %v5369
        %v5390 = vpack.c.b16 %v5372, %v5371
        %v5391 = vpack.c.b16 %v5374, %v5373
        %v5392 = vpack.c.b16 %v5376, %v5375
        %5393 = vrot.lane.b32.xlu0 %v5377, 48
        %v5394 = vpop.permute.xlu0 %5393
        %5395 = vrot.lane.b32.xlu0 %v5378, 48
        %v5396 = vpop.permute.xlu0 %5395
        %5397 = vrot.lane.b32.xlu0 %v5379, 48
        %v5398 = vpop.permute.xlu0 %5397
        %5399 = vrot.lane.b32.xlu0 %v5380, 48
        %v5400 = vpop.permute.xlu0 %5399
        %5401 = vrot.lane.b32.xlu0 %v5381, 48
        %v5402 = vpop.permute.xlu0 %5401
        %5403 = vrot.lane.b32.xlu0 %v5382, 48
        %v5404 = vpop.permute.xlu0 %5403
        %5405 = vrot.lane.b32.xlu0 %v5383, 48
        %v5406 = vpop.permute.xlu0 %5405
        %5407 = vrot.lane.b32.xlu0 %v5384, 48
        %v5408 = vpop.permute.xlu0 %5407
        %5409 = vrot.lane.b32.xlu0 %v5385, 48
        %v5410 = vpop.permute.xlu0 %5409
        %5411 = vrot.lane.b32.xlu0 %v5386, 48
        %v5412 = vpop.permute.xlu0 %5411
        %5413 = vrot.lane.b32.xlu0 %v5387, 48
        %v5414 = vpop.permute.xlu0 %5413
        %5415 = vrot.lane.b32.xlu0 %v5388, 48
        %v5416 = vpop.permute.xlu0 %5415
        %5417 = vrot.lane.b32.xlu0 %v5389, 48
        %v5418 = vpop.permute.xlu0 %5417
        %5419 = vrot.lane.b32.xlu0 %v5390, 48
        %v5420 = vpop.permute.xlu0 %5419
        %5421 = vrot.lane.b32.xlu0 %v5391, 48
        %v5422 = vpop.permute.xlu0 %5421
        %5423 = vrot.lane.b32.xlu0 %v5392, 48
        %v5424 = vpop.permute.xlu0 %5423
        %v5457 = vunpack.c.l.b16 %v4145
        %v5458 = vunpack.c.l.b16 %v4146
        %v5459 = vunpack.c.l.b16 %v4147
        %v5460 = vunpack.c.l.b16 %v4148
        %v5461 = vunpack.c.l.b16 %v4149
        %v5462 = vunpack.c.l.b16 %v4150
        %v5463 = vunpack.c.l.b16 %v4151
        %v5464 = vunpack.c.l.b16 %v4152
        %v5465 = vunpack.c.l.b16 %v4153
        %v5466 = vunpack.c.l.b16 %v4154
        %v5467 = vunpack.c.l.b16 %v4155
        %v5468 = vunpack.c.l.b16 %v4156
        %v5469 = vunpack.c.l.b16 %v4157
        %v5470 = vunpack.c.l.b16 %v4158
        %v5471 = vunpack.c.l.b16 %v4159
        %v5472 = vunpack.c.l.b16 %v4160
        %v5473 = vunpack.c.l.b16 %v4161
        %v5474 = vunpack.c.l.b16 %v4162
        %v5475 = vunpack.c.l.b16 %v4163
        %v5476 = vunpack.c.l.b16 %v4164
        %v5477 = vunpack.c.l.b16 %v4165
        %v5478 = vunpack.c.l.b16 %v4166
        %v5479 = vunpack.c.l.b16 %v4167
        %v5480 = vunpack.c.l.b16 %v4168
        %v5481 = vunpack.c.l.b16 %v4169
        %v5482 = vunpack.c.l.b16 %v4170
        %v5483 = vunpack.c.l.b16 %v4171
        %v5484 = vunpack.c.l.b16 %v4172
        %v5485 = vunpack.c.l.b16 %v4173
        %v5486 = vunpack.c.l.b16 %v4174
        %v5487 = vunpack.c.l.b16 %v4175
        %v5488 = vunpack.c.l.b16 %v4176
        %v5489 = vpack.c.b16 %v5458, %v5457
        %v5490 = vpack.c.b16 %v5460, %v5459
        %v5491 = vpack.c.b16 %v5462, %v5461
        %v5492 = vpack.c.b16 %v5464, %v5463
        %v5493 = vpack.c.b16 %v5466, %v5465
        %v5494 = vpack.c.b16 %v5468, %v5467
        %v5495 = vpack.c.b16 %v5470, %v5469
        %v5496 = vpack.c.b16 %v5472, %v5471
        %v5497 = vpack.c.b16 %v5474, %v5473
        %v5498 = vpack.c.b16 %v5476, %v5475
        %v5499 = vpack.c.b16 %v5478, %v5477
        %v5500 = vpack.c.b16 %v5480, %v5479
        %v5501 = vpack.c.b16 %v5482, %v5481
        %v5502 = vpack.c.b16 %v5484, %v5483
        %v5503 = vpack.c.b16 %v5486, %v5485
        %v5504 = vpack.c.b16 %v5488, %v5487
        %5505 = vrot.lane.b32.xlu0 %v5489, 64
        %v5506 = vpop.permute.xlu0 %5505
        %5507 = vrot.lane.b32.xlu0 %v5490, 64
        %v5508 = vpop.permute.xlu0 %5507
        %5509 = vrot.lane.b32.xlu0 %v5491, 64
        %v5510 = vpop.permute.xlu0 %5509
        %5511 = vrot.lane.b32.xlu0 %v5492, 64
        %v5512 = vpop.permute.xlu0 %5511
        %5513 = vrot.lane.b32.xlu0 %v5493, 64
        %v5514 = vpop.permute.xlu0 %5513
        %5515 = vrot.lane.b32.xlu0 %v5494, 64
        %v5516 = vpop.permute.xlu0 %5515
        %5517 = vrot.lane.b32.xlu0 %v5495, 64
        %v5518 = vpop.permute.xlu0 %5517
        %5519 = vrot.lane.b32.xlu0 %v5496, 64
        %v5520 = vpop.permute.xlu0 %5519
        %5521 = vrot.lane.b32.xlu0 %v5497, 64
        %v5522 = vpop.permute.xlu0 %5521
        %5523 = vrot.lane.b32.xlu0 %v5498, 64
        %v5524 = vpop.permute.xlu0 %5523
        %5525 = vrot.lane.b32.xlu0 %v5499, 64
        %v5526 = vpop.permute.xlu0 %5525
        %5527 = vrot.lane.b32.xlu0 %v5500, 64
        %v5528 = vpop.permute.xlu0 %5527
        %5529 = vrot.lane.b32.xlu0 %v5501, 64
        %v5530 = vpop.permute.xlu0 %5529
        %5531 = vrot.lane.b32.xlu0 %v5502, 64
        %v5532 = vpop.permute.xlu0 %5531
        %5533 = vrot.lane.b32.xlu0 %v5503, 64
        %v5534 = vpop.permute.xlu0 %5533
        %5535 = vrot.lane.b32.xlu0 %v5504, 64
        %v5536 = vpop.permute.xlu0 %5535
        %v5537 = vunpack.c.l.b16 %v4206
        %v5538 = vunpack.c.l.b16 %v4216
        %v5539 = vunpack.c.l.b16 %v4230
        %v5540 = vunpack.c.l.b16 %v4240
        %v5541 = vunpack.c.l.b16 %v4254
        %v5542 = vunpack.c.l.b16 %v4264
        %v5543 = vunpack.c.l.b16 %v4278
        %v5544 = vunpack.c.l.b16 %v4288
        %v5545 = vunpack.c.l.b16 %v4302
        %v5546 = vunpack.c.l.b16 %v4312
        %v5547 = vunpack.c.l.b16 %v4326
        %v5548 = vunpack.c.l.b16 %v4336
        %v5549 = vunpack.c.l.b16 %v4350
        %v5550 = vunpack.c.l.b16 %v4360
        %v5551 = vunpack.c.l.b16 %v4374
        %v5552 = vunpack.c.l.b16 %v4384
        %v5553 = vunpack.c.l.b16 %v4398
        %v5554 = vunpack.c.l.b16 %v4408
        %v5555 = vunpack.c.l.b16 %v4422
        %v5556 = vunpack.c.l.b16 %v4432
        %v5557 = vunpack.c.l.b16 %v4446
        %v5558 = vunpack.c.l.b16 %v4456
        %v5559 = vunpack.c.l.b16 %v4470
        %v5560 = vunpack.c.l.b16 %v4480
        %v5561 = vunpack.c.l.b16 %v4494
        %v5562 = vunpack.c.l.b16 %v4504
        %v5563 = vunpack.c.l.b16 %v4518
        %v5564 = vunpack.c.l.b16 %v4528
        %v5565 = vunpack.c.l.b16 %v4542
        %v5566 = vunpack.c.l.b16 %v4552
        %v5567 = vunpack.c.l.b16 %v4566
        %v5568 = vunpack.c.l.b16 %v4576
        %v5569 = vpack.c.b16 %v5538, %v5537
        %v5570 = vpack.c.b16 %v5540, %v5539
        %v5571 = vpack.c.b16 %v5542, %v5541
        %v5572 = vpack.c.b16 %v5544, %v5543
        %v5573 = vpack.c.b16 %v5546, %v5545
        %v5574 = vpack.c.b16 %v5548, %v5547
        %v5575 = vpack.c.b16 %v5550, %v5549
        %v5576 = vpack.c.b16 %v5552, %v5551
        %v5577 = vpack.c.b16 %v5554, %v5553
        %v5578 = vpack.c.b16 %v5556, %v5555
        %v5579 = vpack.c.b16 %v5558, %v5557
        %v5580 = vpack.c.b16 %v5560, %v5559
        %v5581 = vpack.c.b16 %v5562, %v5561
        %v5582 = vpack.c.b16 %v5564, %v5563
        %v5583 = vpack.c.b16 %v5566, %v5565
        %v5584 = vpack.c.b16 %v5568, %v5567
        %5585 = vrot.lane.b32.xlu0 %v5569, 80
        %v5586 = vpop.permute.xlu0 %5585
        %5587 = vrot.lane.b32.xlu0 %v5570, 80
        %v5588 = vpop.permute.xlu0 %5587
        %5589 = vrot.lane.b32.xlu0 %v5571, 80
        %v5590 = vpop.permute.xlu0 %5589
        %5591 = vrot.lane.b32.xlu0 %v5572, 80
        %v5592 = vpop.permute.xlu0 %5591
        %5593 = vrot.lane.b32.xlu0 %v5573, 80
        %v5594 = vpop.permute.xlu0 %5593
        %5595 = vrot.lane.b32.xlu0 %v5574, 80
        %v5596 = vpop.permute.xlu0 %5595
        %5597 = vrot.lane.b32.xlu0 %v5575, 80
        %v5598 = vpop.permute.xlu0 %5597
        %5599 = vrot.lane.b32.xlu0 %v5576, 80
        %v5600 = vpop.permute.xlu0 %5599
        %5601 = vrot.lane.b32.xlu0 %v5577, 80
        %v5602 = vpop.permute.xlu0 %5601
        %5603 = vrot.lane.b32.xlu0 %v5578, 80
        %v5604 = vpop.permute.xlu0 %5603
        %5605 = vrot.lane.b32.xlu0 %v5579, 80
        %v5606 = vpop.permute.xlu0 %5605
        %5607 = vrot.lane.b32.xlu0 %v5580, 80
        %v5608 = vpop.permute.xlu0 %5607
        %5609 = vrot.lane.b32.xlu0 %v5581, 80
        %v5610 = vpop.permute.xlu0 %5609
        %5611 = vrot.lane.b32.xlu0 %v5582, 80
        %v5612 = vpop.permute.xlu0 %5611
        %5613 = vrot.lane.b32.xlu0 %v5583, 80
        %v5614 = vpop.permute.xlu0 %5613
        %5615 = vrot.lane.b32.xlu0 %v5584, 80
        %v5616 = vpop.permute.xlu0 %5615
        %v5649 = vunpack.c.l.b16 %v4577
        %v5650 = vunpack.c.l.b16 %v4578
        %v5651 = vunpack.c.l.b16 %v4579
        %v5652 = vunpack.c.l.b16 %v4580
        %v5653 = vunpack.c.l.b16 %v4581
        %v5654 = vunpack.c.l.b16 %v4582
        %v5655 = vunpack.c.l.b16 %v4583
        %v5656 = vunpack.c.l.b16 %v4584
        %v5657 = vunpack.c.l.b16 %v4585
        %v5658 = vunpack.c.l.b16 %v4586
        %v5659 = vunpack.c.l.b16 %v4587
        %v5660 = vunpack.c.l.b16 %v4588
        %v5661 = vunpack.c.l.b16 %v4589
        %v5662 = vunpack.c.l.b16 %v4590
        %v5663 = vunpack.c.l.b16 %v4591
        %v5664 = vunpack.c.l.b16 %v4592
        %v5665 = vunpack.c.l.b16 %v4593
        %v5666 = vunpack.c.l.b16 %v4594
        %v5667 = vunpack.c.l.b16 %v4595
        %v5668 = vunpack.c.l.b16 %v4596
        %v5669 = vunpack.c.l.b16 %v4597
        %v5670 = vunpack.c.l.b16 %v4598
        %v5671 = vunpack.c.l.b16 %v4599
        %v5672 = vunpack.c.l.b16 %v4600
        %v5673 = vunpack.c.l.b16 %v4601
        %v5674 = vunpack.c.l.b16 %v4602
        %v5675 = vunpack.c.l.b16 %v4603
        %v5676 = vunpack.c.l.b16 %v4604
        %v5677 = vunpack.c.l.b16 %v4605
        %v5678 = vunpack.c.l.b16 %v4606
        %v5679 = vunpack.c.l.b16 %v4607
        %v5680 = vunpack.c.l.b16 %v4608
        %v5681 = vpack.c.b16 %v5650, %v5649
        %v5682 = vpack.c.b16 %v5652, %v5651
        %v5683 = vpack.c.b16 %v5654, %v5653
        %v5684 = vpack.c.b16 %v5656, %v5655
        %v5685 = vpack.c.b16 %v5658, %v5657
        %v5686 = vpack.c.b16 %v5660, %v5659
        %v5687 = vpack.c.b16 %v5662, %v5661
        %v5688 = vpack.c.b16 %v5664, %v5663
        %v5689 = vpack.c.b16 %v5666, %v5665
        %v5690 = vpack.c.b16 %v5668, %v5667
        %v5691 = vpack.c.b16 %v5670, %v5669
        %v5692 = vpack.c.b16 %v5672, %v5671
        %v5693 = vpack.c.b16 %v5674, %v5673
        %v5694 = vpack.c.b16 %v5676, %v5675
        %v5695 = vpack.c.b16 %v5678, %v5677
        %v5696 = vpack.c.b16 %v5680, %v5679
        %5697 = vrot.lane.b32.xlu0 %v5681, 96
        %v5698 = vpop.permute.xlu0 %5697
        %5699 = vrot.lane.b32.xlu0 %v5682, 96
        %v5700 = vpop.permute.xlu0 %5699
        %5701 = vrot.lane.b32.xlu0 %v5683, 96
        %v5702 = vpop.permute.xlu0 %5701
        %5703 = vrot.lane.b32.xlu0 %v5684, 96
        %v5704 = vpop.permute.xlu0 %5703
        %5705 = vrot.lane.b32.xlu0 %v5685, 96
        %v5706 = vpop.permute.xlu0 %5705
        %5707 = vrot.lane.b32.xlu0 %v5686, 96
        %v5708 = vpop.permute.xlu0 %5707
        %5709 = vrot.lane.b32.xlu0 %v5687, 96
        %v5710 = vpop.permute.xlu0 %5709
        %5711 = vrot.lane.b32.xlu0 %v5688, 96
        %v5712 = vpop.permute.xlu0 %5711
        %5713 = vrot.lane.b32.xlu0 %v5689, 96
        %v5714 = vpop.permute.xlu0 %5713
        %5715 = vrot.lane.b32.xlu0 %v5690, 96
        %v5716 = vpop.permute.xlu0 %5715
        %5717 = vrot.lane.b32.xlu0 %v5691, 96
        %v5718 = vpop.permute.xlu0 %5717
        %5719 = vrot.lane.b32.xlu0 %v5692, 96
        %v5720 = vpop.permute.xlu0 %5719
        %5721 = vrot.lane.b32.xlu0 %v5693, 96
        %v5722 = vpop.permute.xlu0 %5721
        %5723 = vrot.lane.b32.xlu0 %v5694, 96
        %v5724 = vpop.permute.xlu0 %5723
        %5725 = vrot.lane.b32.xlu0 %v5695, 96
        %v5726 = vpop.permute.xlu0 %5725
        %5727 = vrot.lane.b32.xlu0 %v5696, 96
        %v5728 = vpop.permute.xlu0 %5727
        %v5761 = vunpack.c.l.b16 %v4609
        %v5762 = vunpack.c.l.b16 %v4610
        %v5763 = vunpack.c.l.b16 %v4611
        %v5764 = vunpack.c.l.b16 %v4612
        %v5765 = vunpack.c.l.b16 %v4613
        %v5766 = vunpack.c.l.b16 %v4614
        %v5767 = vunpack.c.l.b16 %v4615
        %v5768 = vunpack.c.l.b16 %v4616
        %v5769 = vunpack.c.l.b16 %v4617
        %v5770 = vunpack.c.l.b16 %v4618
        %v5771 = vunpack.c.l.b16 %v4619
        %v5772 = vunpack.c.l.b16 %v4620
        %v5773 = vunpack.c.l.b16 %v4621
        %v5774 = vunpack.c.l.b16 %v4622
        %v5775 = vunpack.c.l.b16 %v4623
        %v5776 = vunpack.c.l.b16 %v4624
        %v5777 = vunpack.c.l.b16 %v4625
        %v5778 = vunpack.c.l.b16 %v4626
        %v5779 = vunpack.c.l.b16 %v4627
        %v5780 = vunpack.c.l.b16 %v4628
        %v5781 = vunpack.c.l.b16 %v4629
        %v5782 = vunpack.c.l.b16 %v4630
        %v5783 = vunpack.c.l.b16 %v4631
        %v5784 = vunpack.c.l.b16 %v4632
        %v5785 = vunpack.c.l.b16 %v4633
        %v5786 = vunpack.c.l.b16 %v4634
        %v5787 = vunpack.c.l.b16 %v4635
        %v5788 = vunpack.c.l.b16 %v4636
        %v5789 = vunpack.c.l.b16 %v4637
        %v5790 = vunpack.c.l.b16 %v4638
        %v5791 = vunpack.c.l.b16 %v4639
        %v5792 = vunpack.c.l.b16 %v4640
        %v5793 = vpack.c.b16 %v5762, %v5761
        %v5794 = vpack.c.b16 %v5764, %v5763
        %v5795 = vpack.c.b16 %v5766, %v5765
        %v5796 = vpack.c.b16 %v5768, %v5767
        %v5797 = vpack.c.b16 %v5770, %v5769
        %v5798 = vpack.c.b16 %v5772, %v5771
        %v5799 = vpack.c.b16 %v5774, %v5773
        %v5800 = vpack.c.b16 %v5776, %v5775
        %v5801 = vpack.c.b16 %v5778, %v5777
        %v5802 = vpack.c.b16 %v5780, %v5779
        %v5803 = vpack.c.b16 %v5782, %v5781
        %v5804 = vpack.c.b16 %v5784, %v5783
        %v5805 = vpack.c.b16 %v5786, %v5785
        %v5806 = vpack.c.b16 %v5788, %v5787
        %v5807 = vpack.c.b16 %v5790, %v5789
        %v5808 = vpack.c.b16 %v5792, %v5791
        %5809 = vrot.lane.b32.xlu0 %v5793, 112
        %v5810 = vpop.permute.xlu0 %5809
        %5811 = vrot.lane.b32.xlu0 %v5794, 112
        %v5812 = vpop.permute.xlu0 %5811
        %5813 = vrot.lane.b32.xlu0 %v5795, 112
        %v5814 = vpop.permute.xlu0 %5813
        %5815 = vrot.lane.b32.xlu0 %v5796, 112
        %v5816 = vpop.permute.xlu0 %5815
        %5817 = vrot.lane.b32.xlu0 %v5797, 112
        %v5818 = vpop.permute.xlu0 %5817
        %5819 = vrot.lane.b32.xlu0 %v5798, 112
        %v5820 = vpop.permute.xlu0 %5819
        %5821 = vrot.lane.b32.xlu0 %v5799, 112
        %v5822 = vpop.permute.xlu0 %5821
        %5823 = vrot.lane.b32.xlu0 %v5800, 112
        %v5824 = vpop.permute.xlu0 %5823
        %5825 = vrot.lane.b32.xlu0 %v5801, 112
        %v5826 = vpop.permute.xlu0 %5825
        %5827 = vrot.lane.b32.xlu0 %v5802, 112
        %v5828 = vpop.permute.xlu0 %5827
        %5829 = vrot.lane.b32.xlu0 %v5803, 112
        %v5830 = vpop.permute.xlu0 %5829
        %5831 = vrot.lane.b32.xlu0 %v5804, 112
        %v5832 = vpop.permute.xlu0 %5831
        %5833 = vrot.lane.b32.xlu0 %v5805, 112
        %v5834 = vpop.permute.xlu0 %5833
        %5835 = vrot.lane.b32.xlu0 %v5806, 112
        %v5836 = vpop.permute.xlu0 %5835
        %5837 = vrot.lane.b32.xlu0 %v5807, 112
        %v5838 = vpop.permute.xlu0 %5837
        %5839 = vrot.lane.b32.xlu0 %v5808, 112
        %v5840 = vpop.permute.xlu0 %5839
        %v5841 = vunpack.c.l.b16 %v4670
        %v5842 = vunpack.c.l.b16 %v4680
        %v5843 = vunpack.c.l.b16 %v4694
        %v5844 = vunpack.c.l.b16 %v4704
        %v5845 = vunpack.c.l.b16 %v4718
        %v5846 = vunpack.c.l.b16 %v4728
        %v5847 = vunpack.c.l.b16 %v4742
        %v5848 = vunpack.c.l.b16 %v4752
        %v5849 = vunpack.c.l.b16 %v4766
        %v5850 = vunpack.c.l.b16 %v4776
        %v5851 = vunpack.c.l.b16 %v4790
        %v5852 = vunpack.c.l.b16 %v4800
        %v5853 = vunpack.c.l.b16 %v4814
        %v5854 = vunpack.c.l.b16 %v4824
        %v5855 = vunpack.c.l.b16 %v4838
        %v5856 = vunpack.c.l.b16 %v4848
        %v5857 = vunpack.c.l.b16 %v4862
        %v5858 = vunpack.c.l.b16 %v4872
        %v5859 = vunpack.c.l.b16 %v4886
        %v5860 = vunpack.c.l.b16 %v4896
        %v5861 = vunpack.c.l.b16 %v4910
        %v5862 = vunpack.c.l.b16 %v4920
        %v5863 = vunpack.c.l.b16 %v4934
        %v5864 = vunpack.c.l.b16 %v4944
        %v5865 = vunpack.c.l.b16 %v4958
        %v5866 = vunpack.c.l.b16 %v4968
        %v5867 = vunpack.c.l.b16 %v4982
        %v5868 = vunpack.c.l.b16 %v4992
        %v5869 = vunpack.c.l.b16 %v5006
        %v5870 = vunpack.c.l.b16 %v5016
        %v5871 = vunpack.c.l.b16 %v5030
        %v5872 = vunpack.c.l.b16 %v5040
        %v5873 = vpack.c.b16 %v5842, %v5841
        %v5874 = vpack.c.b16 %v5844, %v5843
        %v5875 = vpack.c.b16 %v5846, %v5845
        %v5876 = vpack.c.b16 %v5848, %v5847
        %v5877 = vpack.c.b16 %v5850, %v5849
        %v5878 = vpack.c.b16 %v5852, %v5851
        %v5879 = vpack.c.b16 %v5854, %v5853
        %v5880 = vpack.c.b16 %v5856, %v5855
        %v5881 = vpack.c.b16 %v5858, %v5857
        %v5882 = vpack.c.b16 %v5860, %v5859
        %v5883 = vpack.c.b16 %v5862, %v5861
        %v5884 = vpack.c.b16 %v5864, %v5863
        %v5885 = vpack.c.b16 %v5866, %v5865
        %v5886 = vpack.c.b16 %v5868, %v5867
        %v5887 = vpack.c.b16 %v5870, %v5869
        %v5888 = vpack.c.b16 %v5872, %v5871
        %vm5889 = vcmask 130048
        %v5892 = vsel %vm5889, %v5105, %v5202
        %v5895 = vsel %vm5889, %v5106, %v5204
        %v5898 = vsel %vm5889, %v5107, %v5206
        %v5901 = vsel %vm5889, %v5108, %v5208
        %v5904 = vsel %vm5889, %v5109, %v5210
        %v5907 = vsel %vm5889, %v5110, %v5212
        %v5910 = vsel %vm5889, %v5111, %v5214
        %v5913 = vsel %vm5889, %v5112, %v5216
        %v5916 = vsel %vm5889, %v5113, %v5218
        %v5919 = vsel %vm5889, %v5114, %v5220
        %v5922 = vsel %vm5889, %v5115, %v5222
        %v5925 = vsel %vm5889, %v5116, %v5224
        %v5928 = vsel %vm5889, %v5117, %v5226
        %v5931 = vsel %vm5889, %v5118, %v5228
        %v5934 = vsel %vm5889, %v5119, %v5230
        %v5937 = vsel %vm5889, %v5120, %v5232
        %vm5938 = vcmask 261120
        %v5940 = vsel %vm5938, %v5892, %v5282
        %v5942 = vsel %vm5938, %v5895, %v5284
        %v5944 = vsel %vm5938, %v5898, %v5286
        %v5946 = vsel %vm5938, %v5901, %v5288
        %v5948 = vsel %vm5938, %v5904, %v5290
        %v5950 = vsel %vm5938, %v5907, %v5292
        %v5952 = vsel %vm5938, %v5910, %v5294
        %v5954 = vsel %vm5938, %v5913, %v5296
        %v5956 = vsel %vm5938, %v5916, %v5298
        %v5958 = vsel %vm5938, %v5919, %v5300
        %v5960 = vsel %vm5938, %v5922, %v5302
        %v5962 = vsel %vm5938, %v5925, %v5304
        %v5964 = vsel %vm5938, %v5928, %v5306
        %v5966 = vsel %vm5938, %v5931, %v5308
        %v5968 = vsel %vm5938, %v5934, %v5310
        %v5970 = vsel %vm5938, %v5937, %v5312
        %vm5971 = vcmask 392192
        %v5973 = vsel %vm5971, %v5940, %v5394
        %v5975 = vsel %vm5971, %v5942, %v5396
        %v5977 = vsel %vm5971, %v5944, %v5398
        %v5979 = vsel %vm5971, %v5946, %v5400
        %v5981 = vsel %vm5971, %v5948, %v5402
        %v5983 = vsel %vm5971, %v5950, %v5404
        %v5985 = vsel %vm5971, %v5952, %v5406
        %v5987 = vsel %vm5971, %v5954, %v5408
        %v5989 = vsel %vm5971, %v5956, %v5410
        %v5991 = vsel %vm5971, %v5958, %v5412
        %v5993 = vsel %vm5971, %v5960, %v5414
        %v5995 = vsel %vm5971, %v5962, %v5416
        %v5997 = vsel %vm5971, %v5964, %v5418
        %v5999 = vsel %vm5971, %v5966, %v5420
        %v6001 = vsel %vm5971, %v5968, %v5422
        %v6003 = vsel %vm5971, %v5970, %v5424
        %vm6004 = vcmask 523264
        %v6006 = vsel %vm6004, %v5973, %v5506
        %v6008 = vsel %vm6004, %v5975, %v5508
        %v6010 = vsel %vm6004, %v5977, %v5510
        %v6012 = vsel %vm6004, %v5979, %v5512
        %v6014 = vsel %vm6004, %v5981, %v5514
        %v6016 = vsel %vm6004, %v5983, %v5516
        %v6018 = vsel %vm6004, %v5985, %v5518
        %v6020 = vsel %vm6004, %v5987, %v5520
        %v6022 = vsel %vm6004, %v5989, %v5522
        %v6024 = vsel %vm6004, %v5991, %v5524
        %v6026 = vsel %vm6004, %v5993, %v5526
        %v6028 = vsel %vm6004, %v5995, %v5528
        %v6030 = vsel %vm6004, %v5997, %v5530
        %v6032 = vsel %vm6004, %v5999, %v5532
        %v6034 = vsel %vm6004, %v6001, %v5534
        %v6036 = vsel %vm6004, %v6003, %v5536
        %vm6037 = vcmask 654336
        %v6039 = vsel %vm6037, %v6006, %v5586
        %v6041 = vsel %vm6037, %v6008, %v5588
        %v6043 = vsel %vm6037, %v6010, %v5590
        %v6045 = vsel %vm6037, %v6012, %v5592
        %v6047 = vsel %vm6037, %v6014, %v5594
        %v6049 = vsel %vm6037, %v6016, %v5596
        %v6051 = vsel %vm6037, %v6018, %v5598
        %v6053 = vsel %vm6037, %v6020, %v5600
        %v6055 = vsel %vm6037, %v6022, %v5602
        %v6057 = vsel %vm6037, %v6024, %v5604
        %v6059 = vsel %vm6037, %v6026, %v5606
        %v6061 = vsel %vm6037, %v6028, %v5608
        %v6063 = vsel %vm6037, %v6030, %v5610
        %v6065 = vsel %vm6037, %v6032, %v5612
        %v6067 = vsel %vm6037, %v6034, %v5614
        %v6069 = vsel %vm6037, %v6036, %v5616
        %vm6070 = vcmask 785408
        %v6072 = vsel %vm6070, %v6039, %v5698
        %v6074 = vsel %vm6070, %v6041, %v5700
        %v6076 = vsel %vm6070, %v6043, %v5702
        %v6078 = vsel %vm6070, %v6045, %v5704
        %v6080 = vsel %vm6070, %v6047, %v5706
        %v6082 = vsel %vm6070, %v6049, %v5708
        %v6084 = vsel %vm6070, %v6051, %v5710
        %v6086 = vsel %vm6070, %v6053, %v5712
        %v6088 = vsel %vm6070, %v6055, %v5714
        %v6090 = vsel %vm6070, %v6057, %v5716
        %v6092 = vsel %vm6070, %v6059, %v5718
        %v6094 = vsel %vm6070, %v6061, %v5720
        %v6096 = vsel %vm6070, %v6063, %v5722
        %v6098 = vsel %vm6070, %v6065, %v5724
        %v6100 = vsel %vm6070, %v6067, %v5726
        %v6102 = vsel %vm6070, %v6069, %v5728
        %vm6103 = vcmask 916480
        %v6105 = vsel %vm6103, %v6072, %v5810
        %v6108 = vsel %vm6103, %v6074, %v5812
        %v6111 = vsel %vm6103, %v6076, %v5814
        %v6114 = vsel %vm6103, %v6078, %v5816
        %v6117 = vsel %vm6103, %v6080, %v5818
        %v6120 = vsel %vm6103, %v6082, %v5820
        %v6123 = vsel %vm6103, %v6084, %v5822
        %v6126 = vsel %vm6103, %v6086, %v5824
        %v6129 = vsel %vm6103, %v6088, %v5826
        %v6132 = vsel %vm6103, %v6090, %v5828
        %v6135 = vsel %vm6103, %v6092, %v5830
        %v6138 = vsel %vm6103, %v6094, %v5832
        %v6141 = vsel %vm6103, %v6096, %v5834
        %v6144 = vsel %vm6103, %v6098, %v5836
        %v6147 = vsel %vm6103, %v6100, %v5838
        %v6150 = vsel %vm6103, %v6102, %v5840
        %v6152 = vld [vmem:[%s3] sm:$0xf]
        %v6153 = vld [vmem:[%s3 + $0x4] sm:$0xf]
        %v6154 = vld [vmem:[%s3 + $0x8] sm:$0xf]
        %v6155 = vld [vmem:[%s3 + $0xc] sm:$0xf]
        %v6156 = vld [vmem:[%s3 + $0x10] sm:$0xf]
        %v6157 = vld [vmem:[%s3 + $0x14] sm:$0xf]
        %v6158 = vld [vmem:[%s3 + $0x18] sm:$0xf]
        %v6159 = vld [vmem:[%s3 + $0x1c] sm:$0xf]
        %v6160 = vld [vmem:[%s3 + $0x20] sm:$0xf]
        %v6161 = vld [vmem:[%s3 + $0x24] sm:$0xf]
        %v6162 = vld [vmem:[%s3 + $0x28] sm:$0xf]
        %v6163 = vld [vmem:[%s3 + $0x2c] sm:$0xf]
        %v6164 = vld [vmem:[%s3 + $0x30] sm:$0xf]
        %v6165 = vld [vmem:[%s3 + $0x34] sm:$0xf]
        %v6166 = vld [vmem:[%s3 + $0x38] sm:$0xf]
        %v6167 = vld [vmem:[%s3 + $0x3c] sm:$0xf]
        %v6168 = vld [vmem:[%s3 + $0x40] sm:$0xf]
        %v6169 = vld [vmem:[%s3 + $0x44] sm:$0xf]
        %v6170 = vld [vmem:[%s4] sm:$0x1]
        %v6172 = vlaneseq
        %v6173 = vshrl.u32 %v6172, 7
        %v6174 = vsub.s32 0, %v6173
        %v6175 = vrot.slane %v6170, %v6174
        %v6195 = vunpack.c.l.b16 %v6152
        %v6196 = vunpack.c.l.b16 %v6153
        %v6197 = vunpack.c.l.b16 %v6154
        %v6198 = vunpack.c.l.b16 %v6155
        %v6199 = vunpack.c.l.b16 %v6156
        %v6200 = vunpack.c.l.b16 %v6157
        %v6201 = vunpack.c.l.b16 %v6158
        %v6202 = vunpack.c.l.b16 %v6159
        %v6203 = vunpack.c.l.b16 %v6160
        %v6204 = vunpack.c.l.b16 %v6161
        %v6205 = vunpack.c.l.b16 %v6162
        %v6206 = vunpack.c.l.b16 %v6163
        %v6207 = vunpack.c.l.b16 %v6164
        %v6208 = vunpack.c.l.b16 %v6165
        %v6209 = vunpack.c.l.b16 %v6166
        %v6210 = vunpack.c.l.b16 %v6167
        %v6211 = vunpack.c.l.b16 %v6168
        %v6212 = vunpack.c.l.b16 %v6169
        %v6213 = vpack.c.b16 %v6196, %v6195
        %v6214 = vpack.c.b16 %v6198, %v6197
        %v6215 = vpack.c.b16 %v6200, %v6199
        %v6216 = vpack.c.b16 %v6202, %v6201
        %v6217 = vpack.c.b16 %v6204, %v6203
        %v6218 = vpack.c.b16 %v6206, %v6205
        %v6219 = vpack.c.b16 %v6208, %v6207
        %v6220 = vpack.c.b16 %v6210, %v6209
        %v6221 = vpack.c.b16 %v6212, %v6211
        %v6232 = vsel %vm5889, %v5873, 0
        %v6235 = vsel %vm5889, %v5874, 0
        %v6238 = vsel %vm5889, %v5875, 0
        %v6241 = vsel %vm5889, %v5876, 0
        %v6244 = vsel %vm5889, %v5877, 0
        %v6247 = vsel %vm5889, %v5878, 0
        %v6250 = vsel %vm5889, %v5879, 0
        %v6253 = vsel %vm5889, %v5880, 0
        %v6256 = vsel %vm5889, %v5881, 0
        %v6259 = vsel %vm5889, %v5882, 0
        %v6262 = vsel %vm5889, %v5883, 0
        %v6265 = vsel %vm5889, %v5884, 0
        %v6268 = vsel %vm5889, %v5885, 0
        %v6271 = vsel %vm5889, %v5886, 0
        %v6274 = vsel %vm5889, %v5887, 0
        %v6277 = vsel %vm5889, %v5888, 0
        %6279 = vmatprep.subr.bf16.mxu0 0
        %6280 = vmatpush1.bf16.msra.mxu0 %v6213
        %6281 = vmatprep.subr.bf16.mxu0 0
        %6282 = vmatpush1.bf16.msra.mxu0 %v6214
        %6283 = vmatprep.subr.bf16.mxu0 0
        %6284 = vmatpush1.bf16.msra.mxu0 %v6215
        %6285 = vmatprep.subr.bf16.mxu0 0
        %6286 = vmatpush1.bf16.msra.mxu0 %v6216
        %6287 = vmatprep.subr.bf16.mxu0 0
        %6288 = vmatpush1.bf16.msra.mxu0 %v6217
        %6289 = vmatprep.subr.bf16.mxu0 0
        %6290 = vmatpush1.bf16.msra.mxu0 %v6218
        %6291 = vmatprep.subr.bf16.mxu0 0
        %6292 = vmatpush1.bf16.msra.mxu0 %v6219
        %6293 = vmatprep.subr.bf16.mxu0 0
        %6294 = vmatpush1.bf16.msra.mxu0 %v6220
        %6295 = vmatprep.subr.bf16.mxu0 0
        %6296 = vmatpush1.bf16.msra.mxu0 %v6221
        %6297 = vmatprep.subr.bf16.mxu0 0
        %6298 = vmatpush1.bf16.msra.mxu0 0
        %6299 = vmatprep.subr.bf16.mxu0 0
        %6300 = vmatpush1.bf16.msra.mxu0 0
        %6301 = vmatprep.subr.bf16.mxu0 0
        %6302 = vmatpush1.bf16.msra.mxu0 0
        %6303 = vmatprep.subr.bf16.mxu0 0
        %6304 = vmatpush1.bf16.msra.mxu0 0
        %6305 = vmatprep.subr.bf16.mxu0 0
        %6306 = vmatpush1.bf16.msra.mxu0 0
        %6307 = vmatprep.subr.bf16.mxu0 0
        %6308 = vmatpush1.bf16.msra.mxu0 0
        %6309 = vmatprep.subr.bf16.mxu0 0
        %6310 = vmatpush1.bf16.msra.mxu0 0
        %6311 = vmatprep.mubr.bf16.mxu0 %v6232
        %6312 = vmatmul.mubr.bf16.gmra.mrb[0].mxu0 %v6105
        %v6313 = vpop.f32.mrb[0].mxu0
        %v6314 = vadd.f32 %v6175, %v6313
        %v6315 = vpop.f32.mrb[0].mxu0
        %v6316 = vpop.f32.mrb[0].mxu0
        %v6317 = vadd.f32 %v6175, %v6316
        %v6318 = vpop.f32.mrb[0].mxu0
        %6319 = vmatprep.mubr.bf16.mxu0 %v6235
        %6320 = vmatmul.mubr.bf16.gmra.mrb[0].mxu0 %v6108
        %v6321 = vpop.f32.mrb[0].mxu0
        %v6322 = vadd.f32 %v6175, %v6321
        %v6323 = vpop.f32.mrb[0].mxu0
        %v6324 = vpop.f32.mrb[0].mxu0
        %v6325 = vadd.f32 %v6175, %v6324
        %v6326 = vpop.f32.mrb[0].mxu0
        %6327 = vmatprep.mubr.bf16.mxu0 %v6238
        %6328 = vmatmul.mubr.bf16.gmra.mrb[0].mxu0 %v6111
        %v6329 = vpop.f32.mrb[0].mxu0
        %v6330 = vadd.f32 %v6175, %v6329
        %v6331 = vpop.f32.mrb[0].mxu0
        %v6332 = vpop.f32.mrb[0].mxu0
        %v6333 = vadd.f32 %v6175, %v6332
        %v6334 = vpop.f32.mrb[0].mxu0
        %6335 = vmatprep.mubr.bf16.mxu0 %v6241
        %6336 = vmatmul.mubr.bf16.gmra.mrb[0].mxu0 %v6114
        %v6337 = vpop.f32.mrb[0].mxu0
        %v6338 = vadd.f32 %v6175, %v6337
        %v6339 = vpop.f32.mrb[0].mxu0
        %v6340 = vpop.f32.mrb[0].mxu0
        %v6341 = vadd.f32 %v6175, %v6340
        %v6342 = vpop.f32.mrb[0].mxu0
        %6343 = vmatprep.mubr.bf16.mxu0 %v6244
        %6344 = vmatmul.mubr.bf16.gmra.mrb[0].mxu0 %v6117
        %v6345 = vpop.f32.mrb[0].mxu0
        %v6346 = vadd.f32 %v6175, %v6345
        %v6347 = vpop.f32.mrb[0].mxu0
        %v6348 = vpop.f32.mrb[0].mxu0
        %v6349 = vadd.f32 %v6175, %v6348
        %v6350 = vpop.f32.mrb[0].mxu0
        %6351 = vmatprep.mubr.bf16.mxu0 %v6247
        %6352 = vmatmul.mubr.bf16.gmra.mrb[0].mxu0 %v6120
        %v6353 = vpop.f32.mrb[0].mxu0
        %v6354 = vadd.f32 %v6175, %v6353
        %v6355 = vpop.f32.mrb[0].mxu0
        %v6356 = vpop.f32.mrb[0].mxu0
        %v6357 = vadd.f32 %v6175, %v6356
        %v6358 = vpop.f32.mrb[0].mxu0
        %6359 = vmatprep.mubr.bf16.mxu0 %v6250
        %6360 = vmatmul.mubr.bf16.gmra.mrb[0].mxu0 %v6123
        %v6361 = vpop.f32.mrb[0].mxu0
        %v6362 = vadd.f32 %v6175, %v6361
        %v6363 = vpop.f32.mrb[0].mxu0
        %v6364 = vpop.f32.mrb[0].mxu0
        %v6365 = vadd.f32 %v6175, %v6364
        %v6366 = vpop.f32.mrb[0].mxu0
        %6367 = vmatprep.mubr.bf16.mxu0 %v6253
        %6368 = vmatmul.mubr.bf16.gmra.mrb[0].mxu0 %v6126
        %v6369 = vpop.f32.mrb[0].mxu0
        %v6370 = vadd.f32 %v6175, %v6369
        %v6371 = vpop.f32.mrb[0].mxu0
        %v6372 = vpop.f32.mrb[0].mxu0
        %v6373 = vadd.f32 %v6175, %v6372
        %v6374 = vpop.f32.mrb[0].mxu0
        %6375 = vmatprep.mubr.bf16.mxu0 %v6256
        %6376 = vmatmul.mubr.bf16.gmra.mrb[0].mxu0 %v6129
        %v6377 = vpop.f32.mrb[0].mxu0
        %v6378 = vadd.f32 %v6175, %v6377
        %v6379 = vpop.f32.mrb[0].mxu0
        %v6380 = vpop.f32.mrb[0].mxu0
        %v6381 = vadd.f32 %v6175, %v6380
        %v6382 = vpop.f32.mrb[0].mxu0
        %6383 = vmatprep.mubr.bf16.mxu0 %v6259
        %6384 = vmatmul.mubr.bf16.gmra.mrb[0].mxu0 %v6132
        %v6385 = vpop.f32.mrb[0].mxu0
        %v6386 = vadd.f32 %v6175, %v6385
        %v6387 = vpop.f32.mrb[0].mxu0
        %v6388 = vpop.f32.mrb[0].mxu0
        %v6389 = vadd.f32 %v6175, %v6388
        %v6390 = vpop.f32.mrb[0].mxu0
        %6391 = vmatprep.mubr.bf16.mxu0 %v6262
        %6392 = vmatmul.mubr.bf16.gmra.mrb[0].mxu0 %v6135
        %v6393 = vpop.f32.mrb[0].mxu0
        %v6394 = vadd.f32 %v6175, %v6393
        %v6395 = vpop.f32.mrb[0].mxu0
        %v6396 = vpop.f32.mrb[0].mxu0
        %v6397 = vadd.f32 %v6175, %v6396
        %v6398 = vpop.f32.mrb[0].mxu0
        %6399 = vmatprep.mubr.bf16.mxu0 %v6265
        %6400 = vmatmul.mubr.bf16.gmra.mrb[0].mxu0 %v6138
        %v6401 = vpop.f32.mrb[0].mxu0
        %v6402 = vadd.f32 %v6175, %v6401
        %v6403 = vpop.f32.mrb[0].mxu0
        %v6404 = vpop.f32.mrb[0].mxu0
        %v6405 = vadd.f32 %v6175, %v6404
        %v6406 = vpop.f32.mrb[0].mxu0
        %6407 = vmatprep.mubr.bf16.mxu0 %v6268
        %6408 = vmatmul.mubr.bf16.gmra.mrb[0].mxu0 %v6141
        %v6409 = vpop.f32.mrb[0].mxu0
        %v6410 = vadd.f32 %v6175, %v6409
        %v6411 = vpop.f32.mrb[0].mxu0
        %v6412 = vpop.f32.mrb[0].mxu0
        %v6413 = vadd.f32 %v6175, %v6412
        %v6414 = vpop.f32.mrb[0].mxu0
        %6415 = vmatprep.mubr.bf16.mxu0 %v6271
        %6416 = vmatmul.mubr.bf16.gmra.mrb[0].mxu0 %v6144
        %v6417 = vpop.f32.mrb[0].mxu0
        %v6418 = vadd.f32 %v6175, %v6417
        %v6419 = vpop.f32.mrb[0].mxu0
        %v6420 = vpop.f32.mrb[0].mxu0
        %v6421 = vadd.f32 %v6175, %v6420
        %v6422 = vpop.f32.mrb[0].mxu0
        %6423 = vmatprep.mubr.bf16.mxu0 %v6274
        %6424 = vmatmul.mubr.bf16.gmra.mrb[0].mxu0 %v6147
        %v6425 = vpop.f32.mrb[0].mxu0
        %v6426 = vadd.f32 %v6175, %v6425
        %v6427 = vpop.f32.mrb[0].mxu0
        %v6428 = vpop.f32.mrb[0].mxu0
        %v6429 = vadd.f32 %v6175, %v6428
        %v6430 = vpop.f32.mrb[0].mxu0
        %6431 = vmatprep.mubr.bf16.mxu0 %v6277
        %6432 = vmatmul.mubr.bf16.gmra.mrb[0].mxu0 %v6150
        %v6433 = vpop.f32.mrb[0].mxu0
        %v6434 = vadd.f32 %v6175, %v6433
        %v6435 = vpop.f32.mrb[0].mxu0
        %v6436 = vpop.f32.mrb[0].mxu0
        %v6437 = vadd.f32 %v6175, %v6436
        %v6438 = vpop.f32.mrb[0].mxu0
        %6439 = vdwg.mxu0
        %v6440 = vmax.f32 %v6314, 0.0
        %v6441 = vmax.f32 %v6317, 0.0
        %v6442 = vmax.f32 %v6322, 0.0
        %v6443 = vmax.f32 %v6325, 0.0
        %v6444 = vmax.f32 %v6330, 0.0
        %v6445 = vmax.f32 %v6333, 0.0
        %v6446 = vmax.f32 %v6338, 0.0
        %v6447 = vmax.f32 %v6341, 0.0
        %v6448 = vmax.f32 %v6346, 0.0
        %v6449 = vmax.f32 %v6349, 0.0
        %v6450 = vmax.f32 %v6354, 0.0
        %v6451 = vmax.f32 %v6357, 0.0
        %v6452 = vmax.f32 %v6362, 0.0
        %v6453 = vmax.f32 %v6365, 0.0
        %v6454 = vmax.f32 %v6370, 0.0
        %v6455 = vmax.f32 %v6373, 0.0
        %v6456 = vmax.f32 %v6378, 0.0
        %v6457 = vmax.f32 %v6381, 0.0
        %v6458 = vmax.f32 %v6386, 0.0
        %v6459 = vmax.f32 %v6389, 0.0
        %v6460 = vmax.f32 %v6394, 0.0
        %v6461 = vmax.f32 %v6397, 0.0
        %v6462 = vmax.f32 %v6402, 0.0
        %v6463 = vmax.f32 %v6405, 0.0
        %v6464 = vmax.f32 %v6410, 0.0
        %v6465 = vmax.f32 %v6413, 0.0
        %v6466 = vmax.f32 %v6418, 0.0
        %v6467 = vmax.f32 %v6421, 0.0
        %v6468 = vmax.f32 %v6426, 0.0
        %v6469 = vmax.f32 %v6429, 0.0
        %v6470 = vmax.f32 %v6434, 0.0
        %v6471 = vmax.f32 %v6437, 0.0
        %v6472 = vpack.c.bf16 %v6441, %v6440
        %v6473 = vpack.c.bf16 %v6443, %v6442
        %v6474 = vpack.c.bf16 %v6445, %v6444
        %v6475 = vpack.c.bf16 %v6447, %v6446
        %v6476 = vpack.c.bf16 %v6449, %v6448
        %v6477 = vpack.c.bf16 %v6451, %v6450
        %v6478 = vpack.c.bf16 %v6453, %v6452
        %v6479 = vpack.c.bf16 %v6455, %v6454
        %v6480 = vpack.c.bf16 %v6457, %v6456
        %v6481 = vpack.c.bf16 %v6459, %v6458
        %v6482 = vpack.c.bf16 %v6461, %v6460
        %v6483 = vpack.c.bf16 %v6463, %v6462
        %v6484 = vpack.c.bf16 %v6465, %v6464
        %v6485 = vpack.c.bf16 %v6467, %v6466
        %v6486 = vpack.c.bf16 %v6469, %v6468
        %v6487 = vpack.c.bf16 %v6471, %v6470
        %v6488 = vld [vmem:[%s5] sm:$0xf]
        %v6489 = vld [vmem:[%s5 + $0x4] sm:$0xf]
        %v6490 = vld [vmem:[%s5 + $0x8] sm:$0xf]
        %v6491 = vld [vmem:[%s5 + $0xc] sm:$0xf]
        %v6492 = vld [vmem:[%s6] sm:$0x1]
        %v6494 = vlaneseq
        %v6495 = vshrl.u32 %v6494, 7
        %v6496 = vsub.s32 0, %v6495
        %v6497 = vrot.slane %v6492, %v6496
        %v6503 = vunpack.c.l.b16 %v6488
        %v6504 = vunpack.c.l.b16 %v6489
        %v6505 = vunpack.c.l.b16 %v6490
        %v6506 = vunpack.c.l.b16 %v6491
        %v6507 = vpack.c.b16 %v6504, %v6503
        %v6508 = vpack.c.b16 %v6506, %v6505
        %v6512 = vsel %vm5938, %v6472, 0
        %v6515 = vsel %vm5938, %v6473, 0
        %v6518 = vsel %vm5938, %v6474, 0
        %v6521 = vsel %vm5938, %v6475, 0
        %v6524 = vsel %vm5938, %v6476, 0
        %v6527 = vsel %vm5938, %v6477, 0
        %v6530 = vsel %vm5938, %v6478, 0
        %v6533 = vsel %vm5938, %v6479, 0
        %v6536 = vsel %vm5938, %v6480, 0
        %v6539 = vsel %vm5938, %v6481, 0
        %v6542 = vsel %vm5938, %v6482, 0
        %v6545 = vsel %vm5938, %v6483, 0
        %v6548 = vsel %vm5938, %v6484, 0
        %v6551 = vsel %vm5938, %v6485, 0
        %v6554 = vsel %vm5938, %v6486, 0
        %v6557 = vsel %vm5938, %v6487, 0
        %6559 = vmatprep.subr.bf16.mxu0 0
        %6560 = vmatpush1.bf16.msra.mxu0 %v6507
        %6561 = vmatprep.subr.bf16.mxu0 0
        %6562 = vmatpush1.bf16.msra.mxu0 %v6508
        %6563 = vmatprep.subr.bf16.mxu0 0
        %6564 = vmatpush1.bf16.msra.mxu0 0
        %6565 = vmatprep.subr.bf16.mxu0 0
        %6566 = vmatpush1.bf16.msra.mxu0 0
        %6567 = vmatprep.subr.bf16.mxu0 0
        %6568 = vmatpush1.bf16.msra.mxu0 0
        %6569 = vmatprep.subr.bf16.mxu0 0
        %6570 = vmatpush1.bf16.msra.mxu0 0
        %6571 = vmatprep.subr.bf16.mxu0 0
        %6572 = vmatpush1.bf16.msra.mxu0 0
        %6573 = vmatprep.subr.bf16.mxu0 0
        %6574 = vmatpush1.bf16.msra.mxu0 0
        %6575 = vmatprep.subr.bf16.mxu0 0
        %6576 = vmatpush1.bf16.msra.mxu0 0
        %6577 = vmatprep.subr.bf16.mxu0 0
        %6578 = vmatpush1.bf16.msra.mxu0 0
        %6579 = vmatprep.subr.bf16.mxu0 0
        %6580 = vmatpush1.bf16.msra.mxu0 0
        %6581 = vmatprep.subr.bf16.mxu0 0
        %6582 = vmatpush1.bf16.msra.mxu0 0
        %6583 = vmatprep.subr.bf16.mxu0 0
        %6584 = vmatpush1.bf16.msra.mxu0 0
        %6585 = vmatprep.subr.bf16.mxu0 0
        %6586 = vmatpush1.bf16.msra.mxu0 0
        %6587 = vmatprep.subr.bf16.mxu0 0
        %6588 = vmatpush1.bf16.msra.mxu0 0
        %6589 = vmatprep.subr.bf16.mxu0 0
        %6590 = vmatpush1.bf16.msra.mxu0 0
        %6591 = vmatprep.mubr.bf16.mxu0 0
        %6592 = vmatmul.mubr.bf16.gmra.mrb[0].mxu0 %v6512
        %v6593 = vpop.f32.mrb[0].mxu0
        %v6594 = vadd.f32 %v6497, %v6593
        %v6595 = vpop.f32.mrb[0].mxu0
        %v6596 = vpop.f32.mrb[0].mxu0
        %v6597 = vadd.f32 %v6497, %v6596
        %v6598 = vpop.f32.mrb[0].mxu0
        %6599 = vmatprep.mubr.bf16.mxu0 0
        %6600 = vmatmul.mubr.bf16.gmra.mrb[0].mxu0 %v6515
        %v6601 = vpop.f32.mrb[0].mxu0
        %v6602 = vadd.f32 %v6497, %v6601
        %v6603 = vpop.f32.mrb[0].mxu0
        %v6604 = vpop.f32.mrb[0].mxu0
        %v6605 = vadd.f32 %v6497, %v6604
        %v6606 = vpop.f32.mrb[0].mxu0
        %6607 = vmatprep.mubr.bf16.mxu0 0
        %6608 = vmatmul.mubr.bf16.gmra.mrb[0].mxu0 %v6518
        %v6609 = vpop.f32.mrb[0].mxu0
        %v6610 = vadd.f32 %v6497, %v6609
        %v6611 = vpop.f32.mrb[0].mxu0
        %v6612 = vpop.f32.mrb[0].mxu0
        %v6613 = vadd.f32 %v6497, %v6612
        %v6614 = vpop.f32.mrb[0].mxu0
        %6615 = vmatprep.mubr.bf16.mxu0 0
        %6616 = vmatmul.mubr.bf16.gmra.mrb[0].mxu0 %v6521
        %v6617 = vpop.f32.mrb[0].mxu0
        %v6618 = vadd.f32 %v6497, %v6617
        %v6619 = vpop.f32.mrb[0].mxu0
        %v6620 = vpop.f32.mrb[0].mxu0
        %v6621 = vadd.f32 %v6497, %v6620
        %v6622 = vpop.f32.mrb[0].mxu0
        %6623 = vmatprep.mubr.bf16.mxu0 0
        %6624 = vmatmul.mubr.bf16.gmra.mrb[0].mxu0 %v6524
        %v6625 = vpop.f32.mrb[0].mxu0
        %v6626 = vadd.f32 %v6497, %v6625
        %v6627 = vpop.f32.mrb[0].mxu0
        %v6628 = vpop.f32.mrb[0].mxu0
        %v6629 = vadd.f32 %v6497, %v6628
        %v6630 = vpop.f32.mrb[0].mxu0
        %6631 = vmatprep.mubr.bf16.mxu0 0
        %6632 = vmatmul.mubr.bf16.gmra.mrb[0].mxu0 %v6527
        %v6633 = vpop.f32.mrb[0].mxu0
        %v6634 = vadd.f32 %v6497, %v6633
        %v6635 = vpop.f32.mrb[0].mxu0
        %v6636 = vpop.f32.mrb[0].mxu0
        %v6637 = vadd.f32 %v6497, %v6636
        %v6638 = vpop.f32.mrb[0].mxu0
        %6639 = vmatprep.mubr.bf16.mxu0 0
        %6640 = vmatmul.mubr.bf16.gmra.mrb[0].mxu0 %v6530
        %v6641 = vpop.f32.mrb[0].mxu0
        %v6642 = vadd.f32 %v6497, %v6641
        %v6643 = vpop.f32.mrb[0].mxu0
        %v6644 = vpop.f32.mrb[0].mxu0
        %v6645 = vadd.f32 %v6497, %v6644
        %v6646 = vpop.f32.mrb[0].mxu0
        %6647 = vmatprep.mubr.bf16.mxu0 0
        %6648 = vmatmul.mubr.bf16.gmra.mrb[0].mxu0 %v6533
        %v6649 = vpop.f32.mrb[0].mxu0
        %v6650 = vadd.f32 %v6497, %v6649
        %v6651 = vpop.f32.mrb[0].mxu0
        %v6652 = vpop.f32.mrb[0].mxu0
        %v6653 = vadd.f32 %v6497, %v6652
        %v6654 = vpop.f32.mrb[0].mxu0
        %6655 = vmatprep.mubr.bf16.mxu0 0
        %6656 = vmatmul.mubr.bf16.gmra.mrb[0].mxu0 %v6536
        %v6657 = vpop.f32.mrb[0].mxu0
        %v6658 = vadd.f32 %v6497, %v6657
        %v6659 = vpop.f32.mrb[0].mxu0
        %v6660 = vpop.f32.mrb[0].mxu0
        %v6661 = vadd.f32 %v6497, %v6660
        %v6662 = vpop.f32.mrb[0].mxu0
        %6663 = vmatprep.mubr.bf16.mxu0 0
        %6664 = vmatmul.mubr.bf16.gmra.mrb[0].mxu0 %v6539
        %v6665 = vpop.f32.mrb[0].mxu0
        %v6666 = vadd.f32 %v6497, %v6665
        %v6667 = vpop.f32.mrb[0].mxu0
        %v6668 = vpop.f32.mrb[0].mxu0
        %v6669 = vadd.f32 %v6497, %v6668
        %v6670 = vpop.f32.mrb[0].mxu0
        %6671 = vmatprep.mubr.bf16.mxu0 0
        %6672 = vmatmul.mubr.bf16.gmra.mrb[0].mxu0 %v6542
        %v6673 = vpop.f32.mrb[0].mxu0
        %v6674 = vadd.f32 %v6497, %v6673
        %v6675 = vpop.f32.mrb[0].mxu0
        %v6676 = vpop.f32.mrb[0].mxu0
        %v6677 = vadd.f32 %v6497, %v6676
        %v6678 = vpop.f32.mrb[0].mxu0
        %6679 = vmatprep.mubr.bf16.mxu0 0
        %6680 = vmatmul.mubr.bf16.gmra.mrb[0].mxu0 %v6545
        %v6681 = vpop.f32.mrb[0].mxu0
        %v6682 = vadd.f32 %v6497, %v6681
        %v6683 = vpop.f32.mrb[0].mxu0
        %v6684 = vpop.f32.mrb[0].mxu0
        %v6685 = vadd.f32 %v6497, %v6684
        %v6686 = vpop.f32.mrb[0].mxu0
        %6687 = vmatprep.mubr.bf16.mxu0 0
        %6688 = vmatmul.mubr.bf16.gmra.mrb[0].mxu0 %v6548
        %v6689 = vpop.f32.mrb[0].mxu0
        %v6690 = vadd.f32 %v6497, %v6689
        %v6691 = vpop.f32.mrb[0].mxu0
        %v6692 = vpop.f32.mrb[0].mxu0
        %v6693 = vadd.f32 %v6497, %v6692
        %v6694 = vpop.f32.mrb[0].mxu0
        %6695 = vmatprep.mubr.bf16.mxu0 0
        %6696 = vmatmul.mubr.bf16.gmra.mrb[0].mxu0 %v6551
        %v6697 = vpop.f32.mrb[0].mxu0
        %v6698 = vadd.f32 %v6497, %v6697
        %v6699 = vpop.f32.mrb[0].mxu0
        %v6700 = vpop.f32.mrb[0].mxu0
        %v6701 = vadd.f32 %v6497, %v6700
        %v6702 = vpop.f32.mrb[0].mxu0
        %6703 = vmatprep.mubr.bf16.mxu0 0
        %6704 = vmatmul.mubr.bf16.gmra.mrb[0].mxu0 %v6554
        %v6705 = vpop.f32.mrb[0].mxu0
        %v6706 = vadd.f32 %v6497, %v6705
        %v6707 = vpop.f32.mrb[0].mxu0
        %v6708 = vpop.f32.mrb[0].mxu0
        %v6709 = vadd.f32 %v6497, %v6708
        %v6710 = vpop.f32.mrb[0].mxu0
        %6711 = vmatprep.mubr.bf16.mxu0 0
        %6712 = vmatmul.mubr.bf16.gmra.mrb[0].mxu0 %v6557
        %v6713 = vpop.f32.mrb[0].mxu0
        %v6714 = vadd.f32 %v6497, %v6713
        %v6715 = vpop.f32.mrb[0].mxu0
        %v6716 = vpop.f32.mrb[0].mxu0
        %v6717 = vadd.f32 %v6497, %v6716
        %v6718 = vpop.f32.mrb[0].mxu0
        %6719 = vdwg.mxu0
        %v6720 = vmax.f32 %v6594, 0.0
        %v6721 = vmax.f32 %v6597, 0.0
        %v6722 = vmax.f32 %v6602, 0.0
        %v6723 = vmax.f32 %v6605, 0.0
        %v6724 = vmax.f32 %v6610, 0.0
        %v6725 = vmax.f32 %v6613, 0.0
        %v6726 = vmax.f32 %v6618, 0.0
        %v6727 = vmax.f32 %v6621, 0.0
        %v6728 = vmax.f32 %v6626, 0.0
        %v6729 = vmax.f32 %v6629, 0.0
        %v6730 = vmax.f32 %v6634, 0.0
        %v6731 = vmax.f32 %v6637, 0.0
        %v6732 = vmax.f32 %v6642, 0.0
        %v6733 = vmax.f32 %v6645, 0.0
        %v6734 = vmax.f32 %v6650, 0.0
        %v6735 = vmax.f32 %v6653, 0.0
        %v6736 = vmax.f32 %v6658, 0.0
        %v6737 = vmax.f32 %v6661, 0.0
        %v6738 = vmax.f32 %v6666, 0.0
        %v6739 = vmax.f32 %v6669, 0.0
        %v6740 = vmax.f32 %v6674, 0.0
        %v6741 = vmax.f32 %v6677, 0.0
        %v6742 = vmax.f32 %v6682, 0.0
        %v6743 = vmax.f32 %v6685, 0.0
        %v6744 = vmax.f32 %v6690, 0.0
        %v6745 = vmax.f32 %v6693, 0.0
        %v6746 = vmax.f32 %v6698, 0.0
        %v6747 = vmax.f32 %v6701, 0.0
        %v6748 = vmax.f32 %v6706, 0.0
        %v6749 = vmax.f32 %v6709, 0.0
        %v6750 = vmax.f32 %v6714, 0.0
        %v6751 = vmax.f32 %v6717, 0.0
        %v6752 = vpack.c.bf16 %v6721, %v6720
        %v6753 = vpack.c.bf16 %v6723, %v6722
        %v6754 = vpack.c.bf16 %v6725, %v6724
        %v6755 = vpack.c.bf16 %v6727, %v6726
        %v6756 = vpack.c.bf16 %v6729, %v6728
        %v6757 = vpack.c.bf16 %v6731, %v6730
        %v6758 = vpack.c.bf16 %v6733, %v6732
        %v6759 = vpack.c.bf16 %v6735, %v6734
        %v6760 = vpack.c.bf16 %v6737, %v6736
        %v6761 = vpack.c.bf16 %v6739, %v6738
        %v6762 = vpack.c.bf16 %v6741, %v6740
        %v6763 = vpack.c.bf16 %v6743, %v6742
        %v6764 = vpack.c.bf16 %v6745, %v6744
        %v6765 = vpack.c.bf16 %v6747, %v6746
        %v6766 = vpack.c.bf16 %v6749, %v6748
        %v6767 = vpack.c.bf16 %v6751, %v6750
        %v6784 = vunpack.c.l.b16 %v6752
        %v6785 = vunpack.c.h.b16 %v6752
        %v6786 = vunpack.c.l.b16 %v6753
        %v6787 = vunpack.c.h.b16 %v6753
        %v6788 = vunpack.c.l.b16 %v6754
        %v6789 = vunpack.c.h.b16 %v6754
        %v6790 = vunpack.c.l.b16 %v6755
        %v6791 = vunpack.c.h.b16 %v6755
        %v6792 = vunpack.c.l.b16 %v6756
        %v6793 = vunpack.c.h.b16 %v6756
        %v6794 = vunpack.c.l.b16 %v6757
        %v6795 = vunpack.c.h.b16 %v6757
        %v6796 = vunpack.c.l.b16 %v6758
        %v6797 = vunpack.c.h.b16 %v6758
        %v6798 = vunpack.c.l.b16 %v6759
        %v6799 = vunpack.c.h.b16 %v6759
        %v6800 = vunpack.c.l.b16 %v6760
        %v6801 = vunpack.c.h.b16 %v6760
        %v6802 = vunpack.c.l.b16 %v6761
        %v6803 = vunpack.c.h.b16 %v6761
        %v6804 = vunpack.c.l.b16 %v6762
        %v6805 = vunpack.c.h.b16 %v6762
        %v6806 = vunpack.c.l.b16 %v6763
        %v6807 = vunpack.c.h.b16 %v6763
        %v6808 = vunpack.c.l.b16 %v6764
        %v6809 = vunpack.c.h.b16 %v6764
        %v6810 = vunpack.c.l.b16 %v6765
        %v6811 = vunpack.c.h.b16 %v6765
        %v6812 = vunpack.c.l.b16 %v6766
        %v6813 = vunpack.c.h.b16 %v6766
        %v6814 = vunpack.c.l.b16 %v6767
        %v6815 = vunpack.c.h.b16 %v6767
        %v6816 = vpack.c.b16 %v6784, %v6784
        %v6817 = vpack.c.b16 %v6785, %v6785
        %v6818 = vpack.c.b16 %v6786, %v6786
        %v6819 = vpack.c.b16 %v6787, %v6787
        %v6820 = vpack.c.b16 %v6788, %v6788
        %v6821 = vpack.c.b16 %v6789, %v6789
        %v6822 = vpack.c.b16 %v6790, %v6790
        %v6823 = vpack.c.b16 %v6791, %v6791
        %v6824 = vpack.c.b16 %v6792, %v6792
        %v6825 = vpack.c.b16 %v6793, %v6793
        %v6826 = vpack.c.b16 %v6794, %v6794
        %v6827 = vpack.c.b16 %v6795, %v6795
        %v6828 = vpack.c.b16 %v6796, %v6796
        %v6829 = vpack.c.b16 %v6797, %v6797
        %v6830 = vpack.c.b16 %v6798, %v6798
        %v6831 = vpack.c.b16 %v6799, %v6799
        %v6832 = vpack.c.b16 %v6800, %v6800
        %v6833 = vpack.c.b16 %v6801, %v6801
        %v6834 = vpack.c.b16 %v6802, %v6802
        %v6835 = vpack.c.b16 %v6803, %v6803
        %v6836 = vpack.c.b16 %v6804, %v6804
        %v6837 = vpack.c.b16 %v6805, %v6805
        %v6838 = vpack.c.b16 %v6806, %v6806
        %v6839 = vpack.c.b16 %v6807, %v6807
        %v6840 = vpack.c.b16 %v6808, %v6808
        %v6841 = vpack.c.b16 %v6809, %v6809
        %v6842 = vpack.c.b16 %v6810, %v6810
        %v6843 = vpack.c.b16 %v6811, %v6811
        %v6844 = vpack.c.b16 %v6812, %v6812
        %v6845 = vpack.c.b16 %v6813, %v6813
        %v6846 = vpack.c.b16 %v6814, %v6814
        %v6847 = vpack.c.b16 %v6815, %v6815
        %vm6880 = vcmask 257024
        %6881 = vst.msk [vmem:[%s507] sm:$0xf] %vm6880, %v6816
        %6882 = vst.msk [vmem:[%s507 + $0x4] sm:$0xf] %vm6880, %v6817
        %6883 = vst.msk [vmem:[%s507 + $0x8] sm:$0xf] %vm6880, %v6818
        %6884 = vst.msk [vmem:[%s507 + $0xc] sm:$0xf] %vm6880, %v6819
        %6885 = vst.msk [vmem:[%s507 + $0x10] sm:$0xf] %vm6880, %v6820
        %6886 = vst.msk [vmem:[%s507 + $0x14] sm:$0xf] %vm6880, %v6821
        %6887 = vst.msk [vmem:[%s507 + $0x18] sm:$0xf] %vm6880, %v6822
        %6888 = vst.msk [vmem:[%s507 + $0x1c] sm:$0xf] %vm6880, %v6823
        %6889 = vst.msk [vmem:[%s507 + $0x20] sm:$0xf] %vm6880, %v6824
        %6890 = vst.msk [vmem:[%s507 + $0x24] sm:$0xf] %vm6880, %v6825
        %6891 = vst.msk [vmem:[%s507 + $0x28] sm:$0xf] %vm6880, %v6826
        %6892 = vst.msk [vmem:[%s507 + $0x2c] sm:$0xf] %vm6880, %v6827
        %6893 = vst.msk [vmem:[%s507 + $0x30] sm:$0xf] %vm6880, %v6828
        %6894 = vst.msk [vmem:[%s507 + $0x34] sm:$0xf] %vm6880, %v6829
        %6895 = vst.msk [vmem:[%s507 + $0x38] sm:$0xf] %vm6880, %v6830
        %6896 = vst.msk [vmem:[%s507 + $0x3c] sm:$0xf] %vm6880, %v6831
        %6897 = vst.msk [vmem:[%s507 + $0x40] sm:$0xf] %vm6880, %v6832
        %6898 = vst.msk [vmem:[%s507 + $0x44] sm:$0xf] %vm6880, %v6833
        %6899 = vst.msk [vmem:[%s507 + $0x48] sm:$0xf] %vm6880, %v6834
        %6900 = vst.msk [vmem:[%s507 + $0x4c] sm:$0xf] %vm6880, %v6835
        %6901 = vst.msk [vmem:[%s507 + $0x50] sm:$0xf] %vm6880, %v6836
        %6902 = vst.msk [vmem:[%s507 + $0x54] sm:$0xf] %vm6880, %v6837
        %6903 = vst.msk [vmem:[%s507 + $0x58] sm:$0xf] %vm6880, %v6838
        %6904 = vst.msk [vmem:[%s507 + $0x5c] sm:$0xf] %vm6880, %v6839
        %6905 = vst.msk [vmem:[%s507 + $0x60] sm:$0xf] %vm6880, %v6840
        %6906 = vst.msk [vmem:[%s507 + $0x64] sm:$0xf] %vm6880, %v6841
        %6907 = vst.msk [vmem:[%s507 + $0x68] sm:$0xf] %vm6880, %v6842
        %6908 = vst.msk [vmem:[%s507 + $0x6c] sm:$0xf] %vm6880, %v6843
        %6909 = vst.msk [vmem:[%s507 + $0x70] sm:$0xf] %vm6880, %v6844
        %6910 = vst.msk [vmem:[%s507 + $0x74] sm:$0xf] %vm6880, %v6845
        %6911 = vst.msk [vmem:[%s507 + $0x78] sm:$0xf] %vm6880, %v6846
        %6912 = vst.msk [vmem:[%s507 + $0x7c] sm:$0xf] %vm6880, %v6847
        %v6914 = vshrl.u32 %v6816, 16
        %v6916 = vrot.slane %v6914, 7
        %v6917 = vshll.u32 %v6816, 16
        %v6919 = vor.u32 %v6916, %v6917
        %v6920 = vrot.slane %v6916, 4
        %v6922 = vshrl.u32 %v6817, 16
        %v6924 = vrot.slane %v6922, 7
        %v6925 = vshll.u32 %v6817, 16
        %v6927 = vor.u32 %v6924, %v6925
        %v6928 = vsel %vm2402, %v6920, %v6927
        %v6929 = vrot.slane %v6924, 4
        %v6931 = vshrl.u32 %v6818, 16
        %v6933 = vrot.slane %v6931, 7
        %v6934 = vshll.u32 %v6818, 16
        %v6936 = vor.u32 %v6933, %v6934
        %v6937 = vrot.slane %v6933, 4
        %v6939 = vshrl.u32 %v6819, 16
        %v6941 = vrot.slane %v6939, 7
        %v6942 = vshll.u32 %v6819, 16
        %v6944 = vor.u32 %v6941, %v6942
        %v6945 = vsel %vm2402, %v6937, %v6944
        %v6946 = vrot.slane %v6941, 4
        %v6948 = vshrl.u32 %v6820, 16
        %v6950 = vrot.slane %v6948, 7
        %v6951 = vshll.u32 %v6820, 16
        %v6953 = vor.u32 %v6950, %v6951
        %v6954 = vrot.slane %v6950, 4
        %v6956 = vshrl.u32 %v6821, 16
        %v6958 = vrot.slane %v6956, 7
        %v6959 = vshll.u32 %v6821, 16
        %v6961 = vor.u32 %v6958, %v6959
        %v6962 = vsel %vm2402, %v6954, %v6961
        %v6963 = vrot.slane %v6958, 4
        %v6965 = vshrl.u32 %v6822, 16
        %v6967 = vrot.slane %v6965, 7
        %v6968 = vshll.u32 %v6822, 16
        %v6970 = vor.u32 %v6967, %v6968
        %v6971 = vrot.slane %v6967, 4
        %v6973 = vshrl.u32 %v6823, 16
        %v6975 = vrot.slane %v6973, 7
        %v6976 = vshll.u32 %v6823, 16
        %v6978 = vor.u32 %v6975, %v6976
        %v6979 = vsel %vm2402, %v6971, %v6978
        %v6980 = vrot.slane %v6975, 4
        %v6982 = vshrl.u32 %v6824, 16
        %v6984 = vrot.slane %v6982, 7
        %v6985 = vshll.u32 %v6824, 16
        %v6987 = vor.u32 %v6984, %v6985
        %v6988 = vrot.slane %v6984, 4
        %v6990 = vshrl.u32 %v6825, 16
        %v6992 = vrot.slane %v6990, 7
        %v6993 = vshll.u32 %v6825, 16
        %v6995 = vor.u32 %v6992, %v6993
        %v6996 = vsel %vm2402, %v6988, %v6995
        %v6997 = vrot.slane %v6992, 4
        %v6999 = vshrl.u32 %v6826, 16
        %v7001 = vrot.slane %v6999, 7
        %v7002 = vshll.u32 %v6826, 16
        %v7004 = vor.u32 %v7001, %v7002
        %v7005 = vrot.slane %v7001, 4
        %v7007 = vshrl.u32 %v6827, 16
        %v7009 = vrot.slane %v7007, 7
        %v7010 = vshll.u32 %v6827, 16
        %v7012 = vor.u32 %v7009, %v7010
        %v7013 = vsel %vm2402, %v7005, %v7012
        %v7014 = vrot.slane %v7009, 4
        %v7016 = vshrl.u32 %v6828, 16
        %v7018 = vrot.slane %v7016, 7
        %v7019 = vshll.u32 %v6828, 16
        %v7021 = vor.u32 %v7018, %v7019
        %v7022 = vrot.slane %v7018, 4
        %v7024 = vshrl.u32 %v6829, 16
        %v7026 = vrot.slane %v7024, 7
        %v7027 = vshll.u32 %v6829, 16
        %v7029 = vor.u32 %v7026, %v7027
        %v7030 = vsel %vm2402, %v7022, %v7029
        %v7031 = vrot.slane %v7026, 4
        %v7033 = vshrl.u32 %v6830, 16
        %v7035 = vrot.slane %v7033, 7
        %v7036 = vshll.u32 %v6830, 16
        %v7038 = vor.u32 %v7035, %v7036
        %v7039 = vrot.slane %v7035, 4
        %v7041 = vshrl.u32 %v6831, 16
        %v7043 = vrot.slane %v7041, 7
        %v7044 = vshll.u32 %v6831, 16
        %v7046 = vor.u32 %v7043, %v7044
        %v7047 = vsel %vm2402, %v7039, %v7046
        %v7048 = vrot.slane %v7043, 4
        %v7050 = vshrl.u32 %v6832, 16
        %v7052 = vrot.slane %v7050, 7
        %v7053 = vshll.u32 %v6832, 16
        %v7055 = vor.u32 %v7052, %v7053
        %v7056 = vrot.slane %v7052, 4
        %v7058 = vshrl.u32 %v6833, 16
        %v7060 = vrot.slane %v7058, 7
        %v7061 = vshll.u32 %v6833, 16
        %v7063 = vor.u32 %v7060, %v7061
        %v7064 = vsel %vm2402, %v7056, %v7063
        %v7065 = vrot.slane %v7060, 4
        %v7067 = vshrl.u32 %v6834, 16
        %v7069 = vrot.slane %v7067, 7
        %v7070 = vshll.u32 %v6834, 16
        %v7072 = vor.u32 %v7069, %v7070
        %v7073 = vrot.slane %v7069, 4
        %v7075 = vshrl.u32 %v6835, 16
        %v7077 = vrot.slane %v7075, 7
        %v7078 = vshll.u32 %v6835, 16
        %v7080 = vor.u32 %v7077, %v7078
        %v7081 = vsel %vm2402, %v7073, %v7080
        %v7082 = vrot.slane %v7077, 4
        %v7084 = vshrl.u32 %v6836, 16
        %v7086 = vrot.slane %v7084, 7
        %v7087 = vshll.u32 %v6836, 16
        %v7089 = vor.u32 %v7086, %v7087
        %v7090 = vrot.slane %v7086, 4
        %v7092 = vshrl.u32 %v6837, 16
        %v7094 = vrot.slane %v7092, 7
        %v7095 = vshll.u32 %v6837, 16
        %v7097 = vor.u32 %v7094, %v7095
        %v7098 = vsel %vm2402, %v7090, %v7097
        %v7099 = vrot.slane %v7094, 4
        %v7101 = vshrl.u32 %v6838, 16
        %v7103 = vrot.slane %v7101, 7
        %v7104 = vshll.u32 %v6838, 16
        %v7106 = vor.u32 %v7103, %v7104
        %v7107 = vrot.slane %v7103, 4
        %v7109 = vshrl.u32 %v6839, 16
        %v7111 = vrot.slane %v7109, 7
        %v7112 = vshll.u32 %v6839, 16
        %v7114 = vor.u32 %v7111, %v7112
        %v7115 = vsel %vm2402, %v7107, %v7114
        %v7116 = vrot.slane %v7111, 4
        %v7118 = vshrl.u32 %v6840, 16
        %v7120 = vrot.slane %v7118, 7
        %v7121 = vshll.u32 %v6840, 16
        %v7123 = vor.u32 %v7120, %v7121
        %v7124 = vrot.slane %v7120, 4
        %v7126 = vshrl.u32 %v6841, 16
        %v7128 = vrot.slane %v7126, 7
        %v7129 = vshll.u32 %v6841, 16
        %v7131 = vor.u32 %v7128, %v7129
        %v7132 = vsel %vm2402, %v7124, %v7131
        %v7133 = vrot.slane %v7128, 4
        %v7135 = vshrl.u32 %v6842, 16
        %v7137 = vrot.slane %v7135, 7
        %v7138 = vshll.u32 %v6842, 16
        %v7140 = vor.u32 %v7137, %v7138
        %v7141 = vrot.slane %v7137, 4
        %v7143 = vshrl.u32 %v6843, 16
        %v7145 = vrot.slane %v7143, 7
        %v7146 = vshll.u32 %v6843, 16
        %v7148 = vor.u32 %v7145, %v7146
        %v7149 = vsel %vm2402, %v7141, %v7148
        %v7150 = vrot.slane %v7145, 4
        %v7152 = vshrl.u32 %v6844, 16
        %v7154 = vrot.slane %v7152, 7
        %v7155 = vshll.u32 %v6844, 16
        %v7157 = vor.u32 %v7154, %v7155
        %v7158 = vrot.slane %v7154, 4
        %v7160 = vshrl.u32 %v6845, 16
        %v7162 = vrot.slane %v7160, 7
        %v7163 = vshll.u32 %v6845, 16
        %v7165 = vor.u32 %v7162, %v7163
        %v7166 = vsel %vm2402, %v7158, %v7165
        %v7167 = vrot.slane %v7162, 4
        %v7169 = vshrl.u32 %v6846, 16
        %v7171 = vrot.slane %v7169, 7
        %v7172 = vshll.u32 %v6846, 16
        %v7174 = vor.u32 %v7171, %v7172
        %v7175 = vrot.slane %v7171, 4
        %v7177 = vshrl.u32 %v6847, 16
        %v7179 = vrot.slane %v7177, 7
        %v7180 = vshll.u32 %v6847, 16
        %v7182 = vor.u32 %v7179, %v7180
        %v7183 = vsel %vm2402, %v7175, %v7182
        %v7184 = vrot.slane %v7179, 4
        %s7233 = scalar_lea.vmem [#allocation3], 12
        %vm7234 = vcmask 257024
        %vm7235 = vmand %vm7234, %vm2725
        %v7236 = vld [vmem:[%s7233] sm:$0xf]
        %v7237 = vsel %vm7235, %v6919, %v7236
        %7238 = vst [vmem:[%s7233] sm:$0xf] %v7237
        %7239 = vst.msk [vmem:[%s7233 + $0x4] sm:$0xf] %vm6880, %v6928
        %vm7240 = vcmask 253952
        %vm7241 = vmand %vm7240, %vm2400
        %v7242 = vld [vmem:[%s7233 + $0x8] sm:$0x1]
        %v7243 = vsel %vm7241, %v6929, %v7242
        %7244 = vst [vmem:[%s7233 + $0x8] sm:$0x1] %v7243
        %v7245 = vld [vmem:[%s7233 + $0xc] sm:$0xf]
        %v7246 = vsel %vm7235, %v6936, %v7245
        %7247 = vst [vmem:[%s7233 + $0xc] sm:$0xf] %v7246
        %7248 = vst.msk [vmem:[%s7233 + $0x10] sm:$0xf] %vm6880, %v6945
        %v7249 = vld [vmem:[%s7233 + $0x14] sm:$0x1]
        %v7250 = vsel %vm7241, %v6946, %v7249
        %7251 = vst [vmem:[%s7233 + $0x14] sm:$0x1] %v7250
        %v7252 = vld [vmem:[%s7233 + $0x18] sm:$0xf]
        %v7253 = vsel %vm7235, %v6953, %v7252
        %7254 = vst [vmem:[%s7233 + $0x18] sm:$0xf] %v7253
        %7255 = vst.msk [vmem:[%s7233 + $0x1c] sm:$0xf] %vm6880, %v6962
        %v7256 = vld [vmem:[%s7233 + $0x20] sm:$0x1]
        %v7257 = vsel %vm7241, %v6963, %v7256
        %7258 = vst [vmem:[%s7233 + $0x20] sm:$0x1] %v7257
        %v7259 = vld [vmem:[%s7233 + $0x24] sm:$0xf]
        %v7260 = vsel %vm7235, %v6970, %v7259
        %7261 = vst [vmem:[%s7233 + $0x24] sm:$0xf] %v7260
        %7262 = vst.msk [vmem:[%s7233 + $0x28] sm:$0xf] %vm6880, %v6979
        %v7263 = vld [vmem:[%s7233 + $0x2c] sm:$0x1]
        %v7264 = vsel %vm7241, %v6980, %v7263
        %7265 = vst [vmem:[%s7233 + $0x2c] sm:$0x1] %v7264
        %v7266 = vld [vmem:[%s7233 + $0x30] sm:$0xf]
        %v7267 = vsel %vm7235, %v6987, %v7266
        %7268 = vst [vmem:[%s7233 + $0x30] sm:$0xf] %v7267
        %7269 = vst.msk [vmem:[%s7233 + $0x34] sm:$0xf] %vm6880, %v6996
        %v7270 = vld [vmem:[%s7233 + $0x38] sm:$0x1]
        %v7271 = vsel %vm7241, %v6997, %v7270
        %7272 = vst [vmem:[%s7233 + $0x38] sm:$0x1] %v7271
        %v7273 = vld [vmem:[%s7233 + $0x3c] sm:$0xf]
        %v7274 = vsel %vm7235, %v7004, %v7273
        %7275 = vst [vmem:[%s7233 + $0x3c] sm:$0xf] %v7274
        %7276 = vst.msk [vmem:[%s7233 + $0x40] sm:$0xf] %vm6880, %v7013
        %v7277 = vld [vmem:[%s7233 + $0x44] sm:$0x1]
        %v7278 = vsel %vm7241, %v7014, %v7277
        %7279 = vst [vmem:[%s7233 + $0x44] sm:$0x1] %v7278
        %v7280 = vld [vmem:[%s7233 + $0x48] sm:$0xf]
        %v7281 = vsel %vm7235, %v7021, %v7280
        %7282 = vst [vmem:[%s7233 + $0x48] sm:$0xf] %v7281
        %7283 = vst.msk [vmem:[%s7233 + $0x4c] sm:$0xf] %vm6880, %v7030
        %v7284 = vld [vmem:[%s7233 + $0x50] sm:$0x1]
        %v7285 = vsel %vm7241, %v7031, %v7284
        %7286 = vst [vmem:[%s7233 + $0x50] sm:$0x1] %v7285
        %v7287 = vld [vmem:[%s7233 + $0x54] sm:$0xf]
        %v7288 = vsel %vm7235, %v7038, %v7287
        %7289 = vst [vmem:[%s7233 + $0x54] sm:$0xf] %v7288
        %7290 = vst.msk [vmem:[%s7233 + $0x58] sm:$0xf] %vm6880, %v7047
        %v7291 = vld [vmem:[%s7233 + $0x5c] sm:$0x1]
        %v7292 = vsel %vm7241, %v7048, %v7291
        %7293 = vst [vmem:[%s7233 + $0x5c] sm:$0x1] %v7292
        %v7294 = vld [vmem:[%s7233 + $0x60] sm:$0xf]
        %v7295 = vsel %vm7235, %v7055, %v7294
        %7296 = vst [vmem:[%s7233 + $0x60] sm:$0xf] %v7295
        %7297 = vst.msk [vmem:[%s7233 + $0x64] sm:$0xf] %vm6880, %v7064
        %v7298 = vld [vmem:[%s7233 + $0x68] sm:$0x1]
        %v7299 = vsel %vm7241, %v7065, %v7298
        %7300 = vst [vmem:[%s7233 + $0x68] sm:$0x1] %v7299
        %v7301 = vld [vmem:[%s7233 + $0x6c] sm:$0xf]
        %v7302 = vsel %vm7235, %v7072, %v7301
        %7303 = vst [vmem:[%s7233 + $0x6c] sm:$0xf] %v7302
        %7304 = vst.msk [vmem:[%s7233 + $0x70] sm:$0xf] %vm6880, %v7081
        %v7305 = vld [vmem:[%s7233 + $0x74] sm:$0x1]
        %v7306 = vsel %vm7241, %v7082, %v7305
        %7307 = vst [vmem:[%s7233 + $0x74] sm:$0x1] %v7306
        %v7308 = vld [vmem:[%s7233 + $0x78] sm:$0xf]
        %v7309 = vsel %vm7235, %v7089, %v7308
        %7310 = vst [vmem:[%s7233 + $0x78] sm:$0xf] %v7309
        %7311 = vst.msk [vmem:[%s7233 + $0x7c] sm:$0xf] %vm6880, %v7098
        %v7312 = vld [vmem:[%s7233 + $0x80] sm:$0x1]
        %v7313 = vsel %vm7241, %v7099, %v7312
        %7314 = vst [vmem:[%s7233 + $0x80] sm:$0x1] %v7313
        %v7315 = vld [vmem:[%s7233 + $0x84] sm:$0xf]
        %v7316 = vsel %vm7235, %v7106, %v7315
        %7317 = vst [vmem:[%s7233 + $0x84] sm:$0xf] %v7316
        %7318 = vst.msk [vmem:[%s7233 + $0x88] sm:$0xf] %vm6880, %v7115
        %v7319 = vld [vmem:[%s7233 + $0x8c] sm:$0x1]
        %v7320 = vsel %vm7241, %v7116, %v7319
        %7321 = vst [vmem:[%s7233 + $0x8c] sm:$0x1] %v7320
        %v7322 = vld [vmem:[%s7233 + $0x90] sm:$0xf]
        %v7323 = vsel %vm7235, %v7123, %v7322
        %7324 = vst [vmem:[%s7233 + $0x90] sm:$0xf] %v7323
        %7325 = vst.msk [vmem:[%s7233 + $0x94] sm:$0xf] %vm6880, %v7132
        %v7326 = vld [vmem:[%s7233 + $0x98] sm:$0x1]
        %v7327 = vsel %vm7241, %v7133, %v7326
        %7328 = vst [vmem:[%s7233 + $0x98] sm:$0x1] %v7327
        %v7329 = vld [vmem:[%s7233 + $0x9c] sm:$0xf]
        %v7330 = vsel %vm7235, %v7140, %v7329
        %7331 = vst [vmem:[%s7233 + $0x9c] sm:$0xf] %v7330
        %7332 = vst.msk [vmem:[%s7233 + $0xa0] sm:$0xf] %vm6880, %v7149
        %v7333 = vld [vmem:[%s7233 + $0xa4] sm:$0x1]
        %v7334 = vsel %vm7241, %v7150, %v7333
        %7335 = vst [vmem:[%s7233 + $0xa4] sm:$0x1] %v7334
        %v7336 = vld [vmem:[%s7233 + $0xa8] sm:$0xf]
        %v7337 = vsel %vm7235, %v7157, %v7336
        %7338 = vst [vmem:[%s7233 + $0xa8] sm:$0xf] %v7337
        %7339 = vst.msk [vmem:[%s7233 + $0xac] sm:$0xf] %vm6880, %v7166
        %v7340 = vld [vmem:[%s7233 + $0xb0] sm:$0x1]
        %v7341 = vsel %vm7241, %v7167, %v7340
        %7342 = vst [vmem:[%s7233 + $0xb0] sm:$0x1] %v7341
        %v7343 = vld [vmem:[%s7233 + $0xb4] sm:$0xf]
        %v7344 = vsel %vm7235, %v7174, %v7343
        %7345 = vst [vmem:[%s7233 + $0xb4] sm:$0xf] %v7344
        %7346 = vst.msk [vmem:[%s7233 + $0xb8] sm:$0xf] %vm6880, %v7183
        %v7347 = vld [vmem:[%s7233 + $0xbc] sm:$0x1]
        %v7348 = vsel %vm7241, %v7184, %v7347
        %7349 = vst [vmem:[%s7233 + $0xbc] sm:$0x1] %v7348
        %v7350 = vld [vmem:[#allocation3] sm:$0xf]
        %v7351 = vld [vmem:[#allocation3 + $0x4] sm:$0xf]
        %v7352 = vld [vmem:[#allocation3 + $0xc] sm:$0xf]
        %v7353 = vld [vmem:[#allocation3 + $0x10] sm:$0xf]
        %v7354 = vld [vmem:[#allocation3 + $0x18] sm:$0xf]
        %v7355 = vld [vmem:[#allocation3 + $0x1c] sm:$0xf]
        %v7356 = vld [vmem:[#allocation3 + $0x24] sm:$0xf]
        %v7357 = vld [vmem:[#allocation3 + $0x28] sm:$0xf]
        %v7358 = vld [vmem:[#allocation3 + $0x30] sm:$0xf]
        %v7359 = vld [vmem:[#allocation3 + $0x34] sm:$0xf]
        %v7360 = vld [vmem:[#allocation3 + $0x3c] sm:$0xf]
        %v7361 = vld [vmem:[#allocation3 + $0x40] sm:$0xf]
        %v7362 = vld [vmem:[#allocation3 + $0x48] sm:$0xf]
        %v7363 = vld [vmem:[#allocation3 + $0x4c] sm:$0xf]
        %v7364 = vld [vmem:[#allocation3 + $0x54] sm:$0xf]
        %v7365 = vld [vmem:[#allocation3 + $0x58] sm:$0xf]
        %v7366 = vld [vmem:[#allocation3 + $0x60] sm:$0xf]
        %v7367 = vld [vmem:[#allocation3 + $0x64] sm:$0xf]
        %v7368 = vld [vmem:[#allocation3 + $0x6c] sm:$0xf]
        %v7369 = vld [vmem:[#allocation3 + $0x70] sm:$0xf]
        %v7370 = vld [vmem:[#allocation3 + $0x78] sm:$0xf]
        %v7371 = vld [vmem:[#allocation3 + $0x7c] sm:$0xf]
        %v7372 = vld [vmem:[#allocation3 + $0x84] sm:$0xf]
        %v7373 = vld [vmem:[#allocation3 + $0x88] sm:$0xf]
        %v7374 = vld [vmem:[#allocation3 + $0x90] sm:$0xf]
        %v7375 = vld [vmem:[#allocation3 + $0x94] sm:$0xf]
        %v7376 = vld [vmem:[#allocation3 + $0x9c] sm:$0xf]
        %v7377 = vld [vmem:[#allocation3 + $0xa0] sm:$0xf]
        %v7378 = vld [vmem:[#allocation3 + $0xa8] sm:$0xf]
        %v7379 = vld [vmem:[#allocation3 + $0xac] sm:$0xf]
        %v7380 = vld [vmem:[#allocation3 + $0xb4] sm:$0xf]
        %v7381 = vld [vmem:[#allocation3 + $0xb8] sm:$0xf]
        %v7382 = vld [vmem:[#allocation3 + $0x8] sm:$0x1]
        %v7383 = vld [vmem:[#allocation3 + $0x14] sm:$0x1]
        %v7384 = vld [vmem:[#allocation3 + $0x20] sm:$0x1]
        %v7385 = vld [vmem:[#allocation3 + $0x2c] sm:$0x1]
        %v7386 = vld [vmem:[#allocation3 + $0x38] sm:$0x1]
        %v7387 = vld [vmem:[#allocation3 + $0x44] sm:$0x1]
        %v7388 = vld [vmem:[#allocation3 + $0x50] sm:$0x1]
        %v7389 = vld [vmem:[#allocation3 + $0x5c] sm:$0x1]
        %v7390 = vld [vmem:[#allocation3 + $0x68] sm:$0x1]
        %v7391 = vld [vmem:[#allocation3 + $0x74] sm:$0x1]
        %v7392 = vld [vmem:[#allocation3 + $0x80] sm:$0x1]
        %v7393 = vld [vmem:[#allocation3 + $0x8c] sm:$0x1]
        %v7394 = vld [vmem:[#allocation3 + $0x98] sm:$0x1]
        %v7395 = vld [vmem:[#allocation3 + $0xa4] sm:$0x1]
        %v7396 = vld [vmem:[#allocation3 + $0xb0] sm:$0x1]
        %v7397 = vld [vmem:[#allocation3 + $0xbc] sm:$0x1]
        %v7399 = vshrl.u32 %v7350, 16
        %v7401 = vrot.slane %v7399, 4
        %v7402 = vshll.u32 %v7350, 16
        %v7404 = vrot.slane %v7402, 5
        %v7405 = vor.u32 %v7401, %v7404
        %v7406 = vrot.slane %v7405, 4
        %v7408 = vshll.u32 %v7351, 16
        %v7410 = vrot.slane %v7408, 5
        %v7411 = vsel %vm3728, %v7406, %v7410
        %v7412 = vshrl.u32 %v7351, 16
        %v7414 = vrot.slane %v7412, 4
        %v7415 = vor.u32 %v7414, %v7410
        %v7416 = vrot.slane %v7415, 4
        %v7418 = vshll.u32 %v7382, 16
        %v7420 = vrot.slane %v7418, 5
        %v7421 = vsel %vm3728, %v7416, %v7420
        %v7423 = vshrl.u32 %v7352, 16
        %v7425 = vrot.slane %v7423, 4
        %v7426 = vshll.u32 %v7352, 16
        %v7428 = vrot.slane %v7426, 5
        %v7429 = vor.u32 %v7425, %v7428
        %v7430 = vrot.slane %v7429, 4
        %v7432 = vshll.u32 %v7353, 16
        %v7434 = vrot.slane %v7432, 5
        %v7435 = vsel %vm3728, %v7430, %v7434
        %v7436 = vshrl.u32 %v7353, 16
        %v7438 = vrot.slane %v7436, 4
        %v7439 = vor.u32 %v7438, %v7434
        %v7440 = vrot.slane %v7439, 4
        %v7442 = vshll.u32 %v7383, 16
        %v7444 = vrot.slane %v7442, 5
        %v7445 = vsel %vm3728, %v7440, %v7444
        %v7447 = vshrl.u32 %v7354, 16
        %v7449 = vrot.slane %v7447, 4
        %v7450 = vshll.u32 %v7354, 16
        %v7452 = vrot.slane %v7450, 5
        %v7453 = vor.u32 %v7449, %v7452
        %v7454 = vrot.slane %v7453, 4
        %v7456 = vshll.u32 %v7355, 16
        %v7458 = vrot.slane %v7456, 5
        %v7459 = vsel %vm3728, %v7454, %v7458
        %v7460 = vshrl.u32 %v7355, 16
        %v7462 = vrot.slane %v7460, 4
        %v7463 = vor.u32 %v7462, %v7458
        %v7464 = vrot.slane %v7463, 4
        %v7466 = vshll.u32 %v7384, 16
        %v7468 = vrot.slane %v7466, 5
        %v7469 = vsel %vm3728, %v7464, %v7468
        %v7471 = vshrl.u32 %v7356, 16
        %v7473 = vrot.slane %v7471, 4
        %v7474 = vshll.u32 %v7356, 16
        %v7476 = vrot.slane %v7474, 5
        %v7477 = vor.u32 %v7473, %v7476
        %v7478 = vrot.slane %v7477, 4
        %v7480 = vshll.u32 %v7357, 16
        %v7482 = vrot.slane %v7480, 5
        %v7483 = vsel %vm3728, %v7478, %v7482
        %v7484 = vshrl.u32 %v7357, 16
        %v7486 = vrot.slane %v7484, 4
        %v7487 = vor.u32 %v7486, %v7482
        %v7488 = vrot.slane %v7487, 4
        %v7490 = vshll.u32 %v7385, 16
        %v7492 = vrot.slane %v7490, 5
        %v7493 = vsel %vm3728, %v7488, %v7492
        %v7495 = vshrl.u32 %v7358, 16
        %v7497 = vrot.slane %v7495, 4
        %v7498 = vshll.u32 %v7358, 16
        %v7500 = vrot.slane %v7498, 5
        %v7501 = vor.u32 %v7497, %v7500
        %v7502 = vrot.slane %v7501, 4
        %v7504 = vshll.u32 %v7359, 16
        %v7506 = vrot.slane %v7504, 5
        %v7507 = vsel %vm3728, %v7502, %v7506
        %v7508 = vshrl.u32 %v7359, 16
        %v7510 = vrot.slane %v7508, 4
        %v7511 = vor.u32 %v7510, %v7506
        %v7512 = vrot.slane %v7511, 4
        %v7514 = vshll.u32 %v7386, 16
        %v7516 = vrot.slane %v7514, 5
        %v7517 = vsel %vm3728, %v7512, %v7516
        %v7519 = vshrl.u32 %v7360, 16
        %v7521 = vrot.slane %v7519, 4
        %v7522 = vshll.u32 %v7360, 16
        %v7524 = vrot.slane %v7522, 5
        %v7525 = vor.u32 %v7521, %v7524
        %v7526 = vrot.slane %v7525, 4
        %v7528 = vshll.u32 %v7361, 16
        %v7530 = vrot.slane %v7528, 5
        %v7531 = vsel %vm3728, %v7526, %v7530
        %v7532 = vshrl.u32 %v7361, 16
        %v7534 = vrot.slane %v7532, 4
        %v7535 = vor.u32 %v7534, %v7530
        %v7536 = vrot.slane %v7535, 4
        %v7538 = vshll.u32 %v7387, 16
        %v7540 = vrot.slane %v7538, 5
        %v7541 = vsel %vm3728, %v7536, %v7540
        %v7543 = vshrl.u32 %v7362, 16
        %v7545 = vrot.slane %v7543, 4
        %v7546 = vshll.u32 %v7362, 16
        %v7548 = vrot.slane %v7546, 5
        %v7549 = vor.u32 %v7545, %v7548
        %v7550 = vrot.slane %v7549, 4
        %v7552 = vshll.u32 %v7363, 16
        %v7554 = vrot.slane %v7552, 5
        %v7555 = vsel %vm3728, %v7550, %v7554
        %v7556 = vshrl.u32 %v7363, 16
        %v7558 = vrot.slane %v7556, 4
        %v7559 = vor.u32 %v7558, %v7554
        %v7560 = vrot.slane %v7559, 4
        %v7562 = vshll.u32 %v7388, 16
        %v7564 = vrot.slane %v7562, 5
        %v7565 = vsel %vm3728, %v7560, %v7564
        %v7567 = vshrl.u32 %v7364, 16
        %v7569 = vrot.slane %v7567, 4
        %v7570 = vshll.u32 %v7364, 16
        %v7572 = vrot.slane %v7570, 5
        %v7573 = vor.u32 %v7569, %v7572
        %v7574 = vrot.slane %v7573, 4
        %v7576 = vshll.u32 %v7365, 16
        %v7578 = vrot.slane %v7576, 5
        %v7579 = vsel %vm3728, %v7574, %v7578
        %v7580 = vshrl.u32 %v7365, 16
        %v7582 = vrot.slane %v7580, 4
        %v7583 = vor.u32 %v7582, %v7578
        %v7584 = vrot.slane %v7583, 4
        %v7586 = vshll.u32 %v7389, 16
        %v7588 = vrot.slane %v7586, 5
        %v7589 = vsel %vm3728, %v7584, %v7588
        %v7591 = vshrl.u32 %v7366, 16
        %v7593 = vrot.slane %v7591, 4
        %v7594 = vshll.u32 %v7366, 16
        %v7596 = vrot.slane %v7594, 5
        %v7597 = vor.u32 %v7593, %v7596
        %v7598 = vrot.slane %v7597, 4
        %v7600 = vshll.u32 %v7367, 16
        %v7602 = vrot.slane %v7600, 5
        %v7603 = vsel %vm3728, %v7598, %v7602
        %v7604 = vshrl.u32 %v7367, 16
        %v7606 = vrot.slane %v7604, 4
        %v7607 = vor.u32 %v7606, %v7602
        %v7608 = vrot.slane %v7607, 4
        %v7610 = vshll.u32 %v7390, 16
        %v7612 = vrot.slane %v7610, 5
        %v7613 = vsel %vm3728, %v7608, %v7612
        %v7615 = vshrl.u32 %v7368, 16
        %v7617 = vrot.slane %v7615, 4
        %v7618 = vshll.u32 %v7368, 16
        %v7620 = vrot.slane %v7618, 5
        %v7621 = vor.u32 %v7617, %v7620
        %v7622 = vrot.slane %v7621, 4
        %v7624 = vshll.u32 %v7369, 16
        %v7626 = vrot.slane %v7624, 5
        %v7627 = vsel %vm3728, %v7622, %v7626
        %v7628 = vshrl.u32 %v7369, 16
        %v7630 = vrot.slane %v7628, 4
        %v7631 = vor.u32 %v7630, %v7626
        %v7632 = vrot.slane %v7631, 4
        %v7634 = vshll.u32 %v7391, 16
        %v7636 = vrot.slane %v7634, 5
        %v7637 = vsel %vm3728, %v7632, %v7636
        %v7639 = vshrl.u32 %v7370, 16
        %v7641 = vrot.slane %v7639, 4
        %v7642 = vshll.u32 %v7370, 16
        %v7644 = vrot.slane %v7642, 5
        %v7645 = vor.u32 %v7641, %v7644
        %v7646 = vrot.slane %v7645, 4
        %v7648 = vshll.u32 %v7371, 16
        %v7650 = vrot.slane %v7648, 5
        %v7651 = vsel %vm3728, %v7646, %v7650
        %v7652 = vshrl.u32 %v7371, 16
        %v7654 = vrot.slane %v7652, 4
        %v7655 = vor.u32 %v7654, %v7650
        %v7656 = vrot.slane %v7655, 4
        %v7658 = vshll.u32 %v7392, 16
        %v7660 = vrot.slane %v7658, 5
        %v7661 = vsel %vm3728, %v7656, %v7660
        %v7663 = vshrl.u32 %v7372, 16
        %v7665 = vrot.slane %v7663, 4
        %v7666 = vshll.u32 %v7372, 16
        %v7668 = vrot.slane %v7666, 5
        %v7669 = vor.u32 %v7665, %v7668
        %v7670 = vrot.slane %v7669, 4
        %v7672 = vshll.u32 %v7373, 16
        %v7674 = vrot.slane %v7672, 5
        %v7675 = vsel %vm3728, %v7670, %v7674
        %v7676 = vshrl.u32 %v7373, 16
        %v7678 = vrot.slane %v7676, 4
        %v7679 = vor.u32 %v7678, %v7674
        %v7680 = vrot.slane %v7679, 4
        %v7682 = vshll.u32 %v7393, 16
        %v7684 = vrot.slane %v7682, 5
        %v7685 = vsel %vm3728, %v7680, %v7684
        %v7687 = vshrl.u32 %v7374, 16
        %v7689 = vrot.slane %v7687, 4
        %v7690 = vshll.u32 %v7374, 16
        %v7692 = vrot.slane %v7690, 5
        %v7693 = vor.u32 %v7689, %v7692
        %v7694 = vrot.slane %v7693, 4
        %v7696 = vshll.u32 %v7375, 16
        %v7698 = vrot.slane %v7696, 5
        %v7699 = vsel %vm3728, %v7694, %v7698
        %v7700 = vshrl.u32 %v7375, 16
        %v7702 = vrot.slane %v7700, 4
        %v7703 = vor.u32 %v7702, %v7698
        %v7704 = vrot.slane %v7703, 4
        %v7706 = vshll.u32 %v7394, 16
        %v7708 = vrot.slane %v7706, 5
        %v7709 = vsel %vm3728, %v7704, %v7708
        %v7711 = vshrl.u32 %v7376, 16
        %v7713 = vrot.slane %v7711, 4
        %v7714 = vshll.u32 %v7376, 16
        %v7716 = vrot.slane %v7714, 5
        %v7717 = vor.u32 %v7713, %v7716
        %v7718 = vrot.slane %v7717, 4
        %v7720 = vshll.u32 %v7377, 16
        %v7722 = vrot.slane %v7720, 5
        %v7723 = vsel %vm3728, %v7718, %v7722
        %v7724 = vshrl.u32 %v7377, 16
        %v7726 = vrot.slane %v7724, 4
        %v7727 = vor.u32 %v7726, %v7722
        %v7728 = vrot.slane %v7727, 4
        %v7730 = vshll.u32 %v7395, 16
        %v7732 = vrot.slane %v7730, 5
        %v7733 = vsel %vm3728, %v7728, %v7732
        %v7735 = vshrl.u32 %v7378, 16
        %v7737 = vrot.slane %v7735, 4
        %v7738 = vshll.u32 %v7378, 16
        %v7740 = vrot.slane %v7738, 5
        %v7741 = vor.u32 %v7737, %v7740
        %v7742 = vrot.slane %v7741, 4
        %v7744 = vshll.u32 %v7379, 16
        %v7746 = vrot.slane %v7744, 5
        %v7747 = vsel %vm3728, %v7742, %v7746
        %v7748 = vshrl.u32 %v7379, 16
        %v7750 = vrot.slane %v7748, 4
        %v7751 = vor.u32 %v7750, %v7746
        %v7752 = vrot.slane %v7751, 4
        %v7754 = vshll.u32 %v7396, 16
        %v7756 = vrot.slane %v7754, 5
        %v7757 = vsel %vm3728, %v7752, %v7756
        %v7759 = vshrl.u32 %v7380, 16
        %v7761 = vrot.slane %v7759, 4
        %v7762 = vshll.u32 %v7380, 16
        %v7764 = vrot.slane %v7762, 5
        %v7765 = vor.u32 %v7761, %v7764
        %v7766 = vrot.slane %v7765, 4
        %v7768 = vshll.u32 %v7381, 16
        %v7770 = vrot.slane %v7768, 5
        %v7771 = vsel %vm3728, %v7766, %v7770
        %v7772 = vshrl.u32 %v7381, 16
        %v7774 = vrot.slane %v7772, 4
        %v7775 = vor.u32 %v7774, %v7770
        %v7776 = vrot.slane %v7775, 4
        %v7778 = vshll.u32 %v7397, 16
        %v7780 = vrot.slane %v7778, 5
        %v7781 = vsel %vm3728, %v7776, %v7780
        %v7782 = vld [vmem:[#allocation3] sm:$0xe]
        %v7783 = vld [vmem:[#allocation3 + $0xc] sm:$0xe]
        %v7784 = vld [vmem:[#allocation3 + $0x18] sm:$0xe]
        %v7785 = vld [vmem:[#allocation3 + $0x24] sm:$0xe]
        %v7786 = vld [vmem:[#allocation3 + $0x30] sm:$0xe]
        %v7787 = vld [vmem:[#allocation3 + $0x3c] sm:$0xe]
        %v7788 = vld [vmem:[#allocation3 + $0x48] sm:$0xe]
        %v7789 = vld [vmem:[#allocation3 + $0x54] sm:$0xe]
        %v7790 = vld [vmem:[#allocation3 + $0x60] sm:$0xe]
        %v7791 = vld [vmem:[#allocation3 + $0x6c] sm:$0xe]
        %v7792 = vld [vmem:[#allocation3 + $0x78] sm:$0xe]
        %v7793 = vld [vmem:[#allocation3 + $0x84] sm:$0xe]
        %v7794 = vld [vmem:[#allocation3 + $0x90] sm:$0xe]
        %v7795 = vld [vmem:[#allocation3 + $0x9c] sm:$0xe]
        %v7796 = vld [vmem:[#allocation3 + $0xa8] sm:$0xe]
        %v7797 = vld [vmem:[#allocation3 + $0xb4] sm:$0xe]
        %vm7846 = vcmask 1042432
        %vm7847 = vcmask 1046532
        %vm7848 = vmor %vm7846, %vm7847
        %v7849 = vrot.slane %v7782, 5
        %v7850 = vrot.slane %v7849, 4
        %v7851 = vrot.slane %v7351, 5
        %v7852 = vsel %vm7848, %v7850, %v7851
        %v7853 = vrot.slane %v7851, 4
        %v7854 = vrot.slane %v7382, 5
        %v7855 = vsel %vm7848, %v7853, %v7854
        %v7856 = vrot.slane %v7783, 5
        %v7857 = vrot.slane %v7856, 4
        %v7858 = vrot.slane %v7353, 5
        %v7859 = vsel %vm7848, %v7857, %v7858
        %v7860 = vrot.slane %v7858, 4
        %v7861 = vrot.slane %v7383, 5
        %v7862 = vsel %vm7848, %v7860, %v7861
        %v7863 = vrot.slane %v7784, 5
        %v7864 = vrot.slane %v7863, 4
        %v7865 = vrot.slane %v7355, 5
        %v7866 = vsel %vm7848, %v7864, %v7865
        %v7867 = vrot.slane %v7865, 4
        %v7868 = vrot.slane %v7384, 5
        %v7869 = vsel %vm7848, %v7867, %v7868
        %v7870 = vrot.slane %v7785, 5
        %v7871 = vrot.slane %v7870, 4
        %v7872 = vrot.slane %v7357, 5
        %v7873 = vsel %vm7848, %v7871, %v7872
        %v7874 = vrot.slane %v7872, 4
        %v7875 = vrot.slane %v7385, 5
        %v7876 = vsel %vm7848, %v7874, %v7875
        %v7877 = vrot.slane %v7786, 5
        %v7878 = vrot.slane %v7877, 4
        %v7879 = vrot.slane %v7359, 5
        %v7880 = vsel %vm7848, %v7878, %v7879
        %v7881 = vrot.slane %v7879, 4
        %v7882 = vrot.slane %v7386, 5
        %v7883 = vsel %vm7848, %v7881, %v7882
        %v7884 = vrot.slane %v7787, 5
        %v7885 = vrot.slane %v7884, 4
        %v7886 = vrot.slane %v7361, 5
        %v7887 = vsel %vm7848, %v7885, %v7886
        %v7888 = vrot.slane %v7886, 4
        %v7889 = vrot.slane %v7387, 5
        %v7890 = vsel %vm7848, %v7888, %v7889
        %v7891 = vrot.slane %v7788, 5
        %v7892 = vrot.slane %v7891, 4
        %v7893 = vrot.slane %v7363, 5
        %v7894 = vsel %vm7848, %v7892, %v7893
        %v7895 = vrot.slane %v7893, 4
        %v7896 = vrot.slane %v7388, 5
        %v7897 = vsel %vm7848, %v7895, %v7896
        %v7898 = vrot.slane %v7789, 5
        %v7899 = vrot.slane %v7898, 4
        %v7900 = vrot.slane %v7365, 5
        %v7901 = vsel %vm7848, %v7899, %v7900
        %v7902 = vrot.slane %v7900, 4
        %v7903 = vrot.slane %v7389, 5
        %v7904 = vsel %vm7848, %v7902, %v7903
        %v7905 = vrot.slane %v7790, 5
        %v7906 = vrot.slane %v7905, 4
        %v7907 = vrot.slane %v7367, 5
        %v7908 = vsel %vm7848, %v7906, %v7907
        %v7909 = vrot.slane %v7907, 4
        %v7910 = vrot.slane %v7390, 5
        %v7911 = vsel %vm7848, %v7909, %v7910
        %v7912 = vrot.slane %v7791, 5
        %v7913 = vrot.slane %v7912, 4
        %v7914 = vrot.slane %v7369, 5
        %v7915 = vsel %vm7848, %v7913, %v7914
        %v7916 = vrot.slane %v7914, 4
        %v7917 = vrot.slane %v7391, 5
        %v7918 = vsel %vm7848, %v7916, %v7917
        %v7919 = vrot.slane %v7792, 5
        %v7920 = vrot.slane %v7919, 4
        %v7921 = vrot.slane %v7371, 5
        %v7922 = vsel %vm7848, %v7920, %v7921
        %v7923 = vrot.slane %v7921, 4
        %v7924 = vrot.slane %v7392, 5
        %v7925 = vsel %vm7848, %v7923, %v7924
        %v7926 = vrot.slane %v7793, 5
        %v7927 = vrot.slane %v7926, 4
        %v7928 = vrot.slane %v7373, 5
        %v7929 = vsel %vm7848, %v7927, %v7928
        %v7930 = vrot.slane %v7928, 4
        %v7931 = vrot.slane %v7393, 5
        %v7932 = vsel %vm7848, %v7930, %v7931
        %v7933 = vrot.slane %v7794, 5
        %v7934 = vrot.slane %v7933, 4
        %v7935 = vrot.slane %v7375, 5
        %v7936 = vsel %vm7848, %v7934, %v7935
        %v7937 = vrot.slane %v7935, 4
        %v7938 = vrot.slane %v7394, 5
        %v7939 = vsel %vm7848, %v7937, %v7938
        %v7940 = vrot.slane %v7795, 5
        %v7941 = vrot.slane %v7940, 4
        %v7942 = vrot.slane %v7377, 5
        %v7943 = vsel %vm7848, %v7941, %v7942
        %v7944 = vrot.slane %v7942, 4
        %v7945 = vrot.slane %v7395, 5
        %v7946 = vsel %vm7848, %v7944, %v7945
        %v7947 = vrot.slane %v7796, 5
        %v7948 = vrot.slane %v7947, 4
        %v7949 = vrot.slane %v7379, 5
        %v7950 = vsel %vm7848, %v7948, %v7949
        %v7951 = vrot.slane %v7949, 4
        %v7952 = vrot.slane %v7396, 5
        %v7953 = vsel %vm7848, %v7951, %v7952
        %v7954 = vrot.slane %v7797, 5
        %v7955 = vrot.slane %v7954, 4
        %v7956 = vrot.slane %v7381, 5
        %v7957 = vsel %vm7848, %v7955, %v7956
        %v7958 = vrot.slane %v7956, 4
        %v7959 = vrot.slane %v7397, 5
        %v7960 = vsel %vm7848, %v7958, %v7959
        %v7961 = vld [vmem:[%s7233] sm:$0xf]
        %v7962 = vld [vmem:[%s7233 + $0x4] sm:$0xf]
        %v7963 = vld [vmem:[%s7233 + $0xc] sm:$0xf]
        %v7964 = vld [vmem:[%s7233 + $0x10] sm:$0xf]
        %v7965 = vld [vmem:[%s7233 + $0x18] sm:$0xf]
        %v7966 = vld [vmem:[%s7233 + $0x1c] sm:$0xf]
        %v7967 = vld [vmem:[%s7233 + $0x24] sm:$0xf]
        %v7968 = vld [vmem:[%s7233 + $0x28] sm:$0xf]
        %v7969 = vld [vmem:[%s7233 + $0x30] sm:$0xf]
        %v7970 = vld [vmem:[%s7233 + $0x34] sm:$0xf]
        %v7971 = vld [vmem:[%s7233 + $0x3c] sm:$0xf]
        %v7972 = vld [vmem:[%s7233 + $0x40] sm:$0xf]
        %v7973 = vld [vmem:[%s7233 + $0x48] sm:$0xf]
        %v7974 = vld [vmem:[%s7233 + $0x4c] sm:$0xf]
        %v7975 = vld [vmem:[%s7233 + $0x54] sm:$0xf]
        %v7976 = vld [vmem:[%s7233 + $0x58] sm:$0xf]
        %v7977 = vld [vmem:[%s7233 + $0x60] sm:$0xf]
        %v7978 = vld [vmem:[%s7233 + $0x64] sm:$0xf]
        %v7979 = vld [vmem:[%s7233 + $0x6c] sm:$0xf]
        %v7980 = vld [vmem:[%s7233 + $0x70] sm:$0xf]
        %v7981 = vld [vmem:[%s7233 + $0x78] sm:$0xf]
        %v7982 = vld [vmem:[%s7233 + $0x7c] sm:$0xf]
        %v7983 = vld [vmem:[%s7233 + $0x84] sm:$0xf]
        %v7984 = vld [vmem:[%s7233 + $0x88] sm:$0xf]
        %v7985 = vld [vmem:[%s7233 + $0x90] sm:$0xf]
        %v7986 = vld [vmem:[%s7233 + $0x94] sm:$0xf]
        %v7987 = vld [vmem:[%s7233 + $0x9c] sm:$0xf]
        %v7988 = vld [vmem:[%s7233 + $0xa0] sm:$0xf]
        %v7989 = vld [vmem:[%s7233 + $0xa8] sm:$0xf]
        %v7990 = vld [vmem:[%s7233 + $0xac] sm:$0xf]
        %v7991 = vld [vmem:[%s7233 + $0xb4] sm:$0xf]
        %v7992 = vld [vmem:[%s7233 + $0xb8] sm:$0xf]
        %v7993 = vld [vmem:[%s7233 + $0x8] sm:$0x1]
        %v7994 = vld [vmem:[%s7233 + $0x14] sm:$0x1]
        %v7995 = vld [vmem:[%s7233 + $0x20] sm:$0x1]
        %v7996 = vld [vmem:[%s7233 + $0x2c] sm:$0x1]
        %v7997 = vld [vmem:[%s7233 + $0x38] sm:$0x1]
        %v7998 = vld [vmem:[%s7233 + $0x44] sm:$0x1]
        %v7999 = vld [vmem:[%s7233 + $0x50] sm:$0x1]
        %v8000 = vld [vmem:[%s7233 + $0x5c] sm:$0x1]
        %v8001 = vld [vmem:[%s7233 + $0x68] sm:$0x1]
        %v8002 = vld [vmem:[%s7233 + $0x74] sm:$0x1]
        %v8003 = vld [vmem:[%s7233 + $0x80] sm:$0x1]
        %v8004 = vld [vmem:[%s7233 + $0x8c] sm:$0x1]
        %v8005 = vld [vmem:[%s7233 + $0x98] sm:$0x1]
        %v8006 = vld [vmem:[%s7233 + $0xa4] sm:$0x1]
        %v8007 = vld [vmem:[%s7233 + $0xb0] sm:$0x1]
        %v8008 = vld [vmem:[%s7233 + $0xbc] sm:$0x1]
        %v8010 = vshrl.u32 %v7961, 16
        %v8012 = vrot.slane %v8010, 4
        %v8013 = vshll.u32 %v7961, 16
        %v8015 = vrot.slane %v8013, 5
        %v8016 = vor.u32 %v8012, %v8015
        %v8017 = vrot.slane %v8016, 4
        %v8019 = vshll.u32 %v7962, 16
        %v8021 = vrot.slane %v8019, 5
        %v8022 = vsel %vm3728, %v8017, %v8021
        %v8023 = vshrl.u32 %v7962, 16
        %v8025 = vrot.slane %v8023, 4
        %v8026 = vor.u32 %v8025, %v8021
        %v8027 = vrot.slane %v8026, 4
        %v8029 = vshll.u32 %v7993, 16
        %v8031 = vrot.slane %v8029, 5
        %v8032 = vsel %vm3728, %v8027, %v8031
        %v8034 = vshrl.u32 %v7963, 16
        %v8036 = vrot.slane %v8034, 4
        %v8037 = vshll.u32 %v7963, 16
        %v8039 = vrot.slane %v8037, 5
        %v8040 = vor.u32 %v8036, %v8039
        %v8041 = vrot.slane %v8040, 4
        %v8043 = vshll.u32 %v7964, 16
        %v8045 = vrot.slane %v8043, 5
        %v8046 = vsel %vm3728, %v8041, %v8045
        %v8047 = vshrl.u32 %v7964, 16
        %v8049 = vrot.slane %v8047, 4
        %v8050 = vor.u32 %v8049, %v8045
        %v8051 = vrot.slane %v8050, 4
        %v8053 = vshll.u32 %v7994, 16
        %v8055 = vrot.slane %v8053, 5
        %v8056 = vsel %vm3728, %v8051, %v8055
        %v8058 = vshrl.u32 %v7965, 16
        %v8060 = vrot.slane %v8058, 4
        %v8061 = vshll.u32 %v7965, 16
        %v8063 = vrot.slane %v8061, 5
        %v8064 = vor.u32 %v8060, %v8063
        %v8065 = vrot.slane %v8064, 4
        %v8067 = vshll.u32 %v7966, 16
        %v8069 = vrot.slane %v8067, 5
        %v8070 = vsel %vm3728, %v8065, %v8069
        %v8071 = vshrl.u32 %v7966, 16
        %v8073 = vrot.slane %v8071, 4
        %v8074 = vor.u32 %v8073, %v8069
        %v8075 = vrot.slane %v8074, 4
        %v8077 = vshll.u32 %v7995, 16
        %v8079 = vrot.slane %v8077, 5
        %v8080 = vsel %vm3728, %v8075, %v8079
        %v8082 = vshrl.u32 %v7967, 16
        %v8084 = vrot.slane %v8082, 4
        %v8085 = vshll.u32 %v7967, 16
        %v8087 = vrot.slane %v8085, 5
        %v8088 = vor.u32 %v8084, %v8087
        %v8089 = vrot.slane %v8088, 4
        %v8091 = vshll.u32 %v7968, 16
        %v8093 = vrot.slane %v8091, 5
        %v8094 = vsel %vm3728, %v8089, %v8093
        %v8095 = vshrl.u32 %v7968, 16
        %v8097 = vrot.slane %v8095, 4
        %v8098 = vor.u32 %v8097, %v8093
        %v8099 = vrot.slane %v8098, 4
        %v8101 = vshll.u32 %v7996, 16
        %v8103 = vrot.slane %v8101, 5
        %v8104 = vsel %vm3728, %v8099, %v8103
        %v8106 = vshrl.u32 %v7969, 16
        %v8108 = vrot.slane %v8106, 4
        %v8109 = vshll.u32 %v7969, 16
        %v8111 = vrot.slane %v8109, 5
        %v8112 = vor.u32 %v8108, %v8111
        %v8113 = vrot.slane %v8112, 4
        %v8115 = vshll.u32 %v7970, 16
        %v8117 = vrot.slane %v8115, 5
        %v8118 = vsel %vm3728, %v8113, %v8117
        %v8119 = vshrl.u32 %v7970, 16
        %v8121 = vrot.slane %v8119, 4
        %v8122 = vor.u32 %v8121, %v8117
        %v8123 = vrot.slane %v8122, 4
        %v8125 = vshll.u32 %v7997, 16
        %v8127 = vrot.slane %v8125, 5
        %v8128 = vsel %vm3728, %v8123, %v8127
        %v8130 = vshrl.u32 %v7971, 16
        %v8132 = vrot.slane %v8130, 4
        %v8133 = vshll.u32 %v7971, 16
        %v8135 = vrot.slane %v8133, 5
        %v8136 = vor.u32 %v8132, %v8135
        %v8137 = vrot.slane %v8136, 4
        %v8139 = vshll.u32 %v7972, 16
        %v8141 = vrot.slane %v8139, 5
        %v8142 = vsel %vm3728, %v8137, %v8141
        %v8143 = vshrl.u32 %v7972, 16
        %v8145 = vrot.slane %v8143, 4
        %v8146 = vor.u32 %v8145, %v8141
        %v8147 = vrot.slane %v8146, 4
        %v8149 = vshll.u32 %v7998, 16
        %v8151 = vrot.slane %v8149, 5
        %v8152 = vsel %vm3728, %v8147, %v8151
        %v8154 = vshrl.u32 %v7973, 16
        %v8156 = vrot.slane %v8154, 4
        %v8157 = vshll.u32 %v7973, 16
        %v8159 = vrot.slane %v8157, 5
        %v8160 = vor.u32 %v8156, %v8159
        %v8161 = vrot.slane %v8160, 4
        %v8163 = vshll.u32 %v7974, 16
        %v8165 = vrot.slane %v8163, 5
        %v8166 = vsel %vm3728, %v8161, %v8165
        %v8167 = vshrl.u32 %v7974, 16
        %v8169 = vrot.slane %v8167, 4
        %v8170 = vor.u32 %v8169, %v8165
        %v8171 = vrot.slane %v8170, 4
        %v8173 = vshll.u32 %v7999, 16
        %v8175 = vrot.slane %v8173, 5
        %v8176 = vsel %vm3728, %v8171, %v8175
        %v8178 = vshrl.u32 %v7975, 16
        %v8180 = vrot.slane %v8178, 4
        %v8181 = vshll.u32 %v7975, 16
        %v8183 = vrot.slane %v8181, 5
        %v8184 = vor.u32 %v8180, %v8183
        %v8185 = vrot.slane %v8184, 4
        %v8187 = vshll.u32 %v7976, 16
        %v8189 = vrot.slane %v8187, 5
        %v8190 = vsel %vm3728, %v8185, %v8189
        %v8191 = vshrl.u32 %v7976, 16
        %v8193 = vrot.slane %v8191, 4
        %v8194 = vor.u32 %v8193, %v8189
        %v8195 = vrot.slane %v8194, 4
        %v8197 = vshll.u32 %v8000, 16
        %v8199 = vrot.slane %v8197, 5
        %v8200 = vsel %vm3728, %v8195, %v8199
        %v8202 = vshrl.u32 %v7977, 16
        %v8204 = vrot.slane %v8202, 4
        %v8205 = vshll.u32 %v7977, 16
        %v8207 = vrot.slane %v8205, 5
        %v8208 = vor.u32 %v8204, %v8207
        %v8209 = vrot.slane %v8208, 4
        %v8211 = vshll.u32 %v7978, 16
        %v8213 = vrot.slane %v8211, 5
        %v8214 = vsel %vm3728, %v8209, %v8213
        %v8215 = vshrl.u32 %v7978, 16
        %v8217 = vrot.slane %v8215, 4
        %v8218 = vor.u32 %v8217, %v8213
        %v8219 = vrot.slane %v8218, 4
        %v8221 = vshll.u32 %v8001, 16
        %v8223 = vrot.slane %v8221, 5
        %v8224 = vsel %vm3728, %v8219, %v8223
        %v8226 = vshrl.u32 %v7979, 16
        %v8228 = vrot.slane %v8226, 4
        %v8229 = vshll.u32 %v7979, 16
        %v8231 = vrot.slane %v8229, 5
        %v8232 = vor.u32 %v8228, %v8231
        %v8233 = vrot.slane %v8232, 4
        %v8235 = vshll.u32 %v7980, 16
        %v8237 = vrot.slane %v8235, 5
        %v8238 = vsel %vm3728, %v8233, %v8237
        %v8239 = vshrl.u32 %v7980, 16
        %v8241 = vrot.slane %v8239, 4
        %v8242 = vor.u32 %v8241, %v8237
        %v8243 = vrot.slane %v8242, 4
        %v8245 = vshll.u32 %v8002, 16
        %v8247 = vrot.slane %v8245, 5
        %v8248 = vsel %vm3728, %v8243, %v8247
        %v8250 = vshrl.u32 %v7981, 16
        %v8252 = vrot.slane %v8250, 4
        %v8253 = vshll.u32 %v7981, 16
        %v8255 = vrot.slane %v8253, 5
        %v8256 = vor.u32 %v8252, %v8255
        %v8257 = vrot.slane %v8256, 4
        %v8259 = vshll.u32 %v7982, 16
        %v8261 = vrot.slane %v8259, 5
        %v8262 = vsel %vm3728, %v8257, %v8261
        %v8263 = vshrl.u32 %v7982, 16
        %v8265 = vrot.slane %v8263, 4
        %v8266 = vor.u32 %v8265, %v8261
        %v8267 = vrot.slane %v8266, 4
        %v8269 = vshll.u32 %v8003, 16
        %v8271 = vrot.slane %v8269, 5
        %v8272 = vsel %vm3728, %v8267, %v8271
        %v8274 = vshrl.u32 %v7983, 16
        %v8276 = vrot.slane %v8274, 4
        %v8277 = vshll.u32 %v7983, 16
        %v8279 = vrot.slane %v8277, 5
        %v8280 = vor.u32 %v8276, %v8279
        %v8281 = vrot.slane %v8280, 4
        %v8283 = vshll.u32 %v7984, 16
        %v8285 = vrot.slane %v8283, 5
        %v8286 = vsel %vm3728, %v8281, %v8285
        %v8287 = vshrl.u32 %v7984, 16
        %v8289 = vrot.slane %v8287, 4
        %v8290 = vor.u32 %v8289, %v8285
        %v8291 = vrot.slane %v8290, 4
        %v8293 = vshll.u32 %v8004, 16
        %v8295 = vrot.slane %v8293, 5
        %v8296 = vsel %vm3728, %v8291, %v8295
        %v8298 = vshrl.u32 %v7985, 16
        %v8300 = vrot.slane %v8298, 4
        %v8301 = vshll.u32 %v7985, 16
        %v8303 = vrot.slane %v8301, 5
        %v8304 = vor.u32 %v8300, %v8303
        %v8305 = vrot.slane %v8304, 4
        %v8307 = vshll.u32 %v7986, 16
        %v8309 = vrot.slane %v8307, 5
        %v8310 = vsel %vm3728, %v8305, %v8309
        %v8311 = vshrl.u32 %v7986, 16
        %v8313 = vrot.slane %v8311, 4
        %v8314 = vor.u32 %v8313, %v8309
        %v8315 = vrot.slane %v8314, 4
        %v8317 = vshll.u32 %v8005, 16
        %v8319 = vrot.slane %v8317, 5
        %v8320 = vsel %vm3728, %v8315, %v8319
        %v8322 = vshrl.u32 %v7987, 16
        %v8324 = vrot.slane %v8322, 4
        %v8325 = vshll.u32 %v7987, 16
        %v8327 = vrot.slane %v8325, 5
        %v8328 = vor.u32 %v8324, %v8327
        %v8329 = vrot.slane %v8328, 4
        %v8331 = vshll.u32 %v7988, 16
        %v8333 = vrot.slane %v8331, 5
        %v8334 = vsel %vm3728, %v8329, %v8333
        %v8335 = vshrl.u32 %v7988, 16
        %v8337 = vrot.slane %v8335, 4
        %v8338 = vor.u32 %v8337, %v8333
        %v8339 = vrot.slane %v8338, 4
        %v8341 = vshll.u32 %v8006, 16
        %v8343 = vrot.slane %v8341, 5
        %v8344 = vsel %vm3728, %v8339, %v8343
        %v8346 = vshrl.u32 %v7989, 16
        %v8348 = vrot.slane %v8346, 4
        %v8349 = vshll.u32 %v7989, 16
        %v8351 = vrot.slane %v8349, 5
        %v8352 = vor.u32 %v8348, %v8351
        %v8353 = vrot.slane %v8352, 4
        %v8355 = vshll.u32 %v7990, 16
        %v8357 = vrot.slane %v8355, 5
        %v8358 = vsel %vm3728, %v8353, %v8357
        %v8359 = vshrl.u32 %v7990, 16
        %v8361 = vrot.slane %v8359, 4
        %v8362 = vor.u32 %v8361, %v8357
        %v8363 = vrot.slane %v8362, 4
        %v8365 = vshll.u32 %v8007, 16
        %v8367 = vrot.slane %v8365, 5
        %v8368 = vsel %vm3728, %v8363, %v8367
        %v8370 = vshrl.u32 %v7991, 16
        %v8372 = vrot.slane %v8370, 4
        %v8373 = vshll.u32 %v7991, 16
        %v8375 = vrot.slane %v8373, 5
        %v8376 = vor.u32 %v8372, %v8375
        %v8377 = vrot.slane %v8376, 4
        %v8379 = vshll.u32 %v7992, 16
        %v8381 = vrot.slane %v8379, 5
        %v8382 = vsel %vm3728, %v8377, %v8381
        %v8383 = vshrl.u32 %v7992, 16
        %v8385 = vrot.slane %v8383, 4
        %v8386 = vor.u32 %v8385, %v8381
        %v8387 = vrot.slane %v8386, 4
        %v8389 = vshll.u32 %v8008, 16
        %v8391 = vrot.slane %v8389, 5
        %v8392 = vsel %vm3728, %v8387, %v8391
        %v8393 = vld [vmem:[%s7233] sm:$0xe]
        %v8394 = vld [vmem:[%s7233 + $0xc] sm:$0xe]
        %v8395 = vld [vmem:[%s7233 + $0x18] sm:$0xe]
        %v8396 = vld [vmem:[%s7233 + $0x24] sm:$0xe]
        %v8397 = vld [vmem:[%s7233 + $0x30] sm:$0xe]
        %v8398 = vld [vmem:[%s7233 + $0x3c] sm:$0xe]
        %v8399 = vld [vmem:[%s7233 + $0x48] sm:$0xe]
        %v8400 = vld [vmem:[%s7233 + $0x54] sm:$0xe]
        %v8401 = vld [vmem:[%s7233 + $0x60] sm:$0xe]
        %v8402 = vld [vmem:[%s7233 + $0x6c] sm:$0xe]
        %v8403 = vld [vmem:[%s7233 + $0x78] sm:$0xe]
        %v8404 = vld [vmem:[%s7233 + $0x84] sm:$0xe]
        %v8405 = vld [vmem:[%s7233 + $0x90] sm:$0xe]
        %v8406 = vld [vmem:[%s7233 + $0x9c] sm:$0xe]
        %v8407 = vld [vmem:[%s7233 + $0xa8] sm:$0xe]
        %v8408 = vld [vmem:[%s7233 + $0xb4] sm:$0xe]
        %v8457 = vrot.slane %v8393, 5
        %v8458 = vrot.slane %v8457, 4
        %v8459 = vrot.slane %v7962, 5
        %v8460 = vsel %vm7848, %v8458, %v8459
        %v8461 = vrot.slane %v8459, 4
        %v8462 = vrot.slane %v7993, 5
        %v8463 = vsel %vm7848, %v8461, %v8462
        %v8464 = vrot.slane %v8394, 5
        %v8465 = vrot.slane %v8464, 4
        %v8466 = vrot.slane %v7964, 5
        %v8467 = vsel %vm7848, %v8465, %v8466
        %v8468 = vrot.slane %v8466, 4
        %v8469 = vrot.slane %v7994, 5
        %v8470 = vsel %vm7848, %v8468, %v8469
        %v8471 = vrot.slane %v8395, 5
        %v8472 = vrot.slane %v8471, 4
        %v8473 = vrot.slane %v7966, 5
        %v8474 = vsel %vm7848, %v8472, %v8473
        %v8475 = vrot.slane %v8473, 4
        %v8476 = vrot.slane %v7995, 5
        %v8477 = vsel %vm7848, %v8475, %v8476
        %v8478 = vrot.slane %v8396, 5
        %v8479 = vrot.slane %v8478, 4
        %v8480 = vrot.slane %v7968, 5
        %v8481 = vsel %vm7848, %v8479, %v8480
        %v8482 = vrot.slane %v8480, 4
        %v8483 = vrot.slane %v7996, 5
        %v8484 = vsel %vm7848, %v8482, %v8483
        %v8485 = vrot.slane %v8397, 5
        %v8486 = vrot.slane %v8485, 4
        %v8487 = vrot.slane %v7970, 5
        %v8488 = vsel %vm7848, %v8486, %v8487
        %v8489 = vrot.slane %v8487, 4
        %v8490 = vrot.slane %v7997, 5
        %v8491 = vsel %vm7848, %v8489, %v8490
        %v8492 = vrot.slane %v8398, 5
        %v8493 = vrot.slane %v8492, 4
        %v8494 = vrot.slane %v7972, 5
        %v8495 = vsel %vm7848, %v8493, %v8494
        %v8496 = vrot.slane %v8494, 4
        %v8497 = vrot.slane %v7998, 5
        %v8498 = vsel %vm7848, %v8496, %v8497
        %v8499 = vrot.slane %v8399, 5
        %v8500 = vrot.slane %v8499, 4
        %v8501 = vrot.slane %v7974, 5
        %v8502 = vsel %vm7848, %v8500, %v8501
        %v8503 = vrot.slane %v8501, 4
        %v8504 = vrot.slane %v7999, 5
        %v8505 = vsel %vm7848, %v8503, %v8504
        %v8506 = vrot.slane %v8400, 5
        %v8507 = vrot.slane %v8506, 4
        %v8508 = vrot.slane %v7976, 5
        %v8509 = vsel %vm7848, %v8507, %v8508
        %v8510 = vrot.slane %v8508, 4
        %v8511 = vrot.slane %v8000, 5
        %v8512 = vsel %vm7848, %v8510, %v8511
        %v8513 = vrot.slane %v8401, 5
        %v8514 = vrot.slane %v8513, 4
        %v8515 = vrot.slane %v7978, 5
        %v8516 = vsel %vm7848, %v8514, %v8515
        %v8517 = vrot.slane %v8515, 4
        %v8518 = vrot.slane %v8001, 5
        %v8519 = vsel %vm7848, %v8517, %v8518
        %v8520 = vrot.slane %v8402, 5
        %v8521 = vrot.slane %v8520, 4
        %v8522 = vrot.slane %v7980, 5
        %v8523 = vsel %vm7848, %v8521, %v8522
        %v8524 = vrot.slane %v8522, 4
        %v8525 = vrot.slane %v8002, 5
        %v8526 = vsel %vm7848, %v8524, %v8525
        %v8527 = vrot.slane %v8403, 5
        %v8528 = vrot.slane %v8527, 4
        %v8529 = vrot.slane %v7982, 5
        %v8530 = vsel %vm7848, %v8528, %v8529
        %v8531 = vrot.slane %v8529, 4
        %v8532 = vrot.slane %v8003, 5
        %v8533 = vsel %vm7848, %v8531, %v8532
        %v8534 = vrot.slane %v8404, 5
        %v8535 = vrot.slane %v8534, 4
        %v8536 = vrot.slane %v7984, 5
        %v8537 = vsel %vm7848, %v8535, %v8536
        %v8538 = vrot.slane %v8536, 4
        %v8539 = vrot.slane %v8004, 5
        %v8540 = vsel %vm7848, %v8538, %v8539
        %v8541 = vrot.slane %v8405, 5
        %v8542 = vrot.slane %v8541, 4
        %v8543 = vrot.slane %v7986, 5
        %v8544 = vsel %vm7848, %v8542, %v8543
        %v8545 = vrot.slane %v8543, 4
        %v8546 = vrot.slane %v8005, 5
        %v8547 = vsel %vm7848, %v8545, %v8546
        %v8548 = vrot.slane %v8406, 5
        %v8549 = vrot.slane %v8548, 4
        %v8550 = vrot.slane %v7988, 5
        %v8551 = vsel %vm7848, %v8549, %v8550
        %v8552 = vrot.slane %v8550, 4
        %v8553 = vrot.slane %v8006, 5
        %v8554 = vsel %vm7848, %v8552, %v8553
        %v8555 = vrot.slane %v8407, 5
        %v8556 = vrot.slane %v8555, 4
        %v8557 = vrot.slane %v7990, 5
        %v8558 = vsel %vm7848, %v8556, %v8557
        %v8559 = vrot.slane %v8557, 4
        %v8560 = vrot.slane %v8007, 5
        %v8561 = vsel %vm7848, %v8559, %v8560
        %v8562 = vrot.slane %v8408, 5
        %v8563 = vrot.slane %v8562, 4
        %v8564 = vrot.slane %v7992, 5
        %v8565 = vsel %vm7848, %v8563, %v8564
        %v8566 = vrot.slane %v8564, 4
        %v8567 = vrot.slane %v8008, 5
        %v8568 = vsel %vm7848, %v8566, %v8567
        %s8569 = scalar_lea.vmem [#allocation3], 24
        %v8570 = vld [vmem:[%s8569] sm:$0xf]
        %v8571 = vld [vmem:[%s8569 + $0x4] sm:$0xf]
        %v8572 = vld [vmem:[%s8569 + $0xc] sm:$0xf]
        %v8573 = vld [vmem:[%s8569 + $0x10] sm:$0xf]
        %v8574 = vld [vmem:[%s8569 + $0x18] sm:$0xf]
        %v8575 = vld [vmem:[%s8569 + $0x1c] sm:$0xf]
        %v8576 = vld [vmem:[%s8569 + $0x24] sm:$0xf]
        %v8577 = vld [vmem:[%s8569 + $0x28] sm:$0xf]
        %v8578 = vld [vmem:[%s8569 + $0x30] sm:$0xf]
        %v8579 = vld [vmem:[%s8569 + $0x34] sm:$0xf]
        %v8580 = vld [vmem:[%s8569 + $0x3c] sm:$0xf]
        %v8581 = vld [vmem:[%s8569 + $0x40] sm:$0xf]
        %v8582 = vld [vmem:[%s8569 + $0x48] sm:$0xf]
        %v8583 = vld [vmem:[%s8569 + $0x4c] sm:$0xf]
        %v8584 = vld [vmem:[%s8569 + $0x54] sm:$0xf]
        %v8585 = vld [vmem:[%s8569 + $0x58] sm:$0xf]
        %v8586 = vld [vmem:[%s8569 + $0x60] sm:$0xf]
        %v8587 = vld [vmem:[%s8569 + $0x64] sm:$0xf]
        %v8588 = vld [vmem:[%s8569 + $0x6c] sm:$0xf]
        %v8589 = vld [vmem:[%s8569 + $0x70] sm:$0xf]
        %v8590 = vld [vmem:[%s8569 + $0x78] sm:$0xf]
        %v8591 = vld [vmem:[%s8569 + $0x7c] sm:$0xf]
        %v8592 = vld [vmem:[%s8569 + $0x84] sm:$0xf]
        %v8593 = vld [vmem:[%s8569 + $0x88] sm:$0xf]
        %v8594 = vld [vmem:[%s8569 + $0x90] sm:$0xf]
        %v8595 = vld [vmem:[%s8569 + $0x94] sm:$0xf]
        %v8596 = vld [vmem:[%s8569 + $0x9c] sm:$0xf]
        %v8597 = vld [vmem:[%s8569 + $0xa0] sm:$0xf]
        %v8598 = vld [vmem:[%s8569 + $0xa8] sm:$0xf]
        %v8599 = vld [vmem:[%s8569 + $0xac] sm:$0xf]
        %v8600 = vld [vmem:[%s8569 + $0xb4] sm:$0xf]
        %v8601 = vld [vmem:[%s8569 + $0xb8] sm:$0xf]
        %v8602 = vld [vmem:[%s8569 + $0x8] sm:$0x1]
        %v8603 = vld [vmem:[%s8569 + $0x14] sm:$0x1]
        %v8604 = vld [vmem:[%s8569 + $0x20] sm:$0x1]
        %v8605 = vld [vmem:[%s8569 + $0x2c] sm:$0x1]
        %v8606 = vld [vmem:[%s8569 + $0x38] sm:$0x1]
        %v8607 = vld [vmem:[%s8569 + $0x44] sm:$0x1]
        %v8608 = vld [vmem:[%s8569 + $0x50] sm:$0x1]
        %v8609 = vld [vmem:[%s8569 + $0x5c] sm:$0x1]
        %v8610 = vld [vmem:[%s8569 + $0x68] sm:$0x1]
        %v8611 = vld [vmem:[%s8569 + $0x74] sm:$0x1]
        %v8612 = vld [vmem:[%s8569 + $0x80] sm:$0x1]
        %v8613 = vld [vmem:[%s8569 + $0x8c] sm:$0x1]
        %v8614 = vld [vmem:[%s8569 + $0x98] sm:$0x1]
        %v8615 = vld [vmem:[%s8569 + $0xa4] sm:$0x1]
        %v8616 = vld [vmem:[%s8569 + $0xb0] sm:$0x1]
        %v8617 = vld [vmem:[%s8569 + $0xbc] sm:$0x1]
        %v8619 = vshrl.u32 %v8570, 16
        %v8621 = vrot.slane %v8619, 4
        %v8622 = vshll.u32 %v8570, 16
        %v8624 = vrot.slane %v8622, 5
        %v8625 = vor.u32 %v8621, %v8624
        %v8626 = vrot.slane %v8625, 4
        %v8628 = vshll.u32 %v8571, 16
        %v8630 = vrot.slane %v8628, 5
        %v8631 = vsel %vm3728, %v8626, %v8630
        %v8632 = vshrl.u32 %v8571, 16
        %v8634 = vrot.slane %v8632, 4
        %v8635 = vor.u32 %v8634, %v8630
        %v8636 = vrot.slane %v8635, 4
        %v8638 = vshll.u32 %v8602, 16
        %v8640 = vrot.slane %v8638, 5
        %v8641 = vsel %vm3728, %v8636, %v8640
        %v8643 = vshrl.u32 %v8572, 16
        %v8645 = vrot.slane %v8643, 4
        %v8646 = vshll.u32 %v8572, 16
        %v8648 = vrot.slane %v8646, 5
        %v8649 = vor.u32 %v8645, %v8648
        %v8650 = vrot.slane %v8649, 4
        %v8652 = vshll.u32 %v8573, 16
        %v8654 = vrot.slane %v8652, 5
        %v8655 = vsel %vm3728, %v8650, %v8654
        %v8656 = vshrl.u32 %v8573, 16
        %v8658 = vrot.slane %v8656, 4
        %v8659 = vor.u32 %v8658, %v8654
        %v8660 = vrot.slane %v8659, 4
        %v8662 = vshll.u32 %v8603, 16
        %v8664 = vrot.slane %v8662, 5
        %v8665 = vsel %vm3728, %v8660, %v8664
        %v8667 = vshrl.u32 %v8574, 16
        %v8669 = vrot.slane %v8667, 4
        %v8670 = vshll.u32 %v8574, 16
        %v8672 = vrot.slane %v8670, 5
        %v8673 = vor.u32 %v8669, %v8672
        %v8674 = vrot.slane %v8673, 4
        %v8676 = vshll.u32 %v8575, 16
        %v8678 = vrot.slane %v8676, 5
        %v8679 = vsel %vm3728, %v8674, %v8678
        %v8680 = vshrl.u32 %v8575, 16
        %v8682 = vrot.slane %v8680, 4
        %v8683 = vor.u32 %v8682, %v8678
        %v8684 = vrot.slane %v8683, 4
        %v8686 = vshll.u32 %v8604, 16
        %v8688 = vrot.slane %v8686, 5
        %v8689 = vsel %vm3728, %v8684, %v8688
        %v8691 = vshrl.u32 %v8576, 16
        %v8693 = vrot.slane %v8691, 4
        %v8694 = vshll.u32 %v8576, 16
        %v8696 = vrot.slane %v8694, 5
        %v8697 = vor.u32 %v8693, %v8696
        %v8698 = vrot.slane %v8697, 4
        %v8700 = vshll.u32 %v8577, 16
        %v8702 = vrot.slane %v8700, 5
        %v8703 = vsel %vm3728, %v8698, %v8702
        %v8704 = vshrl.u32 %v8577, 16
        %v8706 = vrot.slane %v8704, 4
        %v8707 = vor.u32 %v8706, %v8702
        %v8708 = vrot.slane %v8707, 4
        %v8710 = vshll.u32 %v8605, 16
        %v8712 = vrot.slane %v8710, 5
        %v8713 = vsel %vm3728, %v8708, %v8712
        %v8715 = vshrl.u32 %v8578, 16
        %v8717 = vrot.slane %v8715, 4
        %v8718 = vshll.u32 %v8578, 16
        %v8720 = vrot.slane %v8718, 5
        %v8721 = vor.u32 %v8717, %v8720
        %v8722 = vrot.slane %v8721, 4
        %v8724 = vshll.u32 %v8579, 16
        %v8726 = vrot.slane %v8724, 5
        %v8727 = vsel %vm3728, %v8722, %v8726
        %v8728 = vshrl.u32 %v8579, 16
        %v8730 = vrot.slane %v8728, 4
        %v8731 = vor.u32 %v8730, %v8726
        %v8732 = vrot.slane %v8731, 4
        %v8734 = vshll.u32 %v8606, 16
        %v8736 = vrot.slane %v8734, 5
        %v8737 = vsel %vm3728, %v8732, %v8736
        %v8739 = vshrl.u32 %v8580, 16
        %v8741 = vrot.slane %v8739, 4
        %v8742 = vshll.u32 %v8580, 16
        %v8744 = vrot.slane %v8742, 5
        %v8745 = vor.u32 %v8741, %v8744
        %v8746 = vrot.slane %v8745, 4
        %v8748 = vshll.u32 %v8581, 16
        %v8750 = vrot.slane %v8748, 5
        %v8751 = vsel %vm3728, %v8746, %v8750
        %v8752 = vshrl.u32 %v8581, 16
        %v8754 = vrot.slane %v8752, 4
        %v8755 = vor.u32 %v8754, %v8750
        %v8756 = vrot.slane %v8755, 4
        %v8758 = vshll.u32 %v8607, 16
        %v8760 = vrot.slane %v8758, 5
        %v8761 = vsel %vm3728, %v8756, %v8760
        %v8763 = vshrl.u32 %v8582, 16
        %v8765 = vrot.slane %v8763, 4
        %v8766 = vshll.u32 %v8582, 16
        %v8768 = vrot.slane %v8766, 5
        %v8769 = vor.u32 %v8765, %v8768
        %v8770 = vrot.slane %v8769, 4
        %v8772 = vshll.u32 %v8583, 16
        %v8774 = vrot.slane %v8772, 5
        %v8775 = vsel %vm3728, %v8770, %v8774
        %v8776 = vshrl.u32 %v8583, 16
        %v8778 = vrot.slane %v8776, 4
        %v8779 = vor.u32 %v8778, %v8774
        %v8780 = vrot.slane %v8779, 4
        %v8782 = vshll.u32 %v8608, 16
        %v8784 = vrot.slane %v8782, 5
        %v8785 = vsel %vm3728, %v8780, %v8784
        %v8787 = vshrl.u32 %v8584, 16
        %v8789 = vrot.slane %v8787, 4
        %v8790 = vshll.u32 %v8584, 16
        %v8792 = vrot.slane %v8790, 5
        %v8793 = vor.u32 %v8789, %v8792
        %v8794 = vrot.slane %v8793, 4
        %v8796 = vshll.u32 %v8585, 16
        %v8798 = vrot.slane %v8796, 5
        %v8799 = vsel %vm3728, %v8794, %v8798
        %v8800 = vshrl.u32 %v8585, 16
        %v8802 = vrot.slane %v8800, 4
        %v8803 = vor.u32 %v8802, %v8798
        %v8804 = vrot.slane %v8803, 4
        %v8806 = vshll.u32 %v8609, 16
        %v8808 = vrot.slane %v8806, 5
        %v8809 = vsel %vm3728, %v8804, %v8808
        %v8811 = vshrl.u32 %v8586, 16
        %v8813 = vrot.slane %v8811, 4
        %v8814 = vshll.u32 %v8586, 16
        %v8816 = vrot.slane %v8814, 5
        %v8817 = vor.u32 %v8813, %v8816
        %v8818 = vrot.slane %v8817, 4
        %v8820 = vshll.u32 %v8587, 16
        %v8822 = vrot.slane %v8820, 5
        %v8823 = vsel %vm3728, %v8818, %v8822
        %v8824 = vshrl.u32 %v8587, 16
        %v8826 = vrot.slane %v8824, 4
        %v8827 = vor.u32 %v8826, %v8822
        %v8828 = vrot.slane %v8827, 4
        %v8830 = vshll.u32 %v8610, 16
        %v8832 = vrot.slane %v8830, 5
        %v8833 = vsel %vm3728, %v8828, %v8832
        %v8835 = vshrl.u32 %v8588, 16
        %v8837 = vrot.slane %v8835, 4
        %v8838 = vshll.u32 %v8588, 16
        %v8840 = vrot.slane %v8838, 5
        %v8841 = vor.u32 %v8837, %v8840
        %v8842 = vrot.slane %v8841, 4
        %v8844 = vshll.u32 %v8589, 16
        %v8846 = vrot.slane %v8844, 5
        %v8847 = vsel %vm3728, %v8842, %v8846
        %v8848 = vshrl.u32 %v8589, 16
        %v8850 = vrot.slane %v8848, 4
        %v8851 = vor.u32 %v8850, %v8846
        %v8852 = vrot.slane %v8851, 4
        %v8854 = vshll.u32 %v8611, 16
        %v8856 = vrot.slane %v8854, 5
        %v8857 = vsel %vm3728, %v8852, %v8856
        %v8859 = vshrl.u32 %v8590, 16
        %v8861 = vrot.slane %v8859, 4
        %v8862 = vshll.u32 %v8590, 16
        %v8864 = vrot.slane %v8862, 5
        %v8865 = vor.u32 %v8861, %v8864
        %v8866 = vrot.slane %v8865, 4
        %v8868 = vshll.u32 %v8591, 16
        %v8870 = vrot.slane %v8868, 5
        %v8871 = vsel %vm3728, %v8866, %v8870
        %v8872 = vshrl.u32 %v8591, 16
        %v8874 = vrot.slane %v8872, 4
        %v8875 = vor.u32 %v8874, %v8870
        %v8876 = vrot.slane %v8875, 4
        %v8878 = vshll.u32 %v8612, 16
        %v8880 = vrot.slane %v8878, 5
        %v8881 = vsel %vm3728, %v8876, %v8880
        %v8883 = vshrl.u32 %v8592, 16
        %v8885 = vrot.slane %v8883, 4
        %v8886 = vshll.u32 %v8592, 16
        %v8888 = vrot.slane %v8886, 5
        %v8889 = vor.u32 %v8885, %v8888
        %v8890 = vrot.slane %v8889, 4
        %v8892 = vshll.u32 %v8593, 16
        %v8894 = vrot.slane %v8892, 5
        %v8895 = vsel %vm3728, %v8890, %v8894
        %v8896 = vshrl.u32 %v8593, 16
        %v8898 = vrot.slane %v8896, 4
        %v8899 = vor.u32 %v8898, %v8894
        %v8900 = vrot.slane %v8899, 4
        %v8902 = vshll.u32 %v8613, 16
        %v8904 = vrot.slane %v8902, 5
        %v8905 = vsel %vm3728, %v8900, %v8904
        %v8907 = vshrl.u32 %v8594, 16
        %v8909 = vrot.slane %v8907, 4
        %v8910 = vshll.u32 %v8594, 16
        %v8912 = vrot.slane %v8910, 5
        %v8913 = vor.u32 %v8909, %v8912
        %v8914 = vrot.slane %v8913, 4
        %v8916 = vshll.u32 %v8595, 16
        %v8918 = vrot.slane %v8916, 5
        %v8919 = vsel %vm3728, %v8914, %v8918
        %v8920 = vshrl.u32 %v8595, 16
        %v8922 = vrot.slane %v8920, 4
        %v8923 = vor.u32 %v8922, %v8918
        %v8924 = vrot.slane %v8923, 4
        %v8926 = vshll.u32 %v8614, 16
        %v8928 = vrot.slane %v8926, 5
        %v8929 = vsel %vm3728, %v8924, %v8928
        %v8931 = vshrl.u32 %v8596, 16
        %v8933 = vrot.slane %v8931, 4
        %v8934 = vshll.u32 %v8596, 16
        %v8936 = vrot.slane %v8934, 5
        %v8937 = vor.u32 %v8933, %v8936
        %v8938 = vrot.slane %v8937, 4
        %v8940 = vshll.u32 %v8597, 16
        %v8942 = vrot.slane %v8940, 5
        %v8943 = vsel %vm3728, %v8938, %v8942
        %v8944 = vshrl.u32 %v8597, 16
        %v8946 = vrot.slane %v8944, 4
        %v8947 = vor.u32 %v8946, %v8942
        %v8948 = vrot.slane %v8947, 4
        %v8950 = vshll.u32 %v8615, 16
        %v8952 = vrot.slane %v8950, 5
        %v8953 = vsel %vm3728, %v8948, %v8952
        %v8955 = vshrl.u32 %v8598, 16
        %v8957 = vrot.slane %v8955, 4
        %v8958 = vshll.u32 %v8598, 16
        %v8960 = vrot.slane %v8958, 5
        %v8961 = vor.u32 %v8957, %v8960
        %v8962 = vrot.slane %v8961, 4
        %v8964 = vshll.u32 %v8599, 16
        %v8966 = vrot.slane %v8964, 5
        %v8967 = vsel %vm3728, %v8962, %v8966
        %v8968 = vshrl.u32 %v8599, 16
        %v8970 = vrot.slane %v8968, 4
        %v8971 = vor.u32 %v8970, %v8966
        %v8972 = vrot.slane %v8971, 4
        %v8974 = vshll.u32 %v8616, 16
        %v8976 = vrot.slane %v8974, 5
        %v8977 = vsel %vm3728, %v8972, %v8976
        %v8979 = vshrl.u32 %v8600, 16
        %v8981 = vrot.slane %v8979, 4
        %v8982 = vshll.u32 %v8600, 16
        %v8984 = vrot.slane %v8982, 5
        %v8985 = vor.u32 %v8981, %v8984
        %v8986 = vrot.slane %v8985, 4
        %v8988 = vshll.u32 %v8601, 16
        %v8990 = vrot.slane %v8988, 5
        %v8991 = vsel %vm3728, %v8986, %v8990
        %v8992 = vshrl.u32 %v8601, 16
        %v8994 = vrot.slane %v8992, 4
        %v8995 = vor.u32 %v8994, %v8990
        %v8996 = vrot.slane %v8995, 4
        %v8998 = vshll.u32 %v8617, 16
        %v9000 = vrot.slane %v8998, 5
        %v9001 = vsel %vm3728, %v8996, %v9000
        %v9002 = vld [vmem:[%s8569] sm:$0xe]
        %v9003 = vld [vmem:[%s8569 + $0xc] sm:$0xe]
        %v9004 = vld [vmem:[%s8569 + $0x18] sm:$0xe]
        %v9005 = vld [vmem:[%s8569 + $0x24] sm:$0xe]
        %v9006 = vld [vmem:[%s8569 + $0x30] sm:$0xe]
        %v9007 = vld [vmem:[%s8569 + $0x3c] sm:$0xe]
        %v9008 = vld [vmem:[%s8569 + $0x48] sm:$0xe]
        %v9009 = vld [vmem:[%s8569 + $0x54] sm:$0xe]
        %v9010 = vld [vmem:[%s8569 + $0x60] sm:$0xe]
        %v9011 = vld [vmem:[%s8569 + $0x6c] sm:$0xe]
        %v9012 = vld [vmem:[%s8569 + $0x78] sm:$0xe]
        %v9013 = vld [vmem:[%s8569 + $0x84] sm:$0xe]
        %v9014 = vld [vmem:[%s8569 + $0x90] sm:$0xe]
        %v9015 = vld [vmem:[%s8569 + $0x9c] sm:$0xe]
        %v9016 = vld [vmem:[%s8569 + $0xa8] sm:$0xe]
        %v9017 = vld [vmem:[%s8569 + $0xb4] sm:$0xe]
        %v9066 = vrot.slane %v9002, 5
        %v9067 = vrot.slane %v9066, 4
        %v9068 = vrot.slane %v8571, 5
        %v9069 = vsel %vm7848, %v9067, %v9068
        %v9070 = vrot.slane %v9068, 4
        %v9071 = vrot.slane %v8602, 5
        %v9072 = vsel %vm7848, %v9070, %v9071
        %v9073 = vrot.slane %v9003, 5
        %v9074 = vrot.slane %v9073, 4
        %v9075 = vrot.slane %v8573, 5
        %v9076 = vsel %vm7848, %v9074, %v9075
        %v9077 = vrot.slane %v9075, 4
        %v9078 = vrot.slane %v8603, 5
        %v9079 = vsel %vm7848, %v9077, %v9078
        %v9080 = vrot.slane %v9004, 5
        %v9081 = vrot.slane %v9080, 4
        %v9082 = vrot.slane %v8575, 5
        %v9083 = vsel %vm7848, %v9081, %v9082
        %v9084 = vrot.slane %v9082, 4
        %v9085 = vrot.slane %v8604, 5
        %v9086 = vsel %vm7848, %v9084, %v9085
        %v9087 = vrot.slane %v9005, 5
        %v9088 = vrot.slane %v9087, 4
        %v9089 = vrot.slane %v8577, 5
        %v9090 = vsel %vm7848, %v9088, %v9089
        %v9091 = vrot.slane %v9089, 4
        %v9092 = vrot.slane %v8605, 5
        %v9093 = vsel %vm7848, %v9091, %v9092
        %v9094 = vrot.slane %v9006, 5
        %v9095 = vrot.slane %v9094, 4
        %v9096 = vrot.slane %v8579, 5
        %v9097 = vsel %vm7848, %v9095, %v9096
        %v9098 = vrot.slane %v9096, 4
        %v9099 = vrot.slane %v8606, 5
        %v9100 = vsel %vm7848, %v9098, %v9099
        %v9101 = vrot.slane %v9007, 5
        %v9102 = vrot.slane %v9101, 4
        %v9103 = vrot.slane %v8581, 5
        %v9104 = vsel %vm7848, %v9102, %v9103
        %v9105 = vrot.slane %v9103, 4
        %v9106 = vrot.slane %v8607, 5
        %v9107 = vsel %vm7848, %v9105, %v9106
        %v9108 = vrot.slane %v9008, 5
        %v9109 = vrot.slane %v9108, 4
        %v9110 = vrot.slane %v8583, 5
        %v9111 = vsel %vm7848, %v9109, %v9110
        %v9112 = vrot.slane %v9110, 4
        %v9113 = vrot.slane %v8608, 5
        %v9114 = vsel %vm7848, %v9112, %v9113
        %v9115 = vrot.slane %v9009, 5
        %v9116 = vrot.slane %v9115, 4
        %v9117 = vrot.slane %v8585, 5
        %v9118 = vsel %vm7848, %v9116, %v9117
        %v9119 = vrot.slane %v9117, 4
        %v9120 = vrot.slane %v8609, 5
        %v9121 = vsel %vm7848, %v9119, %v9120
        %v9122 = vrot.slane %v9010, 5
        %v9123 = vrot.slane %v9122, 4
        %v9124 = vrot.slane %v8587, 5
        %v9125 = vsel %vm7848, %v9123, %v9124
        %v9126 = vrot.slane %v9124, 4
        %v9127 = vrot.slane %v8610, 5
        %v9128 = vsel %vm7848, %v9126, %v9127
        %v9129 = vrot.slane %v9011, 5
        %v9130 = vrot.slane %v9129, 4
        %v9131 = vrot.slane %v8589, 5
        %v9132 = vsel %vm7848, %v9130, %v9131
        %v9133 = vrot.slane %v9131, 4
        %v9134 = vrot.slane %v8611, 5
        %v9135 = vsel %vm7848, %v9133, %v9134
        %v9136 = vrot.slane %v9012, 5
        %v9137 = vrot.slane %v9136, 4
        %v9138 = vrot.slane %v8591, 5
        %v9139 = vsel %vm7848, %v9137, %v9138
        %v9140 = vrot.slane %v9138, 4
        %v9141 = vrot.slane %v8612, 5
        %v9142 = vsel %vm7848, %v9140, %v9141
        %v9143 = vrot.slane %v9013, 5
        %v9144 = vrot.slane %v9143, 4
        %v9145 = vrot.slane %v8593, 5
        %v9146 = vsel %vm7848, %v9144, %v9145
        %v9147 = vrot.slane %v9145, 4
        %v9148 = vrot.slane %v8613, 5
        %v9149 = vsel %vm7848, %v9147, %v9148
        %v9150 = vrot.slane %v9014, 5
        %v9151 = vrot.slane %v9150, 4
        %v9152 = vrot.slane %v8595, 5
        %v9153 = vsel %vm7848, %v9151, %v9152
        %v9154 = vrot.slane %v9152, 4
        %v9155 = vrot.slane %v8614, 5
        %v9156 = vsel %vm7848, %v9154, %v9155
        %v9157 = vrot.slane %v9015, 5
        %v9158 = vrot.slane %v9157, 4
        %v9159 = vrot.slane %v8597, 5
        %v9160 = vsel %vm7848, %v9158, %v9159
        %v9161 = vrot.slane %v9159, 4
        %v9162 = vrot.slane %v8615, 5
        %v9163 = vsel %vm7848, %v9161, %v9162
        %v9164 = vrot.slane %v9016, 5
        %v9165 = vrot.slane %v9164, 4
        %v9166 = vrot.slane %v8599, 5
        %v9167 = vsel %vm7848, %v9165, %v9166
        %v9168 = vrot.slane %v9166, 4
        %v9169 = vrot.slane %v8616, 5
        %v9170 = vsel %vm7848, %v9168, %v9169
        %v9171 = vrot.slane %v9017, 5
        %v9172 = vrot.slane %v9171, 4
        %v9173 = vrot.slane %v8601, 5
        %v9174 = vsel %vm7848, %v9172, %v9173
        %v9175 = vrot.slane %v9173, 4
        %v9176 = vrot.slane %v8617, 5
        %v9177 = vsel %vm7848, %v9175, %v9176
        %v9194 = vunpack.c.l.b16 %v7350
        %v9195 = vunpack.c.l.b16 %v7351
        %v9196 = vunpack.c.l.b16 %v7352
        %v9197 = vunpack.c.l.b16 %v7353
        %v9198 = vunpack.c.l.b16 %v7354
        %v9199 = vunpack.c.l.b16 %v7355
        %v9200 = vunpack.c.l.b16 %v7356
        %v9201 = vunpack.c.l.b16 %v7357
        %v9202 = vunpack.c.l.b16 %v7358
        %v9203 = vunpack.c.l.b16 %v7359
        %v9204 = vunpack.c.l.b16 %v7360
        %v9205 = vunpack.c.l.b16 %v7361
        %v9206 = vunpack.c.l.b16 %v7362
        %v9207 = vunpack.c.l.b16 %v7363
        %v9208 = vunpack.c.l.b16 %v7364
        %v9209 = vunpack.c.l.b16 %v7365
        %v9210 = vunpack.c.l.b16 %v7366
        %v9211 = vunpack.c.l.b16 %v7367
        %v9212 = vunpack.c.l.b16 %v7368
        %v9213 = vunpack.c.l.b16 %v7369
        %v9214 = vunpack.c.l.b16 %v7370
        %v9215 = vunpack.c.l.b16 %v7371
        %v9216 = vunpack.c.l.b16 %v7372
        %v9217 = vunpack.c.l.b16 %v7373
        %v9218 = vunpack.c.l.b16 %v7374
        %v9219 = vunpack.c.l.b16 %v7375
        %v9220 = vunpack.c.l.b16 %v7376
        %v9221 = vunpack.c.l.b16 %v7377
        %v9222 = vunpack.c.l.b16 %v7378
        %v9223 = vunpack.c.l.b16 %v7379
        %v9224 = vunpack.c.l.b16 %v7380
        %v9225 = vunpack.c.l.b16 %v7381
        %v9226 = vpack.c.b16 %v9195, %v9194
        %v9227 = vpack.c.b16 %v9197, %v9196
        %v9228 = vpack.c.b16 %v9199, %v9198
        %v9229 = vpack.c.b16 %v9201, %v9200
        %v9230 = vpack.c.b16 %v9203, %v9202
        %v9231 = vpack.c.b16 %v9205, %v9204
        %v9232 = vpack.c.b16 %v9207, %v9206
        %v9233 = vpack.c.b16 %v9209, %v9208
        %v9234 = vpack.c.b16 %v9211, %v9210
        %v9235 = vpack.c.b16 %v9213, %v9212
        %v9236 = vpack.c.b16 %v9215, %v9214
        %v9237 = vpack.c.b16 %v9217, %v9216
        %v9238 = vpack.c.b16 %v9219, %v9218
        %v9239 = vpack.c.b16 %v9221, %v9220
        %v9240 = vpack.c.b16 %v9223, %v9222
        %v9241 = vpack.c.b16 %v9225, %v9224
        %v9242 = vunpack.c.l.b16 %v7411
        %v9243 = vunpack.c.l.b16 %v7421
        %v9244 = vunpack.c.l.b16 %v7435
        %v9245 = vunpack.c.l.b16 %v7445
        %v9246 = vunpack.c.l.b16 %v7459
        %v9247 = vunpack.c.l.b16 %v7469
        %v9248 = vunpack.c.l.b16 %v7483
        %v9249 = vunpack.c.l.b16 %v7493
        %v9250 = vunpack.c.l.b16 %v7507
        %v9251 = vunpack.c.l.b16 %v7517
        %v9252 = vunpack.c.l.b16 %v7531
        %v9253 = vunpack.c.l.b16 %v7541
        %v9254 = vunpack.c.l.b16 %v7555
        %v9255 = vunpack.c.l.b16 %v7565
        %v9256 = vunpack.c.l.b16 %v7579
        %v9257 = vunpack.c.l.b16 %v7589
        %v9258 = vunpack.c.l.b16 %v7603
        %v9259 = vunpack.c.l.b16 %v7613
        %v9260 = vunpack.c.l.b16 %v7627
        %v9261 = vunpack.c.l.b16 %v7637
        %v9262 = vunpack.c.l.b16 %v7651
        %v9263 = vunpack.c.l.b16 %v7661
        %v9264 = vunpack.c.l.b16 %v7675
        %v9265 = vunpack.c.l.b16 %v7685
        %v9266 = vunpack.c.l.b16 %v7699
        %v9267 = vunpack.c.l.b16 %v7709
        %v9268 = vunpack.c.l.b16 %v7723
        %v9269 = vunpack.c.l.b16 %v7733
        %v9270 = vunpack.c.l.b16 %v7747
        %v9271 = vunpack.c.l.b16 %v7757
        %v9272 = vunpack.c.l.b16 %v7771
        %v9273 = vunpack.c.l.b16 %v7781
        %v9274 = vpack.c.b16 %v9243, %v9242
        %v9275 = vpack.c.b16 %v9245, %v9244
        %v9276 = vpack.c.b16 %v9247, %v9246
        %v9277 = vpack.c.b16 %v9249, %v9248
        %v9278 = vpack.c.b16 %v9251, %v9250
        %v9279 = vpack.c.b16 %v9253, %v9252
        %v9280 = vpack.c.b16 %v9255, %v9254
        %v9281 = vpack.c.b16 %v9257, %v9256
        %v9282 = vpack.c.b16 %v9259, %v9258
        %v9283 = vpack.c.b16 %v9261, %v9260
        %v9284 = vpack.c.b16 %v9263, %v9262
        %v9285 = vpack.c.b16 %v9265, %v9264
        %v9286 = vpack.c.b16 %v9267, %v9266
        %v9287 = vpack.c.b16 %v9269, %v9268
        %v9288 = vpack.c.b16 %v9271, %v9270
        %v9289 = vpack.c.b16 %v9273, %v9272
        %9290 = vrot.lane.b32.xlu0 %v9274, 32
        %v9291 = vpop.permute.xlu0 %9290
        %9292 = vrot.lane.b32.xlu0 %v9275, 32
        %v9293 = vpop.permute.xlu0 %9292
        %9294 = vrot.lane.b32.xlu0 %v9276, 32
        %v9295 = vpop.permute.xlu0 %9294
        %9296 = vrot.lane.b32.xlu0 %v9277, 32
        %v9297 = vpop.permute.xlu0 %9296
        %9298 = vrot.lane.b32.xlu0 %v9278, 32
        %v9299 = vpop.permute.xlu0 %9298
        %9300 = vrot.lane.b32.xlu0 %v9279, 32
        %v9301 = vpop.permute.xlu0 %9300
        %9302 = vrot.lane.b32.xlu0 %v9280, 32
        %v9303 = vpop.permute.xlu0 %9302
        %9304 = vrot.lane.b32.xlu0 %v9281, 32
        %v9305 = vpop.permute.xlu0 %9304
        %9306 = vrot.lane.b32.xlu0 %v9282, 32
        %v9307 = vpop.permute.xlu0 %9306
        %9308 = vrot.lane.b32.xlu0 %v9283, 32
        %v9309 = vpop.permute.xlu0 %9308
        %9310 = vrot.lane.b32.xlu0 %v9284, 32
        %v9311 = vpop.permute.xlu0 %9310
        %9312 = vrot.lane.b32.xlu0 %v9285, 32
        %v9313 = vpop.permute.xlu0 %9312
        %9314 = vrot.lane.b32.xlu0 %v9286, 32
        %v9315 = vpop.permute.xlu0 %9314
        %9316 = vrot.lane.b32.xlu0 %v9287, 32
        %v9317 = vpop.permute.xlu0 %9316
        %9318 = vrot.lane.b32.xlu0 %v9288, 32
        %v9319 = vpop.permute.xlu0 %9318
        %9320 = vrot.lane.b32.xlu0 %v9289, 32
        %v9321 = vpop.permute.xlu0 %9320
        %v9322 = vunpack.c.l.b16 %v7852
        %v9323 = vunpack.c.l.b16 %v7855
        %v9324 = vunpack.c.l.b16 %v7859
        %v9325 = vunpack.c.l.b16 %v7862
        %v9326 = vunpack.c.l.b16 %v7866
        %v9327 = vunpack.c.l.b16 %v7869
        %v9328 = vunpack.c.l.b16 %v7873
        %v9329 = vunpack.c.l.b16 %v7876
        %v9330 = vunpack.c.l.b16 %v7880
        %v9331 = vunpack.c.l.b16 %v7883
        %v9332 = vunpack.c.l.b16 %v7887
        %v9333 = vunpack.c.l.b16 %v7890
        %v9334 = vunpack.c.l.b16 %v7894
        %v9335 = vunpack.c.l.b16 %v7897
        %v9336 = vunpack.c.l.b16 %v7901
        %v9337 = vunpack.c.l.b16 %v7904
        %v9338 = vunpack.c.l.b16 %v7908
        %v9339 = vunpack.c.l.b16 %v7911
        %v9340 = vunpack.c.l.b16 %v7915
        %v9341 = vunpack.c.l.b16 %v7918
        %v9342 = vunpack.c.l.b16 %v7922
        %v9343 = vunpack.c.l.b16 %v7925
        %v9344 = vunpack.c.l.b16 %v7929
        %v9345 = vunpack.c.l.b16 %v7932
        %v9346 = vunpack.c.l.b16 %v7936
        %v9347 = vunpack.c.l.b16 %v7939
        %v9348 = vunpack.c.l.b16 %v7943
        %v9349 = vunpack.c.l.b16 %v7946
        %v9350 = vunpack.c.l.b16 %v7950
        %v9351 = vunpack.c.l.b16 %v7953
        %v9352 = vunpack.c.l.b16 %v7957
        %v9353 = vunpack.c.l.b16 %v7960
        %v9354 = vpack.c.b16 %v9323, %v9322
        %v9355 = vpack.c.b16 %v9325, %v9324
        %v9356 = vpack.c.b16 %v9327, %v9326
        %v9357 = vpack.c.b16 %v9329, %v9328
        %v9358 = vpack.c.b16 %v9331, %v9330
        %v9359 = vpack.c.b16 %v9333, %v9332
        %v9360 = vpack.c.b16 %v9335, %v9334
        %v9361 = vpack.c.b16 %v9337, %v9336
        %v9362 = vpack.c.b16 %v9339, %v9338
        %v9363 = vpack.c.b16 %v9341, %v9340
        %v9364 = vpack.c.b16 %v9343, %v9342
        %v9365 = vpack.c.b16 %v9345, %v9344
        %v9366 = vpack.c.b16 %v9347, %v9346
        %v9367 = vpack.c.b16 %v9349, %v9348
        %v9368 = vpack.c.b16 %v9351, %v9350
        %v9369 = vpack.c.b16 %v9353, %v9352
        %9370 = vrot.lane.b32.xlu0 %v9354, 64
        %v9371 = vpop.permute.xlu0 %9370
        %9372 = vrot.lane.b32.xlu0 %v9355, 64
        %v9373 = vpop.permute.xlu0 %9372
        %9374 = vrot.lane.b32.xlu0 %v9356, 64
        %v9375 = vpop.permute.xlu0 %9374
        %9376 = vrot.lane.b32.xlu0 %v9357, 64
        %v9377 = vpop.permute.xlu0 %9376
        %9378 = vrot.lane.b32.xlu0 %v9358, 64
        %v9379 = vpop.permute.xlu0 %9378
        %9380 = vrot.lane.b32.xlu0 %v9359, 64
        %v9381 = vpop.permute.xlu0 %9380
        %9382 = vrot.lane.b32.xlu0 %v9360, 64
        %v9383 = vpop.permute.xlu0 %9382
        %9384 = vrot.lane.b32.xlu0 %v9361, 64
        %v9385 = vpop.permute.xlu0 %9384
        %9386 = vrot.lane.b32.xlu0 %v9362, 64
        %v9387 = vpop.permute.xlu0 %9386
        %9388 = vrot.lane.b32.xlu0 %v9363, 64
        %v9389 = vpop.permute.xlu0 %9388
        %9390 = vrot.lane.b32.xlu0 %v9364, 64
        %v9391 = vpop.permute.xlu0 %9390
        %9392 = vrot.lane.b32.xlu0 %v9365, 64
        %v9393 = vpop.permute.xlu0 %9392
        %9394 = vrot.lane.b32.xlu0 %v9366, 64
        %v9395 = vpop.permute.xlu0 %9394
        %9396 = vrot.lane.b32.xlu0 %v9367, 64
        %v9397 = vpop.permute.xlu0 %9396
        %9398 = vrot.lane.b32.xlu0 %v9368, 64
        %v9399 = vpop.permute.xlu0 %9398
        %9400 = vrot.lane.b32.xlu0 %v9369, 64
        %v9401 = vpop.permute.xlu0 %9400
        %v9418 = vunpack.c.l.b16 %v7961
        %v9419 = vunpack.c.l.b16 %v7962
        %v9420 = vunpack.c.l.b16 %v7963
        %v9421 = vunpack.c.l.b16 %v7964
        %v9422 = vunpack.c.l.b16 %v7965
        %v9423 = vunpack.c.l.b16 %v7966
        %v9424 = vunpack.c.l.b16 %v7967
        %v9425 = vunpack.c.l.b16 %v7968
        %v9426 = vunpack.c.l.b16 %v7969
        %v9427 = vunpack.c.l.b16 %v7970
        %v9428 = vunpack.c.l.b16 %v7971
        %v9429 = vunpack.c.l.b16 %v7972
        %v9430 = vunpack.c.l.b16 %v7973
        %v9431 = vunpack.c.l.b16 %v7974
        %v9432 = vunpack.c.l.b16 %v7975
        %v9433 = vunpack.c.l.b16 %v7976
        %v9434 = vunpack.c.l.b16 %v7977
        %v9435 = vunpack.c.l.b16 %v7978
        %v9436 = vunpack.c.l.b16 %v7979
        %v9437 = vunpack.c.l.b16 %v7980
        %v9438 = vunpack.c.l.b16 %v7981
        %v9439 = vunpack.c.l.b16 %v7982
        %v9440 = vunpack.c.l.b16 %v7983
        %v9441 = vunpack.c.l.b16 %v7984
        %v9442 = vunpack.c.l.b16 %v7985
        %v9443 = vunpack.c.l.b16 %v7986
        %v9444 = vunpack.c.l.b16 %v7987
        %v9445 = vunpack.c.l.b16 %v7988
        %v9446 = vunpack.c.l.b16 %v7989
        %v9447 = vunpack.c.l.b16 %v7990
        %v9448 = vunpack.c.l.b16 %v7991
        %v9449 = vunpack.c.l.b16 %v7992
        %v9450 = vpack.c.b16 %v9419, %v9418
        %v9451 = vpack.c.b16 %v9421, %v9420
        %v9452 = vpack.c.b16 %v9423, %v9422
        %v9453 = vpack.c.b16 %v9425, %v9424
        %v9454 = vpack.c.b16 %v9427, %v9426
        %v9455 = vpack.c.b16 %v9429, %v9428
        %v9456 = vpack.c.b16 %v9431, %v9430
        %v9457 = vpack.c.b16 %v9433, %v9432
        %v9458 = vpack.c.b16 %v9435, %v9434
        %v9459 = vpack.c.b16 %v9437, %v9436
        %v9460 = vpack.c.b16 %v9439, %v9438
        %v9461 = vpack.c.b16 %v9441, %v9440
        %v9462 = vpack.c.b16 %v9443, %v9442
        %v9463 = vpack.c.b16 %v9445, %v9444
        %v9464 = vpack.c.b16 %v9447, %v9446
        %v9465 = vpack.c.b16 %v9449, %v9448
        %9466 = vrot.lane.b32.xlu0 %v9450, 96
        %v9467 = vpop.permute.xlu0 %9466
        %9468 = vrot.lane.b32.xlu0 %v9451, 96
        %v9469 = vpop.permute.xlu0 %9468
        %9470 = vrot.lane.b32.xlu0 %v9452, 96
        %v9471 = vpop.permute.xlu0 %9470
        %9472 = vrot.lane.b32.xlu0 %v9453, 96
        %v9473 = vpop.permute.xlu0 %9472
        %9474 = vrot.lane.b32.xlu0 %v9454, 96
        %v9475 = vpop.permute.xlu0 %9474
        %9476 = vrot.lane.b32.xlu0 %v9455, 96
        %v9477 = vpop.permute.xlu0 %9476
        %9478 = vrot.lane.b32.xlu0 %v9456, 96
        %v9479 = vpop.permute.xlu0 %9478
        %9480 = vrot.lane.b32.xlu0 %v9457, 96
        %v9481 = vpop.permute.xlu0 %9480
        %9482 = vrot.lane.b32.xlu0 %v9458, 96
        %v9483 = vpop.permute.xlu0 %9482
        %9484 = vrot.lane.b32.xlu0 %v9459, 96
        %v9485 = vpop.permute.xlu0 %9484
        %9486 = vrot.lane.b32.xlu0 %v9460, 96
        %v9487 = vpop.permute.xlu0 %9486
        %9488 = vrot.lane.b32.xlu0 %v9461, 96
        %v9489 = vpop.permute.xlu0 %9488
        %9490 = vrot.lane.b32.xlu0 %v9462, 96
        %v9491 = vpop.permute.xlu0 %9490
        %9492 = vrot.lane.b32.xlu0 %v9463, 96
        %v9493 = vpop.permute.xlu0 %9492
        %9494 = vrot.lane.b32.xlu0 %v9464, 96
        %v9495 = vpop.permute.xlu0 %9494
        %9496 = vrot.lane.b32.xlu0 %v9465, 96
        %v9497 = vpop.permute.xlu0 %9496
        %v9498 = vunpack.c.l.b16 %v8022
        %v9499 = vunpack.c.l.b16 %v8032
        %v9500 = vunpack.c.l.b16 %v8046
        %v9501 = vunpack.c.l.b16 %v8056
        %v9502 = vunpack.c.l.b16 %v8070
        %v9503 = vunpack.c.l.b16 %v8080
        %v9504 = vunpack.c.l.b16 %v8094
        %v9505 = vunpack.c.l.b16 %v8104
        %v9506 = vunpack.c.l.b16 %v8118
        %v9507 = vunpack.c.l.b16 %v8128
        %v9508 = vunpack.c.l.b16 %v8142
        %v9509 = vunpack.c.l.b16 %v8152
        %v9510 = vunpack.c.l.b16 %v8166
        %v9511 = vunpack.c.l.b16 %v8176
        %v9512 = vunpack.c.l.b16 %v8190
        %v9513 = vunpack.c.l.b16 %v8200
        %v9514 = vunpack.c.l.b16 %v8214
        %v9515 = vunpack.c.l.b16 %v8224
        %v9516 = vunpack.c.l.b16 %v8238
        %v9517 = vunpack.c.l.b16 %v8248
        %v9518 = vunpack.c.l.b16 %v8262
        %v9519 = vunpack.c.l.b16 %v8272
        %v9520 = vunpack.c.l.b16 %v8286
        %v9521 = vunpack.c.l.b16 %v8296
        %v9522 = vunpack.c.l.b16 %v8310
        %v9523 = vunpack.c.l.b16 %v8320
        %v9524 = vunpack.c.l.b16 %v8334
        %v9525 = vunpack.c.l.b16 %v8344
        %v9526 = vunpack.c.l.b16 %v8358
        %v9527 = vunpack.c.l.b16 %v8368
        %v9528 = vunpack.c.l.b16 %v8382
        %v9529 = vunpack.c.l.b16 %v8392
        %v9530 = vpack.c.b16 %v9499, %v9498
        %v9531 = vpack.c.b16 %v9501, %v9500
        %v9532 = vpack.c.b16 %v9503, %v9502
        %v9533 = vpack.c.b16 %v9505, %v9504
        %v9534 = vpack.c.b16 %v9507, %v9506
        %v9535 = vpack.c.b16 %v9509, %v9508
        %v9536 = vpack.c.b16 %v9511, %v9510
        %v9537 = vpack.c.b16 %v9513, %v9512
        %v9538 = vpack.c.b16 %v9515, %v9514
        %v9539 = vpack.c.b16 %v9517, %v9516
        %v9540 = vpack.c.b16 %v9519, %v9518
        %v9541 = vpack.c.b16 %v9521, %v9520
        %v9542 = vpack.c.b16 %v9523, %v9522
        %v9543 = vpack.c.b16 %v9525, %v9524
        %v9544 = vpack.c.b16 %v9527, %v9526
        %v9545 = vpack.c.b16 %v9529, %v9528
        %v9546 = vunpack.c.l.b16 %v8460
        %v9547 = vunpack.c.l.b16 %v8463
        %v9548 = vunpack.c.l.b16 %v8467
        %v9549 = vunpack.c.l.b16 %v8470
        %v9550 = vunpack.c.l.b16 %v8474
        %v9551 = vunpack.c.l.b16 %v8477
        %v9552 = vunpack.c.l.b16 %v8481
        %v9553 = vunpack.c.l.b16 %v8484
        %v9554 = vunpack.c.l.b16 %v8488
        %v9555 = vunpack.c.l.b16 %v8491
        %v9556 = vunpack.c.l.b16 %v8495
        %v9557 = vunpack.c.l.b16 %v8498
        %v9558 = vunpack.c.l.b16 %v8502
        %v9559 = vunpack.c.l.b16 %v8505
        %v9560 = vunpack.c.l.b16 %v8509
        %v9561 = vunpack.c.l.b16 %v8512
        %v9562 = vunpack.c.l.b16 %v8516
        %v9563 = vunpack.c.l.b16 %v8519
        %v9564 = vunpack.c.l.b16 %v8523
        %v9565 = vunpack.c.l.b16 %v8526
        %v9566 = vunpack.c.l.b16 %v8530
        %v9567 = vunpack.c.l.b16 %v8533
        %v9568 = vunpack.c.l.b16 %v8537
        %v9569 = vunpack.c.l.b16 %v8540
        %v9570 = vunpack.c.l.b16 %v8544
        %v9571 = vunpack.c.l.b16 %v8547
        %v9572 = vunpack.c.l.b16 %v8551
        %v9573 = vunpack.c.l.b16 %v8554
        %v9574 = vunpack.c.l.b16 %v8558
        %v9575 = vunpack.c.l.b16 %v8561
        %v9576 = vunpack.c.l.b16 %v8565
        %v9577 = vunpack.c.l.b16 %v8568
        %v9578 = vpack.c.b16 %v9547, %v9546
        %v9579 = vpack.c.b16 %v9549, %v9548
        %v9580 = vpack.c.b16 %v9551, %v9550
        %v9581 = vpack.c.b16 %v9553, %v9552
        %v9582 = vpack.c.b16 %v9555, %v9554
        %v9583 = vpack.c.b16 %v9557, %v9556
        %v9584 = vpack.c.b16 %v9559, %v9558
        %v9585 = vpack.c.b16 %v9561, %v9560
        %v9586 = vpack.c.b16 %v9563, %v9562
        %v9587 = vpack.c.b16 %v9565, %v9564
        %v9588 = vpack.c.b16 %v9567, %v9566
        %v9589 = vpack.c.b16 %v9569, %v9568
        %v9590 = vpack.c.b16 %v9571, %v9570
        %v9591 = vpack.c.b16 %v9573, %v9572
        %v9592 = vpack.c.b16 %v9575, %v9574
        %v9593 = vpack.c.b16 %v9577, %v9576
        %9594 = vrot.lane.b32.xlu0 %v9578, 32
        %v9595 = vpop.permute.xlu0 %9594
        %9596 = vrot.lane.b32.xlu0 %v9579, 32
        %v9597 = vpop.permute.xlu0 %9596
        %9598 = vrot.lane.b32.xlu0 %v9580, 32
        %v9599 = vpop.permute.xlu0 %9598
        %9600 = vrot.lane.b32.xlu0 %v9581, 32
        %v9601 = vpop.permute.xlu0 %9600
        %9602 = vrot.lane.b32.xlu0 %v9582, 32
        %v9603 = vpop.permute.xlu0 %9602
        %9604 = vrot.lane.b32.xlu0 %v9583, 32
        %v9605 = vpop.permute.xlu0 %9604
        %9606 = vrot.lane.b32.xlu0 %v9584, 32
        %v9607 = vpop.permute.xlu0 %9606
        %9608 = vrot.lane.b32.xlu0 %v9585, 32
        %v9609 = vpop.permute.xlu0 %9608
        %9610 = vrot.lane.b32.xlu0 %v9586, 32
        %v9611 = vpop.permute.xlu0 %9610
        %9612 = vrot.lane.b32.xlu0 %v9587, 32
        %v9613 = vpop.permute.xlu0 %9612
        %9614 = vrot.lane.b32.xlu0 %v9588, 32
        %v9615 = vpop.permute.xlu0 %9614
        %9616 = vrot.lane.b32.xlu0 %v9589, 32
        %v9617 = vpop.permute.xlu0 %9616
        %9618 = vrot.lane.b32.xlu0 %v9590, 32
        %v9619 = vpop.permute.xlu0 %9618
        %9620 = vrot.lane.b32.xlu0 %v9591, 32
        %v9621 = vpop.permute.xlu0 %9620
        %9622 = vrot.lane.b32.xlu0 %v9592, 32
        %v9623 = vpop.permute.xlu0 %9622
        %9624 = vrot.lane.b32.xlu0 %v9593, 32
        %v9625 = vpop.permute.xlu0 %9624
        %v9642 = vunpack.c.l.b16 %v8570
        %v9643 = vunpack.c.l.b16 %v8571
        %v9644 = vunpack.c.l.b16 %v8572
        %v9645 = vunpack.c.l.b16 %v8573
        %v9646 = vunpack.c.l.b16 %v8574
        %v9647 = vunpack.c.l.b16 %v8575
        %v9648 = vunpack.c.l.b16 %v8576
        %v9649 = vunpack.c.l.b16 %v8577
        %v9650 = vunpack.c.l.b16 %v8578
        %v9651 = vunpack.c.l.b16 %v8579
        %v9652 = vunpack.c.l.b16 %v8580
        %v9653 = vunpack.c.l.b16 %v8581
        %v9654 = vunpack.c.l.b16 %v8582
        %v9655 = vunpack.c.l.b16 %v8583
        %v9656 = vunpack.c.l.b16 %v8584
        %v9657 = vunpack.c.l.b16 %v8585
        %v9658 = vunpack.c.l.b16 %v8586
        %v9659 = vunpack.c.l.b16 %v8587
        %v9660 = vunpack.c.l.b16 %v8588
        %v9661 = vunpack.c.l.b16 %v8589
        %v9662 = vunpack.c.l.b16 %v8590
        %v9663 = vunpack.c.l.b16 %v8591
        %v9664 = vunpack.c.l.b16 %v8592
        %v9665 = vunpack.c.l.b16 %v8593
        %v9666 = vunpack.c.l.b16 %v8594
        %v9667 = vunpack.c.l.b16 %v8595
        %v9668 = vunpack.c.l.b16 %v8596
        %v9669 = vunpack.c.l.b16 %v8597
        %v9670 = vunpack.c.l.b16 %v8598
        %v9671 = vunpack.c.l.b16 %v8599
        %v9672 = vunpack.c.l.b16 %v8600
        %v9673 = vunpack.c.l.b16 %v8601
        %v9674 = vpack.c.b16 %v9643, %v9642
        %v9675 = vpack.c.b16 %v9645, %v9644
        %v9676 = vpack.c.b16 %v9647, %v9646
        %v9677 = vpack.c.b16 %v9649, %v9648
        %v9678 = vpack.c.b16 %v9651, %v9650
        %v9679 = vpack.c.b16 %v9653, %v9652
        %v9680 = vpack.c.b16 %v9655, %v9654
        %v9681 = vpack.c.b16 %v9657, %v9656
        %v9682 = vpack.c.b16 %v9659, %v9658
        %v9683 = vpack.c.b16 %v9661, %v9660
        %v9684 = vpack.c.b16 %v9663, %v9662
        %v9685 = vpack.c.b16 %v9665, %v9664
        %v9686 = vpack.c.b16 %v9667, %v9666
        %v9687 = vpack.c.b16 %v9669, %v9668
        %v9688 = vpack.c.b16 %v9671, %v9670
        %v9689 = vpack.c.b16 %v9673, %v9672
        %9690 = vrot.lane.b32.xlu0 %v9674, 64
        %v9691 = vpop.permute.xlu0 %9690
        %9692 = vrot.lane.b32.xlu0 %v9675, 64
        %v9693 = vpop.permute.xlu0 %9692
        %9694 = vrot.lane.b32.xlu0 %v9676, 64
        %v9695 = vpop.permute.xlu0 %9694
        %9696 = vrot.lane.b32.xlu0 %v9677, 64
        %v9697 = vpop.permute.xlu0 %9696
        %9698 = vrot.lane.b32.xlu0 %v9678, 64
        %v9699 = vpop.permute.xlu0 %9698
        %9700 = vrot.lane.b32.xlu0 %v9679, 64
        %v9701 = vpop.permute.xlu0 %9700
        %9702 = vrot.lane.b32.xlu0 %v9680, 64
        %v9703 = vpop.permute.xlu0 %9702
        %9704 = vrot.lane.b32.xlu0 %v9681, 64
        %v9705 = vpop.permute.xlu0 %9704
        %9706 = vrot.lane.b32.xlu0 %v9682, 64
        %v9707 = vpop.permute.xlu0 %9706
        %9708 = vrot.lane.b32.xlu0 %v9683, 64
        %v9709 = vpop.permute.xlu0 %9708
        %9710 = vrot.lane.b32.xlu0 %v9684, 64
        %v9711 = vpop.permute.xlu0 %9710
        %9712 = vrot.lane.b32.xlu0 %v9685, 64
        %v9713 = vpop.permute.xlu0 %9712
        %9714 = vrot.lane.b32.xlu0 %v9686, 64
        %v9715 = vpop.permute.xlu0 %9714
        %9716 = vrot.lane.b32.xlu0 %v9687, 64
        %v9717 = vpop.permute.xlu0 %9716
        %9718 = vrot.lane.b32.xlu0 %v9688, 64
        %v9719 = vpop.permute.xlu0 %9718
        %9720 = vrot.lane.b32.xlu0 %v9689, 64
        %v9721 = vpop.permute.xlu0 %9720
        %v9722 = vunpack.c.l.b16 %v8631
        %v9723 = vunpack.c.l.b16 %v8641
        %v9724 = vunpack.c.l.b16 %v8655
        %v9725 = vunpack.c.l.b16 %v8665
        %v9726 = vunpack.c.l.b16 %v8679
        %v9727 = vunpack.c.l.b16 %v8689
        %v9728 = vunpack.c.l.b16 %v8703
        %v9729 = vunpack.c.l.b16 %v8713
        %v9730 = vunpack.c.l.b16 %v8727
        %v9731 = vunpack.c.l.b16 %v8737
        %v9732 = vunpack.c.l.b16 %v8751
        %v9733 = vunpack.c.l.b16 %v8761
        %v9734 = vunpack.c.l.b16 %v8775
        %v9735 = vunpack.c.l.b16 %v8785
        %v9736 = vunpack.c.l.b16 %v8799
        %v9737 = vunpack.c.l.b16 %v8809
        %v9738 = vunpack.c.l.b16 %v8823
        %v9739 = vunpack.c.l.b16 %v8833
        %v9740 = vunpack.c.l.b16 %v8847
        %v9741 = vunpack.c.l.b16 %v8857
        %v9742 = vunpack.c.l.b16 %v8871
        %v9743 = vunpack.c.l.b16 %v8881
        %v9744 = vunpack.c.l.b16 %v8895
        %v9745 = vunpack.c.l.b16 %v8905
        %v9746 = vunpack.c.l.b16 %v8919
        %v9747 = vunpack.c.l.b16 %v8929
        %v9748 = vunpack.c.l.b16 %v8943
        %v9749 = vunpack.c.l.b16 %v8953
        %v9750 = vunpack.c.l.b16 %v8967
        %v9751 = vunpack.c.l.b16 %v8977
        %v9752 = vunpack.c.l.b16 %v8991
        %v9753 = vunpack.c.l.b16 %v9001
        %v9754 = vpack.c.b16 %v9723, %v9722
        %v9755 = vpack.c.b16 %v9725, %v9724
        %v9756 = vpack.c.b16 %v9727, %v9726
        %v9757 = vpack.c.b16 %v9729, %v9728
        %v9758 = vpack.c.b16 %v9731, %v9730
        %v9759 = vpack.c.b16 %v9733, %v9732
        %v9760 = vpack.c.b16 %v9735, %v9734
        %v9761 = vpack.c.b16 %v9737, %v9736
        %v9762 = vpack.c.b16 %v9739, %v9738
        %v9763 = vpack.c.b16 %v9741, %v9740
        %v9764 = vpack.c.b16 %v9743, %v9742
        %v9765 = vpack.c.b16 %v9745, %v9744
        %v9766 = vpack.c.b16 %v9747, %v9746
        %v9767 = vpack.c.b16 %v9749, %v9748
        %v9768 = vpack.c.b16 %v9751, %v9750
        %v9769 = vpack.c.b16 %v9753, %v9752
        %9770 = vrot.lane.b32.xlu0 %v9754, 96
        %v9771 = vpop.permute.xlu0 %9770
        %9772 = vrot.lane.b32.xlu0 %v9755, 96
        %v9773 = vpop.permute.xlu0 %9772
        %9774 = vrot.lane.b32.xlu0 %v9756, 96
        %v9775 = vpop.permute.xlu0 %9774
        %9776 = vrot.lane.b32.xlu0 %v9757, 96
        %v9777 = vpop.permute.xlu0 %9776
        %9778 = vrot.lane.b32.xlu0 %v9758, 96
        %v9779 = vpop.permute.xlu0 %9778
        %9780 = vrot.lane.b32.xlu0 %v9759, 96
        %v9781 = vpop.permute.xlu0 %9780
        %9782 = vrot.lane.b32.xlu0 %v9760, 96
        %v9783 = vpop.permute.xlu0 %9782
        %9784 = vrot.lane.b32.xlu0 %v9761, 96
        %v9785 = vpop.permute.xlu0 %9784
        %9786 = vrot.lane.b32.xlu0 %v9762, 96
        %v9787 = vpop.permute.xlu0 %9786
        %9788 = vrot.lane.b32.xlu0 %v9763, 96
        %v9789 = vpop.permute.xlu0 %9788
        %9790 = vrot.lane.b32.xlu0 %v9764, 96
        %v9791 = vpop.permute.xlu0 %9790
        %9792 = vrot.lane.b32.xlu0 %v9765, 96
        %v9793 = vpop.permute.xlu0 %9792
        %9794 = vrot.lane.b32.xlu0 %v9766, 96
        %v9795 = vpop.permute.xlu0 %9794
        %9796 = vrot.lane.b32.xlu0 %v9767, 96
        %v9797 = vpop.permute.xlu0 %9796
        %9798 = vrot.lane.b32.xlu0 %v9768, 96
        %v9799 = vpop.permute.xlu0 %9798
        %9800 = vrot.lane.b32.xlu0 %v9769, 96
        %v9801 = vpop.permute.xlu0 %9800
        %v9802 = vunpack.c.l.b16 %v9069
        %v9803 = vunpack.c.l.b16 %v9072
        %v9804 = vunpack.c.l.b16 %v9076
        %v9805 = vunpack.c.l.b16 %v9079
        %v9806 = vunpack.c.l.b16 %v9083
        %v9807 = vunpack.c.l.b16 %v9086
        %v9808 = vunpack.c.l.b16 %v9090
        %v9809 = vunpack.c.l.b16 %v9093
        %v9810 = vunpack.c.l.b16 %v9097
        %v9811 = vunpack.c.l.b16 %v9100
        %v9812 = vunpack.c.l.b16 %v9104
        %v9813 = vunpack.c.l.b16 %v9107
        %v9814 = vunpack.c.l.b16 %v9111
        %v9815 = vunpack.c.l.b16 %v9114
        %v9816 = vunpack.c.l.b16 %v9118
        %v9817 = vunpack.c.l.b16 %v9121
        %v9818 = vunpack.c.l.b16 %v9125
        %v9819 = vunpack.c.l.b16 %v9128
        %v9820 = vunpack.c.l.b16 %v9132
        %v9821 = vunpack.c.l.b16 %v9135
        %v9822 = vunpack.c.l.b16 %v9139
        %v9823 = vunpack.c.l.b16 %v9142
        %v9824 = vunpack.c.l.b16 %v9146
        %v9825 = vunpack.c.l.b16 %v9149
        %v9826 = vunpack.c.l.b16 %v9153
        %v9827 = vunpack.c.l.b16 %v9156
        %v9828 = vunpack.c.l.b16 %v9160
        %v9829 = vunpack.c.l.b16 %v9163
        %v9830 = vunpack.c.l.b16 %v9167
        %v9831 = vunpack.c.l.b16 %v9170
        %v9832 = vunpack.c.l.b16 %v9174
        %v9833 = vunpack.c.l.b16 %v9177
        %v9834 = vpack.c.b16 %v9803, %v9802
        %v9835 = vpack.c.b16 %v9805, %v9804
        %v9836 = vpack.c.b16 %v9807, %v9806
        %v9837 = vpack.c.b16 %v9809, %v9808
        %v9838 = vpack.c.b16 %v9811, %v9810
        %v9839 = vpack.c.b16 %v9813, %v9812
        %v9840 = vpack.c.b16 %v9815, %v9814
        %v9841 = vpack.c.b16 %v9817, %v9816
        %v9842 = vpack.c.b16 %v9819, %v9818
        %v9843 = vpack.c.b16 %v9821, %v9820
        %v9844 = vpack.c.b16 %v9823, %v9822
        %v9845 = vpack.c.b16 %v9825, %v9824
        %v9846 = vpack.c.b16 %v9827, %v9826
        %v9847 = vpack.c.b16 %v9829, %v9828
        %v9848 = vpack.c.b16 %v9831, %v9830
        %v9849 = vpack.c.b16 %v9833, %v9832
        %v9852 = vsel %vm5938, %v9226, %v9291
        %v9855 = vsel %vm5938, %v9227, %v9293
        %v9858 = vsel %vm5938, %v9228, %v9295
        %v9861 = vsel %vm5938, %v9229, %v9297
        %v9864 = vsel %vm5938, %v9230, %v9299
        %v9867 = vsel %vm5938, %v9231, %v9301
        %v9870 = vsel %vm5938, %v9232, %v9303
        %v9873 = vsel %vm5938, %v9233, %v9305
        %v9876 = vsel %vm5938, %v9234, %v9307
        %v9879 = vsel %vm5938, %v9235, %v9309
        %v9882 = vsel %vm5938, %v9236, %v9311
        %v9885 = vsel %vm5938, %v9237, %v9313
        %v9888 = vsel %vm5938, %v9238, %v9315
        %v9891 = vsel %vm5938, %v9239, %v9317
        %v9894 = vsel %vm5938, %v9240, %v9319
        %v9897 = vsel %vm5938, %v9241, %v9321
        %v9899 = vsel %vm6004, %v9852, %v9371
        %v9901 = vsel %vm6004, %v9855, %v9373
        %v9903 = vsel %vm6004, %v9858, %v9375
        %v9905 = vsel %vm6004, %v9861, %v9377
        %v9907 = vsel %vm6004, %v9864, %v9379
        %v9909 = vsel %vm6004, %v9867, %v9381
        %v9911 = vsel %vm6004, %v9870, %v9383
        %v9913 = vsel %vm6004, %v9873, %v9385
        %v9915 = vsel %vm6004, %v9876, %v9387
        %v9917 = vsel %vm6004, %v9879, %v9389
        %v9919 = vsel %vm6004, %v9882, %v9391
        %v9921 = vsel %vm6004, %v9885, %v9393
        %v9923 = vsel %vm6004, %v9888, %v9395
        %v9925 = vsel %vm6004, %v9891, %v9397
        %v9927 = vsel %vm6004, %v9894, %v9399
        %v9929 = vsel %vm6004, %v9897, %v9401
        %v9931 = vsel %vm6070, %v9899, %v9467
        %v9934 = vsel %vm6070, %v9901, %v9469
        %v9937 = vsel %vm6070, %v9903, %v9471
        %v9940 = vsel %vm6070, %v9905, %v9473
        %v9943 = vsel %vm6070, %v9907, %v9475
        %v9946 = vsel %vm6070, %v9909, %v9477
        %v9949 = vsel %vm6070, %v9911, %v9479
        %v9952 = vsel %vm6070, %v9913, %v9481
        %v9955 = vsel %vm6070, %v9915, %v9483
        %v9958 = vsel %vm6070, %v9917, %v9485
        %v9961 = vsel %vm6070, %v9919, %v9487
        %v9964 = vsel %vm6070, %v9921, %v9489
        %v9967 = vsel %vm6070, %v9923, %v9491
        %v9970 = vsel %vm6070, %v9925, %v9493
        %v9973 = vsel %vm6070, %v9927, %v9495
        %v9976 = vsel %vm6070, %v9929, %v9497
        %v9980 = vsel %vm5938, %v9530, %v9595
        %v9983 = vsel %vm5938, %v9531, %v9597
        %v9986 = vsel %vm5938, %v9532, %v9599
        %v9989 = vsel %vm5938, %v9533, %v9601
        %v9992 = vsel %vm5938, %v9534, %v9603
        %v9995 = vsel %vm5938, %v9535, %v9605
        %v9998 = vsel %vm5938, %v9536, %v9607
        %v10001 = vsel %vm5938, %v9537, %v9609
        %v10004 = vsel %vm5938, %v9538, %v9611
        %v10007 = vsel %vm5938, %v9539, %v9613
        %v10010 = vsel %vm5938, %v9540, %v9615
        %v10013 = vsel %vm5938, %v9541, %v9617
        %v10016 = vsel %vm5938, %v9542, %v9619
        %v10019 = vsel %vm5938, %v9543, %v9621
        %v10022 = vsel %vm5938, %v9544, %v9623
        %v10025 = vsel %vm5938, %v9545, %v9625
        %v10027 = vsel %vm6004, %v9980, %v9691
        %v10029 = vsel %vm6004, %v9983, %v9693
        %v10031 = vsel %vm6004, %v9986, %v9695
        %v10033 = vsel %vm6004, %v9989, %v9697
        %v10035 = vsel %vm6004, %v9992, %v9699
        %v10037 = vsel %vm6004, %v9995, %v9701
        %v10039 = vsel %vm6004, %v9998, %v9703
        %v10041 = vsel %vm6004, %v10001, %v9705
        %v10043 = vsel %vm6004, %v10004, %v9707
        %v10045 = vsel %vm6004, %v10007, %v9709
        %v10047 = vsel %vm6004, %v10010, %v9711
        %v10049 = vsel %vm6004, %v10013, %v9713
        %v10051 = vsel %vm6004, %v10016, %v9715
        %v10053 = vsel %vm6004, %v10019, %v9717
        %v10055 = vsel %vm6004, %v10022, %v9719
        %v10057 = vsel %vm6004, %v10025, %v9721
        %v10059 = vsel %vm6070, %v10027, %v9771
        %v10062 = vsel %vm6070, %v10029, %v9773
        %v10065 = vsel %vm6070, %v10031, %v9775
        %v10068 = vsel %vm6070, %v10033, %v9777
        %v10071 = vsel %vm6070, %v10035, %v9779
        %v10074 = vsel %vm6070, %v10037, %v9781
        %v10077 = vsel %vm6070, %v10039, %v9783
        %v10080 = vsel %vm6070, %v10041, %v9785
        %v10083 = vsel %vm6070, %v10043, %v9787
        %v10086 = vsel %vm6070, %v10045, %v9789
        %v10089 = vsel %vm6070, %v10047, %v9791
        %v10092 = vsel %vm6070, %v10049, %v9793
        %v10095 = vsel %vm6070, %v10051, %v9795
        %v10098 = vsel %vm6070, %v10053, %v9797
        %v10101 = vsel %vm6070, %v10055, %v9799
        %v10104 = vsel %vm6070, %v10057, %v9801
        %v10106 = vld [vmem:[%s7] sm:$0xf]
        %v10107 = vld [vmem:[%s7 + $0x4] sm:$0xf]
        %v10108 = vld [vmem:[%s7 + $0x8] sm:$0xf]
        %v10109 = vld [vmem:[%s7 + $0xc] sm:$0xf]
        %v10110 = vld [vmem:[%s7 + $0x10] sm:$0xf]
        %v10111 = vld [vmem:[%s7 + $0x14] sm:$0xf]
        %v10112 = vld [vmem:[%s7 + $0x18] sm:$0xf]
        %v10113 = vld [vmem:[%s7 + $0x1c] sm:$0xf]
        %v10114 = vld [vmem:[%s7 + $0x20] sm:$0xf]
        %v10115 = vld [vmem:[%s7 + $0x24] sm:$0xf]
        %v10116 = vld [vmem:[%s7 + $0x28] sm:$0xf]
        %v10117 = vld [vmem:[%s7 + $0x2c] sm:$0xf]
        %v10118 = vld [vmem:[%s7 + $0x30] sm:$0xf]
        %v10119 = vld [vmem:[%s7 + $0x34] sm:$0xf]
        %v10120 = vld [vmem:[%s7 + $0x38] sm:$0xf]
        %v10121 = vld [vmem:[%s7 + $0x3c] sm:$0xf]
        %v10122 = vld [vmem:[%s7 + $0x40] sm:$0xf]
        %v10123 = vld [vmem:[%s7 + $0x44] sm:$0xf]
        %v10124 = vld [vmem:[%s7 + $0x48] sm:$0xf]
        %v10125 = vld [vmem:[%s7 + $0x4c] sm:$0xf]
        %v10126 = vld [vmem:[%s7 + $0x50] sm:$0xf]
        %v10127 = vld [vmem:[%s7 + $0x54] sm:$0xf]
        %v10128 = vld [vmem:[%s7 + $0x58] sm:$0xf]
        %v10129 = vld [vmem:[%s7 + $0x5c] sm:$0xf]
        %v10130 = vld [vmem:[%s7 + $0x60] sm:$0xf]
        %v10131 = vld [vmem:[%s7 + $0x64] sm:$0xf]
        %v10132 = vld [vmem:[%s7 + $0x68] sm:$0xf]
        %v10133 = vld [vmem:[%s7 + $0x6c] sm:$0xf]
        %v10134 = vld [vmem:[%s7 + $0x70] sm:$0xf]
        %v10135 = vld [vmem:[%s7 + $0x74] sm:$0xf]
        %v10136 = vld [vmem:[%s7 + $0x78] sm:$0xf]
        %v10137 = vld [vmem:[%s7 + $0x7c] sm:$0xf]
        %v10138 = vld [vmem:[%s7 + $0x80] sm:$0xf]
        %v10139 = vld [vmem:[%s7 + $0x84] sm:$0xf]
        %v10140 = vld [vmem:[%s7 + $0x88] sm:$0xf]
        %v10141 = vld [vmem:[%s7 + $0x8c] sm:$0xf]
        %v10142 = vld [vmem:[%s8] sm:$0x1]
        %v10144 = vlaneseq
        %v10145 = vshrl.u32 %v10144, 7
        %v10146 = vsub.s32 0, %v10145
        %v10147 = vrot.slane %v10142, %v10146
        %v10185 = vunpack.c.l.b16 %v10106
        %v10186 = vunpack.c.l.b16 %v10107
        %v10187 = vunpack.c.l.b16 %v10108
        %v10188 = vunpack.c.l.b16 %v10109
        %v10189 = vunpack.c.l.b16 %v10110
        %v10190 = vunpack.c.l.b16 %v10111
        %v10191 = vunpack.c.l.b16 %v10112
        %v10192 = vunpack.c.l.b16 %v10113
        %v10193 = vunpack.c.l.b16 %v10114
        %v10194 = vunpack.c.l.b16 %v10115
        %v10195 = vunpack.c.l.b16 %v10116
        %v10196 = vunpack.c.l.b16 %v10117
        %v10197 = vunpack.c.l.b16 %v10118
        %v10198 = vunpack.c.l.b16 %v10119
        %v10199 = vunpack.c.l.b16 %v10120
        %v10200 = vunpack.c.l.b16 %v10121
        %v10201 = vunpack.c.l.b16 %v10122
        %v10202 = vunpack.c.l.b16 %v10123
        %v10203 = vunpack.c.l.b16 %v10124
        %v10204 = vunpack.c.l.b16 %v10125
        %v10205 = vunpack.c.l.b16 %v10126
        %v10206 = vunpack.c.l.b16 %v10127
        %v10207 = vunpack.c.l.b16 %v10128
        %v10208 = vunpack.c.l.b16 %v10129
        %v10209 = vunpack.c.l.b16 %v10130
        %v10210 = vunpack.c.l.b16 %v10131
        %v10211 = vunpack.c.l.b16 %v10132
        %v10212 = vunpack.c.l.b16 %v10133
        %v10213 = vunpack.c.l.b16 %v10134
        %v10214 = vunpack.c.l.b16 %v10135
        %v10215 = vunpack.c.l.b16 %v10136
        %v10216 = vunpack.c.l.b16 %v10137
        %v10217 = vunpack.c.l.b16 %v10138
        %v10218 = vunpack.c.l.b16 %v10139
        %v10219 = vunpack.c.l.b16 %v10140
        %v10220 = vunpack.c.l.b16 %v10141
        %v10221 = vpack.c.b16 %v10186, %v10185
        %v10222 = vpack.c.b16 %v10188, %v10187
        %v10223 = vpack.c.b16 %v10190, %v10189
        %v10224 = vpack.c.b16 %v10192, %v10191
        %v10225 = vpack.c.b16 %v10194, %v10193
        %v10226 = vpack.c.b16 %v10196, %v10195
        %v10227 = vpack.c.b16 %v10198, %v10197
        %v10228 = vpack.c.b16 %v10200, %v10199
        %v10229 = vpack.c.b16 %v10202, %v10201
        %v10230 = vpack.c.b16 %v10204, %v10203
        %v10231 = vpack.c.b16 %v10206, %v10205
        %v10232 = vpack.c.b16 %v10208, %v10207
        %v10233 = vpack.c.b16 %v10210, %v10209
        %v10234 = vpack.c.b16 %v10212, %v10211
        %v10235 = vpack.c.b16 %v10214, %v10213
        %v10236 = vpack.c.b16 %v10216, %v10215
        %v10237 = vpack.c.b16 %v10218, %v10217
        %v10238 = vpack.c.b16 %v10220, %v10219
        %v10258 = vsel %vm5938, %v9834, 0
        %v10261 = vsel %vm5938, %v9835, 0
        %v10264 = vsel %vm5938, %v9836, 0
        %v10267 = vsel %vm5938, %v9837, 0
        %v10270 = vsel %vm5938, %v9838, 0
        %v10273 = vsel %vm5938, %v9839, 0
        %v10276 = vsel %vm5938, %v9840, 0
        %v10279 = vsel %vm5938, %v9841, 0
        %v10282 = vsel %vm5938, %v9842, 0
        %v10285 = vsel %vm5938, %v9843, 0
        %v10288 = vsel %vm5938, %v9844, 0
        %v10291 = vsel %vm5938, %v9845, 0
        %v10294 = vsel %vm5938, %v9846, 0
        %v10297 = vsel %vm5938, %v9847, 0
        %v10300 = vsel %vm5938, %v9848, 0
        %v10303 = vsel %vm5938, %v9849, 0
        %10305 = vmatprep.subr.bf16.mxu0 0
        %10306 = vmatpush1.bf16.msra.mxu0 %v10221
        %10307 = vmatprep.subr.bf16.mxu0 0
        %10308 = vmatpush1.bf16.msra.mxu0 %v10222
        %10309 = vmatprep.subr.bf16.mxu0 0
        %10310 = vmatpush1.bf16.msra.mxu0 %v10223
        %10311 = vmatprep.subr.bf16.mxu0 0
        %10312 = vmatpush1.bf16.msra.mxu0 %v10224
        %10313 = vmatprep.subr.bf16.mxu0 0
        %10314 = vmatpush1.bf16.msra.mxu0 %v10225
        %10315 = vmatprep.subr.bf16.mxu0 0
        %10316 = vmatpush1.bf16.msra.mxu0 %v10226
        %10317 = vmatprep.subr.bf16.mxu0 0
        %10318 = vmatpush1.bf16.msra.mxu0 %v10227
        %10319 = vmatprep.subr.bf16.mxu0 0
        %10320 = vmatpush1.bf16.msra.mxu0 %v10228
        %10321 = vmatprep.subr.bf16.mxu0 0
        %10322 = vmatpush1.bf16.msra.mxu0 %v10229
        %10323 = vmatprep.subr.bf16.mxu0 0
        %10324 = vmatpush1.bf16.msra.mxu0 %v10230
        %10325 = vmatprep.subr.bf16.mxu0 0
        %10326 = vmatpush1.bf16.msra.mxu0 %v10231
        %10327 = vmatprep.subr.bf16.mxu0 0
        %10328 = vmatpush1.bf16.msra.mxu0 %v10232
        %10329 = vmatprep.subr.bf16.mxu0 0
        %10330 = vmatpush1.bf16.msra.mxu0 %v10233
        %10331 = vmatprep.subr.bf16.mxu0 0
        %10332 = vmatpush1.bf16.msra.mxu0 %v10234
        %10333 = vmatprep.subr.bf16.mxu0 0
        %10334 = vmatpush1.bf16.msra.mxu0 %v10235
        %10335 = vmatprep.subr.bf16.mxu0 0
        %10336 = vmatpush1.bf16.msra.mxu0 %v10236
        %10337 = vmatprep.mubr.bf16.mxu0 %v10059
        %10338 = vmatmul.mubr.bf16.gmra.mrb[0].mxu0 %v9931
        %v10339 = vpop.f32.mrb[0].mxu0
        %v10340 = vadd.f32 %v10147, %v10339
        %v10341 = vpop.f32.mrb[0].mxu0
        %v10342 = vpop.f32.mrb[0].mxu0
        %v10343 = vadd.f32 %v10147, %v10342
        %v10344 = vpop.f32.mrb[0].mxu0
        %10345 = vmatprep.mubr.bf16.mxu0 %v10062
        %10346 = vmatmul.mubr.bf16.gmra.mrb[0].mxu0 %v9934
        %v10347 = vpop.f32.mrb[0].mxu0
        %v10348 = vadd.f32 %v10147, %v10347
        %v10349 = vpop.f32.mrb[0].mxu0
        %v10350 = vpop.f32.mrb[0].mxu0
        %v10351 = vadd.f32 %v10147, %v10350
        %v10352 = vpop.f32.mrb[0].mxu0
        %10353 = vmatprep.mubr.bf16.mxu0 %v10065
        %10354 = vmatmul.mubr.bf16.gmra.mrb[0].mxu0 %v9937
        %v10355 = vpop.f32.mrb[0].mxu0
        %v10356 = vadd.f32 %v10147, %v10355
        %v10357 = vpop.f32.mrb[0].mxu0
        %v10358 = vpop.f32.mrb[0].mxu0
        %v10359 = vadd.f32 %v10147, %v10358
        %v10360 = vpop.f32.mrb[0].mxu0
        %10361 = vmatprep.mubr.bf16.mxu0 %v10068
        %10362 = vmatmul.mubr.bf16.gmra.mrb[0].mxu0 %v9940
        %v10363 = vpop.f32.mrb[0].mxu0
        %v10364 = vadd.f32 %v10147, %v10363
        %v10365 = vpop.f32.mrb[0].mxu0
        %v10366 = vpop.f32.mrb[0].mxu0
        %v10367 = vadd.f32 %v10147, %v10366
        %v10368 = vpop.f32.mrb[0].mxu0
        %10369 = vmatprep.mubr.bf16.mxu0 %v10071
        %10370 = vmatmul.mubr.bf16.gmra.mrb[0].mxu0 %v9943
        %v10371 = vpop.f32.mrb[0].mxu0
        %v10372 = vadd.f32 %v10147, %v10371
        %v10373 = vpop.f32.mrb[0].mxu0
        %v10374 = vpop.f32.mrb[0].mxu0
        %v10375 = vadd.f32 %v10147, %v10374
        %v10376 = vpop.f32.mrb[0].mxu0
        %10377 = vmatprep.mubr.bf16.mxu0 %v10074
        %10378 = vmatmul.mubr.bf16.gmra.mrb[0].mxu0 %v9946
        %v10379 = vpop.f32.mrb[0].mxu0
        %v10380 = vadd.f32 %v10147, %v10379
        %v10381 = vpop.f32.mrb[0].mxu0
        %v10382 = vpop.f32.mrb[0].mxu0
        %v10383 = vadd.f32 %v10147, %v10382
        %v10384 = vpop.f32.mrb[0].mxu0
        %10385 = vmatprep.mubr.bf16.mxu0 %v10077
        %10386 = vmatmul.mubr.bf16.gmra.mrb[0].mxu0 %v9949
        %v10387 = vpop.f32.mrb[0].mxu0
        %v10388 = vadd.f32 %v10147, %v10387
        %v10389 = vpop.f32.mrb[0].mxu0
        %v10390 = vpop.f32.mrb[0].mxu0
        %v10391 = vadd.f32 %v10147, %v10390
        %v10392 = vpop.f32.mrb[0].mxu0
        %10393 = vmatprep.mubr.bf16.mxu0 %v10080
        %10394 = vmatmul.mubr.bf16.gmra.mrb[0].mxu0 %v9952
        %v10395 = vpop.f32.mrb[0].mxu0
        %v10396 = vadd.f32 %v10147, %v10395
        %v10397 = vpop.f32.mrb[0].mxu0
        %v10398 = vpop.f32.mrb[0].mxu0
        %v10399 = vadd.f32 %v10147, %v10398
        %v10400 = vpop.f32.mrb[0].mxu0
        %10401 = vmatprep.mubr.bf16.mxu0 %v10083
        %10402 = vmatmul.mubr.bf16.gmra.mrb[0].mxu0 %v9955
        %v10403 = vpop.f32.mrb[0].mxu0
        %v10404 = vadd.f32 %v10147, %v10403
        %v10405 = vpop.f32.mrb[0].mxu0
        %v10406 = vpop.f32.mrb[0].mxu0
        %v10407 = vadd.f32 %v10147, %v10406
        %v10408 = vpop.f32.mrb[0].mxu0
        %10409 = vmatprep.mubr.bf16.mxu0 %v10086
        %10410 = vmatmul.mubr.bf16.gmra.mrb[0].mxu0 %v9958
        %v10411 = vpop.f32.mrb[0].mxu0
        %v10412 = vadd.f32 %v10147, %v10411
        %v10413 = vpop.f32.mrb[0].mxu0
        %v10414 = vpop.f32.mrb[0].mxu0
        %v10415 = vadd.f32 %v10147, %v10414
        %v10416 = vpop.f32.mrb[0].mxu0
        %10417 = vmatprep.mubr.bf16.mxu0 %v10089
        %10418 = vmatmul.mubr.bf16.gmra.mrb[0].mxu0 %v9961
        %v10419 = vpop.f32.mrb[0].mxu0
        %v10420 = vadd.f32 %v10147, %v10419
        %v10421 = vpop.f32.mrb[0].mxu0
        %v10422 = vpop.f32.mrb[0].mxu0
        %v10423 = vadd.f32 %v10147, %v10422
        %v10424 = vpop.f32.mrb[0].mxu0
        %10425 = vmatprep.mubr.bf16.mxu0 %v10092
        %10426 = vmatmul.mubr.bf16.gmra.mrb[0].mxu0 %v9964
        %v10427 = vpop.f32.mrb[0].mxu0
        %v10428 = vadd.f32 %v10147, %v10427
        %v10429 = vpop.f32.mrb[0].mxu0
        %v10430 = vpop.f32.mrb[0].mxu0
        %v10431 = vadd.f32 %v10147, %v10430
        %v10432 = vpop.f32.mrb[0].mxu0
        %10433 = vmatprep.mubr.bf16.mxu0 %v10095
        %10434 = vmatmul.mubr.bf16.gmra.mrb[0].mxu0 %v9967
        %v10435 = vpop.f32.mrb[0].mxu0
        %v10436 = vadd.f32 %v10147, %v10435
        %v10437 = vpop.f32.mrb[0].mxu0
        %v10438 = vpop.f32.mrb[0].mxu0
        %v10439 = vadd.f32 %v10147, %v10438
        %v10440 = vpop.f32.mrb[0].mxu0
        %10441 = vmatprep.mubr.bf16.mxu0 %v10098
        %10442 = vmatmul.mubr.bf16.gmra.mrb[0].mxu0 %v9970
        %v10443 = vpop.f32.mrb[0].mxu0
        %v10444 = vadd.f32 %v10147, %v10443
        %v10445 = vpop.f32.mrb[0].mxu0
        %v10446 = vpop.f32.mrb[0].mxu0
        %v10447 = vadd.f32 %v10147, %v10446
        %v10448 = vpop.f32.mrb[0].mxu0
        %10449 = vmatprep.mubr.bf16.mxu0 %v10101
        %10450 = vmatmul.mubr.bf16.gmra.mrb[0].mxu0 %v9973
        %v10451 = vpop.f32.mrb[0].mxu0
        %v10452 = vadd.f32 %v10147, %v10451
        %v10453 = vpop.f32.mrb[0].mxu0
        %v10454 = vpop.f32.mrb[0].mxu0
        %v10455 = vadd.f32 %v10147, %v10454
        %v10456 = vpop.f32.mrb[0].mxu0
        %10457 = vmatprep.mubr.bf16.mxu0 %v10104
        %10458 = vmatmul.mubr.bf16.gmra.mrb[0].mxu0 %v9976
        %v10459 = vpop.f32.mrb[0].mxu0
        %v10460 = vadd.f32 %v10147, %v10459
        %v10461 = vpop.f32.mrb[0].mxu0
        %v10462 = vpop.f32.mrb[0].mxu0
        %v10463 = vadd.f32 %v10147, %v10462
        %v10464 = vpop.f32.mrb[0].mxu0
        %10465 = vdwg.mxu0
        %10466 = vmatprep.subr.bf16.mxu0 0
        %10467 = vmatpush1.bf16.msra.mxu0 %v10237
        %10468 = vmatprep.subr.bf16.mxu0 0
        %10469 = vmatpush1.bf16.msra.mxu0 %v10238
        %10470 = vmatprep.subr.bf16.mxu0 0
        %10471 = vmatpush1.bf16.msra.mxu0 0
        %10472 = vmatprep.subr.bf16.mxu0 0
        %10473 = vmatpush1.bf16.msra.mxu0 0
        %10474 = vmatprep.subr.bf16.mxu0 0
        %10475 = vmatpush1.bf16.msra.mxu0 0
        %10476 = vmatprep.subr.bf16.mxu0 0
        %10477 = vmatpush1.bf16.msra.mxu0 0
        %10478 = vmatprep.subr.bf16.mxu0 0
        %10479 = vmatpush1.bf16.msra.mxu0 0
        %10480 = vmatprep.subr.bf16.mxu0 0
        %10481 = vmatpush1.bf16.msra.mxu0 0
        %10482 = vmatprep.subr.bf16.mxu0 0
        %10483 = vmatpush1.bf16.msra.mxu0 0
        %10484 = vmatprep.subr.bf16.mxu0 0
        %10485 = vmatpush1.bf16.msra.mxu0 0
        %10486 = vmatprep.subr.bf16.mxu0 0
        %10487 = vmatpush1.bf16.msra.mxu0 0
        %10488 = vmatprep.subr.bf16.mxu0 0
        %10489 = vmatpush1.bf16.msra.mxu0 0
        %10490 = vmatprep.subr.bf16.mxu0 0
        %10491 = vmatpush1.bf16.msra.mxu0 0
        %10492 = vmatprep.subr.bf16.mxu0 0
        %10493 = vmatpush1.bf16.msra.mxu0 0
        %10494 = vmatprep.subr.bf16.mxu0 0
        %10495 = vmatpush1.bf16.msra.mxu0 0
        %10496 = vmatprep.subr.bf16.mxu0 0
        %10497 = vmatpush1.bf16.msra.mxu0 0
        %10498 = vmatprep.mubr.bf16.mxu0 0
        %10499 = vmatmul.mubr.bf16.gmra.mrb[0].mxu0 %v10258
        %v10500 = vpop.f32.mrb[0].mxu0
        %v10501 = vadd.f32 %v10340, %v10500
        %v10502 = vpop.f32.mrb[0].mxu0
        %v10503 = vpop.f32.mrb[0].mxu0
        %v10504 = vadd.f32 %v10343, %v10503
        %v10505 = vpop.f32.mrb[0].mxu0
        %10506 = vmatprep.mubr.bf16.mxu0 0
        %10507 = vmatmul.mubr.bf16.gmra.mrb[0].mxu0 %v10261
        %v10508 = vpop.f32.mrb[0].mxu0
        %v10509 = vadd.f32 %v10348, %v10508
        %v10510 = vpop.f32.mrb[0].mxu0
        %v10511 = vpop.f32.mrb[0].mxu0
        %v10512 = vadd.f32 %v10351, %v10511
        %v10513 = vpop.f32.mrb[0].mxu0
        %10514 = vmatprep.mubr.bf16.mxu0 0
        %10515 = vmatmul.mubr.bf16.gmra.mrb[0].mxu0 %v10264
        %v10516 = vpop.f32.mrb[0].mxu0
        %v10517 = vadd.f32 %v10356, %v10516
        %v10518 = vpop.f32.mrb[0].mxu0
        %v10519 = vpop.f32.mrb[0].mxu0
        %v10520 = vadd.f32 %v10359, %v10519
        %v10521 = vpop.f32.mrb[0].mxu0
        %10522 = vmatprep.mubr.bf16.mxu0 0
        %10523 = vmatmul.mubr.bf16.gmra.mrb[0].mxu0 %v10267
        %v10524 = vpop.f32.mrb[0].mxu0
        %v10525 = vadd.f32 %v10364, %v10524
        %v10526 = vpop.f32.mrb[0].mxu0
        %v10527 = vpop.f32.mrb[0].mxu0
        %v10528 = vadd.f32 %v10367, %v10527
        %v10529 = vpop.f32.mrb[0].mxu0
        %10530 = vmatprep.mubr.bf16.mxu0 0
        %10531 = vmatmul.mubr.bf16.gmra.mrb[0].mxu0 %v10270
        %v10532 = vpop.f32.mrb[0].mxu0
        %v10533 = vadd.f32 %v10372, %v10532
        %v10534 = vpop.f32.mrb[0].mxu0
        %v10535 = vpop.f32.mrb[0].mxu0
        %v10536 = vadd.f32 %v10375, %v10535
        %v10537 = vpop.f32.mrb[0].mxu0
        %10538 = vmatprep.mubr.bf16.mxu0 0
        %10539 = vmatmul.mubr.bf16.gmra.mrb[0].mxu0 %v10273
        %v10540 = vpop.f32.mrb[0].mxu0
        %v10541 = vadd.f32 %v10380, %v10540
        %v10542 = vpop.f32.mrb[0].mxu0
        %v10543 = vpop.f32.mrb[0].mxu0
        %v10544 = vadd.f32 %v10383, %v10543
        %v10545 = vpop.f32.mrb[0].mxu0
        %10546 = vmatprep.mubr.bf16.mxu0 0
        %10547 = vmatmul.mubr.bf16.gmra.mrb[0].mxu0 %v10276
        %v10548 = vpop.f32.mrb[0].mxu0
        %v10549 = vadd.f32 %v10388, %v10548
        %v10550 = vpop.f32.mrb[0].mxu0
        %v10551 = vpop.f32.mrb[0].mxu0
        %v10552 = vadd.f32 %v10391, %v10551
        %v10553 = vpop.f32.mrb[0].mxu0
        %10554 = vmatprep.mubr.bf16.mxu0 0
        %10555 = vmatmul.mubr.bf16.gmra.mrb[0].mxu0 %v10279
        %v10556 = vpop.f32.mrb[0].mxu0
        %v10557 = vadd.f32 %v10396, %v10556
        %v10558 = vpop.f32.mrb[0].mxu0
        %v10559 = vpop.f32.mrb[0].mxu0
        %v10560 = vadd.f32 %v10399, %v10559
        %v10561 = vpop.f32.mrb[0].mxu0
        %10562 = vmatprep.mubr.bf16.mxu0 0
        %10563 = vmatmul.mubr.bf16.gmra.mrb[0].mxu0 %v10282
        %v10564 = vpop.f32.mrb[0].mxu0
        %v10565 = vadd.f32 %v10404, %v10564
        %v10566 = vpop.f32.mrb[0].mxu0
        %v10567 = vpop.f32.mrb[0].mxu0
        %v10568 = vadd.f32 %v10407, %v10567
        %v10569 = vpop.f32.mrb[0].mxu0
        %10570 = vmatprep.mubr.bf16.mxu0 0
        %10571 = vmatmul.mubr.bf16.gmra.mrb[0].mxu0 %v10285
        %v10572 = vpop.f32.mrb[0].mxu0
        %v10573 = vadd.f32 %v10412, %v10572
        %v10574 = vpop.f32.mrb[0].mxu0
        %v10575 = vpop.f32.mrb[0].mxu0
        %v10576 = vadd.f32 %v10415, %v10575
        %v10577 = vpop.f32.mrb[0].mxu0
        %10578 = vmatprep.mubr.bf16.mxu0 0
        %10579 = vmatmul.mubr.bf16.gmra.mrb[0].mxu0 %v10288
        %v10580 = vpop.f32.mrb[0].mxu0
        %v10581 = vadd.f32 %v10420, %v10580
        %v10582 = vpop.f32.mrb[0].mxu0
        %v10583 = vpop.f32.mrb[0].mxu0
        %v10584 = vadd.f32 %v10423, %v10583
        %v10585 = vpop.f32.mrb[0].mxu0
        %10586 = vmatprep.mubr.bf16.mxu0 0
        %10587 = vmatmul.mubr.bf16.gmra.mrb[0].mxu0 %v10291
        %v10588 = vpop.f32.mrb[0].mxu0
        %v10589 = vadd.f32 %v10428, %v10588
        %v10590 = vpop.f32.mrb[0].mxu0
        %v10591 = vpop.f32.mrb[0].mxu0
        %v10592 = vadd.f32 %v10431, %v10591
        %v10593 = vpop.f32.mrb[0].mxu0
        %10594 = vmatprep.mubr.bf16.mxu0 0
        %10595 = vmatmul.mubr.bf16.gmra.mrb[0].mxu0 %v10294
        %v10596 = vpop.f32.mrb[0].mxu0
        %v10597 = vadd.f32 %v10436, %v10596
        %v10598 = vpop.f32.mrb[0].mxu0
        %v10599 = vpop.f32.mrb[0].mxu0
        %v10600 = vadd.f32 %v10439, %v10599
        %v10601 = vpop.f32.mrb[0].mxu0
        %10602 = vmatprep.mubr.bf16.mxu0 0
        %10603 = vmatmul.mubr.bf16.gmra.mrb[0].mxu0 %v10297
        %v10604 = vpop.f32.mrb[0].mxu0
        %v10605 = vadd.f32 %v10444, %v10604
        %v10606 = vpop.f32.mrb[0].mxu0
        %v10607 = vpop.f32.mrb[0].mxu0
        %v10608 = vadd.f32 %v10447, %v10607
        %v10609 = vpop.f32.mrb[0].mxu0
        %10610 = vmatprep.mubr.bf16.mxu0 0
        %10611 = vmatmul.mubr.bf16.gmra.mrb[0].mxu0 %v10300
        %v10612 = vpop.f32.mrb[0].mxu0
        %v10613 = vadd.f32 %v10452, %v10612
        %v10614 = vpop.f32.mrb[0].mxu0
        %v10615 = vpop.f32.mrb[0].mxu0
        %v10616 = vadd.f32 %v10455, %v10615
        %v10617 = vpop.f32.mrb[0].mxu0
        %10618 = vmatprep.mubr.bf16.mxu0 0
        %10619 = vmatmul.mubr.bf16.gmra.mrb[0].mxu0 %v10303
        %v10620 = vpop.f32.mrb[0].mxu0
        %v10621 = vadd.f32 %v10460, %v10620
        %v10622 = vpop.f32.mrb[0].mxu0
        %v10623 = vpop.f32.mrb[0].mxu0
        %v10624 = vadd.f32 %v10463, %v10623
        %v10625 = vpop.f32.mrb[0].mxu0
        %10626 = vdwg.mxu0
        %v10627 = vmax.f32 %v10501, 0.0
        %v10628 = vmax.f32 %v10504, 0.0
        %v10629 = vmax.f32 %v10509, 0.0
        %v10630 = vmax.f32 %v10512, 0.0
        %v10631 = vmax.f32 %v10517, 0.0
        %v10632 = vmax.f32 %v10520, 0.0
        %v10633 = vmax.f32 %v10525, 0.0
        %v10634 = vmax.f32 %v10528, 0.0
        %v10635 = vmax.f32 %v10533, 0.0
        %v10636 = vmax.f32 %v10536, 0.0
        %v10637 = vmax.f32 %v10541, 0.0
        %v10638 = vmax.f32 %v10544, 0.0
        %v10639 = vmax.f32 %v10549, 0.0
        %v10640 = vmax.f32 %v10552, 0.0
        %v10641 = vmax.f32 %v10557, 0.0
        %v10642 = vmax.f32 %v10560, 0.0
        %v10643 = vmax.f32 %v10565, 0.0
        %v10644 = vmax.f32 %v10568, 0.0
        %v10645 = vmax.f32 %v10573, 0.0
        %v10646 = vmax.f32 %v10576, 0.0
        %v10647 = vmax.f32 %v10581, 0.0
        %v10648 = vmax.f32 %v10584, 0.0
        %v10649 = vmax.f32 %v10589, 0.0
        %v10650 = vmax.f32 %v10592, 0.0
        %v10651 = vmax.f32 %v10597, 0.0
        %v10652 = vmax.f32 %v10600, 0.0
        %v10653 = vmax.f32 %v10605, 0.0
        %v10654 = vmax.f32 %v10608, 0.0
        %v10655 = vmax.f32 %v10613, 0.0
        %v10656 = vmax.f32 %v10616, 0.0
        %v10657 = vmax.f32 %v10621, 0.0
        %v10658 = vmax.f32 %v10624, 0.0
        %v10659 = vld [vmem:[%s9] sm:$0x1]
        %v10661 = vlaneseq
        %v10662 = vshrl.u32 %v10661, 7
        %v10663 = vsub.s32 0, %v10662
        %v10664 = vrot.slane %v10659, %v10663
        %v10666 = vmul.f32 %v10627, %v10664
        %v10667 = vmul.f32 %v10628, %v10664
        %v10668 = vmul.f32 %v10629, %v10664
        %v10669 = vmul.f32 %v10630, %v10664
        %v10670 = vmul.f32 %v10631, %v10664
        %v10671 = vmul.f32 %v10632, %v10664
        %v10672 = vmul.f32 %v10633, %v10664
        %v10673 = vmul.f32 %v10634, %v10664
        %v10674 = vmul.f32 %v10635, %v10664
        %v10675 = vmul.f32 %v10636, %v10664
        %v10676 = vmul.f32 %v10637, %v10664
        %v10677 = vmul.f32 %v10638, %v10664
        %v10678 = vmul.f32 %v10639, %v10664
        %v10679 = vmul.f32 %v10640, %v10664
        %v10680 = vmul.f32 %v10641, %v10664
        %v10681 = vmul.f32 %v10642, %v10664
        %v10682 = vmul.f32 %v10643, %v10664
        %v10683 = vmul.f32 %v10644, %v10664
        %v10684 = vmul.f32 %v10645, %v10664
        %v10685 = vmul.f32 %v10646, %v10664
        %v10686 = vmul.f32 %v10647, %v10664
        %v10687 = vmul.f32 %v10648, %v10664
        %v10688 = vmul.f32 %v10649, %v10664
        %v10689 = vmul.f32 %v10650, %v10664
        %v10690 = vmul.f32 %v10651, %v10664
        %v10691 = vmul.f32 %v10652, %v10664
        %v10692 = vmul.f32 %v10653, %v10664
        %v10693 = vmul.f32 %v10654, %v10664
        %v10694 = vmul.f32 %v10655, %v10664
        %v10695 = vmul.f32 %v10656, %v10664
        %v10696 = vmul.f32 %v10657, %v10664
        %v10697 = vmul.f32 %v10658, %v10664
        %v10698 = vsel %vm5889, %v10666, 0.0
        %10699 = vadd.xlane.f32.xlu0 %v10698
        %v10700 = vpop.xlane.xlu0 %10699
        %v10701 = vsel %vm5889, %v10667, 0.0
        %10702 = vadd.xlane.f32.xlu0 %v10701
        %v10703 = vpop.xlane.xlu0 %10702
        %v10704 = vsel %vm5889, %v10668, 0.0
        %10705 = vadd.xlane.f32.xlu0 %v10704
        %v10706 = vpop.xlane.xlu0 %10705
        %v10707 = vsel %vm5889, %v10669, 0.0
        %10708 = vadd.xlane.f32.xlu0 %v10707
        %v10709 = vpop.xlane.xlu0 %10708
        %v10710 = vsel %vm5889, %v10670, 0.0
        %10711 = vadd.xlane.f32.xlu0 %v10710
        %v10712 = vpop.xlane.xlu0 %10711
        %v10713 = vsel %vm5889, %v10671, 0.0
        %10714 = vadd.xlane.f32.xlu0 %v10713
        %v10715 = vpop.xlane.xlu0 %10714
        %v10716 = vsel %vm5889, %v10672, 0.0
        %10717 = vadd.xlane.f32.xlu0 %v10716
        %v10718 = vpop.xlane.xlu0 %10717
        %v10719 = vsel %vm5889, %v10673, 0.0
        %10720 = vadd.xlane.f32.xlu0 %v10719
        %v10721 = vpop.xlane.xlu0 %10720
        %v10722 = vsel %vm5889, %v10674, 0.0
        %10723 = vadd.xlane.f32.xlu0 %v10722
        %v10724 = vpop.xlane.xlu0 %10723
        %v10725 = vsel %vm5889, %v10675, 0.0
        %10726 = vadd.xlane.f32.xlu0 %v10725
        %v10727 = vpop.xlane.xlu0 %10726
        %v10728 = vsel %vm5889, %v10676, 0.0
        %10729 = vadd.xlane.f32.xlu0 %v10728
        %v10730 = vpop.xlane.xlu0 %10729
        %v10731 = vsel %vm5889, %v10677, 0.0
        %10732 = vadd.xlane.f32.xlu0 %v10731
        %v10733 = vpop.xlane.xlu0 %10732
        %v10734 = vsel %vm5889, %v10678, 0.0
        %10735 = vadd.xlane.f32.xlu0 %v10734
        %v10736 = vpop.xlane.xlu0 %10735
        %v10737 = vsel %vm5889, %v10679, 0.0
        %10738 = vadd.xlane.f32.xlu0 %v10737
        %v10739 = vpop.xlane.xlu0 %10738
        %v10740 = vsel %vm5889, %v10680, 0.0
        %10741 = vadd.xlane.f32.xlu0 %v10740
        %v10742 = vpop.xlane.xlu0 %10741
        %v10743 = vsel %vm5889, %v10681, 0.0
        %10744 = vadd.xlane.f32.xlu0 %v10743
        %v10745 = vpop.xlane.xlu0 %10744
        %v10746 = vsel %vm5889, %v10682, 0.0
        %10747 = vadd.xlane.f32.xlu0 %v10746
        %v10748 = vpop.xlane.xlu0 %10747
        %v10749 = vsel %vm5889, %v10683, 0.0
        %10750 = vadd.xlane.f32.xlu0 %v10749
        %v10751 = vpop.xlane.xlu0 %10750
        %v10752 = vsel %vm5889, %v10684, 0.0
        %10753 = vadd.xlane.f32.xlu0 %v10752
        %v10754 = vpop.xlane.xlu0 %10753
        %v10755 = vsel %vm5889, %v10685, 0.0
        %10756 = vadd.xlane.f32.xlu0 %v10755
        %v10757 = vpop.xlane.xlu0 %10756
        %v10758 = vsel %vm5889, %v10686, 0.0
        %10759 = vadd.xlane.f32.xlu0 %v10758
        %v10760 = vpop.xlane.xlu0 %10759
        %v10761 = vsel %vm5889, %v10687, 0.0
        %10762 = vadd.xlane.f32.xlu0 %v10761
        %v10763 = vpop.xlane.xlu0 %10762
        %v10764 = vsel %vm5889, %v10688, 0.0
        %10765 = vadd.xlane.f32.xlu0 %v10764
        %v10766 = vpop.xlane.xlu0 %10765
        %v10767 = vsel %vm5889, %v10689, 0.0
        %10768 = vadd.xlane.f32.xlu0 %v10767
        %v10769 = vpop.xlane.xlu0 %10768
        %v10770 = vsel %vm5889, %v10690, 0.0
        %10771 = vadd.xlane.f32.xlu0 %v10770
        %v10772 = vpop.xlane.xlu0 %10771
        %v10773 = vsel %vm5889, %v10691, 0.0
        %10774 = vadd.xlane.f32.xlu0 %v10773
        %v10775 = vpop.xlane.xlu0 %10774
        %v10776 = vsel %vm5889, %v10692, 0.0
        %10777 = vadd.xlane.f32.xlu0 %v10776
        %v10778 = vpop.xlane.xlu0 %10777
        %v10779 = vsel %vm5889, %v10693, 0.0
        %10780 = vadd.xlane.f32.xlu0 %v10779
        %v10781 = vpop.xlane.xlu0 %10780
        %v10782 = vsel %vm5889, %v10694, 0.0
        %10783 = vadd.xlane.f32.xlu0 %v10782
        %v10784 = vpop.xlane.xlu0 %10783
        %v10785 = vsel %vm5889, %v10695, 0.0
        %10786 = vadd.xlane.f32.xlu0 %v10785
        %v10787 = vpop.xlane.xlu0 %10786
        %v10788 = vsel %vm5889, %v10696, 0.0
        %10789 = vadd.xlane.f32.xlu0 %v10788
        %v10790 = vpop.xlane.xlu0 %10789
        %v10791 = vsel %vm5889, %v10697, 0.0
        %10792 = vadd.xlane.f32.xlu0 %v10791
        %v10793 = vpop.xlane.xlu0 %10792
        %v10794 = vld [vmem:[#allocation4] sm:$0x1]
        %v10796 = vlaneseq
        %v10797 = vshrl.u32 %v10796, 7
        %v10798 = vsub.s32 0, %v10797
        %v10799 = vrot.slane %v10794, %v10798
        %v10801 = vadd.f32 %v10700, %v10799
        %v10802 = vadd.f32 %v10703, %v10799
        %v10803 = vadd.f32 %v10706, %v10799
        %v10804 = vadd.f32 %v10709, %v10799
        %v10805 = vadd.f32 %v10712, %v10799
        %v10806 = vadd.f32 %v10715, %v10799
        %v10807 = vadd.f32 %v10718, %v10799
        %v10808 = vadd.f32 %v10721, %v10799
        %v10809 = vadd.f32 %v10724, %v10799
        %v10810 = vadd.f32 %v10727, %v10799
        %v10811 = vadd.f32 %v10730, %v10799
        %v10812 = vadd.f32 %v10733, %v10799
        %v10813 = vadd.f32 %v10736, %v10799
        %v10814 = vadd.f32 %v10739, %v10799
        %v10815 = vadd.f32 %v10742, %v10799
        %v10816 = vadd.f32 %v10745, %v10799
        %v10817 = vadd.f32 %v10748, %v10799
        %v10818 = vadd.f32 %v10751, %v10799
        %v10819 = vadd.f32 %v10754, %v10799
        %v10820 = vadd.f32 %v10757, %v10799
        %v10821 = vadd.f32 %v10760, %v10799
        %v10822 = vadd.f32 %v10763, %v10799
        %v10823 = vadd.f32 %v10766, %v10799
        %v10824 = vadd.f32 %v10769, %v10799
        %v10825 = vadd.f32 %v10772, %v10799
        %v10826 = vadd.f32 %v10775, %v10799
        %v10827 = vadd.f32 %v10778, %v10799
        %v10828 = vadd.f32 %v10781, %v10799
        %v10829 = vadd.f32 %v10784, %v10799
        %v10830 = vadd.f32 %v10787, %v10799
        %v10831 = vadd.f32 %v10790, %v10799
        %v10832 = vadd.f32 %v10793, %v10799
        %v10833 = vxor.u32 %v10801, 2147483648
        %v10834 = vxor.u32 %v10802, 2147483648
        %v10835 = vxor.u32 %v10803, 2147483648
        %v10836 = vxor.u32 %v10804, 2147483648
        %v10837 = vxor.u32 %v10805, 2147483648
        %v10838 = vxor.u32 %v10806, 2147483648
        %v10839 = vxor.u32 %v10807, 2147483648
        %v10840 = vxor.u32 %v10808, 2147483648
        %v10841 = vxor.u32 %v10809, 2147483648
        %v10842 = vxor.u32 %v10810, 2147483648
        %v10843 = vxor.u32 %v10811, 2147483648
        %v10844 = vxor.u32 %v10812, 2147483648
        %v10845 = vxor.u32 %v10813, 2147483648
        %v10846 = vxor.u32 %v10814, 2147483648
        %v10847 = vxor.u32 %v10815, 2147483648
        %v10848 = vxor.u32 %v10816, 2147483648
        %v10849 = vxor.u32 %v10817, 2147483648
        %v10850 = vxor.u32 %v10818, 2147483648
        %v10851 = vxor.u32 %v10819, 2147483648
        %v10852 = vxor.u32 %v10820, 2147483648
        %v10853 = vxor.u32 %v10821, 2147483648
        %v10854 = vxor.u32 %v10822, 2147483648
        %v10855 = vxor.u32 %v10823, 2147483648
        %v10856 = vxor.u32 %v10824, 2147483648
        %v10857 = vxor.u32 %v10825, 2147483648
        %v10858 = vxor.u32 %v10826, 2147483648
        %v10859 = vxor.u32 %v10827, 2147483648
        %v10860 = vxor.u32 %v10828, 2147483648
        %v10861 = vxor.u32 %v10829, 2147483648
        %v10862 = vxor.u32 %v10830, 2147483648
        %v10863 = vxor.u32 %v10831, 2147483648
        %v10864 = vxor.u32 %v10832, 2147483648
        %v10865 = vmul.f32 %v10833, 1.442695
        %v10866 = vpow.pop %v10865
        %v10867 = vmul.f32 %v10834, 1.442695
        %v10868 = vpow.pop %v10867
        %v10869 = vmul.f32 %v10835, 1.442695
        %v10870 = vpow.pop %v10869
        %v10871 = vmul.f32 %v10836, 1.442695
        %v10872 = vpow.pop %v10871
        %v10873 = vmul.f32 %v10837, 1.442695
        %v10874 = vpow.pop %v10873
        %v10875 = vmul.f32 %v10838, 1.442695
        %v10876 = vpow.pop %v10875
        %v10877 = vmul.f32 %v10839, 1.442695
        %v10878 = vpow.pop %v10877
        %v10879 = vmul.f32 %v10840, 1.442695
        %v10880 = vpow.pop %v10879
        %v10881 = vmul.f32 %v10841, 1.442695
        %v10882 = vpow.pop %v10881
        %v10883 = vmul.f32 %v10842, 1.442695
        %v10884 = vpow.pop %v10883
        %v10885 = vmul.f32 %v10843, 1.442695
        %v10886 = vpow.pop %v10885
        %v10887 = vmul.f32 %v10844, 1.442695
        %v10888 = vpow.pop %v10887
        %v10889 = vmul.f32 %v10845, 1.442695
        %v10890 = vpow.pop %v10889
        %v10891 = vmul.f32 %v10846, 1.442695
        %v10892 = vpow.pop %v10891
        %v10893 = vmul.f32 %v10847, 1.442695
        %v10894 = vpow.pop %v10893
        %v10895 = vmul.f32 %v10848, 1.442695
        %v10896 = vpow.pop %v10895
        %v10897 = vmul.f32 %v10849, 1.442695
        %v10898 = vpow.pop %v10897
        %v10899 = vmul.f32 %v10850, 1.442695
        %v10900 = vpow.pop %v10899
        %v10901 = vmul.f32 %v10851, 1.442695
        %v10902 = vpow.pop %v10901
        %v10903 = vmul.f32 %v10852, 1.442695
        %v10904 = vpow.pop %v10903
        %v10905 = vmul.f32 %v10853, 1.442695
        %v10906 = vpow.pop %v10905
        %v10907 = vmul.f32 %v10854, 1.442695
        %v10908 = vpow.pop %v10907
        %v10909 = vmul.f32 %v10855, 1.442695
        %v10910 = vpow.pop %v10909
        %v10911 = vmul.f32 %v10856, 1.442695
        %v10912 = vpow.pop %v10911
        %v10913 = vmul.f32 %v10857, 1.442695
        %v10914 = vpow.pop %v10913
        %v10915 = vmul.f32 %v10858, 1.442695
        %v10916 = vpow.pop %v10915
        %v10917 = vmul.f32 %v10859, 1.442695
        %v10918 = vpow.pop %v10917
        %v10919 = vmul.f32 %v10860, 1.442695
        %v10920 = vpow.pop %v10919
        %v10921 = vmul.f32 %v10861, 1.442695
        %v10922 = vpow.pop %v10921
        %v10923 = vmul.f32 %v10862, 1.442695
        %v10924 = vpow.pop %v10923
        %v10925 = vmul.f32 %v10863, 1.442695
        %v10926 = vpow.pop %v10925
        %v10927 = vmul.f32 %v10864, 1.442695
        %v10928 = vpow.pop %v10927
        %v10929 = vadd.f32 %v10866, 1.0
        %v10930 = vadd.f32 %v10868, 1.0
        %v10931 = vadd.f32 %v10870, 1.0
        %v10932 = vadd.f32 %v10872, 1.0
        %v10933 = vadd.f32 %v10874, 1.0
        %v10934 = vadd.f32 %v10876, 1.0
        %v10935 = vadd.f32 %v10878, 1.0
        %v10936 = vadd.f32 %v10880, 1.0
        %v10937 = vadd.f32 %v10882, 1.0
        %v10938 = vadd.f32 %v10884, 1.0
        %v10939 = vadd.f32 %v10886, 1.0
        %v10940 = vadd.f32 %v10888, 1.0
        %v10941 = vadd.f32 %v10890, 1.0
        %v10942 = vadd.f32 %v10892, 1.0
        %v10943 = vadd.f32 %v10894, 1.0
        %v10944 = vadd.f32 %v10896, 1.0
        %v10945 = vadd.f32 %v10898, 1.0
        %v10946 = vadd.f32 %v10900, 1.0
        %v10947 = vadd.f32 %v10902, 1.0
        %v10948 = vadd.f32 %v10904, 1.0
        %v10949 = vadd.f32 %v10906, 1.0
        %v10950 = vadd.f32 %v10908, 1.0
        %v10951 = vadd.f32 %v10910, 1.0
        %v10952 = vadd.f32 %v10912, 1.0
        %v10953 = vadd.f32 %v10914, 1.0
        %v10954 = vadd.f32 %v10916, 1.0
        %v10955 = vadd.f32 %v10918, 1.0
        %v10956 = vadd.f32 %v10920, 1.0
        %v10957 = vadd.f32 %v10922, 1.0
        %v10958 = vadd.f32 %v10924, 1.0
        %v10959 = vadd.f32 %v10926, 1.0
        %v10960 = vadd.f32 %v10928, 1.0
        %v10961 = vrcp.pop %v10929
        %v10962 = vmul.f32 1.0, %v10961
        %v10963 = vrcp.pop %v10930
        %v10964 = vmul.f32 1.0, %v10963
        %v10965 = vrcp.pop %v10931
        %v10966 = vmul.f32 1.0, %v10965
        %v10967 = vrcp.pop %v10932
        %v10968 = vmul.f32 1.0, %v10967
        %v10969 = vrcp.pop %v10933
        %v10970 = vmul.f32 1.0, %v10969
        %v10971 = vrcp.pop %v10934
        %v10972 = vmul.f32 1.0, %v10971
        %v10973 = vrcp.pop %v10935
        %v10974 = vmul.f32 1.0, %v10973
        %v10975 = vrcp.pop %v10936
        %v10976 = vmul.f32 1.0, %v10975
        %v10977 = vrcp.pop %v10937
        %v10978 = vmul.f32 1.0, %v10977
        %v10979 = vrcp.pop %v10938
        %v10980 = vmul.f32 1.0, %v10979
        %v10981 = vrcp.pop %v10939
        %v10982 = vmul.f32 1.0, %v10981
        %v10983 = vrcp.pop %v10940
        %v10984 = vmul.f32 1.0, %v10983
        %v10985 = vrcp.pop %v10941
        %v10986 = vmul.f32 1.0, %v10985
        %v10987 = vrcp.pop %v10942
        %v10988 = vmul.f32 1.0, %v10987
        %v10989 = vrcp.pop %v10943
        %v10990 = vmul.f32 1.0, %v10989
        %v10991 = vrcp.pop %v10944
        %v10992 = vmul.f32 1.0, %v10991
        %v10993 = vrcp.pop %v10945
        %v10994 = vmul.f32 1.0, %v10993
        %v10995 = vrcp.pop %v10946
        %v10996 = vmul.f32 1.0, %v10995
        %v10997 = vrcp.pop %v10947
        %v10998 = vmul.f32 1.0, %v10997
        %v10999 = vrcp.pop %v10948
        %v11000 = vmul.f32 1.0, %v10999
        %v11001 = vrcp.pop %v10949
        %v11002 = vmul.f32 1.0, %v11001
        %v11003 = vrcp.pop %v10950
        %v11004 = vmul.f32 1.0, %v11003
        %v11005 = vrcp.pop %v10951
        %v11006 = vmul.f32 1.0, %v11005
        %v11007 = vrcp.pop %v10952
        %v11008 = vmul.f32 1.0, %v11007
        %v11009 = vrcp.pop %v10953
        %v11010 = vmul.f32 1.0, %v11009
        %v11011 = vrcp.pop %v10954
        %v11012 = vmul.f32 1.0, %v11011
        %v11013 = vrcp.pop %v10955
        %v11014 = vmul.f32 1.0, %v11013
        %v11015 = vrcp.pop %v10956
        %v11016 = vmul.f32 1.0, %v11015
        %v11017 = vrcp.pop %v10957
        %v11018 = vmul.f32 1.0, %v11017
        %v11019 = vrcp.pop %v10958
        %v11020 = vmul.f32 1.0, %v11019
        %v11021 = vrcp.pop %v10959
        %v11022 = vmul.f32 1.0, %v11021
        %v11023 = vrcp.pop %v10960
        %v11024 = vmul.f32 1.0, %v11023
        %v11025 = vld [vmem:[%s11] sm:$0xff]
        %v11026 = vld [vmem:[%s11 + $0x8] sm:$0xff]
        %v11027 = vld [vmem:[%s11 + $0x10] sm:$0xff]
        %v11028 = vld [vmem:[%s11 + $0x18] sm:$0xff]
        %v11029 = vld [vmem:[%s11 + $0x20] sm:$0xff]
        %v11030 = vld [vmem:[%s11 + $0x28] sm:$0xff]
        %v11031 = vld [vmem:[%s11 + $0x30] sm:$0xff]
        %v11032 = vld [vmem:[%s11 + $0x38] sm:$0xff]
        %v11033 = vld [vmem:[%s12] sm:$0xff]
        %v11034 = vld [vmem:[%s12 + $0x8] sm:$0xff]
        %v11035 = vld [vmem:[%s12 + $0x10] sm:$0xff]
        %v11036 = vld [vmem:[%s12 + $0x18] sm:$0xff]
        %v11037 = vld [vmem:[%s12 + $0x20] sm:$0xff]
        %v11038 = vld [vmem:[%s12 + $0x28] sm:$0xff]
        %v11039 = vld [vmem:[%s12 + $0x30] sm:$0xff]
        %v11040 = vld [vmem:[%s12 + $0x38] sm:$0xff]
        %v11041 = vld [vmem:[%s12 + $0x40] sm:$0xff]
        %v11042 = vld [vmem:[%s12 + $0x48] sm:$0xff]
        %v11043 = vld [vmem:[%s12 + $0x50] sm:$0xff]
        %v11044 = vld [vmem:[%s12 + $0x58] sm:$0xff]
        %v11045 = vld [vmem:[%s12 + $0x60] sm:$0xff]
        %v11046 = vld [vmem:[%s12 + $0x68] sm:$0xff]
        %v11047 = vld [vmem:[%s12 + $0x70] sm:$0xff]
        %v11048 = vld [vmem:[%s12 + $0x78] sm:$0xff]
        %v11049 = vld [vmem:[%s12 + $0x80] sm:$0xff]
        %v11050 = vld [vmem:[%s12 + $0x88] sm:$0xff]
        %v11051 = vld [vmem:[%s12 + $0x90] sm:$0xff]
        %v11052 = vld [vmem:[%s12 + $0x98] sm:$0xff]
        %v11053 = vld [vmem:[%s12 + $0xa0] sm:$0xff]
        %v11054 = vld [vmem:[%s12 + $0xa8] sm:$0xff]
        %v11055 = vld [vmem:[%s12 + $0xb0] sm:$0xff]
        %v11056 = vld [vmem:[%s12 + $0xb8] sm:$0xff]
        %v11057 = vld [vmem:[%s12 + $0xc0] sm:$0xff]
        %v11058 = vld [vmem:[%s12 + $0xc8] sm:$0xff]
        %v11059 = vld [vmem:[%s12 + $0xd0] sm:$0xff]
        %v11060 = vld [vmem:[%s12 + $0xd8] sm:$0xff]
        %v11061 = vld [vmem:[%s12 + $0xe0] sm:$0xff]
        %v11062 = vld [vmem:[%s12 + $0xe8] sm:$0xff]
        %v11063 = vld [vmem:[%s12 + $0xf0] sm:$0xff]
        %v11064 = vld [vmem:[%s12 + $0xf8] sm:$0xff]
        %11066 = vset.pattern.permute.xlu0 0
        %11067 = vperm.xlu0 %11066, %v10962
        %v11068 = vpop.permute.xlu0 %11067
        %11071 = vset.pattern.permute.xlu0 0
        %11072 = vperm.xlu0 %11071, %v10964
        %v11073 = vpop.permute.xlu0 %11072
        %11076 = vset.pattern.permute.xlu0 0
        %11077 = vperm.xlu0 %11076, %v10966
        %v11078 = vpop.permute.xlu0 %11077
        %11081 = vset.pattern.permute.xlu0 0
        %11082 = vperm.xlu0 %11081, %v10968
        %v11083 = vpop.permute.xlu0 %11082
        %11086 = vset.pattern.permute.xlu0 0
        %11087 = vperm.xlu0 %11086, %v10970
        %v11088 = vpop.permute.xlu0 %11087
        %11091 = vset.pattern.permute.xlu0 0
        %11092 = vperm.xlu0 %11091, %v10972
        %v11093 = vpop.permute.xlu0 %11092
        %11096 = vset.pattern.permute.xlu0 0
        %11097 = vperm.xlu0 %11096, %v10974
        %v11098 = vpop.permute.xlu0 %11097
        %11101 = vset.pattern.permute.xlu0 0
        %11102 = vperm.xlu0 %11101, %v10976
        %v11103 = vpop.permute.xlu0 %11102
        %11106 = vset.pattern.permute.xlu0 0
        %11107 = vperm.xlu0 %11106, %v10978
        %v11108 = vpop.permute.xlu0 %11107
        %11111 = vset.pattern.permute.xlu0 0
        %11112 = vperm.xlu0 %11111, %v10980
        %v11113 = vpop.permute.xlu0 %11112
        %11116 = vset.pattern.permute.xlu0 0
        %11117 = vperm.xlu0 %11116, %v10982
        %v11118 = vpop.permute.xlu0 %11117
        %11121 = vset.pattern.permute.xlu0 0
        %11122 = vperm.xlu0 %11121, %v10984
        %v11123 = vpop.permute.xlu0 %11122
        %11126 = vset.pattern.permute.xlu0 0
        %11127 = vperm.xlu0 %11126, %v10986
        %v11128 = vpop.permute.xlu0 %11127
        %11131 = vset.pattern.permute.xlu0 0
        %11132 = vperm.xlu0 %11131, %v10988
        %v11133 = vpop.permute.xlu0 %11132
        %11136 = vset.pattern.permute.xlu0 0
        %11137 = vperm.xlu0 %11136, %v10990
        %v11138 = vpop.permute.xlu0 %11137
        %11141 = vset.pattern.permute.xlu0 0
        %11142 = vperm.xlu0 %11141, %v10992
        %v11143 = vpop.permute.xlu0 %11142
        %11146 = vset.pattern.permute.xlu0 0
        %11147 = vperm.xlu0 %11146, %v10994
        %v11148 = vpop.permute.xlu0 %11147
        %11151 = vset.pattern.permute.xlu0 0
        %11152 = vperm.xlu0 %11151, %v10996
        %v11153 = vpop.permute.xlu0 %11152
        %11156 = vset.pattern.permute.xlu0 0
        %11157 = vperm.xlu0 %11156, %v10998
        %v11158 = vpop.permute.xlu0 %11157
        %11161 = vset.pattern.permute.xlu0 0
        %11162 = vperm.xlu0 %11161, %v11000
        %v11163 = vpop.permute.xlu0 %11162
        %11166 = vset.pattern.permute.xlu0 0
        %11167 = vperm.xlu0 %11166, %v11002
        %v11168 = vpop.permute.xlu0 %11167
        %11171 = vset.pattern.permute.xlu0 0
        %11172 = vperm.xlu0 %11171, %v11004
        %v11173 = vpop.permute.xlu0 %11172
        %11176 = vset.pattern.permute.xlu0 0
        %11177 = vperm.xlu0 %11176, %v11006
        %v11178 = vpop.permute.xlu0 %11177
        %11181 = vset.pattern.permute.xlu0 0
        %11182 = vperm.xlu0 %11181, %v11008
        %v11183 = vpop.permute.xlu0 %11182
        %11186 = vset.pattern.permute.xlu0 0
        %11187 = vperm.xlu0 %11186, %v11010
        %v11188 = vpop.permute.xlu0 %11187
        %11191 = vset.pattern.permute.xlu0 0
        %11192 = vperm.xlu0 %11191, %v11012
        %v11193 = vpop.permute.xlu0 %11192
        %11196 = vset.pattern.permute.xlu0 0
        %11197 = vperm.xlu0 %11196, %v11014
        %v11198 = vpop.permute.xlu0 %11197
        %11201 = vset.pattern.permute.xlu0 0
        %11202 = vperm.xlu0 %11201, %v11016
        %v11203 = vpop.permute.xlu0 %11202
        %11206 = vset.pattern.permute.xlu0 0
        %11207 = vperm.xlu0 %11206, %v11018
        %v11208 = vpop.permute.xlu0 %11207
        %11211 = vset.pattern.permute.xlu0 0
        %11212 = vperm.xlu0 %11211, %v11020
        %v11213 = vpop.permute.xlu0 %11212
        %11216 = vset.pattern.permute.xlu0 0
        %11217 = vperm.xlu0 %11216, %v11022
        %v11218 = vpop.permute.xlu0 %11217
        %11221 = vset.pattern.permute.xlu0 0
        %11222 = vperm.xlu0 %11221, %v11024
        %v11223 = vpop.permute.xlu0 %11222
        %v11225 = vmul.f32 %v11068, %v11033
        %v11226 = vmul.f32 %v11073, %v11034
        %v11227 = vmul.f32 %v11078, %v11035
        %v11228 = vmul.f32 %v11083, %v11036
        %v11229 = vmul.f32 %v11088, %v11037
        %v11230 = vmul.f32 %v11093, %v11038
        %v11231 = vmul.f32 %v11098, %v11039
        %v11232 = vmul.f32 %v11103, %v11040
        %v11233 = vmul.f32 %v11108, %v11041
        %v11234 = vmul.f32 %v11113, %v11042
        %v11235 = vmul.f32 %v11118, %v11043
        %v11236 = vmul.f32 %v11123, %v11044
        %v11237 = vmul.f32 %v11128, %v11045
        %v11238 = vmul.f32 %v11133, %v11046
        %v11239 = vmul.f32 %v11138, %v11047
        %v11240 = vmul.f32 %v11143, %v11048
        %v11241 = vmul.f32 %v11148, %v11049
        %v11242 = vmul.f32 %v11153, %v11050
        %v11243 = vmul.f32 %v11158, %v11051
        %v11244 = vmul.f32 %v11163, %v11052
        %v11245 = vmul.f32 %v11168, %v11053
        %v11246 = vmul.f32 %v11173, %v11054
        %v11247 = vmul.f32 %v11178, %v11055
        %v11248 = vmul.f32 %v11183, %v11056
        %v11249 = vmul.f32 %v11188, %v11057
        %v11250 = vmul.f32 %v11193, %v11058
        %v11251 = vmul.f32 %v11198, %v11059
        %v11252 = vmul.f32 %v11203, %v11060
        %v11253 = vmul.f32 %v11208, %v11061
        %v11254 = vmul.f32 %v11213, %v11062
        %v11255 = vmul.f32 %v11218, %v11063
        %v11256 = vmul.f32 %v11223, %v11064
        %11257 = vmatprep.subr.mxu0 0.0
        %11258 = vmatpush1.msra.mxu0 %v11225
        %11259 = vmatprep.subr.mxu0 0.0
        %11260 = vmatpush1.msra.mxu0 %v11226
        %11261 = vmatprep.subr.mxu0 0.0
        %11262 = vmatpush1.msra.mxu0 %v11227
        %11263 = vmatprep.subr.mxu0 0.0
        %11264 = vmatpush1.msra.mxu0 %v11228
        %11265 = vmatprep.subr.mxu0 0.0
        %11266 = vmatpush1.msra.mxu0 %v11229
        %11267 = vmatprep.subr.mxu0 0.0
        %11268 = vmatpush1.msra.mxu0 %v11230
        %11269 = vmatprep.subr.mxu0 0.0
        %11270 = vmatpush1.msra.mxu0 %v11231
        %11271 = vmatprep.subr.mxu0 0.0
        %11272 = vmatpush1.msra.mxu0 %v11232
        %11273 = vmatprep.subr.mxu0 0.0
        %11274 = vmatpush1.msra.mxu0 %v11233
        %11275 = vmatprep.subr.mxu0 0.0
        %11276 = vmatpush1.msra.mxu0 %v11234
        %11277 = vmatprep.subr.mxu0 0.0
        %11278 = vmatpush1.msra.mxu0 %v11235
        %11279 = vmatprep.subr.mxu0 0.0
        %11280 = vmatpush1.msra.mxu0 %v11236
        %11281 = vmatprep.subr.mxu0 0.0
        %11282 = vmatpush1.msra.mxu0 %v11237
        %11283 = vmatprep.subr.mxu0 0.0
        %11284 = vmatpush1.msra.mxu0 %v11238
        %11285 = vmatprep.subr.mxu0 0.0
        %11286 = vmatpush1.msra.mxu0 %v11239
        %11287 = vmatprep.subr.mxu0 0.0
        %11288 = vmatpush1.msra.mxu0 %v11240
        %11289 = vmatprep.subr.mxu0 0.0
        %11290 = vmatpush1.msra.mxu0 %v11241
        %11291 = vmatprep.subr.mxu0 0.0
        %11292 = vmatpush1.msra.mxu0 %v11242
        %11293 = vmatprep.subr.mxu0 0.0
        %11294 = vmatpush1.msra.mxu0 %v11243
        %11295 = vmatprep.subr.mxu0 0.0
        %11296 = vmatpush1.msra.mxu0 %v11244
        %11297 = vmatprep.subr.mxu0 0.0
        %11298 = vmatpush1.msra.mxu0 %v11245
        %11299 = vmatprep.subr.mxu0 0.0
        %11300 = vmatpush1.msra.mxu0 %v11246
        %11301 = vmatprep.subr.mxu0 0.0
        %11302 = vmatpush1.msra.mxu0 %v11247
        %11303 = vmatprep.subr.mxu0 0.0
        %11304 = vmatpush1.msra.mxu0 %v11248
        %11305 = vmatprep.subr.mxu0 0.0
        %11306 = vmatpush1.msra.mxu0 %v11249
        %11307 = vmatprep.subr.mxu0 0.0
        %11308 = vmatpush1.msra.mxu0 %v11250
        %11309 = vmatprep.subr.mxu0 0.0
        %11310 = vmatpush1.msra.mxu0 %v11251
        %11311 = vmatprep.subr.mxu0 0.0
        %11312 = vmatpush1.msra.mxu0 %v11252
        %11313 = vmatprep.subr.mxu0 0.0
        %11314 = vmatpush1.msra.mxu0 %v11253
        %11315 = vmatprep.subr.mxu0 0.0
        %11316 = vmatpush1.msra.mxu0 %v11254
        %11317 = vmatprep.subr.mxu0 0.0
        %11318 = vmatpush1.msra.mxu0 %v11255
        %11319 = vmatprep.subr.mxu0 0.0
        %11320 = vmatpush1.msra.mxu0 %v11256
        %11321 = vmatprep.mubr.f32.mxu0 %v11026
        %11322 = vmatmul.mubr.f32.gmra.mrb[0].mxu0 %v11025
        %v11323 = vpop.f32.mrb[0].mxu0
        %v11324 = vadd.f32 0.0, %v11323
        %v11325 = vpop.f32.mrb[0].mxu0
        %11326 = vmatprep.mubr.f32.mxu0 %v11028
        %11327 = vmatmul.mubr.f32.gmra.mrb[0].mxu0 %v11027
        %v11328 = vpop.f32.mrb[0].mxu0
        %v11329 = vadd.f32 0.0, %v11328
        %v11330 = vpop.f32.mrb[0].mxu0
        %11331 = vmatprep.mubr.f32.mxu0 %v11030
        %11332 = vmatmul.mubr.f32.gmra.mrb[0].mxu0 %v11029
        %v11333 = vpop.f32.mrb[0].mxu0
        %v11334 = vadd.f32 0.0, %v11333
        %v11335 = vpop.f32.mrb[0].mxu0
        %11336 = vmatprep.mubr.f32.mxu0 %v11032
        %11337 = vmatmul.mubr.f32.gmra.mrb[0].mxu0 %v11031
        %v11338 = vpop.f32.mrb[0].mxu0
        %v11339 = vadd.f32 0.0, %v11338
        %v11340 = vpop.f32.mrb[0].mxu0
        %11341 = vdwg.mxu0
        %v11342 = vld [vmem:[%s13] sm:$0xff]
        %v11343 = vld [vmem:[%s13 + $0x8] sm:$0xff]
        %v11345 = vsel %vm5889, %v11324, 0
        %v11348 = vsel %vm5889, %v11329, 0
        %v11351 = vsel %vm5889, %v11334, 0
        %v11354 = vsel %vm5889, %v11339, 0
        %11356 = vmatprep.subr.mxu0 0.0
        %11357 = vmatpush1.msra.mxu0 %v11342
        %11358 = vmatprep.subr.mxu0 0.0
        %11359 = vmatpush1.msra.mxu0 %v11343
        %11360 = vmatprep.subr.mxu0 0.0
        %11361 = vmatpush1.msra.mxu0 0.0
        %11362 = vmatprep.subr.mxu0 0.0
        %11363 = vmatpush1.msra.mxu0 0.0
        %11364 = vmatprep.subr.mxu0 0.0
        %11365 = vmatpush1.msra.mxu0 0.0
        %11366 = vmatprep.subr.mxu0 0.0
        %11367 = vmatpush1.msra.mxu0 0.0
        %11368 = vmatprep.subr.mxu0 0.0
        %11369 = vmatpush1.msra.mxu0 0.0
        %11370 = vmatprep.subr.mxu0 0.0
        %11371 = vmatpush1.msra.mxu0 0.0
        %11372 = vmatprep.subr.mxu0 0.0
        %11373 = vmatpush1.msra.mxu0 0.0
        %11374 = vmatprep.subr.mxu0 0.0
        %11375 = vmatpush1.msra.mxu0 0.0
        %11376 = vmatprep.subr.mxu0 0.0
        %11377 = vmatpush1.msra.mxu0 0.0
        %11378 = vmatprep.subr.mxu0 0.0
        %11379 = vmatpush1.msra.mxu0 0.0
        %11380 = vmatprep.subr.mxu0 0.0
        %11381 = vmatpush1.msra.mxu0 0.0
        %11382 = vmatprep.subr.mxu0 0.0
        %11383 = vmatpush1.msra.mxu0 0.0
        %11384 = vmatprep.subr.mxu0 0.0
        %11385 = vmatpush1.msra.mxu0 0.0
        %11386 = vmatprep.subr.mxu0 0.0
        %11387 = vmatpush1.msra.mxu0 0.0
        %11388 = vmatprep.subr.mxu0 0.0
        %11389 = vmatpush1.msra.mxu0 0.0
        %11390 = vmatprep.subr.mxu0 0.0
        %11391 = vmatpush1.msra.mxu0 0.0
        %11392 = vmatprep.subr.mxu0 0.0
        %11393 = vmatpush1.msra.mxu0 0.0
        %11394 = vmatprep.subr.mxu0 0.0
        %11395 = vmatpush1.msra.mxu0 0.0
        %11396 = vmatprep.subr.mxu0 0.0
        %11397 = vmatpush1.msra.mxu0 0.0
        %11398 = vmatprep.subr.mxu0 0.0
        %11399 = vmatpush1.msra.mxu0 0.0
        %11400 = vmatprep.subr.mxu0 0.0
        %11401 = vmatpush1.msra.mxu0 0.0
        %11402 = vmatprep.subr.mxu0 0.0
        %11403 = vmatpush1.msra.mxu0 0.0
        %11404 = vmatprep.subr.mxu0 0.0
        %11405 = vmatpush1.msra.mxu0 0.0
        %11406 = vmatprep.subr.mxu0 0.0
        %11407 = vmatpush1.msra.mxu0 0.0
        %11408 = vmatprep.subr.mxu0 0.0
        %11409 = vmatpush1.msra.mxu0 0.0
        %11410 = vmatprep.subr.mxu0 0.0
        %11411 = vmatpush1.msra.mxu0 0.0
        %11412 = vmatprep.subr.mxu0 0.0
        %11413 = vmatpush1.msra.mxu0 0.0
        %11414 = vmatprep.subr.mxu0 0.0
        %11415 = vmatpush1.msra.mxu0 0.0
        %11416 = vmatprep.subr.mxu0 0.0
        %11417 = vmatpush1.msra.mxu0 0.0
        %11418 = vmatprep.subr.mxu0 0.0
        %11419 = vmatpush1.msra.mxu0 0.0
        %11420 = vmatprep.mubr.f32.mxu0 0.0
        %11421 = vmatmul.mubr.f32.gmra.mrb[0].mxu0 %v11345
        %v11422 = vpop.f32.mrb[0].mxu0
        %v11423 = vadd.f32 0.0, %v11422
        %v11424 = vpop.f32.mrb[0].mxu0
        %11425 = vmatprep.mubr.f32.mxu0 0.0
        %11426 = vmatmul.mubr.f32.gmra.mrb[0].mxu0 %v11348
        %v11427 = vpop.f32.mrb[0].mxu0
        %v11428 = vadd.f32 0.0, %v11427
        %v11429 = vpop.f32.mrb[0].mxu0
        %11430 = vmatprep.mubr.f32.mxu0 0.0
        %11431 = vmatmul.mubr.f32.gmra.mrb[0].mxu0 %v11351
        %v11432 = vpop.f32.mrb[0].mxu0
        %v11433 = vadd.f32 0.0, %v11432
        %v11434 = vpop.f32.mrb[0].mxu0
        %11435 = vmatprep.mubr.f32.mxu0 0.0
        %11436 = vmatmul.mubr.f32.gmra.mrb[0].mxu0 %v11354
        %v11437 = vpop.f32.mrb[0].mxu0
        %v11438 = vadd.f32 0.0, %v11437
        %v11439 = vpop.f32.mrb[0].mxu0
        %11440 = vdwg.mxu0
        %11441 = vst [vmem:[%s497] sm:$0xff] %v11423
        %11442 = vst [vmem:[%s497 + $0x8] sm:$0xff] %v11428
        %11443 = vst [vmem:[%s497 + $0x10] sm:$0xff] %v11433
        %11444 = vst [vmem:[%s497 + $0x18] sm:$0xff] %v11438
        %p11445 = scmp.lt.s32.totalorder %s32, 1
        %s11446 = scalar_select %p11445, %s32, 1
        %s11447 = smul.addr %s11446, 32
        %s11448 = smul.addr %s11447, 4
        %s11449 = scalar_lea.vmem %s14, %s11448
        %s11450 = sand.u32 %s365, 1
        %s11451 = scalar_lea.sflag [#allocation6], %s11450
        %s11452 = sand.u32 %s365, 1
        %s11453 = smul.addr %s11452, 32
        %s11454 = scalar_lea.vmem [#allocation5], %s11453
        // Predicated region
        $region81: #{tpu_custom_call.1} parent=75 // pred_check
          %p11455 = pneg %p349
        $region82: #{tpu_custom_call.1} parent=75 // pred_check_branch
          %11457 = sbr.rel (%p11455) target = $region84
        $region83: #{tpu_custom_call.1} parent=75 // pred_region
          _
        $region84: #{tpu_custom_call.1} parent=75 // pred_fallthru
          _
        // Predicated region
        $region85: #{tpu_custom_call.1} parent=75 // pred_check
          %p11458 = pneg %p375
        $region86: #{tpu_custom_call.1} parent=75 // pred_check_branch
          %11460 = sbr.rel (%p11458) target = $region88
        $region87: #{tpu_custom_call.1} parent=75 // pred_region
          %s11462 = ssub.s32 512, 512
          %11463 = vsyncadd %s11451, %s11462
          %s11464 = smul.addr %s32, 4
          %s11465 = smul.addr %s11464, 128
          %s11466 = scalar_lea.hbm %s15, %s11465
          %s11467 = sshll.u32 %s11454, 4
          %s11468 = int_to_ptr.vmem [resolvable:$true] %s11467
          %11473 = dma.vmem_to_hbm [thread:$0]  %s11468, 512, %s11466, %s11451, 128, 128, 8
        $region88: #{tpu_custom_call.1} parent=75 // pred_fallthru
          _
      $region76: #{tpu_custom_call.1} parent=5 // pred_fallthru
        _
      %p11474 = scmp.le.s32.totalorder 2, %s27
      // Predicated region
      $region89: #{tpu_custom_call.1} parent=5 // pred_check
        %p11475 = pneg %p11474
      $region90: #{tpu_custom_call.1} parent=5 // pred_check_branch
        %11477 = sbr.rel (%p11475) target = $region92
      $region91: #{tpu_custom_call.1} parent=5 // pred_region
        %s11478 = ssub.s32 %s27, 2
        // Predicated region
        $region93: #{tpu_custom_call.1} parent=91 // pred_check
          %p11479 = pneg %p355
        $region94: #{tpu_custom_call.1} parent=91 // pred_check_branch
          %11481 = sbr.rel (%p11479) target = $region96
        $region95: #{tpu_custom_call.1} parent=91 // pred_region
          %p11482 = scmp.lt.s32.totalorder %s33, 1
          %s11483 = scalar_select %p11482, %s33, 1
          %s11484 = smul.addr %s11483, 32
          %s11485 = smul.addr %s11484, 4
          %s11486 = scalar_lea.vmem %s14, %s11485
        $region96: #{tpu_custom_call.1} parent=91 // pred_fallthru
          _
        // Predicated region
        $region97: #{tpu_custom_call.1} parent=91 // pred_check
          %p11487 = pneg %p381
        $region98: #{tpu_custom_call.1} parent=91 // pred_check_branch
          %11489 = sbr.rel (%p11487) target = $region100
        $region99: #{tpu_custom_call.1} parent=91 // pred_region
          %s11490 = sand.u32 %s366, 1
          %s11491 = scalar_lea.sflag [#allocation6], %s11490
          %s11492 = sand.u32 %s366, 1
          %s11493 = smul.addr %s11492, 32
          %s11494 = scalar_lea.vmem [#allocation5], %s11493
          %11495 = dma.done %s11491, 512
        $region100: #{tpu_custom_call.1} parent=91 // pred_fallthru
          _
      $region92: #{tpu_custom_call.1} parent=5 // pred_fallthru
        _
    $region6: #{tpu_custom_call.1} parent=1 // loop_footer
      %s31 = sadd.s32 1, %s27
    $region7: #{tpu_custom_call.1} parent=1 // loop_footer_branch
      %26 = sbr.rel target = $region3
    $region8: #{tpu_custom_call.1} parent=1 // loop_exit
      _
    %11496 = vsyncpa [#allocation6], 1
    %s11497 = scalar_lea.sflag [#allocation6], 1
    %11498 = vsyncpa %s11497, 1

</llo_original>
